<compile_context>
chip_gen: v6e
topology: v6e:2x2x1
jax: 0.10.0
libtpu: 0.0.40
codegen_flags: <defaults>
</compile_context>

<pallas_src>
import functools
import math

import jax
import jax.numpy as jnp
from jax.experimental import pallas as pl
from jax.experimental.pallas import tpu as pltpu


_SQRT_2_OVER_PI = 0.7978845608028654


def _gelu(y):
    # TODO(synk): tanh approximation; PyTorch nn.GELU default is exact erf.
    return 0.5 * y * (1.0 + jnp.tanh(_SQRT_2_OVER_PI * (y + 0.044715 * y * y * y)))


def _mm(a, w):
    """MXU matmul: bf16 operands (weights pre-cast at init), f32 accumulation."""
    return jnp.dot(a.astype(jnp.bfloat16), w.astype(jnp.bfloat16),
                   preferred_element_type=jnp.float32)


def _layer_norm(x, g, b, eps=1e-5):
    mu = jnp.mean(x, axis=-1, keepdims=True)
    var = jnp.mean((x - mu) ** 2, axis=-1, keepdims=True)
    return (x - mu) * jax.lax.rsqrt(var + eps) * g + b


# ----------------------------------------------------------------------------
# Pallas kernels
# ----------------------------------------------------------------------------

def _linear_kernel(x_ref, w_ref, b_ref, o_ref):
    o_ref[...] = _mm(x_ref[...], w_ref[...]) + b_ref[...]


def pallas_linear(x, w, b):
    """Whole-array linear (patch embedding). b is (1, N)."""
    M, _ = x.shape
    N = w.shape[1]
    return pl.pallas_call(
        _linear_kernel,
        out_shape=jax.ShapeDtypeStruct((M, N), jnp.float32),
    )(x, w, b)


def _spectral_kernel(ar_ref, ai_ref, wr_ref, wi_ref, or_ref, oi_ref):
    """Complex spectral multiply for all retained modes (weights pre-summed
    over scales at init).  4 batched bf16 dot_generals, f32 accumulation."""
    ar = ar_ref[...].astype(jnp.bfloat16)
    ai = ai_ref[...].astype(jnp.bfloat16)
    wr = wr_ref[...]
    wi = wi_ref[...]
    dn = (((2,), (1,)), ((0,), (0,)))          # contract C, batch over modes
    rr = jax.lax.dot_general(ar, wr, dn, preferred_element_type=jnp.float32)
    ii = jax.lax.dot_general(ai, wi, dn, preferred_element_type=jnp.float32)
    ri = jax.lax.dot_general(ar, wi, dn, preferred_element_type=jnp.float32)
    ir = jax.lax.dot_general(ai, wr, dn, preferred_element_type=jnp.float32)
    or_ref[...] = rr - ii
    oi_ref[...] = ri + ir


def pallas_spectral_mul(ar, ai, wr, wi):
    Mm, Bc, C = ar.shape
    out = jax.ShapeDtypeStruct((Mm, Bc, C), jnp.float32)
    return pl.pallas_call(_spectral_kernel, out_shape=(out, out))(ar, ai, wr, wi)


def _hifno_block_kernel(tok_ref, spec_ref,
                        pw_ref, pb_ref, g1_ref, b1_ref, qkvw_ref, qkvb_ref,
                        prw_ref, prb_ref, g2_ref, b2_ref,
                        m1w_ref, m1b_ref, m2w_ref, m2b_ref,
                        o_ref, *, num_heads):
    """Entire HiFNO block for one batch element, all intermediates in VMEM."""
    x = tok_ref[0]                              # (N, C) f32
    spec = spec_ref[0]
    C = x.shape[-1]
    hd = C // num_heads

    # --- FNO pointwise path + residual: x = x + gelu(spec + x @ Wp + bp) ---
    x = x + _gelu(spec + _mm(x, pw_ref[...]) + pb_ref[...])

    # --- self-attention (LN fused into QKV, q/k/v never leave VMEM) --------
    xn = _layer_norm(x, g1_ref[...], b1_ref[...])
    qkv = _mm(xn, qkvw_ref[...]) + qkvb_ref[...]            # (N, 3C)
    q, k, v = qkv[:, :C], qkv[:, C:2 * C], qkv[:, 2 * C:]
    qh = jnp.stack([q[:, h * hd:(h + 1) * hd] for h in range(num_heads)],
                   axis=0).astype(jnp.bfloat16)             # (h, N, hd)
    kh = jnp.stack([k[:, h * hd:(h + 1) * hd] for h in range(num_heads)],
                   axis=0).astype(jnp.bfloat16)
    vh = jnp.stack([v[:, h * hd:(h + 1) * hd] for h in range(num_heads)],
                   axis=0).astype(jnp.bfloat16)
    s = jax.lax.dot_general(qh, kh, (((2,), (2,)), ((0,), (0,))),
                            preferred_element_type=jnp.float32)
    s = s * (1.0 / math.sqrt(hd))                           # (h, N, N)
    p = jnp.exp(s - jnp.max(s, axis=-1, keepdims=True))
    p = p * pl.reciprocal(jnp.sum(p, axis=-1, keepdims=True), approx=True)
    o3 = jax.lax.dot_general(p.astype(jnp.bfloat16), vh,
                             (((2,), (1,)), ((0,), (0,))),
                             preferred_element_type=jnp.float32)  # (h, N, hd)
    att = jnp.concatenate([o3[h] for h in range(num_heads)], axis=1)  # (N, C)
    x = x + _mm(att, prw_ref[...]) + prb_ref[...]

    # --- MLP (LN fused into first linear, residual fused into second) ------
    h1 = _gelu(_mm(_layer_norm(x, g2_ref[...], b2_ref[...]), m1w_ref[...])
               + m1b_ref[...])
    x = x + _mm(h1, m2w_ref[...]) + m2b_ref[...]
    o_ref[0] = x


def pallas_hifno_block(tok, spec, p, num_heads):
    """tok/spec: (B, N, C) f32 -> (B, N, C) f32.  Grid over B ("parallel")."""
    B, N, C = tok.shape
    weights = [p["point_w"], p["point_b"], p["ln1_g"], p["ln1_b"],
               p["qkv_w"], p["qkv_b"], p["proj_w"], p["proj_b"],
               p["ln2_g"], p["ln2_b"], p["mlp_w1"], p["mlp_b1"],
               p["mlp_w2"], p["mlp_b2"]]
    tok_spec = pl.BlockSpec((1, N, C), lambda b: (b, 0, 0))
    in_specs = [tok_spec, tok_spec] + [
        pl.BlockSpec(w.shape, lambda b: (0, 0)) for w in weights]
    return pl.pallas_call(
        functools.partial(_hifno_block_kernel, num_heads=num_heads),
        grid=(B,),
        in_specs=in_specs,
        out_specs=pl.BlockSpec((1, N, C), lambda b: (b, 0, 0)),
        out_shape=jax.ShapeDtypeStruct((B, N, C), jnp.float32),
        compiler_params=pltpu.CompilerParams(
            dimension_semantics=("parallel",)),
    )(tok, spec, *weights)


def _ta_head_kernel(tok_ref, lat_ref, sel_ref, outw_ref, outb_ref,
                    lnkvg_ref, lnkvb_ref, wv_ref, bv_ref, wo_ref, bo_ref,
                    lnmg_ref, lnmb_ref, mw1_ref, mb1_ref, mw2_ref, mb2_ref,
                    fmw_ref, fmb_ref, fmg_ref, fmbe_ref, o_ref,
                    *, num_layers, num_latents, mean_scale):
    """hifno out-proj + TimeAggregator (T==1) + (latents,H,W) mean + head."""
    tok = tok_ref[...]                                   # (BG, C_embed)
    BG = tok.shape[0]
    ctx = _mm(tok, outw_ref[...]) + outb_ref[...]        # hifno output proj
    F = ctx.shape[-1]
    L = num_latents

    latents = lat_ref[...]                               # (L, F)
    lat = jnp.concatenate(
        [jnp.broadcast_to(latents[l:l + 1, :], (BG, F)) for l in range(L)],
        axis=0)                                          # (L*BG, F), l-major

    for i in range(num_layers):
        # T == 1: softmax over a single key is exactly 1 -> attention == V;
        # the q / Wq / LNq path is dead work and is skipped entirely.
        cn = _layer_norm(ctx, lnkvg_ref[i], lnkvb_ref[i])
        v = _mm(cn, wv_ref[i]) + bv_ref[i]               # (BG, F)
        a = _mm(v, wo_ref[i]) + bo_ref[i]                # (BG, F)
        lat = lat + jnp.concatenate([a] * L, axis=0)     # broadcast over latents
        xn = _layer_norm(lat, lnmg_ref[i], lnmb_ref[i])
        h = _gelu(_mm(xn, mw1_ref[i]) + mb1_ref[i])
        lat = lat + _mm(h, mw2_ref[i]) + mb2_ref[i]

    # mean over (latents, H, W) per batch element as one small f32 matmul
    # against a constant 0/1 selection matrix (exact scaling applied after).
    m = jnp.dot(sel_ref[...], lat, preferred_element_type=jnp.float32)
    m = m * mean_scale                                   # (B, F)
    y = _mm(m, fmw_ref[...]) + fmb_ref[...]
    y = _layer_norm(y, fmg_ref[...], fmbe_ref[...])
    o_ref[...] = jnp.maximum(y, 0.0)


def pallas_ta_head(tok2d, hifno_p, ta_p, fm_p, *, batch, tokens):
    BG, _ = tok2d.shape
    assert BG == batch * tokens
    L = ta_p["latents"].shape[0]
    hidden = fm_p["w"].shape[1]
    # constant 0/1 selection matrix (shape-only -> folded to a literal by XLA)
    rows = jnp.arange(L * BG)
    owner = (rows % BG) // tokens
    sel = (owner[None, :] == jnp.arange(batch)[:, None]).astype(jnp.float32)
    return pl.pallas_call(
        functools.partial(_ta_head_kernel,
                          num_layers=ta_p["wv"].shape[0],
                          num_latents=L,
                          mean_scale=1.0 / float(L * tokens)),
        out_shape=jax.ShapeDtypeStruct((batch, hidden), jnp.float32),
    )(tok2d, ta_p["latents"], sel,
      hifno_p["out_w"], hifno_p["out_b"],
      ta_p["lnkv_g"], ta_p["lnkv_b"], ta_p["wv"], ta_p["bv"],
      ta_p["wo"], ta_p["bo"], ta_p["lnm_g"], ta_p["lnm_b"],
      ta_p["mw1"], ta_p["mb1"], ta_p["mw2"], ta_p["mb2"],
      fm_p["w"], fm_p["b"], fm_p["gamma"], fm_p["beta"])


# ----------------------------------------------------------------------------
# Parameter construction (deterministic, synthetic)
# ----------------------------------------------------------------------------

class KeyGen:
    def __init__(self, key):
        self.key = key

    def __call__(self):
        self.key, sub = jax.random.split(self.key)
        return sub


def _w(kg, shape, scale=0.02, dtype=jnp.float32):
    return (jax.random.normal(kg(), shape, dtype=jnp.float32) * scale).astype(dtype)


def init_params(key, *, obs_shape, feature_dim, embed_dim, hidden_dim,
                frame_stack, depth, num_scales, trunc_sizes, num_heads,
                mlp_ratio, patch_size):
    kg = KeyGen(key)
    Cin, H, W = obs_shape
    Hp, Wp = H // patch_size, W // patch_size
    Wf = Wp // 2 + 1
    C = embed_dim
    mlp_hidden = int(C * mlp_ratio)
    bf16 = jnp.bfloat16

    def zrow(n):
        return jnp.zeros((1, n), jnp.float32)

    def orow(n):
        return jnp.ones((1, n), jnp.float32)

    hifno = {
        "patch_w": _w(kg, (Cin * patch_size * patch_size, C), dtype=bf16),
        "patch_b": zrow(C),
        "out_w": _w(kg, (C, feature_dim), dtype=bf16),
        "out_b": zrow(feature_dim),
        "blocks": [],
    }
    for _ in range(depth):
        # Per-scale spectral weights zero-padded to the max retained modes and
        # pre-SUMMED with the 1/num_scales mean folded in:
        #   mode-wise  a @ sum_s(W_s)  ==  sum_s(a @ W_s)   (exact).
        m1s = [min(t, Hp) for t in trunc_sizes[:num_scales]]
        m2s = [min(t, Wf) for t in trunc_sizes[:num_scales]]
        m1, m2 = max(m1s), max(m2s)
        wr_sum = jnp.zeros((m1, m2, C, C), jnp.float32)
        wi_sum = jnp.zeros((m1, m2, C, C), jnp.float32)
        for a1, a2 in zip(m1s, m2s):
            wr_sum = wr_sum.at[:a1, :a2].add(_w(kg, (a1, a2, C, C)))
            wi_sum = wi_sum.at[:a1, :a2].add(_w(kg, (a1, a2, C, C)))
        blk = {
            "spec_wr": (wr_sum / num_scales).astype(bf16),
            "spec_wi": (wi_sum / num_scales).astype(bf16),
            "point_w": _w(kg, (C, C), dtype=bf16), "point_b": zrow(C),
            "ln1_g": orow(C), "ln1_b": zrow(C),
            "qkv_w": _w(kg, (C, 3 * C), dtype=bf16), "qkv_b": zrow(3 * C),
            "proj_w": _w(kg, (C, C), dtype=bf16), "proj_b": zrow(C),
            "ln2_g": orow(C), "ln2_b": zrow(C),
            "mlp_w1": _w(kg, (C, mlp_hidden), dtype=bf16), "mlp_b1": zrow(mlp_hidden),
            "mlp_w2": _w(kg, (mlp_hidden, C), dtype=bf16), "mlp_b2": zrow(C),
        }
        hifno["blocks"].append(blk)

    # TimeAggregator(depth=2, mlp_ratio=2.0).  q / Wq / LNq are dead work when
    # the time dimension is 1 (always true in HiFNOEncoder.forward) -> omitted.
    ta_hidden = int(C * 2.0)
    ta_depth = 2
    time_agg = {
        "latents": _w(kg, (frame_stack, C)),
        "lnkv_g": jnp.ones((ta_depth, 1, C), jnp.float32),
        "lnkv_b": jnp.zeros((ta_depth, 1, C), jnp.float32),
        "wv": _w(kg, (ta_depth, C, C), dtype=bf16),
        "bv": jnp.zeros((ta_depth, 1, C), jnp.float32),
        "wo": _w(kg, (ta_depth, C, C), dtype=bf16),
        "bo": jnp.zeros((ta_depth, 1, C), jnp.float32),
        "lnm_g": jnp.ones((ta_depth, 1, C), jnp.float32),
        "lnm_b": jnp.zeros((ta_depth, 1, C), jnp.float32),
        "mw1": _w(kg, (ta_depth, C, ta_hidden), dtype=bf16),
        "mb1": jnp.zeros((ta_depth, 1, ta_hidden), jnp.float32),
        "mw2": _w(kg, (ta_depth, ta_hidden, C), dtype=bf16),
        "mb2": jnp.zeros((ta_depth, 1, C), jnp.float32),
    }

    feature_map = {
        "w": _w(kg, (C, hidden_dim), dtype=bf16),
        "b": zrow(hidden_dim),
        "gamma": orow(hidden_dim),
        "beta": zrow(hidden_dim),
    }

    return {"hifno": hifno, "time_agg": time_agg, "feature_map": feature_map}


# ----------------------------------------------------------------------------
# Forward passes
# ----------------------------------------------------------------------------

def _hifno_block(p, tok, B, Hp, Wp, num_heads):
    N = Hp * Wp
    C = tok.shape[-1]
    Wf = Wp // 2 + 1
    m1, m2 = p["spec_wr"].shape[0], p["spec_wr"].shape[1]     # static ints

    # ---- multi-scale spectral convolution (scales pre-summed at init) ----
    # TODO(synk): rfft2/irfft2 have no Pallas equivalent; they stay in XLA.
    xf = jnp.fft.rfft2(tok.reshape(B, Hp, Wp, C), axes=(1, 2))   # (B,Hp,Wf,C)
    a = xf[:, :m1, :m2, :].transpose(1, 2, 0, 3).reshape(m1 * m2, B, C)
    o_r, o_i = pallas_spectral_mul(
        jnp.real(a), jnp.imag(a),
        p["spec_wr"].reshape(m1 * m2, C, C),
        p["spec_wi"].reshape(m1 * m2, C, C))
    of = (o_r + 1j * o_i).reshape(m1, m2, B, C).transpose(2, 0, 1, 3)
    if m1 == Hp and m2 == Wf:
        acc = of
    else:
        acc = jnp.zeros((B, Hp, Wf, C), of.dtype).at[:, :m1, :m2, :].set(of)
    # mean over scales already folded into the pre-summed weights -> ONE irfft
    spec = jnp.fft.irfft2(acc, s=(Hp, Wp), axes=(1, 2))
    spec = spec.reshape(B, N, C).astype(jnp.float32)

    # ---- fused block kernel (everything else stays in VMEM) --------------
    return pallas_hifno_block(tok, spec, p, num_heads)


def hierarchical_fno_tokens(p, obs, *, patch_size, num_heads):
    B, Cin, H, W = obs.shape
    Hp, Wp = H // patch_size, W // patch_size
    C = p["patch_w"].shape[1]

    # patch embedding (Conv2d k=ps, s=ps) as im2col + Pallas matmul
    x = obs.reshape(B, Cin, Hp, patch_size, Wp, patch_size)
    x = x.transpose(0, 2, 4, 1, 3, 5).reshape(B * Hp * Wp,
                                              Cin * patch_size * patch_size)
    tok = pallas_linear(x, p["patch_w"], p["patch_b"]).reshape(B, Hp * Wp, C)

    for blk in p["blocks"]:
        tok = _hifno_block(blk, tok, B, Hp, Wp, num_heads)
    # channels-last tokens == features.permute(0, 2, 3, 1) flattened
    return tok.reshape(B * Hp * Wp, C), Hp * Wp


def hifno_encoder_forward(params, obs, *, patch_size=4, num_heads=4):
    """Mirrors HiFNOEncoder.forward (obs is NCHW, float32)."""
    B = obs.shape[0]
    tok2d, tokens = hierarchical_fno_tokens(
        params["hifno"], obs, patch_size=patch_size, num_heads=num_heads)
    # hifno out-proj + TimeAggregator (T==1) + mean over (latents, H, W) +
    # Linear/LayerNorm/ReLU head fused into one Pallas call -> (B, hidden_dim)
    return pallas_ta_head(tok2d, params["hifno"], params["time_agg"],
                          params["feature_map"], batch=B, tokens=tokens)


# ----------------------------------------------------------------------------
# Main
# ----------------------------------------------------------------------------

if __name__ == "__main__":
    # Small, self-consistent config:
    #   frame_stack=3, 3 channels/frame -> obs_shape=(9, 16, 16)
    #   embed_dim = feature_dim = 32, hidden_dim = 32, depth = 2, num_scales = 3
    obs_shape = (9, 16, 16)
    cfg = dict(
        obs_shape=obs_shape, feature_dim=32, embed_dim=32, hidden_dim=32,
        frame_stack=3, depth=2, num_scales=3, trunc_sizes=[16, 12, 8],
        num_heads=4, mlp_ratio=2.0, patch_size=4,
    )

    key = jax.random.PRNGKey(0)
    pkey, okey = jax.random.split(key)
    params = init_params(pkey, **cfg)

    B = 2
    obs = jax.random.uniform(okey, (B,) + obs_shape, dtype=jnp.float32) * 255.0

    fwd = jax.jit(functools.partial(hifno_encoder_forward,
                                    patch_size=cfg["patch_size"],
                                    num_heads=cfg["num_heads"]))
    out = jax.block_until_ready(fwd(params, obs))

    assert out.shape == (B, cfg["hidden_dim"]), out.shape
    assert out.dtype == jnp.float32
    assert bool(jnp.all(jnp.isfinite(out)))
    print("KERNEL_OK")
</pallas_src>

<mosaic_0001>
module attributes {stable_mosaic.version = 11 : i64} {
  func.func @_linear_kernel(%arg0: memref<32x144xf32, #tpu.memory_space<vmem>>, %arg1: memref<144x32xbf16, #tpu.memory_space<vmem>>, %arg2: memref<1x32xf32, #tpu.memory_space<vmem>>, %arg3: memref<32x32xf32, #tpu.memory_space<vmem>>) attributes {dimension_semantics = [], scalar_prefetch = 0 : i64, scratch_operands = 0 : i64, tpu.core_type = #tpu.core_type<tc>} {
    %c0 = arith.constant 0 : index
    %c0_0 = arith.constant 0 : index
    %0 = vector.load %arg0[%c0, %c0_0] : memref<32x144xf32, #tpu.memory_space<vmem>>, vector<32x144xf32>
    %c0_1 = arith.constant 0 : index
    %c0_2 = arith.constant 0 : index
    %1 = vector.load %arg1[%c0_1, %c0_2] : memref<144x32xbf16, #tpu.memory_space<vmem>>, vector<144x32xbf16>
    %2 = arith.truncf %0 : vector<32x144xf32> to vector<32x144xbf16>
    %cst = arith.constant dense<0.000000e+00> : vector<32x32xf32>
    %3 = tpu.matmul %2, %1, %cst {dimension_numbers = #tpu.dot_dimension_numbers<[1], [0], [0], [1], [0, 0, 1, 1], [], []>} : vector<32x144xbf16>, vector<144x32xbf16>, vector<32x32xf32> -> vector<32x32xf32>
    %c0_3 = arith.constant 0 : index
    %c0_4 = arith.constant 0 : index
    %4 = vector.load %arg2[%c0_3, %c0_4] : memref<1x32xf32, #tpu.memory_space<vmem>>, vector<1x32xf32>
    %5 = vector.broadcast %4 : vector<1x32xf32> to vector<32x32xf32>
    %6 = arith.addf %3, %5 : vector<32x32xf32>
    %c0_5 = arith.constant 0 : index
    %c0_6 = arith.constant 0 : index
    %7 = vector.load %arg3[%c0_5, %c0_6] : memref<32x32xf32, #tpu.memory_space<vmem>>, vector<32x32xf32>
    tpu.vector_store %arg3[%c0_5, %c0_6], %6 {strides = array<i32>} : memref<32x32xf32, #tpu.memory_space<vmem>>, vector<32x32xf32>,
    return
  }
}

module attributes {stable_mosaic.version = 11 : i64} {
  func.func @_spectral_kernel(%arg0: memref<12x2x32xf32, #tpu.memory_space<vmem>>, %arg1: memref<12x2x32xf32, #tpu.memory_space<vmem>>, %arg2: memref<12x32x32xbf16, #tpu.memory_space<vmem>>, %arg3: memref<12x32x32xbf16, #tpu.memory_space<vmem>>, %arg4: memref<12x2x32xf32, #tpu.memory_space<vmem>>, %arg5: memref<12x2x32xf32, #tpu.memory_space<vmem>>) attributes {dimension_semantics = [], scalar_prefetch = 0 : i64, scratch_operands = 0 : i64, tpu.core_type = #tpu.core_type<tc>} {
    %c0 = arith.constant 0 : index
    %c0_0 = arith.constant 0 : index
    %c0_1 = arith.constant 0 : index
    %0 = vector.load %arg0[%c0, %c0_0, %c0_1] : memref<12x2x32xf32, #tpu.memory_space<vmem>>, vector<12x2x32xf32>
    %1 = arith.truncf %0 : vector<12x2x32xf32> to vector<12x2x32xbf16>
    %c0_2 = arith.constant 0 : index
    %c0_3 = arith.constant 0 : index
    %c0_4 = arith.constant 0 : index
    %2 = vector.load %arg1[%c0_2, %c0_3, %c0_4] : memref<12x2x32xf32, #tpu.memory_space<vmem>>, vector<12x2x32xf32>
    %3 = arith.truncf %2 : vector<12x2x32xf32> to vector<12x2x32xbf16>
    %c0_5 = arith.constant 0 : index
    %c0_6 = arith.constant 0 : index
    %c0_7 = arith.constant 0 : index
    %4 = vector.load %arg2[%c0_5, %c0_6, %c0_7] : memref<12x32x32xbf16, #tpu.memory_space<vmem>>, vector<12x32x32xbf16>
    %c0_8 = arith.constant 0 : index
    %c0_9 = arith.constant 0 : index
    %c0_10 = arith.constant 0 : index
    %5 = vector.load %arg3[%c0_8, %c0_9, %c0_10] : memref<12x32x32xbf16, #tpu.memory_space<vmem>>, vector<12x32x32xbf16>
    %cst = arith.constant dense<0.000000e+00> : vector<12x2x32xf32>
    %6 = tpu.matmul %1, %4, %cst {dimension_numbers = #tpu.dot_dimension_numbers<[2], [1], [1], [2], [0, 0, 0, 1, 1, 2], [0], [0]>} : vector<12x2x32xbf16>, vector<12x32x32xbf16>, vector<12x2x32xf32> -> vector<12x2x32xf32>
    %cst_11 = arith.constant dense<0.000000e+00> : vector<12x2x32xf32>
    %7 = tpu.matmul %3, %5, %cst_11 {dimension_numbers = #tpu.dot_dimension_numbers<[2], [1], [1], [2], [0, 0, 0, 1, 1, 2], [0], [0]>} : vector<12x2x32xbf16>, vector<12x32x32xbf16>, vector<12x2x32xf32> -> vector<12x2x32xf32>
    %cst_12 = arith.constant dense<0.000000e+00> : vector<12x2x32xf32>
    %8 = tpu.matmul %1, %5, %cst_12 {dimension_numbers = #tpu.dot_dimension_numbers<[2], [1], [1], [2], [0, 0, 0, 1, 1, 2], [0], [0]>} : vector<12x2x32xbf16>, vector<12x32x32xbf16>, vector<12x2x32xf32> -> vector<12x2x32xf32>
    %cst_13 = arith.constant dense<0.000000e+00> : vector<12x2x32xf32>
    %9 = tpu.matmul %3, %4, %cst_13 {dimension_numbers = #tpu.dot_dimension_numbers<[2], [1], [1], [2], [0, 0, 0, 1, 1, 2], [0], [0]>} : vector<12x2x32xbf16>, vector<12x32x32xbf16>, vector<12x2x32xf32> -> vector<12x2x32xf32>
    %10 = arith.subf %6, %7 : vector<12x2x32xf32>
    %c0_14 = arith.constant 0 : index
    %c0_15 = arith.constant 0 : index
    %c0_16 = arith.constant 0 : index
    %11 = vector.load %arg4[%c0_14, %c0_15, %c0_16] : memref<12x2x32xf32, #tpu.memory_space<vmem>>, vector<12x2x32xf32>
    tpu.vector_store %arg4[%c0_14, %c0_15, %c0_16], %10 {strides = array<i32>} : memref<12x2x32xf32, #tpu.memory_space<vmem>>, vector<12x2x32xf32>,
    %12 = arith.addf %8, %9 : vector<12x2x32xf32>
    %c0_17 = arith.constant 0 : index
    %c0_18 = arith.constant 0 : index
    %c0_19 = arith.constant 0 : index
    %13 = vector.load %arg5[%c0_17, %c0_18, %c0_19] : memref<12x2x32xf32, #tpu.memory_space<vmem>>, vector<12x2x32xf32>
    tpu.vector_store %arg5[%c0_17, %c0_18, %c0_19], %12 {strides = array<i32>} : memref<12x2x32xf32, #tpu.memory_space<vmem>>, vector<12x2x32xf32>,
    return
  }
}

module attributes {stable_mosaic.version = 11 : i64} {
  func.func @_hifno_block_kernel(%arg0: i32, %arg1: memref<1x16x32xf32, #tpu.memory_space<vmem>>, %arg2: memref<1x16x32xf32, #tpu.memory_space<vmem>>, %arg3: memref<32x32xbf16, #tpu.memory_space<vmem>>, %arg4: memref<1x32xf32, #tpu.memory_space<vmem>>, %arg5: memref<1x32xf32, #tpu.memory_space<vmem>>, %arg6: memref<1x32xf32, #tpu.memory_space<vmem>>, %arg7: memref<32x96xbf16, #tpu.memory_space<vmem>>, %arg8: memref<1x96xf32, #tpu.memory_space<vmem>>, %arg9: memref<32x32xbf16, #tpu.memory_space<vmem>>, %arg10: memref<1x32xf32, #tpu.memory_space<vmem>>, %arg11: memref<1x32xf32, #tpu.memory_space<vmem>>, %arg12: memref<1x32xf32, #tpu.memory_space<vmem>>, %arg13: memref<32x64xbf16, #tpu.memory_space<vmem>>, %arg14: memref<1x64xf32, #tpu.memory_space<vmem>>, %arg15: memref<64x32xbf16, #tpu.memory_space<vmem>>, %arg16: memref<1x32xf32, #tpu.memory_space<vmem>>, %arg17: memref<1x16x32xf32, #tpu.memory_space<vmem>>) attributes {dimension_semantics = [#tpu.dimension_semantics<parallel>], iteration_bounds = array<i64: 2>, scalar_prefetch = 0 : i64, scratch_operands = 0 : i64, tpu.core_type = #tpu.core_type<tc>, window_params = [{transform_indices = @transform_0, window_bounds = array<i64: 1, 16, 32>}, {transform_indices = @transform_1, window_bounds = array<i64: 1, 16, 32>}, {pipeline_mode = #tpu.pipeline_mode<synchronous>, transform_indices = @transform_2, window_bounds = array<i64: 32, 32>}, {pipeline_mode = #tpu.pipeline_mode<synchronous>, transform_indices = @transform_3, window_bounds = array<i64: 1, 32>}, {pipeline_mode = #tpu.pipeline_mode<synchronous>, transform_indices = @transform_4, window_bounds = array<i64: 1, 32>}, {pipeline_mode = #tpu.pipeline_mode<synchronous>, transform_indices = @transform_5, window_bounds = array<i64: 1, 32>}, {pipeline_mode = #tpu.pipeline_mode<synchronous>, transform_indices = @transform_6, window_bounds = array<i64: 32, 96>}, {pipeline_mode = #tpu.pipeline_mode<synchronous>, transform_indices = @transform_7, window_bounds = array<i64: 1, 96>}, {pipeline_mode = #tpu.pipeline_mode<synchronous>, transform_indices = @transform_8, window_bounds = array<i64: 32, 32>}, {pipeline_mode = #tpu.pipeline_mode<synchronous>, transform_indices = @transform_9, window_bounds = array<i64: 1, 32>}, {pipeline_mode = #tpu.pipeline_mode<synchronous>, transform_indices = @transform_10, window_bounds = array<i64: 1, 32>}, {pipeline_mode = #tpu.pipeline_mode<synchronous>, transform_indices = @transform_11, window_bounds = array<i64: 1, 32>}, {pipeline_mode = #tpu.pipeline_mode<synchronous>, transform_indices = @transform_12, window_bounds = array<i64: 32, 64>}, {pipeline_mode = #tpu.pipeline_mode<synchronous>, transform_indices = @transform_13, window_bounds = array<i64: 1, 64>}, {pipeline_mode = #tpu.pipeline_mode<synchronous>, transform_indices = @transform_14, window_bounds = array<i64: 64, 32>}, {pipeline_mode = #tpu.pipeline_mode<synchronous>, transform_indices = @transform_15, window_bounds = array<i64: 1, 32>}, {transform_indices = @transform_16, window_bounds = array<i64: 1, 16, 32>}]} {
    %c0 = arith.constant 0 : index
    %c0_0 = arith.constant 0 : index
    %c0_1 = arith.constant 0 : index
    %0 = vector.load %arg1[%c0, %c0_0, %c0_1] : memref<1x16x32xf32, #tpu.memory_space<vmem>>, vector<1x16x32xf32>
    %1 = vector.shape_cast %0 : vector<1x16x32xf32> to vector<16x32xf32>
    %c0_2 = arith.constant 0 : index
    %c0_3 = arith.constant 0 : index
    %c0_4 = arith.constant 0 : index
    %2 = vector.load %arg2[%c0_2, %c0_3, %c0_4] : memref<1x16x32xf32, #tpu.memory_space<vmem>>, vector<1x16x32xf32>
    %3 = vector.shape_cast %2 : vector<1x16x32xf32> to vector<16x32xf32>
    %c0_5 = arith.constant 0 : index
    %c0_6 = arith.constant 0 : index
    %4 = vector.load %arg3[%c0_5, %c0_6] : memref<32x32xbf16, #tpu.memory_space<vmem>>, vector<32x32xbf16>
    %5 = arith.truncf %1 : vector<16x32xf32> to vector<16x32xbf16>
    %cst = arith.constant dense<0.000000e+00> : vector<16x32xf32>
    %6 = tpu.matmul %5, %4, %cst {dimension_numbers = #tpu.dot_dimension_numbers<[1], [0], [0], [1], [0, 0, 1, 1], [], []>} : vector<16x32xbf16>, vector<32x32xbf16>, vector<16x32xf32> -> vector<16x32xf32>
    %7 = arith.addf %3, %6 : vector<16x32xf32>
    %c0_7 = arith.constant 0 : index
    %c0_8 = arith.constant 0 : index
    %8 = vector.load %arg4[%c0_7, %c0_8] : memref<1x32xf32, #tpu.memory_space<vmem>>, vector<1x32xf32>
    %9 = vector.broadcast %8 : vector<1x32xf32> to vector<16x32xf32>
    %10 = arith.addf %7, %9 : vector<16x32xf32>
    %cst_9 = arith.constant 5.000000e-01 : f32
    %11 = vector.broadcast %cst_9 : f32 to vector<16x32xf32>
    %12 = arith.mulf %11, %10 : vector<16x32xf32>
    %cst_10 = arith.constant 4.471500e-02 : f32
    %13 = vector.broadcast %cst_10 : f32 to vector<16x32xf32>
    %14 = arith.mulf %13, %10 : vector<16x32xf32>
    %15 = arith.mulf %14, %10 : vector<16x32xf32>
    %16 = arith.mulf %15, %10 : vector<16x32xf32>
    %17 = arith.addf %10, %16 : vector<16x32xf32>
    %cst_11 = arith.constant 0.797884583 : f32
    %18 = vector.broadcast %cst_11 : f32 to vector<16x32xf32>
    %19 = arith.mulf %18, %17 : vector<16x32xf32>
    %20 = math.tanh %19 : vector<16x32xf32>
    %cst_12 = arith.constant 1.000000e+00 : f32
    %21 = vector.broadcast %cst_12 : f32 to vector<16x32xf32>
    %22 = arith.addf %21, %20 : vector<16x32xf32>
    %23 = arith.mulf %12, %22 : vector<16x32xf32>
    %24 = arith.addf %1, %23 : vector<16x32xf32>
    %c0_13 = arith.constant 0 : index
    %c0_14 = arith.constant 0 : index
    %25 = vector.load %arg5[%c0_13, %c0_14] : memref<1x32xf32, #tpu.memory_space<vmem>>, vector<1x32xf32>
    %c0_15 = arith.constant 0 : index
    %c0_16 = arith.constant 0 : index
    %26 = vector.load %arg6[%c0_15, %c0_16] : memref<1x32xf32, #tpu.memory_space<vmem>>, vector<1x32xf32>
    %cst_17 = arith.constant dense<0.000000e+00> : vector<16xf32>
    %27 = vector.multi_reduction <add>, %24, %cst_17 [1] : vector<16x32xf32> to vector<16xf32>
    %28 = vector.shape_cast %27 : vector<16xf32> to vector<16x1xf32>
    %cst_18 = arith.constant 3.200000e+01 : f32
    %29 = vector.broadcast %cst_18 : f32 to vector<16x1xf32>
    %30 = arith.divf %28, %29 : vector<16x1xf32>
    %31 = vector.broadcast %30 : vector<16x1xf32> to vector<16x32xf32>
    %32 = arith.subf %24, %31 : vector<16x32xf32>
    %33 = arith.mulf %32, %32 : vector<16x32xf32>
    %cst_19 = arith.constant dense<0.000000e+00> : vector<16xf32>
    %34 = vector.multi_reduction <add>, %33, %cst_19 [1] : vector<16x32xf32> to vector<16xf32>
    %35 = vector.shape_cast %34 : vector<16xf32> to vector<16x1xf32>
    %cst_20 = arith.constant 3.200000e+01 : f32
    %36 = vector.broadcast %cst_20 : f32 to vector<16x1xf32>
    %37 = arith.divf %35, %36 : vector<16x1xf32>
    %38 = vector.broadcast %30 : vector<16x1xf32> to vector<16x32xf32>
    %39 = arith.subf %24, %38 : vector<16x32xf32>
    %cst_21 = arith.constant 9.99999974E-6 : f32
    %40 = vector.broadcast %cst_21 : f32 to vector<16x1xf32>
    %41 = arith.addf %37, %40 : vector<16x1xf32>
    %42 = math.rsqrt %41 : vector<16x1xf32>
    %43 = vector.broadcast %42 : vector<16x1xf32> to vector<16x32xf32>
    %44 = arith.mulf %39, %43 : vector<16x32xf32>
    %45 = vector.broadcast %25 : vector<1x32xf32> to vector<16x32xf32>
    %46 = arith.mulf %44, %45 : vector<16x32xf32>
    %47 = vector.broadcast %26 : vector<1x32xf32> to vector<16x32xf32>
    %48 = arith.addf %46, %47 : vector<16x32xf32>
    %c0_22 = arith.constant 0 : index
    %c0_23 = arith.constant 0 : index
    %49 = vector.load %arg7[%c0_22, %c0_23] : memref<32x96xbf16, #tpu.memory_space<vmem>>, vector<32x96xbf16>
    %50 = arith.truncf %48 : vector<16x32xf32> to vector<16x32xbf16>
    %cst_24 = arith.constant dense<0.000000e+00> : vector<16x96xf32>
    %51 = tpu.matmul %50, %49, %cst_24 {dimension_numbers = #tpu.dot_dimension_numbers<[1], [0], [0], [1], [0, 0, 1, 1], [], []>} : vector<16x32xbf16>, vector<32x96xbf16>, vector<16x96xf32> -> vector<16x96xf32>
    %c0_25 = arith.constant 0 : index
    %c0_26 = arith.constant 0 : index
    %52 = vector.load %arg8[%c0_25, %c0_26] : memref<1x96xf32, #tpu.memory_space<vmem>>, vector<1x96xf32>
    %53 = vector.broadcast %52 : vector<1x96xf32> to vector<16x96xf32>
    %54 = arith.addf %51, %53 : vector<16x96xf32>
    %55 = vector.extract_strided_slice %54 {offsets = [0, 0], sizes = [16, 32], strides = [1, 1]} : vector<16x96xf32> to vector<16x32xf32>
    %56 = vector.extract_strided_slice %54 {offsets = [0, 32], sizes = [16, 32], strides = [1, 1]} : vector<16x96xf32> to vector<16x32xf32>
    %57 = vector.extract_strided_slice %54 {offsets = [0, 64], sizes = [16, 32], strides = [1, 1]} : vector<16x96xf32> to vector<16x32xf32>
    %58 = vector.extract_strided_slice %55 {offsets = [0, 0], sizes = [16, 8], strides = [1, 1]} : vector<16x32xf32> to vector<16x8xf32>
    %59 = vector.extract_strided_slice %55 {offsets = [0, 8], sizes = [16, 8], strides = [1, 1]} : vector<16x32xf32> to vector<16x8xf32>
    %60 = vector.extract_strided_slice %55 {offsets = [0, 16], sizes = [16, 8], strides = [1, 1]} : vector<16x32xf32> to vector<16x8xf32>
    %61 = vector.extract_strided_slice %55 {offsets = [0, 24], sizes = [16, 8], strides = [1, 1]} : vector<16x32xf32> to vector<16x8xf32>
    %62 = vector.shape_cast %58 : vector<16x8xf32> to vector<1x16x8xf32>
    %63 = vector.shape_cast %59 : vector<16x8xf32> to vector<1x16x8xf32>
    %64 = vector.shape_cast %60 : vector<16x8xf32> to vector<1x16x8xf32>
    %65 = vector.shape_cast %61 : vector<16x8xf32> to vector<1x16x8xf32>
    %66 = tpu.concatenate %62, %63, %64, %65 in 0 : vector<1x16x8xf32>, vector<1x16x8xf32>, vector<1x16x8xf32>, vector<1x16x8xf32> -> vector<4x16x8xf32>
    %67 = arith.truncf %66 : vector<4x16x8xf32> to vector<4x16x8xbf16>
    %68 = vector.extract_strided_slice %56 {offsets = [0, 0], sizes = [16, 8], strides = [1, 1]} : vector<16x32xf32> to vector<16x8xf32>
    %69 = vector.extract_strided_slice %56 {offsets = [0, 8], sizes = [16, 8], strides = [1, 1]} : vector<16x32xf32> to vector<16x8xf32>
    %70 = vector.extract_strided_slice %56 {offsets = [0, 16], sizes = [16, 8], strides = [1, 1]} : vector<16x32xf32> to vector<16x8xf32>
    %71 = vector.extract_strided_slice %56 {offsets = [0, 24], sizes = [16, 8], strides = [1, 1]} : vector<16x32xf32> to vector<16x8xf32>
    %72 = vector.shape_cast %68 : vector<16x8xf32> to vector<1x16x8xf32>
    %73 = vector.shape_cast %69 : vector<16x8xf32> to vector<1x16x8xf32>
    %74 = vector.shape_cast %70 : vector<16x8xf32> to vector<1x16x8xf32>
    %75 = vector.shape_cast %71 : vector<16x8xf32> to vector<1x16x8xf32>
    %76 = tpu.concatenate %72, %73, %74, %75 in 0 : vector<1x16x8xf32>, vector<1x16x8xf32>, vector<1x16x8xf32>, vector<1x16x8xf32> -> vector<4x16x8xf32>
    %77 = arith.truncf %76 : vector<4x16x8xf32> to vector<4x16x8xbf16>
    %78 = vector.extract_strided_slice %57 {offsets = [0, 0], sizes = [16, 8], strides = [1, 1]} : vector<16x32xf32> to vector<16x8xf32>
    %79 = vector.extract_strided_slice %57 {offsets = [0, 8], sizes = [16, 8], strides = [1, 1]} : vector<16x32xf32> to vector<16x8xf32>
    %80 = vector.extract_strided_slice %57 {offsets = [0, 16], sizes = [16, 8], strides = [1, 1]} : vector<16x32xf32> to vector<16x8xf32>
    %81 = vector.extract_strided_slice %57 {offsets = [0, 24], sizes = [16, 8], strides = [1, 1]} : vector<16x32xf32> to vector<16x8xf32>
    %82 = vector.shape_cast %78 : vector<16x8xf32> to vector<1x16x8xf32>
    %83 = vector.shape_cast %79 : vector<16x8xf32> to vector<1x16x8xf32>
    %84 = vector.shape_cast %80 : vector<16x8xf32> to vector<1x16x8xf32>
    %85 = vector.shape_cast %81 : vector<16x8xf32> to vector<1x16x8xf32>
    %86 = tpu.concatenate %82, %83, %84, %85 in 0 : vector<1x16x8xf32>, vector<1x16x8xf32>, vector<1x16x8xf32>, vector<1x16x8xf32> -> vector<4x16x8xf32>
    %87 = arith.truncf %86 : vector<4x16x8xf32> to vector<4x16x8xbf16>
    %cst_27 = arith.constant dense<0.000000e+00> : vector<4x16x16xf32>
    %88 = tpu.matmul %67, %77, %cst_27 {dimension_numbers = #tpu.dot_dimension_numbers<[2], [2], [1], [1], [0, 0, 0, 1, 1, 1], [0], [0]>} : vector<4x16x8xbf16>, vector<4x16x8xbf16>, vector<4x16x16xf32> -> vector<4x16x16xf32>
    %cst_28 = arith.constant 0.353553385 : f32
    %89 = vector.broadcast %cst_28 : f32 to vector<4x16x16xf32>
    %90 = arith.mulf %88, %89 : vector<4x16x16xf32>
    %cst_29 = arith.constant dense<0xFF800000> : vector<4x16xf32>
    %91 = vector.multi_reduction <maximumf>, %90, %cst_29 [2] : vector<4x16x16xf32> to vector<4x16xf32>
    %92 = vector.shape_cast %91 : vector<4x16xf32> to vector<4x16x1xf32>
    %93 = vector.broadcast %92 : vector<4x16x1xf32> to vector<4x16x16xf32>
    %94 = arith.subf %90, %93 : vector<4x16x16xf32>
    %95 = math.exp %94 : vector<4x16x16xf32>
    %cst_30 = arith.constant dense<0.000000e+00> : vector<4x16xf32>
    %96 = vector.multi_reduction <add>, %95, %cst_30 [2] : vector<4x16x16xf32> to vector<4x16xf32>
    %97 = vector.shape_cast %96 : vector<4x16xf32> to vector<4x16x1xf32>
    %98 = tpu.reciprocal %97 {approx = true} : vector<4x16x1xf32> -> vector<4x16x1xf32>
    %99 = vector.broadcast %98 : vector<4x16x1xf32> to vector<4x16x16xf32>
    %100 = arith.mulf %95, %99 : vector<4x16x16xf32>
    %101 = arith.truncf %100 : vector<4x16x16xf32> to vector<4x16x16xbf16>
    %cst_31 = arith.constant dense<0.000000e+00> : vector<4x16x8xf32>
    %102 = tpu.matmul %101, %87, %cst_31 {dimension_numbers = #tpu.dot_dimension_numbers<[2], [1], [1], [2], [0, 0, 0, 1, 1, 2], [0], [0]>} : vector<4x16x16xbf16>, vector<4x16x8xbf16>, vector<4x16x8xf32> -> vector<4x16x8xf32>
    %103 = vector.extract_strided_slice %102 {offsets = [0, 0, 0], sizes = [1, 16, 8], strides = [1, 1, 1]} : vector<4x16x8xf32> to vector<1x16x8xf32>
    %104 = vector.shape_cast %103 : vector<1x16x8xf32> to vector<16x8xf32>
    %105 = vector.extract_strided_slice %102 {offsets = [1, 0, 0], sizes = [1, 16, 8], strides = [1, 1, 1]} : vector<4x16x8xf32> to vector<1x16x8xf32>
    %106 = vector.shape_cast %105 : vector<1x16x8xf32> to vector<16x8xf32>
    %107 = vector.extract_strided_slice %102 {offsets = [2, 0, 0], sizes = [1, 16, 8], strides = [1, 1, 1]} : vector<4x16x8xf32> to vector<1x16x8xf32>
    %108 = vector.shape_cast %107 : vector<1x16x8xf32> to vector<16x8xf32>
    %109 = vector.extract_strided_slice %102 {offsets = [3, 0, 0], sizes = [1, 16, 8], strides = [1, 1, 1]} : vector<4x16x8xf32> to vector<1x16x8xf32>
    %110 = vector.shape_cast %109 : vector<1x16x8xf32> to vector<16x8xf32>
    %111 = tpu.concatenate %104, %106, %108, %110 in 1 : vector<16x8xf32>, vector<16x8xf32>, vector<16x8xf32>, vector<16x8xf32> -> vector<16x32xf32>
    %c0_32 = arith.constant 0 : index
    %c0_33 = arith.constant 0 : index
    %112 = vector.load %arg9[%c0_32, %c0_33] : memref<32x32xbf16, #tpu.memory_space<vmem>>, vector<32x32xbf16>
    %113 = arith.truncf %111 : vector<16x32xf32> to vector<16x32xbf16>
    %cst_34 = arith.constant dense<0.000000e+00> : vector<16x32xf32>
    %114 = tpu.matmul %113, %112, %cst_34 {dimension_numbers = #tpu.dot_dimension_numbers<[1], [0], [0], [1], [0, 0, 1, 1], [], []>} : vector<16x32xbf16>, vector<32x32xbf16>, vector<16x32xf32> -> vector<16x32xf32>
    %115 = arith.addf %24, %114 : vector<16x32xf32>
    %c0_35 = arith.constant 0 : index
    %c0_36 = arith.constant 0 : index
    %116 = vector.load %arg10[%c0_35, %c0_36] : memref<1x32xf32, #tpu.memory_space<vmem>>, vector<1x32xf32>
    %117 = vector.broadcast %116 : vector<1x32xf32> to vector<16x32xf32>
    %118 = arith.addf %115, %117 : vector<16x32xf32>
    %c0_37 = arith.constant 0 : index
    %c0_38 = arith.constant 0 : index
    %119 = vector.load %arg11[%c0_37, %c0_38] : memref<1x32xf32, #tpu.memory_space<vmem>>, vector<1x32xf32>
    %c0_39 = arith.constant 0 : index
    %c0_40 = arith.constant 0 : index
    %120 = vector.load %arg12[%c0_39, %c0_40] : memref<1x32xf32, #tpu.memory_space<vmem>>, vector<1x32xf32>
    %cst_41 = arith.constant dense<0.000000e+00> : vector<16xf32>
    %121 = vector.multi_reduction <add>, %118, %cst_41 [1] : vector<16x32xf32> to vector<16xf32>
    %122 = vector.shape_cast %121 : vector<16xf32> to vector<16x1xf32>
    %cst_42 = arith.constant 3.200000e+01 : f32
    %123 = vector.broadcast %cst_42 : f32 to vector<16x1xf32>
    %124 = arith.divf %122, %123 : vector<16x1xf32>
    %125 = vector.broadcast %124 : vector<16x1xf32> to vector<16x32xf32>
    %126 = arith.subf %118, %125 : vector<16x32xf32>
    %127 = arith.mulf %126, %126 : vector<16x32xf32>
    %cst_43 = arith.constant dense<0.000000e+00> : vector<16xf32>
    %128 = vector.multi_reduction <add>, %127, %cst_43 [1] : vector<16x32xf32> to vector<16xf32>
    %129 = vector.shape_cast %128 : vector<16xf32> to vector<16x1xf32>
    %cst_44 = arith.constant 3.200000e+01 : f32
    %130 = vector.broadcast %cst_44 : f32 to vector<16x1xf32>
    %131 = arith.divf %129, %130 : vector<16x1xf32>
    %132 = vector.broadcast %124 : vector<16x1xf32> to vector<16x32xf32>
    %133 = arith.subf %118, %132 : vector<16x32xf32>
    %cst_45 = arith.constant 9.99999974E-6 : f32
    %134 = vector.broadcast %cst_45 : f32 to vector<16x1xf32>
    %135 = arith.addf %131, %134 : vector<16x1xf32>
    %136 = math.rsqrt %135 : vector<16x1xf32>
    %137 = vector.broadcast %136 : vector<16x1xf32> to vector<16x32xf32>
    %138 = arith.mulf %133, %137 : vector<16x32xf32>
    %139 = vector.broadcast %119 : vector<1x32xf32> to vector<16x32xf32>
    %140 = arith.mulf %138, %139 : vector<16x32xf32>
    %141 = vector.broadcast %120 : vector<1x32xf32> to vector<16x32xf32>
    %142 = arith.addf %140, %141 : vector<16x32xf32>
    %c0_46 = arith.constant 0 : index
    %c0_47 = arith.constant 0 : index
    %143 = vector.load %arg13[%c0_46, %c0_47] : memref<32x64xbf16, #tpu.memory_space<vmem>>, vector<32x64xbf16>
    %144 = arith.truncf %142 : vector<16x32xf32> to vector<16x32xbf16>
    %cst_48 = arith.constant dense<0.000000e+00> : vector<16x64xf32>
    %145 = tpu.matmul %144, %143, %cst_48 {dimension_numbers = #tpu.dot_dimension_numbers<[1], [0], [0], [1], [0, 0, 1, 1], [], []>} : vector<16x32xbf16>, vector<32x64xbf16>, vector<16x64xf32> -> vector<16x64xf32>
    %c0_49 = arith.constant 0 : index
    %c0_50 = arith.constant 0 : index
    %146 = vector.load %arg14[%c0_49, %c0_50] : memref<1x64xf32, #tpu.memory_space<vmem>>, vector<1x64xf32>
    %147 = vector.broadcast %146 : vector<1x64xf32> to vector<16x64xf32>
    %148 = arith.addf %145, %147 : vector<16x64xf32>
    %cst_51 = arith.constant 5.000000e-01 : f32
    %149 = vector.broadcast %cst_51 : f32 to vector<16x64xf32>
    %150 = arith.mulf %149, %148 : vector<16x64xf32>
    %cst_52 = arith.constant 4.471500e-02 : f32
    %151 = vector.broadcast %cst_52 : f32 to vector<16x64xf32>
    %152 = arith.mulf %151, %148 : vector<16x64xf32>
    %153 = arith.mulf %152, %148 : vector<16x64xf32>
    %154 = arith.mulf %153, %148 : vector<16x64xf32>
    %155 = arith.addf %148, %154 : vector<16x64xf32>
    %cst_53 = arith.constant 0.797884583 : f32
    %156 = vector.broadcast %cst_53 : f32 to vector<16x64xf32>
    %157 = arith.mulf %156, %155 : vector<16x64xf32>
    %158 = math.tanh %157 : vector<16x64xf32>
    %cst_54 = arith.constant 1.000000e+00 : f32
    %159 = vector.broadcast %cst_54 : f32 to vector<16x64xf32>
    %160 = arith.addf %159, %158 : vector<16x64xf32>
    %161 = arith.mulf %150, %160 : vector<16x64xf32>
    %c0_55 = arith.constant 0 : index
    %c0_56 = arith.constant 0 : index
    %162 = vector.load %arg15[%c0_55, %c0_56] : memref<64x32xbf16, #tpu.memory_space<vmem>>, vector<64x32xbf16>
    %163 = arith.truncf %161 : vector<16x64xf32> to vector<16x64xbf16>
    %cst_57 = arith.constant dense<0.000000e+00> : vector<16x32xf32>
    %164 = tpu.matmul %163, %162, %cst_57 {dimension_numbers = #tpu.dot_dimension_numbers<[1], [0], [0], [1], [0, 0, 1, 1], [], []>} : vector<16x64xbf16>, vector<64x32xbf16>, vector<16x32xf32> -> vector<16x32xf32>
    %165 = arith.addf %118, %164 : vector<16x32xf32>
    %c0_58 = arith.constant 0 : index
    %c0_59 = arith.constant 0 : index
    %166 = vector.load %arg16[%c0_58, %c0_59] : memref<1x32xf32, #tpu.memory_space<vmem>>, vector<1x32xf32>
    %167 = vector.broadcast %166 : vector<1x32xf32> to vector<16x32xf32>
    %168 = arith.addf %165, %167 : vector<16x32xf32>
    %c0_60 = arith.constant 0 : index
    %c0_61 = arith.constant 0 : index
    %c0_62 = arith.constant 0 : index
    %169 = vector.load %arg17[%c0_60, %c0_61, %c0_62] : memref<1x16x32xf32, #tpu.memory_space<vmem>>, vector<1x16x32xf32>
    %170 = vector.shape_cast %169 : vector<1x16x32xf32> to vector<16x32xf32>
    %171 = vector.shape_cast %168 : vector<16x32xf32> to vector<1x16x32xf32>
    tpu.vector_store %arg17[%c0_60, %c0_61, %c0_62], %171 {strides = array<i32>} : memref<1x16x32xf32, #tpu.memory_space<vmem>>, vector<1x16x32xf32>,
    return
  }
  func.func @transform_0(%arg0: i32) -> (i32, i32, i32) {
    %c0_i32 = arith.constant 0 : i32
    %c0_i32_0 = arith.constant 0 : i32
    %c0_i32_1 = arith.constant 0 : i32
    return %arg0, %c0_i32, %c0_i32_0 : i32, i32, i32
  }
  func.func @transform_1(%arg0: i32) -> (i32, i32, i32) {
    %c0_i32 = arith.constant 0 : i32
    %c0_i32_0 = arith.constant 0 : i32
    %c0_i32_1 = arith.constant 0 : i32
    return %arg0, %c0_i32, %c0_i32_0 : i32, i32, i32
  }
  func.func @transform_2(%arg0: i32) -> (i32, i32) {
    %c0_i32 = arith.constant 0 : i32
    %c0_i32_0 = arith.constant 0 : i32
    %c0_i32_1 = arith.constant 0 : i32
    return %c0_i32, %c0_i32_0 : i32, i32
  }
  func.func @transform_3(%arg0: i32) -> (i32, i32) {
    %c0_i32 = arith.constant 0 : i32
    %c0_i32_0 = arith.constant 0 : i32
    %c0_i32_1 = arith.constant 0 : i32
    return %c0_i32, %c0_i32_0 : i32, i32
  }
  func.func @transform_4(%arg0: i32) -> (i32, i32) {
    %c0_i32 = arith.constant 0 : i32
    %c0_i32_0 = arith.constant 0 : i32
    %c0_i32_1 = arith.constant 0 : i32
    return %c0_i32, %c0_i32_0 : i32, i32
  }
  func.func @transform_5(%arg0: i32) -> (i32, i32) {
    %c0_i32 = arith.constant 0 : i32
    %c0_i32_0 = arith.constant 0 : i32
    %c0_i32_1 = arith.constant 0 : i32
    return %c0_i32, %c0_i32_0 : i32, i32
  }
  func.func @transform_6(%arg0: i32) -> (i32, i32) {
    %c0_i32 = arith.constant 0 : i32
    %c0_i32_0 = arith.constant 0 : i32
    %c0_i32_1 = arith.constant 0 : i32
    return %c0_i32, %c0_i32_0 : i32, i32
  }
  func.func @transform_7(%arg0: i32) -> (i32, i32) {
    %c0_i32 = arith.constant 0 : i32
    %c0_i32_0 = arith.constant 0 : i32
    %c0_i32_1 = arith.constant 0 : i32
    return %c0_i32, %c0_i32_0 : i32, i32
  }
  func.func @transform_8(%arg0: i32) -> (i32, i32) {
    %c0_i32 = arith.constant 0 : i32
    %c0_i32_0 = arith.constant 0 : i32
    %c0_i32_1 = arith.constant 0 : i32
    return %c0_i32, %c0_i32_0 : i32, i32
  }
  func.func @transform_9(%arg0: i32) -> (i32, i32) {
    %c0_i32 = arith.constant 0 : i32
    %c0_i32_0 = arith.constant 0 : i32
    %c0_i32_1 = arith.constant 0 : i32
    return %c0_i32, %c0_i32_0 : i32, i32
  }
  func.func @transform_10(%arg0: i32) -> (i32, i32) {
    %c0_i32 = arith.constant 0 : i32
    %c0_i32_0 = arith.constant 0 : i32
    %c0_i32_1 = arith.constant 0 : i32
    return %c0_i32, %c0_i32_0 : i32, i32
  }
  func.func @transform_11(%arg0: i32) -> (i32, i32) {
    %c0_i32 = arith.constant 0 : i32
    %c0_i32_0 = arith.constant 0 : i32
    %c0_i32_1 = arith.constant 0 : i32
    return %c0_i32, %c0_i32_0 : i32, i32
  }
  func.func @transform_12(%arg0: i32) -> (i32, i32) {
    %c0_i32 = arith.constant 0 : i32
    %c0_i32_0 = arith.constant 0 : i32
    %c0_i32_1 = arith.constant 0 : i32
    return %c0_i32, %c0_i32_0 : i32, i32
  }
  func.func @transform_13(%arg0: i32) -> (i32, i32) {
    %c0_i32 = arith.constant 0 : i32
    %c0_i32_0 = arith.constant 0 : i32
    %c0_i32_1 = arith.constant 0 : i32
    return %c0_i32, %c0_i32_0 : i32, i32
  }
  func.func @transform_14(%arg0: i32) -> (i32, i32) {
    %c0_i32 = arith.constant 0 : i32
    %c0_i32_0 = arith.constant 0 : i32
    %c0_i32_1 = arith.constant 0 : i32
    return %c0_i32, %c0_i32_0 : i32, i32
  }
  func.func @transform_15(%arg0: i32) -> (i32, i32) {
    %c0_i32 = arith.constant 0 : i32
    %c0_i32_0 = arith.constant 0 : i32
    %c0_i32_1 = arith.constant 0 : i32
    return %c0_i32, %c0_i32_0 : i32, i32
  }
  func.func @transform_16(%arg0: i32) -> (i32, i32, i32) {
    %c0_i32 = arith.constant 0 : i32
    %c0_i32_0 = arith.constant 0 : i32
    %c0_i32_1 = arith.constant 0 : i32
    return %arg0, %c0_i32, %c0_i32_0 : i32, i32, i32
  }
}

module attributes {stable_mosaic.version = 11 : i64} {
  func.func @_ta_head_kernel(%arg0: memref<32x32xf32, #tpu.memory_space<vmem>>, %arg1: memref<3x32xf32, #tpu.memory_space<vmem>>, %arg2: memref<2x96xf32, #tpu.memory_space<vmem>>, %arg3: memref<32x32xbf16, #tpu.memory_space<vmem>>, %arg4: memref<1x32xf32, #tpu.memory_space<vmem>>, %arg5: memref<2x1x32xf32, #tpu.memory_space<vmem>>, %arg6: memref<2x1x32xf32, #tpu.memory_space<vmem>>, %arg7: memref<2x32x32xbf16, #tpu.memory_space<vmem>>, %arg8: memref<2x1x32xf32, #tpu.memory_space<vmem>>, %arg9: memref<2x32x32xbf16, #tpu.memory_space<vmem>>, %arg10: memref<2x1x32xf32, #tpu.memory_space<vmem>>, %arg11: memref<2x1x32xf32, #tpu.memory_space<vmem>>, %arg12: memref<2x1x32xf32, #tpu.memory_space<vmem>>, %arg13: memref<2x32x64xbf16, #tpu.memory_space<vmem>>, %arg14: memref<2x1x64xf32, #tpu.memory_space<vmem>>, %arg15: memref<2x64x32xbf16, #tpu.memory_space<vmem>>, %arg16: memref<2x1x32xf32, #tpu.memory_space<vmem>>, %arg17: memref<32x32xbf16, #tpu.memory_space<vmem>>, %arg18: memref<1x32xf32, #tpu.memory_space<vmem>>, %arg19: memref<1x32xf32, #tpu.memory_space<vmem>>, %arg20: memref<1x32xf32, #tpu.memory_space<vmem>>, %arg21: memref<2x32xf32, #tpu.memory_space<vmem>>) attributes {dimension_semantics = [], scalar_prefetch = 0 : i64, scratch_operands = 0 : i64, tpu.core_type = #tpu.core_type<tc>} {
    %c0 = arith.constant 0 : index
    %c0_0 = arith.constant 0 : index
    %0 = vector.load %arg0[%c0, %c0_0] : memref<32x32xf32, #tpu.memory_space<vmem>>, vector<32x32xf32>
    %c0_1 = arith.constant 0 : index
    %c0_2 = arith.constant 0 : index
    %1 = vector.load %arg3[%c0_1, %c0_2] : memref<32x32xbf16, #tpu.memory_space<vmem>>, vector<32x32xbf16>
    %2 = arith.truncf %0 : vector<32x32xf32> to vector<32x32xbf16>
    %cst = arith.constant dense<0.000000e+00> : vector<32x32xf32>
    %3 = tpu.matmul %2, %1, %cst {dimension_numbers = #tpu.dot_dimension_numbers<[1], [0], [0], [1], [0, 0, 1, 1], [], []>} : vector<32x32xbf16>, vector<32x32xbf16>, vector<32x32xf32> -> vector<32x32xf32>
    %c0_3 = arith.constant 0 : index
    %c0_4 = arith.constant 0 : index
    %4 = vector.load %arg4[%c0_3, %c0_4] : memref<1x32xf32, #tpu.memory_space<vmem>>, vector<1x32xf32>
    %5 = vector.broadcast %4 : vector<1x32xf32> to vector<32x32xf32>
    %6 = arith.addf %3, %5 : vector<32x32xf32>
    %c0_5 = arith.constant 0 : index
    %c0_6 = arith.constant 0 : index
    %7 = vector.load %arg1[%c0_5, %c0_6] : memref<3x32xf32, #tpu.memory_space<vmem>>, vector<3x32xf32>
    %8 = vector.extract_strided_slice %7 {offsets = [0, 0], sizes = [1, 32], strides = [1, 1]} : vector<3x32xf32> to vector<1x32xf32>
    %9 = vector.shape_cast %8 : vector<1x32xf32> to vector<1x32xf32>
    %10 = vector.broadcast %9 : vector<1x32xf32> to vector<32x32xf32>
    %11 = vector.extract_strided_slice %7 {offsets = [1, 0], sizes = [1, 32], strides = [1, 1]} : vector<3x32xf32> to vector<1x32xf32>
    %12 = vector.shape_cast %11 : vector<1x32xf32> to vector<1x32xf32>
    %13 = vector.broadcast %12 : vector<1x32xf32> to vector<32x32xf32>
    %14 = vector.extract_strided_slice %7 {offsets = [2, 0], sizes = [1, 32], strides = [1, 1]} : vector<3x32xf32> to vector<1x32xf32>
    %15 = vector.shape_cast %14 : vector<1x32xf32> to vector<1x32xf32>
    %16 = vector.broadcast %15 : vector<1x32xf32> to vector<32x32xf32>
    %17 = tpu.concatenate %10, %13, %16 in 0 : vector<32x32xf32>, vector<32x32xf32>, vector<32x32xf32> -> vector<96x32xf32>
    %c0_7 = arith.constant 0 : index
    %c0_8 = arith.constant 0 : index
    %c0_9 = arith.constant 0 : index
    %18 = vector.load %arg5[%c0_7, %c0_8, %c0_9] : memref<2x1x32xf32, #tpu.memory_space<vmem>>, vector<1x1x32xf32>
    %19 = vector.shape_cast %18 : vector<1x1x32xf32> to vector<1x32xf32>
    %c0_10 = arith.constant 0 : index
    %c0_11 = arith.constant 0 : index
    %c0_12 = arith.constant 0 : index
    %20 = vector.load %arg6[%c0_10, %c0_11, %c0_12] : memref<2x1x32xf32, #tpu.memory_space<vmem>>, vector<1x1x32xf32>
    %21 = vector.shape_cast %20 : vector<1x1x32xf32> to vector<1x32xf32>
    %cst_13 = arith.constant dense<0.000000e+00> : vector<32xf32>
    %22 = vector.multi_reduction <add>, %6, %cst_13 [1] : vector<32x32xf32> to vector<32xf32>
    %23 = vector.shape_cast %22 : vector<32xf32> to vector<32x1xf32>
    %cst_14 = arith.constant 3.200000e+01 : f32
    %24 = vector.broadcast %cst_14 : f32 to vector<32x1xf32>
    %25 = arith.divf %23, %24 : vector<32x1xf32>
    %26 = vector.broadcast %25 : vector<32x1xf32> to vector<32x32xf32>
    %27 = arith.subf %6, %26 : vector<32x32xf32>
    %28 = arith.mulf %27, %27 : vector<32x32xf32>
    %cst_15 = arith.constant dense<0.000000e+00> : vector<32xf32>
    %29 = vector.multi_reduction <add>, %28, %cst_15 [1] : vector<32x32xf32> to vector<32xf32>
    %30 = vector.shape_cast %29 : vector<32xf32> to vector<32x1xf32>
    %cst_16 = arith.constant 3.200000e+01 : f32
    %31 = vector.broadcast %cst_16 : f32 to vector<32x1xf32>
    %32 = arith.divf %30, %31 : vector<32x1xf32>
    %33 = vector.broadcast %25 : vector<32x1xf32> to vector<32x32xf32>
    %34 = arith.subf %6, %33 : vector<32x32xf32>
    %cst_17 = arith.constant 9.99999974E-6 : f32
    %35 = vector.broadcast %cst_17 : f32 to vector<32x1xf32>
    %36 = arith.addf %32, %35 : vector<32x1xf32>
    %37 = math.rsqrt %36 : vector<32x1xf32>
    %38 = vector.broadcast %37 : vector<32x1xf32> to vector<32x32xf32>
    %39 = arith.mulf %34, %38 : vector<32x32xf32>
    %40 = vector.broadcast %19 : vector<1x32xf32> to vector<32x32xf32>
    %41 = arith.mulf %39, %40 : vector<32x32xf32>
    %42 = vector.broadcast %21 : vector<1x32xf32> to vector<32x32xf32>
    %43 = arith.addf %41, %42 : vector<32x32xf32>
    %c0_18 = arith.constant 0 : index
    %c0_19 = arith.constant 0 : index
    %c0_20 = arith.constant 0 : index
    %44 = vector.load %arg7[%c0_18, %c0_19, %c0_20] : memref<2x32x32xbf16, #tpu.memory_space<vmem>>, vector<1x32x32xbf16>
    %45 = vector.shape_cast %44 : vector<1x32x32xbf16> to vector<32x32xbf16>
    %46 = arith.truncf %43 : vector<32x32xf32> to vector<32x32xbf16>
    %cst_21 = arith.constant dense<0.000000e+00> : vector<32x32xf32>
    %47 = tpu.matmul %46, %45, %cst_21 {dimension_numbers = #tpu.dot_dimension_numbers<[1], [0], [0], [1], [0, 0, 1, 1], [], []>} : vector<32x32xbf16>, vector<32x32xbf16>, vector<32x32xf32> -> vector<32x32xf32>
    %c0_22 = arith.constant 0 : index
    %c0_23 = arith.constant 0 : index
    %c0_24 = arith.constant 0 : index
    %48 = vector.load %arg8[%c0_22, %c0_23, %c0_24] : memref<2x1x32xf32, #tpu.memory_space<vmem>>, vector<1x1x32xf32>
    %49 = vector.shape_cast %48 : vector<1x1x32xf32> to vector<1x32xf32>
    %50 = vector.broadcast %49 : vector<1x32xf32> to vector<32x32xf32>
    %51 = arith.addf %47, %50 : vector<32x32xf32>
    %c0_25 = arith.constant 0 : index
    %c0_26 = arith.constant 0 : index
    %c0_27 = arith.constant 0 : index
    %52 = vector.load %arg9[%c0_25, %c0_26, %c0_27] : memref<2x32x32xbf16, #tpu.memory_space<vmem>>, vector<1x32x32xbf16>
    %53 = vector.shape_cast %52 : vector<1x32x32xbf16> to vector<32x32xbf16>
    %54 = arith.truncf %51 : vector<32x32xf32> to vector<32x32xbf16>
    %cst_28 = arith.constant dense<0.000000e+00> : vector<32x32xf32>
    %55 = tpu.matmul %54, %53, %cst_28 {dimension_numbers = #tpu.dot_dimension_numbers<[1], [0], [0], [1], [0, 0, 1, 1], [], []>} : vector<32x32xbf16>, vector<32x32xbf16>, vector<32x32xf32> -> vector<32x32xf32>
    %c0_29 = arith.constant 0 : index
    %c0_30 = arith.constant 0 : index
    %c0_31 = arith.constant 0 : index
    %56 = vector.load %arg10[%c0_29, %c0_30, %c0_31] : memref<2x1x32xf32, #tpu.memory_space<vmem>>, vector<1x1x32xf32>
    %57 = vector.shape_cast %56 : vector<1x1x32xf32> to vector<1x32xf32>
    %58 = vector.broadcast %57 : vector<1x32xf32> to vector<32x32xf32>
    %59 = arith.addf %55, %58 : vector<32x32xf32>
    %60 = tpu.concatenate %59, %59, %59 in 0 : vector<32x32xf32>, vector<32x32xf32>, vector<32x32xf32> -> vector<96x32xf32>
    %61 = arith.addf %17, %60 : vector<96x32xf32>
    %c0_32 = arith.constant 0 : index
    %c0_33 = arith.constant 0 : index
    %c0_34 = arith.constant 0 : index
    %62 = vector.load %arg11[%c0_32, %c0_33, %c0_34] : memref<2x1x32xf32, #tpu.memory_space<vmem>>, vector<1x1x32xf32>
    %63 = vector.shape_cast %62 : vector<1x1x32xf32> to vector<1x32xf32>
    %c0_35 = arith.constant 0 : index
    %c0_36 = arith.constant 0 : index
    %c0_37 = arith.constant 0 : index
    %64 = vector.load %arg12[%c0_35, %c0_36, %c0_37] : memref<2x1x32xf32, #tpu.memory_space<vmem>>, vector<1x1x32xf32>
    %65 = vector.shape_cast %64 : vector<1x1x32xf32> to vector<1x32xf32>
    %cst_38 = arith.constant dense<0.000000e+00> : vector<96xf32>
    %66 = vector.multi_reduction <add>, %61, %cst_38 [1] : vector<96x32xf32> to vector<96xf32>
    %67 = vector.shape_cast %66 : vector<96xf32> to vector<96x1xf32>
    %cst_39 = arith.constant 3.200000e+01 : f32
    %68 = vector.broadcast %cst_39 : f32 to vector<96x1xf32>
    %69 = arith.divf %67, %68 : vector<96x1xf32>
    %70 = vector.broadcast %69 : vector<96x1xf32> to vector<96x32xf32>
    %71 = arith.subf %61, %70 : vector<96x32xf32>
    %72 = arith.mulf %71, %71 : vector<96x32xf32>
    %cst_40 = arith.constant dense<0.000000e+00> : vector<96xf32>
    %73 = vector.multi_reduction <add>, %72, %cst_40 [1] : vector<96x32xf32> to vector<96xf32>
    %74 = vector.shape_cast %73 : vector<96xf32> to vector<96x1xf32>
    %cst_41 = arith.constant 3.200000e+01 : f32
    %75 = vector.broadcast %cst_41 : f32 to vector<96x1xf32>
    %76 = arith.divf %74, %75 : vector<96x1xf32>
    %77 = vector.broadcast %69 : vector<96x1xf32> to vector<96x32xf32>
    %78 = arith.subf %61, %77 : vector<96x32xf32>
    %cst_42 = arith.constant 9.99999974E-6 : f32
    %79 = vector.broadcast %cst_42 : f32 to vector<96x1xf32>
    %80 = arith.addf %76, %79 : vector<96x1xf32>
    %81 = math.rsqrt %80 : vector<96x1xf32>
    %82 = vector.broadcast %81 : vector<96x1xf32> to vector<96x32xf32>
    %83 = arith.mulf %78, %82 : vector<96x32xf32>
    %84 = vector.broadcast %63 : vector<1x32xf32> to vector<96x32xf32>
    %85 = arith.mulf %83, %84 : vector<96x32xf32>
    %86 = vector.broadcast %65 : vector<1x32xf32> to vector<96x32xf32>
    %87 = arith.addf %85, %86 : vector<96x32xf32>
    %c0_43 = arith.constant 0 : index
    %c0_44 = arith.constant 0 : index
    %c0_45 = arith.constant 0 : index
    %88 = vector.load %arg13[%c0_43, %c0_44, %c0_45] : memref<2x32x64xbf16, #tpu.memory_space<vmem>>, vector<1x32x64xbf16>
    %89 = vector.shape_cast %88 : vector<1x32x64xbf16> to vector<32x64xbf16>
    %90 = arith.truncf %87 : vector<96x32xf32> to vector<96x32xbf16>
    %cst_46 = arith.constant dense<0.000000e+00> : vector<96x64xf32>
    %91 = tpu.matmul %90, %89, %cst_46 {dimension_numbers = #tpu.dot_dimension_numbers<[1], [0], [0], [1], [0, 0, 1, 1], [], []>} : vector<96x32xbf16>, vector<32x64xbf16>, vector<96x64xf32> -> vector<96x64xf32>
    %c0_47 = arith.constant 0 : index
    %c0_48 = arith.constant 0 : index
    %c0_49 = arith.constant 0 : index
    %92 = vector.load %arg14[%c0_47, %c0_48, %c0_49] : memref<2x1x64xf32, #tpu.memory_space<vmem>>, vector<1x1x64xf32>
    %93 = vector.shape_cast %92 : vector<1x1x64xf32> to vector<1x64xf32>
    %94 = vector.broadcast %93 : vector<1x64xf32> to vector<96x64xf32>
    %95 = arith.addf %91, %94 : vector<96x64xf32>
    %cst_50 = arith.constant 5.000000e-01 : f32
    %96 = vector.broadcast %cst_50 : f32 to vector<96x64xf32>
    %97 = arith.mulf %96, %95 : vector<96x64xf32>
    %cst_51 = arith.constant 4.471500e-02 : f32
    %98 = vector.broadcast %cst_51 : f32 to vector<96x64xf32>
    %99 = arith.mulf %98, %95 : vector<96x64xf32>
    %100 = arith.mulf %99, %95 : vector<96x64xf32>
    %101 = arith.mulf %100, %95 : vector<96x64xf32>
    %102 = arith.addf %95, %101 : vector<96x64xf32>
    %cst_52 = arith.constant 0.797884583 : f32
    %103 = vector.broadcast %cst_52 : f32 to vector<96x64xf32>
    %104 = arith.mulf %103, %102 : vector<96x64xf32>
    %105 = math.tanh %104 : vector<96x64xf32>
    %cst_53 = arith.constant 1.000000e+00 : f32
    %106 = vector.broadcast %cst_53 : f32 to vector<96x64xf32>
    %107 = arith.addf %106, %105 : vector<96x64xf32>
    %108 = arith.mulf %97, %107 : vector<96x64xf32>
    %c0_54 = arith.constant 0 : index
    %c0_55 = arith.constant 0 : index
    %c0_56 = arith.constant 0 : index
    %109 = vector.load %arg15[%c0_54, %c0_55, %c0_56] : memref<2x64x32xbf16, #tpu.memory_space<vmem>>, vector<1x64x32xbf16>
    %110 = vector.shape_cast %109 : vector<1x64x32xbf16> to vector<64x32xbf16>
    %111 = arith.truncf %108 : vector<96x64xf32> to vector<96x64xbf16>
    %cst_57 = arith.constant dense<0.000000e+00> : vector<96x32xf32>
    %112 = tpu.matmul %111, %110, %cst_57 {dimension_numbers = #tpu.dot_dimension_numbers<[1], [0], [0], [1], [0, 0, 1, 1], [], []>} : vector<96x64xbf16>, vector<64x32xbf16>, vector<96x32xf32> -> vector<96x32xf32>
    %113 = arith.addf %61, %112 : vector<96x32xf32>
    %c0_58 = arith.constant 0 : index
    %c0_59 = arith.constant 0 : index
    %c0_60 = arith.constant 0 : index
    %114 = vector.load %arg16[%c0_58, %c0_59, %c0_60] : memref<2x1x32xf32, #tpu.memory_space<vmem>>, vector<1x1x32xf32>
    %115 = vector.shape_cast %114 : vector<1x1x32xf32> to vector<1x32xf32>
    %116 = vector.broadcast %115 : vector<1x32xf32> to vector<96x32xf32>
    %117 = arith.addf %113, %116 : vector<96x32xf32>
    %c1 = arith.constant 1 : index
    %c0_61 = arith.constant 0 : index
    %c0_62 = arith.constant 0 : index
    %118 = vector.load %arg5[%c1, %c0_61, %c0_62] : memref<2x1x32xf32, #tpu.memory_space<vmem>>, vector<1x1x32xf32>
    %119 = vector.shape_cast %118 : vector<1x1x32xf32> to vector<1x32xf32>
    %c1_63 = arith.constant 1 : index
    %c0_64 = arith.constant 0 : index
    %c0_65 = arith.constant 0 : index
    %120 = vector.load %arg6[%c1_63, %c0_64, %c0_65] : memref<2x1x32xf32, #tpu.memory_space<vmem>>, vector<1x1x32xf32>
    %121 = vector.shape_cast %120 : vector<1x1x32xf32> to vector<1x32xf32>
    %cst_66 = arith.constant dense<0.000000e+00> : vector<32xf32>
    %122 = vector.multi_reduction <add>, %6, %cst_66 [1] : vector<32x32xf32> to vector<32xf32>
    %123 = vector.shape_cast %122 : vector<32xf32> to vector<32x1xf32>
    %cst_67 = arith.constant 3.200000e+01 : f32
    %124 = vector.broadcast %cst_67 : f32 to vector<32x1xf32>
    %125 = arith.divf %123, %124 : vector<32x1xf32>
    %126 = vector.broadcast %125 : vector<32x1xf32> to vector<32x32xf32>
    %127 = arith.subf %6, %126 : vector<32x32xf32>
    %128 = arith.mulf %127, %127 : vector<32x32xf32>
    %cst_68 = arith.constant dense<0.000000e+00> : vector<32xf32>
    %129 = vector.multi_reduction <add>, %128, %cst_68 [1] : vector<32x32xf32> to vector<32xf32>
    %130 = vector.shape_cast %129 : vector<32xf32> to vector<32x1xf32>
    %cst_69 = arith.constant 3.200000e+01 : f32
    %131 = vector.broadcast %cst_69 : f32 to vector<32x1xf32>
    %132 = arith.divf %130, %131 : vector<32x1xf32>
    %133 = vector.broadcast %125 : vector<32x1xf32> to vector<32x32xf32>
    %134 = arith.subf %6, %133 : vector<32x32xf32>
    %cst_70 = arith.constant 9.99999974E-6 : f32
    %135 = vector.broadcast %cst_70 : f32 to vector<32x1xf32>
    %136 = arith.addf %132, %135 : vector<32x1xf32>
    %137 = math.rsqrt %136 : vector<32x1xf32>
    %138 = vector.broadcast %137 : vector<32x1xf32> to vector<32x32xf32>
    %139 = arith.mulf %134, %138 : vector<32x32xf32>
    %140 = vector.broadcast %119 : vector<1x32xf32> to vector<32x32xf32>
    %141 = arith.mulf %139, %140 : vector<32x32xf32>
    %142 = vector.broadcast %121 : vector<1x32xf32> to vector<32x32xf32>
    %143 = arith.addf %141, %142 : vector<32x32xf32>
    %c1_71 = arith.constant 1 : index
    %c0_72 = arith.constant 0 : index
    %c0_73 = arith.constant 0 : index
    %144 = vector.load %arg7[%c1_71, %c0_72, %c0_73] : memref<2x32x32xbf16, #tpu.memory_space<vmem>>, vector<1x32x32xbf16>
    %145 = vector.shape_cast %144 : vector<1x32x32xbf16> to vector<32x32xbf16>
    %146 = arith.truncf %143 : vector<32x32xf32> to vector<32x32xbf16>
    %cst_74 = arith.constant dense<0.000000e+00> : vector<32x32xf32>
    %147 = tpu.matmul %146, %145, %cst_74 {dimension_numbers = #tpu.dot_dimension_numbers<[1], [0], [0], [1], [0, 0, 1, 1], [], []>} : vector<32x32xbf16>, vector<32x32xbf16>, vector<32x32xf32> -> vector<32x32xf32>
    %c1_75 = arith.constant 1 : index
    %c0_76 = arith.constant 0 : index
    %c0_77 = arith.constant 0 : index
    %148 = vector.load %arg8[%c1_75, %c0_76, %c0_77] : memref<2x1x32xf32, #tpu.memory_space<vmem>>, vector<1x1x32xf32>
    %149 = vector.shape_cast %148 : vector<1x1x32xf32> to vector<1x32xf32>
    %150 = vector.broadcast %149 : vector<1x32xf32> to vector<32x32xf32>
    %151 = arith.addf %147, %150 : vector<32x32xf32>
    %c1_78 = arith.constant 1 : index
    %c0_79 = arith.constant 0 : index
    %c0_80 = arith.constant 0 : index
    %152 = vector.load %arg9[%c1_78, %c0_79, %c0_80] : memref<2x32x32xbf16, #tpu.memory_space<vmem>>, vector<1x32x32xbf16>
    %153 = vector.shape_cast %152 : vector<1x32x32xbf16> to vector<32x32xbf16>
    %154 = arith.truncf %151 : vector<32x32xf32> to vector<32x32xbf16>
    %cst_81 = arith.constant dense<0.000000e+00> : vector<32x32xf32>
    %155 = tpu.matmul %154, %153, %cst_81 {dimension_numbers = #tpu.dot_dimension_numbers<[1], [0], [0], [1], [0, 0, 1, 1], [], []>} : vector<32x32xbf16>, vector<32x32xbf16>, vector<32x32xf32> -> vector<32x32xf32>
    %c1_82 = arith.constant 1 : index
    %c0_83 = arith.constant 0 : index
    %c0_84 = arith.constant 0 : index
    %156 = vector.load %arg10[%c1_82, %c0_83, %c0_84] : memref<2x1x32xf32, #tpu.memory_space<vmem>>, vector<1x1x32xf32>
    %157 = vector.shape_cast %156 : vector<1x1x32xf32> to vector<1x32xf32>
    %158 = vector.broadcast %157 : vector<1x32xf32> to vector<32x32xf32>
    %159 = arith.addf %155, %158 : vector<32x32xf32>
    %160 = tpu.concatenate %159, %159, %159 in 0 : vector<32x32xf32>, vector<32x32xf32>, vector<32x32xf32> -> vector<96x32xf32>
    %161 = arith.addf %117, %160 : vector<96x32xf32>
    %c1_85 = arith.constant 1 : index
    %c0_86 = arith.constant 0 : index
    %c0_87 = arith.constant 0 : index
    %162 = vector.load %arg11[%c1_85, %c0_86, %c0_87] : memref<2x1x32xf32, #tpu.memory_space<vmem>>, vector<1x1x32xf32>
    %163 = vector.shape_cast %162 : vector<1x1x32xf32> to vector<1x32xf32>
    %c1_88 = arith.constant 1 : index
    %c0_89 = arith.constant 0 : index
    %c0_90 = arith.constant 0 : index
    %164 = vector.load %arg12[%c1_88, %c0_89, %c0_90] : memref<2x1x32xf32, #tpu.memory_space<vmem>>, vector<1x1x32xf32>
    %165 = vector.shape_cast %164 : vector<1x1x32xf32> to vector<1x32xf32>
    %cst_91 = arith.constant dense<0.000000e+00> : vector<96xf32>
    %166 = vector.multi_reduction <add>, %161, %cst_91 [1] : vector<96x32xf32> to vector<96xf32>
    %167 = vector.shape_cast %166 : vector<96xf32> to vector<96x1xf32>
    %cst_92 = arith.constant 3.200000e+01 : f32
    %168 = vector.broadcast %cst_92 : f32 to vector<96x1xf32>
    %169 = arith.divf %167, %168 : vector<96x1xf32>
    %170 = vector.broadcast %169 : vector<96x1xf32> to vector<96x32xf32>
    %171 = arith.subf %161, %170 : vector<96x32xf32>
    %172 = arith.mulf %171, %171 : vector<96x32xf32>
    %cst_93 = arith.constant dense<0.000000e+00> : vector<96xf32>
    %173 = vector.multi_reduction <add>, %172, %cst_93 [1] : vector<96x32xf32> to vector<96xf32>
    %174 = vector.shape_cast %173 : vector<96xf32> to vector<96x1xf32>
    %cst_94 = arith.constant 3.200000e+01 : f32
    %175 = vector.broadcast %cst_94 : f32 to vector<96x1xf32>
    %176 = arith.divf %174, %175 : vector<96x1xf32>
    %177 = vector.broadcast %169 : vector<96x1xf32> to vector<96x32xf32>
    %178 = arith.subf %161, %177 : vector<96x32xf32>
    %cst_95 = arith.constant 9.99999974E-6 : f32
    %179 = vector.broadcast %cst_95 : f32 to vector<96x1xf32>
    %180 = arith.addf %176, %179 : vector<96x1xf32>
    %181 = math.rsqrt %180 : vector<96x1xf32>
    %182 = vector.broadcast %181 : vector<96x1xf32> to vector<96x32xf32>
    %183 = arith.mulf %178, %182 : vector<96x32xf32>
    %184 = vector.broadcast %163 : vector<1x32xf32> to vector<96x32xf32>
    %185 = arith.mulf %183, %184 : vector<96x32xf32>
    %186 = vector.broadcast %165 : vector<1x32xf32> to vector<96x32xf32>
    %187 = arith.addf %185, %186 : vector<96x32xf32>
    %c1_96 = arith.constant 1 : index
    %c0_97 = arith.constant 0 : index
    %c0_98 = arith.constant 0 : index
    %188 = vector.load %arg13[%c1_96, %c0_97, %c0_98] : memref<2x32x64xbf16, #tpu.memory_space<vmem>>, vector<1x32x64xbf16>
    %189 = vector.shape_cast %188 : vector<1x32x64xbf16> to vector<32x64xbf16>
    %190 = arith.truncf %187 : vector<96x32xf32> to vector<96x32xbf16>
    %cst_99 = arith.constant dense<0.000000e+00> : vector<96x64xf32>
    %191 = tpu.matmul %190, %189, %cst_99 {dimension_numbers = #tpu.dot_dimension_numbers<[1], [0], [0], [1], [0, 0, 1, 1], [], []>} : vector<96x32xbf16>, vector<32x64xbf16>, vector<96x64xf32> -> vector<96x64xf32>
    %c1_100 = arith.constant 1 : index
    %c0_101 = arith.constant 0 : index
    %c0_102 = arith.constant 0 : index
    %192 = vector.load %arg14[%c1_100, %c0_101, %c0_102] : memref<2x1x64xf32, #tpu.memory_space<vmem>>, vector<1x1x64xf32>
    %193 = vector.shape_cast %192 : vector<1x1x64xf32> to vector<1x64xf32>
    %194 = vector.broadcast %193 : vector<1x64xf32> to vector<96x64xf32>
    %195 = arith.addf %191, %194 : vector<96x64xf32>
    %cst_103 = arith.constant 5.000000e-01 : f32
    %196 = vector.broadcast %cst_103 : f32 to vector<96x64xf32>
    %197 = arith.mulf %196, %195 : vector<96x64xf32>
    %cst_104 = arith.constant 4.471500e-02 : f32
    %198 = vector.broadcast %cst_104 : f32 to vector<96x64xf32>
    %199 = arith.mulf %198, %195 : vector<96x64xf32>
    %200 = arith.mulf %199, %195 : vector<96x64xf32>
    %201 = arith.mulf %200, %195 : vector<96x64xf32>
    %202 = arith.addf %195, %201 : vector<96x64xf32>
    %cst_105 = arith.constant 0.797884583 : f32
    %203 = vector.broadcast %cst_105 : f32 to vector<96x64xf32>
    %204 = arith.mulf %203, %202 : vector<96x64xf32>
    %205 = math.tanh %204 : vector<96x64xf32>
    %cst_106 = arith.constant 1.000000e+00 : f32
    %206 = vector.broadcast %cst_106 : f32 to vector<96x64xf32>
    %207 = arith.addf %206, %205 : vector<96x64xf32>
    %208 = arith.mulf %197, %207 : vector<96x64xf32>
    %c1_107 = arith.constant 1 : index
    %c0_108 = arith.constant 0 : index
    %c0_109 = arith.constant 0 : index
    %209 = vector.load %arg15[%c1_107, %c0_108, %c0_109] : memref<2x64x32xbf16, #tpu.memory_space<vmem>>, vector<1x64x32xbf16>
    %210 = vector.shape_cast %209 : vector<1x64x32xbf16> to vector<64x32xbf16>
    %211 = arith.truncf %208 : vector<96x64xf32> to vector<96x64xbf16>
    %cst_110 = arith.constant dense<0.000000e+00> : vector<96x32xf32>
    %212 = tpu.matmul %211, %210, %cst_110 {dimension_numbers = #tpu.dot_dimension_numbers<[1], [0], [0], [1], [0, 0, 1, 1], [], []>} : vector<96x64xbf16>, vector<64x32xbf16>, vector<96x32xf32> -> vector<96x32xf32>
    %213 = arith.addf %161, %212 : vector<96x32xf32>
    %c1_111 = arith.constant 1 : index
    %c0_112 = arith.constant 0 : index
    %c0_113 = arith.constant 0 : index
    %214 = vector.load %arg16[%c1_111, %c0_112, %c0_113] : memref<2x1x32xf32, #tpu.memory_space<vmem>>, vector<1x1x32xf32>
    %215 = vector.shape_cast %214 : vector<1x1x32xf32> to vector<1x32xf32>
    %216 = vector.broadcast %215 : vector<1x32xf32> to vector<96x32xf32>
    %217 = arith.addf %213, %216 : vector<96x32xf32>
    %c0_114 = arith.constant 0 : index
    %c0_115 = arith.constant 0 : index
    %218 = vector.load %arg2[%c0_114, %c0_115] : memref<2x96xf32, #tpu.memory_space<vmem>>, vector<2x96xf32>
    %cst_116 = arith.constant dense<0.000000e+00> : vector<2x32xf32>
    %219 = tpu.matmul %218, %217, %cst_116 {dimension_numbers = #tpu.dot_dimension_numbers<[1], [0], [0], [1], [0, 0, 1, 1], [], []>} : vector<2x96xf32>, vector<96x32xf32>, vector<2x32xf32> -> vector<2x32xf32>
    %cst_117 = arith.constant 0.020833334 : f32
    %220 = vector.broadcast %cst_117 : f32 to vector<2x32xf32>
    %221 = arith.mulf %219, %220 : vector<2x32xf32>
    %c0_118 = arith.constant 0 : index
    %c0_119 = arith.constant 0 : index
    %222 = vector.load %arg17[%c0_118, %c0_119] : memref<32x32xbf16, #tpu.memory_space<vmem>>, vector<32x32xbf16>
    %223 = arith.truncf %221 : vector<2x32xf32> to vector<2x32xbf16>
    %cst_120 = arith.constant dense<0.000000e+00> : vector<2x32xf32>
    %224 = tpu.matmul %223, %222, %cst_120 {dimension_numbers = #tpu.dot_dimension_numbers<[1], [0], [0], [1], [0, 0, 1, 1], [], []>} : vector<2x32xbf16>, vector<32x32xbf16>, vector<2x32xf32> -> vector<2x32xf32>
    %c0_121 = arith.constant 0 : index
    %c0_122 = arith.constant 0 : index
    %225 = vector.load %arg18[%c0_121, %c0_122] : memref<1x32xf32, #tpu.memory_space<vmem>>, vector<1x32xf32>
    %226 = vector.broadcast %225 : vector<1x32xf32> to vector<2x32xf32>
    %227 = arith.addf %224, %226 : vector<2x32xf32>
    %c0_123 = arith.constant 0 : index
    %c0_124 = arith.constant 0 : index
    %228 = vector.load %arg19[%c0_123, %c0_124] : memref<1x32xf32, #tpu.memory_space<vmem>>, vector<1x32xf32>
    %c0_125 = arith.constant 0 : index
    %c0_126 = arith.constant 0 : index
    %229 = vector.load %arg20[%c0_125, %c0_126] : memref<1x32xf32, #tpu.memory_space<vmem>>, vector<1x32xf32>
    %cst_127 = arith.constant dense<0.000000e+00> : vector<2xf32>
    %230 = vector.multi_reduction <add>, %227, %cst_127 [1] : vector<2x32xf32> to vector<2xf32>
    %231 = vector.shape_cast %230 : vector<2xf32> to vector<2x1xf32>
    %cst_128 = arith.constant 3.200000e+01 : f32
    %232 = vector.broadcast %cst_128 : f32 to vector<2x1xf32>
    %233 = arith.divf %231, %232 : vector<2x1xf32>
    %234 = vector.broadcast %233 : vector<2x1xf32> to vector<2x32xf32>
    %235 = arith.subf %227, %234 : vector<2x32xf32>
    %236 = arith.mulf %235, %235 : vector<2x32xf32>
    %cst_129 = arith.constant dense<0.000000e+00> : vector<2xf32>
    %237 = vector.multi_reduction <add>, %236, %cst_129 [1] : vector<2x32xf32> to vector<2xf32>
    %238 = vector.shape_cast %237 : vector<2xf32> to vector<2x1xf32>
    %cst_130 = arith.constant 3.200000e+01 : f32
    %239 = vector.broadcast %cst_130 : f32 to vector<2x1xf32>
    %240 = arith.divf %238, %239 : vector<2x1xf32>
    %241 = vector.broadcast %233 : vector<2x1xf32> to vector<2x32xf32>
    %242 = arith.subf %227, %241 : vector<2x32xf32>
    %cst_131 = arith.constant 9.99999974E-6 : f32
    %243 = vector.broadcast %cst_131 : f32 to vector<2x1xf32>
    %244 = arith.addf %240, %243 : vector<2x1xf32>
    %245 = math.rsqrt %244 : vector<2x1xf32>
    %246 = vector.broadcast %245 : vector<2x1xf32> to vector<2x32xf32>
    %247 = arith.mulf %242, %246 : vector<2x32xf32>
    %248 = vector.broadcast %228 : vector<1x32xf32> to vector<2x32xf32>
    %249 = arith.mulf %247, %248 : vector<2x32xf32>
    %250 = vector.broadcast %229 : vector<1x32xf32> to vector<2x32xf32>
    %251 = arith.addf %249, %250 : vector<2x32xf32>
    %cst_132 = arith.constant 0.000000e+00 : f32
    %252 = vector.broadcast %cst_132 : f32 to vector<2x32xf32>
    %253 = arith.maximumf %251, %252 : vector<2x32xf32>
    %c0_133 = arith.constant 0 : index
    %c0_134 = arith.constant 0 : index
    %254 = vector.load %arg21[%c0_133, %c0_134] : memref<2x32xf32, #tpu.memory_space<vmem>>, vector<2x32xf32>
    tpu.vector_store %arg21[%c0_133, %c0_134], %253 {strides = array<i32>} : memref<2x32xf32, #tpu.memory_space<vmem>>, vector<2x32xf32>,
    return
  }
}

</mosaic_0001>

<llo_original>
// kernel: hifno_encoder_forward.6
$region0: #{hifno_encoder_forward.6}
  #allocation0 [shape = 'u32[]', space=smem, size = 0x4, offset = 0x4, fixed_abs, tag = 'smem constant byte address 0x4 - core index']
  #allocation1 [shape = 'u32[144,128]{1,0:T(1,128)}', space=vmem, size = 0x12000, scoped, tag = 'internal scratch']
  %s0 = inlined_call_operand.vmem [shape: f32[32,144], index: 0, kind: input, shape index: {}]
  %s1 = inlined_call_operand.vmem [shape: bf16[144,32], index: 1, kind: input, shape index: {}]
  %s2 = inlined_call_operand.vmem [shape: f32[1,32], index: 2, kind: input, shape index: {}]
  %s3 = inlined_call_operand.vmem [shape: f32[32,32], index: 3, kind: output, shape index: {}]
  %s4 = sld [smem:[#allocation0]]
  $region22: #{hifno_encoder_forward.6} parent=0
    _
  %s6 = ssub.s32 1, %s4
  %s7 = scalar_select 0, %s6, %s4
  // Predicated region
  $region2: #{hifno_encoder_forward.6} parent=0 // pred_check
    _
  $region3: #{hifno_encoder_forward.6} parent=0 // pred_check_branch
    %9 = sbr.rel (0) target = $region5
  $region4: #{hifno_encoder_forward.6} parent=0 // pred_region
    _
  $region5: #{hifno_encoder_forward.6} parent=0 // pred_fallthru
    _
  // Predicated region
  $region6: #{hifno_encoder_forward.6} parent=0 // pred_check
    _
  $region7: #{hifno_encoder_forward.6} parent=0 // pred_check_branch
    %11 = sbr.rel (0) target = $region9
  $region8: #{hifno_encoder_forward.6} parent=0 // pred_region
    _
  $region9: #{hifno_encoder_forward.6} parent=0 // pred_fallthru
    _
  // Predicated region
  $region10: #{hifno_encoder_forward.6} parent=0 // pred_check
    _
  $region11: #{hifno_encoder_forward.6} parent=0 // pred_check_branch
    %13 = sbr.rel (0) target = $region13
  $region12: #{hifno_encoder_forward.6} parent=0 // pred_region
    _
  $region13: #{hifno_encoder_forward.6} parent=0 // pred_fallthru
    _
  %v15 = vld [vmem:[%s0] sm:$0xff]
  %v16 = vld [vmem:[%s0 + $0x8] sm:$0xff]
  %v17 = vld [vmem:[%s0 + $0x10] sm:$0xff]
  %v18 = vld [vmem:[%s0 + $0x18] sm:$0xff]
  %v19 = vld [vmem:[%s0 + $0x20] sm:$0xff]
  %v20 = vld [vmem:[%s0 + $0x28] sm:$0xff]
  %v21 = vld [vmem:[%s0 + $0x30] sm:$0xff]
  %v22 = vld [vmem:[%s0 + $0x38] sm:$0xff]
  %v23 = vld [vmem:[%s1] sm:$0xf]
  %v24 = vld [vmem:[%s1 + $0x4] sm:$0xf]
  %v25 = vld [vmem:[%s1 + $0x8] sm:$0xf]
  %v26 = vld [vmem:[%s1 + $0xc] sm:$0xf]
  %v27 = vld [vmem:[%s1 + $0x10] sm:$0xf]
  %v28 = vld [vmem:[%s1 + $0x14] sm:$0xf]
  %v29 = vld [vmem:[%s1 + $0x18] sm:$0xf]
  %v30 = vld [vmem:[%s1 + $0x1c] sm:$0xf]
  %v31 = vld [vmem:[%s1 + $0x20] sm:$0xf]
  %v32 = vld [vmem:[%s1 + $0x24] sm:$0xf]
  %v33 = vld [vmem:[%s1 + $0x28] sm:$0xf]
  %v34 = vld [vmem:[%s1 + $0x2c] sm:$0xf]
  %v35 = vld [vmem:[%s1 + $0x30] sm:$0xf]
  %v36 = vld [vmem:[%s1 + $0x34] sm:$0xf]
  %v37 = vld [vmem:[%s1 + $0x38] sm:$0xf]
  %v38 = vld [vmem:[%s1 + $0x3c] sm:$0xf]
  %v39 = vld [vmem:[%s1 + $0x40] sm:$0xf]
  %v40 = vld [vmem:[%s1 + $0x44] sm:$0xf]
  %v41 = vpack.c.bf16 %v17, %v15
  %v42 = vpack.c.bf16 %v18, %v16
  %v43 = vpack.c.bf16 %v21, %v19
  %v44 = vpack.c.bf16 %v22, %v20
  %v45 = vld [vmem:[%s2] sm:$0x1]
  %v47 = vlaneseq
  %v48 = vshrl.u32 %v47, 7
  %v49 = vsub.s32 0, %v48
  %v50 = vrot.slane %v45, %v49
  %v70 = vunpack.c.l.b16 %v23
  %v71 = vunpack.c.l.b16 %v24
  %v72 = vunpack.c.l.b16 %v25
  %v73 = vunpack.c.l.b16 %v26
  %v74 = vunpack.c.l.b16 %v27
  %v75 = vunpack.c.l.b16 %v28
  %v76 = vunpack.c.l.b16 %v29
  %v77 = vunpack.c.l.b16 %v30
  %v78 = vunpack.c.l.b16 %v31
  %v79 = vunpack.c.l.b16 %v32
  %v80 = vunpack.c.l.b16 %v33
  %v81 = vunpack.c.l.b16 %v34
  %v82 = vunpack.c.l.b16 %v35
  %v83 = vunpack.c.l.b16 %v36
  %v84 = vunpack.c.l.b16 %v37
  %v85 = vunpack.c.l.b16 %v38
  %v86 = vunpack.c.l.b16 %v39
  %v87 = vunpack.c.l.b16 %v40
  %v88 = vpack.c.b16 %v71, %v70
  %v89 = vpack.c.b16 %v73, %v72
  %v90 = vpack.c.b16 %v75, %v74
  %v91 = vpack.c.b16 %v77, %v76
  %v92 = vpack.c.b16 %v79, %v78
  %v93 = vpack.c.b16 %v81, %v80
  %v94 = vpack.c.b16 %v83, %v82
  %v95 = vpack.c.b16 %v85, %v84
  %v96 = vpack.c.b16 %v87, %v86
  %vm106 = vcmask 130048
  %v108 = vsel %vm106, %v42, 0
  %v111 = vsel %vm106, %v44, 0
  %113 = vmatprep.subr.bf16.mxu0 0
  %114 = vmatpush1.bf16.msra.mxu0 %v95
  %115 = vmatprep.subr.bf16.mxu0 0
  %116 = vmatpush1.bf16.msra.mxu0 %v94
  %117 = vmatprep.subr.bf16.mxu0 0
  %118 = vmatpush1.bf16.msra.mxu0 %v93
  %119 = vmatprep.subr.bf16.mxu0 0
  %120 = vmatpush1.bf16.msra.mxu0 %v92
  %121 = vmatprep.subr.bf16.mxu0 0
  %122 = vmatpush1.bf16.msra.mxu0 %v91
  %123 = vmatprep.subr.bf16.mxu0 0
  %124 = vmatpush1.bf16.msra.mxu0 %v90
  %125 = vmatprep.subr.bf16.mxu0 0
  %126 = vmatpush1.bf16.msra.mxu0 %v89
  %127 = vmatprep.subr.bf16.mxu0 0
  %128 = vmatpush1.bf16.msra.mxu0 %v88
  %129 = vmatprep.subr.bf16.mxu0 0
  %130 = vmatpush2.bf16.msra.mxu0 0
  %131 = vmatprep.subr.bf16.mxu0 0
  %132 = vmatpush2.bf16.msra.mxu0 0
  %133 = vmatprep.subr.bf16.mxu0 0
  %134 = vmatpush2.bf16.msra.mxu0 0
  %135 = vmatprep.subr.bf16.mxu0 0
  %136 = vmatpush2.bf16.msra.mxu0 0
  %137 = vmatprep.subr.bf16.mxu0 0
  %138 = vmatpush2.bf16.msra.mxu0 0
  %139 = vmatprep.subr.bf16.mxu0 0
  %140 = vmatpush2.bf16.msra.mxu0 0
  %141 = vmatprep.subr.bf16.mxu0 0
  %142 = vmatpush2.bf16.msra.mxu0 0
  %143 = vmatprep.subr.bf16.mxu0 0
  %144 = vmatpush2.bf16.msra.mxu0 %v96
  %145 = vmatprep.mubr.bf16.mxu0 %v108
  %146 = vmatmul.mubr.bf16.gmra.mxu0 %v41
  %v147 = vpop.f32.mrf.mxu0
  %v148 = vadd.f32 %v50, %v147
  %v149 = vpop.f32.mrf.mxu0
  %v150 = vpop.f32.mrf.mxu0
  %v151 = vadd.f32 %v50, %v150
  %v152 = vpop.f32.mrf.mxu0
  %153 = vmatprep.mubr.bf16.mxu0 %v111
  %154 = vmatmul.mubr.bf16.gmra.mxu0 %v43
  %v155 = vpop.f32.mrf.mxu0
  %v156 = vadd.f32 %v50, %v155
  %v157 = vpop.f32.mrf.mxu0
  %v158 = vpop.f32.mrf.mxu0
  %v159 = vadd.f32 %v50, %v158
  %v160 = vpop.f32.mrf.mxu0
  %161 = vdwg.mxu0
  %vm162 = vcmask 261120
  %163 = vst.msk [vmem:[%s3] sm:$0xff] %vm162, %v148
  %164 = vst.msk [vmem:[%s3 + $0x8] sm:$0xff] %vm162, %v151
  %165 = vst.msk [vmem:[%s3 + $0x10] sm:$0xff] %vm162, %v156
  %166 = vst.msk [vmem:[%s3 + $0x18] sm:$0xff] %vm162, %v159
  // Predicated region
  $region14: #{hifno_encoder_forward.6} parent=0 // pred_check
    _
  $region15: #{hifno_encoder_forward.6} parent=0 // pred_check_branch
    %168 = sbr.rel (0) target = $region17
  $region16: #{hifno_encoder_forward.6} parent=0 // pred_region
    _
  $region17: #{hifno_encoder_forward.6} parent=0 // pred_fallthru
    _
  // Predicated region
  $region18: #{hifno_encoder_forward.6} parent=0 // pred_check
    _
  $region19: #{hifno_encoder_forward.6} parent=0 // pred_check_branch
    %170 = sbr.rel (0) target = $region21
  $region20: #{hifno_encoder_forward.6} parent=0 // pred_region
    _
  $region21: #{hifno_encoder_forward.6} parent=0 // pred_fallthru
    _

// kernel: hifno_encoder_forward.7
$region0: #{hifno_encoder_forward.7}
  #allocation0 [shape = 'u32[]', space=smem, size = 0x4, offset = 0x4, fixed_abs, tag = 'smem constant byte address 0x4 - core index']
  #allocation1 [shape = 'u32[144,128]{1,0:T(1,128)}', space=vmem, size = 0x12000, scoped, tag = 'internal scratch']
  %s0 = inlined_call_operand.vmem [shape: f32[12,2,32], index: 0, kind: input, shape index: {}]
  %s1 = inlined_call_operand.vmem [shape: f32[12,2,32], index: 1, kind: input, shape index: {}]
  %s2 = inlined_call_operand.vmem [shape: bf16[12,32,32], index: 2, kind: input, shape index: {}]
  %s3 = inlined_call_operand.vmem [shape: bf16[12,32,32], index: 3, kind: input, shape index: {}]
  %s4 = inlined_call_operand.vmem [shape: f32[12,2,32], index: 4, kind: output, shape index: {0}]
  %s5 = inlined_call_operand.vmem [shape: f32[12,2,32], index: 5, kind: output, shape index: {1}]
  %6 = xla_tuple %s4, %s5
  %s7 = sld [smem:[#allocation0]]
  $region34: #{hifno_encoder_forward.7} parent=0
    _
  %s9 = ssub.s32 1, %s7
  %s10 = scalar_select 0, %s9, %s7
  // Predicated region
  $region2: #{hifno_encoder_forward.7} parent=0 // pred_check
    _
  $region3: #{hifno_encoder_forward.7} parent=0 // pred_check_branch
    %12 = sbr.rel (0) target = $region5
  $region4: #{hifno_encoder_forward.7} parent=0 // pred_region
    _
  $region5: #{hifno_encoder_forward.7} parent=0 // pred_fallthru
    _
  // Predicated region
  $region6: #{hifno_encoder_forward.7} parent=0 // pred_check
    _
  $region7: #{hifno_encoder_forward.7} parent=0 // pred_check_branch
    %14 = sbr.rel (0) target = $region9
  $region8: #{hifno_encoder_forward.7} parent=0 // pred_region
    _
  $region9: #{hifno_encoder_forward.7} parent=0 // pred_fallthru
    _
  // Predicated region
  $region10: #{hifno_encoder_forward.7} parent=0 // pred_check
    _
  $region11: #{hifno_encoder_forward.7} parent=0 // pred_check_branch
    %16 = sbr.rel (0) target = $region13
  $region12: #{hifno_encoder_forward.7} parent=0 // pred_region
    _
  $region13: #{hifno_encoder_forward.7} parent=0 // pred_fallthru
    _
  // Predicated region
  $region14: #{hifno_encoder_forward.7} parent=0 // pred_check
    _
  $region15: #{hifno_encoder_forward.7} parent=0 // pred_check_branch
    %18 = sbr.rel (0) target = $region17
  $region16: #{hifno_encoder_forward.7} parent=0 // pred_region
    _
  $region17: #{hifno_encoder_forward.7} parent=0 // pred_fallthru
    _
  %v20 = vld [vmem:[%s0] sm:$0x3]
  %v21 = vld [vmem:[%s0 + $0x2] sm:$0x3]
  %v22 = vld [vmem:[%s0 + $0x4] sm:$0x3]
  %v23 = vld [vmem:[%s0 + $0x6] sm:$0x3]
  %v24 = vld [vmem:[%s0 + $0x8] sm:$0x3]
  %v25 = vld [vmem:[%s0 + $0xa] sm:$0x3]
  %v26 = vld [vmem:[%s0 + $0xc] sm:$0x3]
  %v27 = vld [vmem:[%s0 + $0xe] sm:$0x3]
  %v28 = vld [vmem:[%s0 + $0x10] sm:$0x3]
  %v29 = vld [vmem:[%s0 + $0x12] sm:$0x3]
  %v30 = vld [vmem:[%s0 + $0x14] sm:$0x3]
  %v31 = vld [vmem:[%s0 + $0x16] sm:$0x3]
  %v32 = vpack.c.bf16 %v20, %v20
  %v33 = vpack.c.bf16 %v21, %v21
  %v34 = vpack.c.bf16 %v22, %v22
  %v35 = vpack.c.bf16 %v23, %v23
  %v36 = vpack.c.bf16 %v24, %v24
  %v37 = vpack.c.bf16 %v25, %v25
  %v38 = vpack.c.bf16 %v26, %v26
  %v39 = vpack.c.bf16 %v27, %v27
  %v40 = vpack.c.bf16 %v28, %v28
  %v41 = vpack.c.bf16 %v29, %v29
  %v42 = vpack.c.bf16 %v30, %v30
  %v43 = vpack.c.bf16 %v31, %v31
  %v44 = vld [vmem:[%s1] sm:$0x3]
  %v45 = vld [vmem:[%s1 + $0x2] sm:$0x3]
  %v46 = vld [vmem:[%s1 + $0x4] sm:$0x3]
  %v47 = vld [vmem:[%s1 + $0x6] sm:$0x3]
  %v48 = vld [vmem:[%s1 + $0x8] sm:$0x3]
  %v49 = vld [vmem:[%s1 + $0xa] sm:$0x3]
  %v50 = vld [vmem:[%s1 + $0xc] sm:$0x3]
  %v51 = vld [vmem:[%s1 + $0xe] sm:$0x3]
  %v52 = vld [vmem:[%s1 + $0x10] sm:$0x3]
  %v53 = vld [vmem:[%s1 + $0x12] sm:$0x3]
  %v54 = vld [vmem:[%s1 + $0x14] sm:$0x3]
  %v55 = vld [vmem:[%s1 + $0x16] sm:$0x3]
  %v56 = vpack.c.bf16 %v44, %v44
  %v57 = vpack.c.bf16 %v45, %v45
  %v58 = vpack.c.bf16 %v46, %v46
  %v59 = vpack.c.bf16 %v47, %v47
  %v60 = vpack.c.bf16 %v48, %v48
  %v61 = vpack.c.bf16 %v49, %v49
  %v62 = vpack.c.bf16 %v50, %v50
  %v63 = vpack.c.bf16 %v51, %v51
  %v64 = vpack.c.bf16 %v52, %v52
  %v65 = vpack.c.bf16 %v53, %v53
  %v66 = vpack.c.bf16 %v54, %v54
  %v67 = vpack.c.bf16 %v55, %v55
  %v68 = vld [vmem:[%s2] sm:$0xf]
  %v69 = vld [vmem:[%s2 + $0x4] sm:$0xf]
  %v70 = vld [vmem:[%s2 + $0x8] sm:$0xf]
  %v71 = vld [vmem:[%s2 + $0xc] sm:$0xf]
  %v72 = vld [vmem:[%s2 + $0x10] sm:$0xf]
  %v73 = vld [vmem:[%s2 + $0x14] sm:$0xf]
  %v74 = vld [vmem:[%s2 + $0x18] sm:$0xf]
  %v75 = vld [vmem:[%s2 + $0x1c] sm:$0xf]
  %v76 = vld [vmem:[%s2 + $0x20] sm:$0xf]
  %v77 = vld [vmem:[%s2 + $0x24] sm:$0xf]
  %v78 = vld [vmem:[%s2 + $0x28] sm:$0xf]
  %v79 = vld [vmem:[%s2 + $0x2c] sm:$0xf]
  %v80 = vld [vmem:[%s2 + $0x30] sm:$0xf]
  %v81 = vld [vmem:[%s2 + $0x34] sm:$0xf]
  %v82 = vld [vmem:[%s2 + $0x38] sm:$0xf]
  %v83 = vld [vmem:[%s2 + $0x3c] sm:$0xf]
  %v84 = vld [vmem:[%s2 + $0x40] sm:$0xf]
  %v85 = vld [vmem:[%s2 + $0x44] sm:$0xf]
  %v86 = vld [vmem:[%s2 + $0x48] sm:$0xf]
  %v87 = vld [vmem:[%s2 + $0x4c] sm:$0xf]
  %v88 = vld [vmem:[%s2 + $0x50] sm:$0xf]
  %v89 = vld [vmem:[%s2 + $0x54] sm:$0xf]
  %v90 = vld [vmem:[%s2 + $0x58] sm:$0xf]
  %v91 = vld [vmem:[%s2 + $0x5c] sm:$0xf]
  %v92 = vld [vmem:[%s2 + $0x60] sm:$0xf]
  %v93 = vld [vmem:[%s2 + $0x64] sm:$0xf]
  %v94 = vld [vmem:[%s2 + $0x68] sm:$0xf]
  %v95 = vld [vmem:[%s2 + $0x6c] sm:$0xf]
  %v96 = vld [vmem:[%s2 + $0x70] sm:$0xf]
  %v97 = vld [vmem:[%s2 + $0x74] sm:$0xf]
  %v98 = vld [vmem:[%s2 + $0x78] sm:$0xf]
  %v99 = vld [vmem:[%s2 + $0x7c] sm:$0xf]
  %v100 = vld [vmem:[%s2 + $0x80] sm:$0xf]
  %v101 = vld [vmem:[%s2 + $0x84] sm:$0xf]
  %v102 = vld [vmem:[%s2 + $0x88] sm:$0xf]
  %v103 = vld [vmem:[%s2 + $0x8c] sm:$0xf]
  %v104 = vld [vmem:[%s2 + $0x90] sm:$0xf]
  %v105 = vld [vmem:[%s2 + $0x94] sm:$0xf]
  %v106 = vld [vmem:[%s2 + $0x98] sm:$0xf]
  %v107 = vld [vmem:[%s2 + $0x9c] sm:$0xf]
  %v108 = vld [vmem:[%s2 + $0xa0] sm:$0xf]
  %v109 = vld [vmem:[%s2 + $0xa4] sm:$0xf]
  %v110 = vld [vmem:[%s2 + $0xa8] sm:$0xf]
  %v111 = vld [vmem:[%s2 + $0xac] sm:$0xf]
  %v112 = vld [vmem:[%s2 + $0xb0] sm:$0xf]
  %v113 = vld [vmem:[%s2 + $0xb4] sm:$0xf]
  %v114 = vld [vmem:[%s2 + $0xb8] sm:$0xf]
  %v115 = vld [vmem:[%s2 + $0xbc] sm:$0xf]
  %v116 = vld [vmem:[%s3] sm:$0xf]
  %v117 = vld [vmem:[%s3 + $0x4] sm:$0xf]
  %v118 = vld [vmem:[%s3 + $0x8] sm:$0xf]
  %v119 = vld [vmem:[%s3 + $0xc] sm:$0xf]
  %v120 = vld [vmem:[%s3 + $0x10] sm:$0xf]
  %v121 = vld [vmem:[%s3 + $0x14] sm:$0xf]
  %v122 = vld [vmem:[%s3 + $0x18] sm:$0xf]
  %v123 = vld [vmem:[%s3 + $0x1c] sm:$0xf]
  %v124 = vld [vmem:[%s3 + $0x20] sm:$0xf]
  %v125 = vld [vmem:[%s3 + $0x24] sm:$0xf]
  %v126 = vld [vmem:[%s3 + $0x28] sm:$0xf]
  %v127 = vld [vmem:[%s3 + $0x2c] sm:$0xf]
  %v128 = vld [vmem:[%s3 + $0x30] sm:$0xf]
  %v129 = vld [vmem:[%s3 + $0x34] sm:$0xf]
  %v130 = vld [vmem:[%s3 + $0x38] sm:$0xf]
  %v131 = vld [vmem:[%s3 + $0x3c] sm:$0xf]
  %v132 = vld [vmem:[%s3 + $0x40] sm:$0xf]
  %v133 = vld [vmem:[%s3 + $0x44] sm:$0xf]
  %v134 = vld [vmem:[%s3 + $0x48] sm:$0xf]
  %v135 = vld [vmem:[%s3 + $0x4c] sm:$0xf]
  %v136 = vld [vmem:[%s3 + $0x50] sm:$0xf]
  %v137 = vld [vmem:[%s3 + $0x54] sm:$0xf]
  %v138 = vld [vmem:[%s3 + $0x58] sm:$0xf]
  %v139 = vld [vmem:[%s3 + $0x5c] sm:$0xf]
  %v140 = vld [vmem:[%s3 + $0x60] sm:$0xf]
  %v141 = vld [vmem:[%s3 + $0x64] sm:$0xf]
  %v142 = vld [vmem:[%s3 + $0x68] sm:$0xf]
  %v143 = vld [vmem:[%s3 + $0x6c] sm:$0xf]
  %v144 = vld [vmem:[%s3 + $0x70] sm:$0xf]
  %v145 = vld [vmem:[%s3 + $0x74] sm:$0xf]
  %v146 = vld [vmem:[%s3 + $0x78] sm:$0xf]
  %v147 = vld [vmem:[%s3 + $0x7c] sm:$0xf]
  %v148 = vld [vmem:[%s3 + $0x80] sm:$0xf]
  %v149 = vld [vmem:[%s3 + $0x84] sm:$0xf]
  %v150 = vld [vmem:[%s3 + $0x88] sm:$0xf]
  %v151 = vld [vmem:[%s3 + $0x8c] sm:$0xf]
  %v152 = vld [vmem:[%s3 + $0x90] sm:$0xf]
  %v153 = vld [vmem:[%s3 + $0x94] sm:$0xf]
  %v154 = vld [vmem:[%s3 + $0x98] sm:$0xf]
  %v155 = vld [vmem:[%s3 + $0x9c] sm:$0xf]
  %v156 = vld [vmem:[%s3 + $0xa0] sm:$0xf]
  %v157 = vld [vmem:[%s3 + $0xa4] sm:$0xf]
  %v158 = vld [vmem:[%s3 + $0xa8] sm:$0xf]
  %v159 = vld [vmem:[%s3 + $0xac] sm:$0xf]
  %v160 = vld [vmem:[%s3 + $0xb0] sm:$0xf]
  %v161 = vld [vmem:[%s3 + $0xb4] sm:$0xf]
  %v162 = vld [vmem:[%s3 + $0xb8] sm:$0xf]
  %v163 = vld [vmem:[%s3 + $0xbc] sm:$0xf]
  %v168 = vunpack.c.l.b16 %v68
  %v169 = vunpack.c.l.b16 %v69
  %v170 = vunpack.c.l.b16 %v70
  %v171 = vunpack.c.l.b16 %v71
  %v172 = vpack.c.b16 %v169, %v168
  %v173 = vpack.c.b16 %v171, %v170
  %vm176 = vcmask 261120
  %v178 = vsel %vm176, %v32, 0
  %180 = vmatprep.subr.bf16.mxu0 0
  %181 = vmatpush1.bf16.msra.mxu0 0
  %182 = vmatprep.subr.bf16.mxu0 0
  %183 = vmatpush1.bf16.msra.mxu0 0
  %184 = vmatprep.subr.bf16.mxu0 0
  %185 = vmatpush1.bf16.msra.mxu0 0
  %186 = vmatprep.subr.bf16.mxu0 0
  %187 = vmatpush1.bf16.msra.mxu0 0
  %188 = vmatprep.subr.bf16.mxu0 0
  %189 = vmatpush1.bf16.msra.mxu0 0
  %190 = vmatprep.subr.bf16.mxu0 0
  %191 = vmatpush1.bf16.msra.mxu0 0
  %192 = vmatprep.subr.bf16.mxu0 0
  %193 = vmatpush1.bf16.msra.mxu0 %v173
  %194 = vmatprep.subr.bf16.mxu0 0
  %195 = vmatpush1.bf16.msra.mxu0 %v172
  %196 = vmatprep.subr.bf16.mxu0 0
  %197 = vmatpush2.bf16.msra.mxu0 0
  %198 = vmatprep.subr.bf16.mxu0 0
  %199 = vmatpush2.bf16.msra.mxu0 0
  %200 = vmatprep.subr.bf16.mxu0 0
  %201 = vmatpush2.bf16.msra.mxu0 0
  %202 = vmatprep.subr.bf16.mxu0 0
  %203 = vmatpush2.bf16.msra.mxu0 0
  %204 = vmatprep.subr.bf16.mxu0 0
  %205 = vmatpush2.bf16.msra.mxu0 0
  %206 = vmatprep.subr.bf16.mxu0 0
  %207 = vmatpush2.bf16.msra.mxu0 0
  %208 = vmatprep.subr.bf16.mxu0 0
  %209 = vmatpush2.bf16.msra.mxu0 0
  %210 = vmatprep.subr.bf16.mxu0 0
  %211 = vmatpush2.bf16.msra.mxu0 0
  %212 = vmatprep.mubr.bf16.mxu0 0
  %213 = vmatmul.mubr.bf16.gmra.mxu0 %v178
  %v214 = vpop.f32.mrf.mxu0
  %v215 = vadd.f32 0.0, %v214
  %v216 = vpop.f32.mrf.mxu0
  %v217 = vpop.f32.mrf.mxu0
  %v218 = vpop.f32.mrf.mxu0
  %219 = vdwg.mxu0
  %v224 = vunpack.c.l.b16 %v72
  %v225 = vunpack.c.l.b16 %v73
  %v226 = vunpack.c.l.b16 %v74
  %v227 = vunpack.c.l.b16 %v75
  %v228 = vpack.c.b16 %v225, %v224
  %v229 = vpack.c.b16 %v227, %v226
  %v233 = vsel %vm176, %v33, 0
  %235 = vmatprep.subr.bf16.mxu0 0
  %236 = vmatpush1.bf16.msra.mxu0 0
  %237 = vmatprep.subr.bf16.mxu0 0
  %238 = vmatpush1.bf16.msra.mxu0 0
  %239 = vmatprep.subr.bf16.mxu0 0
  %240 = vmatpush1.bf16.msra.mxu0 0
  %241 = vmatprep.subr.bf16.mxu0 0
  %242 = vmatpush1.bf16.msra.mxu0 0
  %243 = vmatprep.subr.bf16.mxu0 0
  %244 = vmatpush1.bf16.msra.mxu0 0
  %245 = vmatprep.subr.bf16.mxu0 0
  %246 = vmatpush1.bf16.msra.mxu0 0
  %247 = vmatprep.subr.bf16.mxu0 0
  %248 = vmatpush1.bf16.msra.mxu0 %v229
  %249 = vmatprep.subr.bf16.mxu0 0
  %250 = vmatpush1.bf16.msra.mxu0 %v228
  %251 = vmatprep.subr.bf16.mxu0 0
  %252 = vmatpush2.bf16.msra.mxu0 0
  %253 = vmatprep.subr.bf16.mxu0 0
  %254 = vmatpush2.bf16.msra.mxu0 0
  %255 = vmatprep.subr.bf16.mxu0 0
  %256 = vmatpush2.bf16.msra.mxu0 0
  %257 = vmatprep.subr.bf16.mxu0 0
  %258 = vmatpush2.bf16.msra.mxu0 0
  %259 = vmatprep.subr.bf16.mxu0 0
  %260 = vmatpush2.bf16.msra.mxu0 0
  %261 = vmatprep.subr.bf16.mxu0 0
  %262 = vmatpush2.bf16.msra.mxu0 0
  %263 = vmatprep.subr.bf16.mxu0 0
  %264 = vmatpush2.bf16.msra.mxu0 0
  %265 = vmatprep.subr.bf16.mxu0 0
  %266 = vmatpush2.bf16.msra.mxu0 0
  %267 = vmatprep.mubr.bf16.mxu0 0
  %268 = vmatmul.mubr.bf16.gmra.mxu0 %v233
  %v269 = vpop.f32.mrf.mxu0
  %v270 = vadd.f32 0.0, %v269
  %v271 = vpop.f32.mrf.mxu0
  %v272 = vpop.f32.mrf.mxu0
  %v273 = vpop.f32.mrf.mxu0
  %274 = vdwg.mxu0
  %v279 = vunpack.c.l.b16 %v76
  %v280 = vunpack.c.l.b16 %v77
  %v281 = vunpack.c.l.b16 %v78
  %v282 = vunpack.c.l.b16 %v79
  %v283 = vpack.c.b16 %v280, %v279
  %v284 = vpack.c.b16 %v282, %v281
  %v288 = vsel %vm176, %v34, 0
  %290 = vmatprep.subr.bf16.mxu0 0
  %291 = vmatpush1.bf16.msra.mxu0 0
  %292 = vmatprep.subr.bf16.mxu0 0
  %293 = vmatpush1.bf16.msra.mxu0 0
  %294 = vmatprep.subr.bf16.mxu0 0
  %295 = vmatpush1.bf16.msra.mxu0 0
  %296 = vmatprep.subr.bf16.mxu0 0
  %297 = vmatpush1.bf16.msra.mxu0 0
  %298 = vmatprep.subr.bf16.mxu0 0
  %299 = vmatpush1.bf16.msra.mxu0 0
  %300 = vmatprep.subr.bf16.mxu0 0
  %301 = vmatpush1.bf16.msra.mxu0 0
  %302 = vmatprep.subr.bf16.mxu0 0
  %303 = vmatpush1.bf16.msra.mxu0 %v284
  %304 = vmatprep.subr.bf16.mxu0 0
  %305 = vmatpush1.bf16.msra.mxu0 %v283
  %306 = vmatprep.subr.bf16.mxu0 0
  %307 = vmatpush2.bf16.msra.mxu0 0
  %308 = vmatprep.subr.bf16.mxu0 0
  %309 = vmatpush2.bf16.msra.mxu0 0
  %310 = vmatprep.subr.bf16.mxu0 0
  %311 = vmatpush2.bf16.msra.mxu0 0
  %312 = vmatprep.subr.bf16.mxu0 0
  %313 = vmatpush2.bf16.msra.mxu0 0
  %314 = vmatprep.subr.bf16.mxu0 0
  %315 = vmatpush2.bf16.msra.mxu0 0
  %316 = vmatprep.subr.bf16.mxu0 0
  %317 = vmatpush2.bf16.msra.mxu0 0
  %318 = vmatprep.subr.bf16.mxu0 0
  %319 = vmatpush2.bf16.msra.mxu0 0
  %320 = vmatprep.subr.bf16.mxu0 0
  %321 = vmatpush2.bf16.msra.mxu0 0
  %322 = vmatprep.mubr.bf16.mxu0 0
  %323 = vmatmul.mubr.bf16.gmra.mxu0 %v288
  %v324 = vpop.f32.mrf.mxu0
  %v325 = vadd.f32 0.0, %v324
  %v326 = vpop.f32.mrf.mxu0
  %v327 = vpop.f32.mrf.mxu0
  %v328 = vpop.f32.mrf.mxu0
  %329 = vdwg.mxu0
  %v334 = vunpack.c.l.b16 %v80
  %v335 = vunpack.c.l.b16 %v81
  %v336 = vunpack.c.l.b16 %v82
  %v337 = vunpack.c.l.b16 %v83
  %v338 = vpack.c.b16 %v335, %v334
  %v339 = vpack.c.b16 %v337, %v336
  %v343 = vsel %vm176, %v35, 0
  %345 = vmatprep.subr.bf16.mxu0 0
  %346 = vmatpush1.bf16.msra.mxu0 0
  %347 = vmatprep.subr.bf16.mxu0 0
  %348 = vmatpush1.bf16.msra.mxu0 0
  %349 = vmatprep.subr.bf16.mxu0 0
  %350 = vmatpush1.bf16.msra.mxu0 0
  %351 = vmatprep.subr.bf16.mxu0 0
  %352 = vmatpush1.bf16.msra.mxu0 0
  %353 = vmatprep.subr.bf16.mxu0 0
  %354 = vmatpush1.bf16.msra.mxu0 0
  %355 = vmatprep.subr.bf16.mxu0 0
  %356 = vmatpush1.bf16.msra.mxu0 0
  %357 = vmatprep.subr.bf16.mxu0 0
  %358 = vmatpush1.bf16.msra.mxu0 %v339
  %359 = vmatprep.subr.bf16.mxu0 0
  %360 = vmatpush1.bf16.msra.mxu0 %v338
  %361 = vmatprep.subr.bf16.mxu0 0
  %362 = vmatpush2.bf16.msra.mxu0 0
  %363 = vmatprep.subr.bf16.mxu0 0
  %364 = vmatpush2.bf16.msra.mxu0 0
  %365 = vmatprep.subr.bf16.mxu0 0
  %366 = vmatpush2.bf16.msra.mxu0 0
  %367 = vmatprep.subr.bf16.mxu0 0
  %368 = vmatpush2.bf16.msra.mxu0 0
  %369 = vmatprep.subr.bf16.mxu0 0
  %370 = vmatpush2.bf16.msra.mxu0 0
  %371 = vmatprep.subr.bf16.mxu0 0
  %372 = vmatpush2.bf16.msra.mxu0 0
  %373 = vmatprep.subr.bf16.mxu0 0
  %374 = vmatpush2.bf16.msra.mxu0 0
  %375 = vmatprep.subr.bf16.mxu0 0
  %376 = vmatpush2.bf16.msra.mxu0 0
  %377 = vmatprep.mubr.bf16.mxu0 0
  %378 = vmatmul.mubr.bf16.gmra.mxu0 %v343
  %v379 = vpop.f32.mrf.mxu0
  %v380 = vadd.f32 0.0, %v379
  %v381 = vpop.f32.mrf.mxu0
  %v382 = vpop.f32.mrf.mxu0
  %v383 = vpop.f32.mrf.mxu0
  %384 = vdwg.mxu0
  %v389 = vunpack.c.l.b16 %v84
  %v390 = vunpack.c.l.b16 %v85
  %v391 = vunpack.c.l.b16 %v86
  %v392 = vunpack.c.l.b16 %v87
  %v393 = vpack.c.b16 %v390, %v389
  %v394 = vpack.c.b16 %v392, %v391
  %v398 = vsel %vm176, %v36, 0
  %400 = vmatprep.subr.bf16.mxu0 0
  %401 = vmatpush1.bf16.msra.mxu0 0
  %402 = vmatprep.subr.bf16.mxu0 0
  %403 = vmatpush1.bf16.msra.mxu0 0
  %404 = vmatprep.subr.bf16.mxu0 0
  %405 = vmatpush1.bf16.msra.mxu0 0
  %406 = vmatprep.subr.bf16.mxu0 0
  %407 = vmatpush1.bf16.msra.mxu0 0
  %408 = vmatprep.subr.bf16.mxu0 0
  %409 = vmatpush1.bf16.msra.mxu0 0
  %410 = vmatprep.subr.bf16.mxu0 0
  %411 = vmatpush1.bf16.msra.mxu0 0
  %412 = vmatprep.subr.bf16.mxu0 0
  %413 = vmatpush1.bf16.msra.mxu0 %v394
  %414 = vmatprep.subr.bf16.mxu0 0
  %415 = vmatpush1.bf16.msra.mxu0 %v393
  %416 = vmatprep.subr.bf16.mxu0 0
  %417 = vmatpush2.bf16.msra.mxu0 0
  %418 = vmatprep.subr.bf16.mxu0 0
  %419 = vmatpush2.bf16.msra.mxu0 0
  %420 = vmatprep.subr.bf16.mxu0 0
  %421 = vmatpush2.bf16.msra.mxu0 0
  %422 = vmatprep.subr.bf16.mxu0 0
  %423 = vmatpush2.bf16.msra.mxu0 0
  %424 = vmatprep.subr.bf16.mxu0 0
  %425 = vmatpush2.bf16.msra.mxu0 0
  %426 = vmatprep.subr.bf16.mxu0 0
  %427 = vmatpush2.bf16.msra.mxu0 0
  %428 = vmatprep.subr.bf16.mxu0 0
  %429 = vmatpush2.bf16.msra.mxu0 0
  %430 = vmatprep.subr.bf16.mxu0 0
  %431 = vmatpush2.bf16.msra.mxu0 0
  %432 = vmatprep.mubr.bf16.mxu0 0
  %433 = vmatmul.mubr.bf16.gmra.mxu0 %v398
  %v434 = vpop.f32.mrf.mxu0
  %v435 = vadd.f32 0.0, %v434
  %v436 = vpop.f32.mrf.mxu0
  %v437 = vpop.f32.mrf.mxu0
  %v438 = vpop.f32.mrf.mxu0
  %439 = vdwg.mxu0
  %v444 = vunpack.c.l.b16 %v88
  %v445 = vunpack.c.l.b16 %v89
  %v446 = vunpack.c.l.b16 %v90
  %v447 = vunpack.c.l.b16 %v91
  %v448 = vpack.c.b16 %v445, %v444
  %v449 = vpack.c.b16 %v447, %v446
  %v453 = vsel %vm176, %v37, 0
  %455 = vmatprep.subr.bf16.mxu0 0
  %456 = vmatpush1.bf16.msra.mxu0 0
  %457 = vmatprep.subr.bf16.mxu0 0
  %458 = vmatpush1.bf16.msra.mxu0 0
  %459 = vmatprep.subr.bf16.mxu0 0
  %460 = vmatpush1.bf16.msra.mxu0 0
  %461 = vmatprep.subr.bf16.mxu0 0
  %462 = vmatpush1.bf16.msra.mxu0 0
  %463 = vmatprep.subr.bf16.mxu0 0
  %464 = vmatpush1.bf16.msra.mxu0 0
  %465 = vmatprep.subr.bf16.mxu0 0
  %466 = vmatpush1.bf16.msra.mxu0 0
  %467 = vmatprep.subr.bf16.mxu0 0
  %468 = vmatpush1.bf16.msra.mxu0 %v449
  %469 = vmatprep.subr.bf16.mxu0 0
  %470 = vmatpush1.bf16.msra.mxu0 %v448
  %471 = vmatprep.subr.bf16.mxu0 0
  %472 = vmatpush2.bf16.msra.mxu0 0
  %473 = vmatprep.subr.bf16.mxu0 0
  %474 = vmatpush2.bf16.msra.mxu0 0
  %475 = vmatprep.subr.bf16.mxu0 0
  %476 = vmatpush2.bf16.msra.mxu0 0
  %477 = vmatprep.subr.bf16.mxu0 0
  %478 = vmatpush2.bf16.msra.mxu0 0
  %479 = vmatprep.subr.bf16.mxu0 0
  %480 = vmatpush2.bf16.msra.mxu0 0
  %481 = vmatprep.subr.bf16.mxu0 0
  %482 = vmatpush2.bf16.msra.mxu0 0
  %483 = vmatprep.subr.bf16.mxu0 0
  %484 = vmatpush2.bf16.msra.mxu0 0
  %485 = vmatprep.subr.bf16.mxu0 0
  %486 = vmatpush2.bf16.msra.mxu0 0
  %487 = vmatprep.mubr.bf16.mxu0 0
  %488 = vmatmul.mubr.bf16.gmra.mxu0 %v453
  %v489 = vpop.f32.mrf.mxu0
  %v490 = vadd.f32 0.0, %v489
  %v491 = vpop.f32.mrf.mxu0
  %v492 = vpop.f32.mrf.mxu0
  %v493 = vpop.f32.mrf.mxu0
  %494 = vdwg.mxu0
  %v499 = vunpack.c.l.b16 %v92
  %v500 = vunpack.c.l.b16 %v93
  %v501 = vunpack.c.l.b16 %v94
  %v502 = vunpack.c.l.b16 %v95
  %v503 = vpack.c.b16 %v500, %v499
  %v504 = vpack.c.b16 %v502, %v501
  %v508 = vsel %vm176, %v38, 0
  %510 = vmatprep.subr.bf16.mxu0 0
  %511 = vmatpush1.bf16.msra.mxu0 0
  %512 = vmatprep.subr.bf16.mxu0 0
  %513 = vmatpush1.bf16.msra.mxu0 0
  %514 = vmatprep.subr.bf16.mxu0 0
  %515 = vmatpush1.bf16.msra.mxu0 0
  %516 = vmatprep.subr.bf16.mxu0 0
  %517 = vmatpush1.bf16.msra.mxu0 0
  %518 = vmatprep.subr.bf16.mxu0 0
  %519 = vmatpush1.bf16.msra.mxu0 0
  %520 = vmatprep.subr.bf16.mxu0 0
  %521 = vmatpush1.bf16.msra.mxu0 0
  %522 = vmatprep.subr.bf16.mxu0 0
  %523 = vmatpush1.bf16.msra.mxu0 %v504
  %524 = vmatprep.subr.bf16.mxu0 0
  %525 = vmatpush1.bf16.msra.mxu0 %v503
  %526 = vmatprep.subr.bf16.mxu0 0
  %527 = vmatpush2.bf16.msra.mxu0 0
  %528 = vmatprep.subr.bf16.mxu0 0
  %529 = vmatpush2.bf16.msra.mxu0 0
  %530 = vmatprep.subr.bf16.mxu0 0
  %531 = vmatpush2.bf16.msra.mxu0 0
  %532 = vmatprep.subr.bf16.mxu0 0
  %533 = vmatpush2.bf16.msra.mxu0 0
  %534 = vmatprep.subr.bf16.mxu0 0
  %535 = vmatpush2.bf16.msra.mxu0 0
  %536 = vmatprep.subr.bf16.mxu0 0
  %537 = vmatpush2.bf16.msra.mxu0 0
  %538 = vmatprep.subr.bf16.mxu0 0
  %539 = vmatpush2.bf16.msra.mxu0 0
  %540 = vmatprep.subr.bf16.mxu0 0
  %541 = vmatpush2.bf16.msra.mxu0 0
  %542 = vmatprep.mubr.bf16.mxu0 0
  %543 = vmatmul.mubr.bf16.gmra.mxu0 %v508
  %v544 = vpop.f32.mrf.mxu0
  %v545 = vadd.f32 0.0, %v544
  %v546 = vpop.f32.mrf.mxu0
  %v547 = vpop.f32.mrf.mxu0
  %v548 = vpop.f32.mrf.mxu0
  %549 = vdwg.mxu0
  %v554 = vunpack.c.l.b16 %v96
  %v555 = vunpack.c.l.b16 %v97
  %v556 = vunpack.c.l.b16 %v98
  %v557 = vunpack.c.l.b16 %v99
  %v558 = vpack.c.b16 %v555, %v554
  %v559 = vpack.c.b16 %v557, %v556
  %v563 = vsel %vm176, %v39, 0
  %565 = vmatprep.subr.bf16.mxu0 0
  %566 = vmatpush1.bf16.msra.mxu0 0
  %567 = vmatprep.subr.bf16.mxu0 0
  %568 = vmatpush1.bf16.msra.mxu0 0
  %569 = vmatprep.subr.bf16.mxu0 0
  %570 = vmatpush1.bf16.msra.mxu0 0
  %571 = vmatprep.subr.bf16.mxu0 0
  %572 = vmatpush1.bf16.msra.mxu0 0
  %573 = vmatprep.subr.bf16.mxu0 0
  %574 = vmatpush1.bf16.msra.mxu0 0
  %575 = vmatprep.subr.bf16.mxu0 0
  %576 = vmatpush1.bf16.msra.mxu0 0
  %577 = vmatprep.subr.bf16.mxu0 0
  %578 = vmatpush1.bf16.msra.mxu0 %v559
  %579 = vmatprep.subr.bf16.mxu0 0
  %580 = vmatpush1.bf16.msra.mxu0 %v558
  %581 = vmatprep.subr.bf16.mxu0 0
  %582 = vmatpush2.bf16.msra.mxu0 0
  %583 = vmatprep.subr.bf16.mxu0 0
  %584 = vmatpush2.bf16.msra.mxu0 0
  %585 = vmatprep.subr.bf16.mxu0 0
  %586 = vmatpush2.bf16.msra.mxu0 0
  %587 = vmatprep.subr.bf16.mxu0 0
  %588 = vmatpush2.bf16.msra.mxu0 0
  %589 = vmatprep.subr.bf16.mxu0 0
  %590 = vmatpush2.bf16.msra.mxu0 0
  %591 = vmatprep.subr.bf16.mxu0 0
  %592 = vmatpush2.bf16.msra.mxu0 0
  %593 = vmatprep.subr.bf16.mxu0 0
  %594 = vmatpush2.bf16.msra.mxu0 0
  %595 = vmatprep.subr.bf16.mxu0 0
  %596 = vmatpush2.bf16.msra.mxu0 0
  %597 = vmatprep.mubr.bf16.mxu0 0
  %598 = vmatmul.mubr.bf16.gmra.mxu0 %v563
  %v599 = vpop.f32.mrf.mxu0
  %v600 = vadd.f32 0.0, %v599
  %v601 = vpop.f32.mrf.mxu0
  %v602 = vpop.f32.mrf.mxu0
  %v603 = vpop.f32.mrf.mxu0
  %604 = vdwg.mxu0
  %v609 = vunpack.c.l.b16 %v100
  %v610 = vunpack.c.l.b16 %v101
  %v611 = vunpack.c.l.b16 %v102
  %v612 = vunpack.c.l.b16 %v103
  %v613 = vpack.c.b16 %v610, %v609
  %v614 = vpack.c.b16 %v612, %v611
  %v618 = vsel %vm176, %v40, 0
  %620 = vmatprep.subr.bf16.mxu0 0
  %621 = vmatpush1.bf16.msra.mxu0 0
  %622 = vmatprep.subr.bf16.mxu0 0
  %623 = vmatpush1.bf16.msra.mxu0 0
  %624 = vmatprep.subr.bf16.mxu0 0
  %625 = vmatpush1.bf16.msra.mxu0 0
  %626 = vmatprep.subr.bf16.mxu0 0
  %627 = vmatpush1.bf16.msra.mxu0 0
  %628 = vmatprep.subr.bf16.mxu0 0
  %629 = vmatpush1.bf16.msra.mxu0 0
  %630 = vmatprep.subr.bf16.mxu0 0
  %631 = vmatpush1.bf16.msra.mxu0 0
  %632 = vmatprep.subr.bf16.mxu0 0
  %633 = vmatpush1.bf16.msra.mxu0 %v614
  %634 = vmatprep.subr.bf16.mxu0 0
  %635 = vmatpush1.bf16.msra.mxu0 %v613
  %636 = vmatprep.subr.bf16.mxu0 0
  %637 = vmatpush2.bf16.msra.mxu0 0
  %638 = vmatprep.subr.bf16.mxu0 0
  %639 = vmatpush2.bf16.msra.mxu0 0
  %640 = vmatprep.subr.bf16.mxu0 0
  %641 = vmatpush2.bf16.msra.mxu0 0
  %642 = vmatprep.subr.bf16.mxu0 0
  %643 = vmatpush2.bf16.msra.mxu0 0
  %644 = vmatprep.subr.bf16.mxu0 0
  %645 = vmatpush2.bf16.msra.mxu0 0
  %646 = vmatprep.subr.bf16.mxu0 0
  %647 = vmatpush2.bf16.msra.mxu0 0
  %648 = vmatprep.subr.bf16.mxu0 0
  %649 = vmatpush2.bf16.msra.mxu0 0
  %650 = vmatprep.subr.bf16.mxu0 0
  %651 = vmatpush2.bf16.msra.mxu0 0
  %652 = vmatprep.mubr.bf16.mxu0 0
  %653 = vmatmul.mubr.bf16.gmra.mxu0 %v618
  %v654 = vpop.f32.mrf.mxu0
  %v655 = vadd.f32 0.0, %v654
  %v656 = vpop.f32.mrf.mxu0
  %v657 = vpop.f32.mrf.mxu0
  %v658 = vpop.f32.mrf.mxu0
  %659 = vdwg.mxu0
  %v664 = vunpack.c.l.b16 %v104
  %v665 = vunpack.c.l.b16 %v105
  %v666 = vunpack.c.l.b16 %v106
  %v667 = vunpack.c.l.b16 %v107
  %v668 = vpack.c.b16 %v665, %v664
  %v669 = vpack.c.b16 %v667, %v666
  %v673 = vsel %vm176, %v41, 0
  %675 = vmatprep.subr.bf16.mxu0 0
  %676 = vmatpush1.bf16.msra.mxu0 0
  %677 = vmatprep.subr.bf16.mxu0 0
  %678 = vmatpush1.bf16.msra.mxu0 0
  %679 = vmatprep.subr.bf16.mxu0 0
  %680 = vmatpush1.bf16.msra.mxu0 0
  %681 = vmatprep.subr.bf16.mxu0 0
  %682 = vmatpush1.bf16.msra.mxu0 0
  %683 = vmatprep.subr.bf16.mxu0 0
  %684 = vmatpush1.bf16.msra.mxu0 0
  %685 = vmatprep.subr.bf16.mxu0 0
  %686 = vmatpush1.bf16.msra.mxu0 0
  %687 = vmatprep.subr.bf16.mxu0 0
  %688 = vmatpush1.bf16.msra.mxu0 %v669
  %689 = vmatprep.subr.bf16.mxu0 0
  %690 = vmatpush1.bf16.msra.mxu0 %v668
  %691 = vmatprep.subr.bf16.mxu0 0
  %692 = vmatpush2.bf16.msra.mxu0 0
  %693 = vmatprep.subr.bf16.mxu0 0
  %694 = vmatpush2.bf16.msra.mxu0 0
  %695 = vmatprep.subr.bf16.mxu0 0
  %696 = vmatpush2.bf16.msra.mxu0 0
  %697 = vmatprep.subr.bf16.mxu0 0
  %698 = vmatpush2.bf16.msra.mxu0 0
  %699 = vmatprep.subr.bf16.mxu0 0
  %700 = vmatpush2.bf16.msra.mxu0 0
  %701 = vmatprep.subr.bf16.mxu0 0
  %702 = vmatpush2.bf16.msra.mxu0 0
  %703 = vmatprep.subr.bf16.mxu0 0
  %704 = vmatpush2.bf16.msra.mxu0 0
  %705 = vmatprep.subr.bf16.mxu0 0
  %706 = vmatpush2.bf16.msra.mxu0 0
  %707 = vmatprep.mubr.bf16.mxu0 0
  %708 = vmatmul.mubr.bf16.gmra.mxu0 %v673
  %v709 = vpop.f32.mrf.mxu0
  %v710 = vadd.f32 0.0, %v709
  %v711 = vpop.f32.mrf.mxu0
  %v712 = vpop.f32.mrf.mxu0
  %v713 = vpop.f32.mrf.mxu0
  %714 = vdwg.mxu0
  %v719 = vunpack.c.l.b16 %v108
  %v720 = vunpack.c.l.b16 %v109
  %v721 = vunpack.c.l.b16 %v110
  %v722 = vunpack.c.l.b16 %v111
  %v723 = vpack.c.b16 %v720, %v719
  %v724 = vpack.c.b16 %v722, %v721
  %v728 = vsel %vm176, %v42, 0
  %730 = vmatprep.subr.bf16.mxu0 0
  %731 = vmatpush1.bf16.msra.mxu0 0
  %732 = vmatprep.subr.bf16.mxu0 0
  %733 = vmatpush1.bf16.msra.mxu0 0
  %734 = vmatprep.subr.bf16.mxu0 0
  %735 = vmatpush1.bf16.msra.mxu0 0
  %736 = vmatprep.subr.bf16.mxu0 0
  %737 = vmatpush1.bf16.msra.mxu0 0
  %738 = vmatprep.subr.bf16.mxu0 0
  %739 = vmatpush1.bf16.msra.mxu0 0
  %740 = vmatprep.subr.bf16.mxu0 0
  %741 = vmatpush1.bf16.msra.mxu0 0
  %742 = vmatprep.subr.bf16.mxu0 0
  %743 = vmatpush1.bf16.msra.mxu0 %v724
  %744 = vmatprep.subr.bf16.mxu0 0
  %745 = vmatpush1.bf16.msra.mxu0 %v723
  %746 = vmatprep.subr.bf16.mxu0 0
  %747 = vmatpush2.bf16.msra.mxu0 0
  %748 = vmatprep.subr.bf16.mxu0 0
  %749 = vmatpush2.bf16.msra.mxu0 0
  %750 = vmatprep.subr.bf16.mxu0 0
  %751 = vmatpush2.bf16.msra.mxu0 0
  %752 = vmatprep.subr.bf16.mxu0 0
  %753 = vmatpush2.bf16.msra.mxu0 0
  %754 = vmatprep.subr.bf16.mxu0 0
  %755 = vmatpush2.bf16.msra.mxu0 0
  %756 = vmatprep.subr.bf16.mxu0 0
  %757 = vmatpush2.bf16.msra.mxu0 0
  %758 = vmatprep.subr.bf16.mxu0 0
  %759 = vmatpush2.bf16.msra.mxu0 0
  %760 = vmatprep.subr.bf16.mxu0 0
  %761 = vmatpush2.bf16.msra.mxu0 0
  %762 = vmatprep.mubr.bf16.mxu0 0
  %763 = vmatmul.mubr.bf16.gmra.mxu0 %v728
  %v764 = vpop.f32.mrf.mxu0
  %v765 = vadd.f32 0.0, %v764
  %v766 = vpop.f32.mrf.mxu0
  %v767 = vpop.f32.mrf.mxu0
  %v768 = vpop.f32.mrf.mxu0
  %769 = vdwg.mxu0
  %v774 = vunpack.c.l.b16 %v112
  %v775 = vunpack.c.l.b16 %v113
  %v776 = vunpack.c.l.b16 %v114
  %v777 = vunpack.c.l.b16 %v115
  %v778 = vpack.c.b16 %v775, %v774
  %v779 = vpack.c.b16 %v777, %v776
  %v783 = vsel %vm176, %v43, 0
  %785 = vmatprep.subr.bf16.mxu0 0
  %786 = vmatpush1.bf16.msra.mxu0 0
  %787 = vmatprep.subr.bf16.mxu0 0
  %788 = vmatpush1.bf16.msra.mxu0 0
  %789 = vmatprep.subr.bf16.mxu0 0
  %790 = vmatpush1.bf16.msra.mxu0 0
  %791 = vmatprep.subr.bf16.mxu0 0
  %792 = vmatpush1.bf16.msra.mxu0 0
  %793 = vmatprep.subr.bf16.mxu0 0
  %794 = vmatpush1.bf16.msra.mxu0 0
  %795 = vmatprep.subr.bf16.mxu0 0
  %796 = vmatpush1.bf16.msra.mxu0 0
  %797 = vmatprep.subr.bf16.mxu0 0
  %798 = vmatpush1.bf16.msra.mxu0 %v779
  %799 = vmatprep.subr.bf16.mxu0 0
  %800 = vmatpush1.bf16.msra.mxu0 %v778
  %801 = vmatprep.subr.bf16.mxu0 0
  %802 = vmatpush2.bf16.msra.mxu0 0
  %803 = vmatprep.subr.bf16.mxu0 0
  %804 = vmatpush2.bf16.msra.mxu0 0
  %805 = vmatprep.subr.bf16.mxu0 0
  %806 = vmatpush2.bf16.msra.mxu0 0
  %807 = vmatprep.subr.bf16.mxu0 0
  %808 = vmatpush2.bf16.msra.mxu0 0
  %809 = vmatprep.subr.bf16.mxu0 0
  %810 = vmatpush2.bf16.msra.mxu0 0
  %811 = vmatprep.subr.bf16.mxu0 0
  %812 = vmatpush2.bf16.msra.mxu0 0
  %813 = vmatprep.subr.bf16.mxu0 0
  %814 = vmatpush2.bf16.msra.mxu0 0
  %815 = vmatprep.subr.bf16.mxu0 0
  %816 = vmatpush2.bf16.msra.mxu0 0
  %817 = vmatprep.mubr.bf16.mxu0 0
  %818 = vmatmul.mubr.bf16.gmra.mxu0 %v783
  %v819 = vpop.f32.mrf.mxu0
  %v820 = vadd.f32 0.0, %v819
  %v821 = vpop.f32.mrf.mxu0
  %v822 = vpop.f32.mrf.mxu0
  %v823 = vpop.f32.mrf.mxu0
  %824 = vdwg.mxu0
  %v829 = vunpack.c.l.b16 %v116
  %v830 = vunpack.c.l.b16 %v117
  %v831 = vunpack.c.l.b16 %v118
  %v832 = vunpack.c.l.b16 %v119
  %v833 = vpack.c.b16 %v830, %v829
  %v834 = vpack.c.b16 %v832, %v831
  %v838 = vsel %vm176, %v56, 0
  %840 = vmatprep.subr.bf16.mxu0 0
  %841 = vmatpush1.bf16.msra.mxu0 0
  %842 = vmatprep.subr.bf16.mxu0 0
  %843 = vmatpush1.bf16.msra.mxu0 0
  %844 = vmatprep.subr.bf16.mxu0 0
  %845 = vmatpush1.bf16.msra.mxu0 0
  %846 = vmatprep.subr.bf16.mxu0 0
  %847 = vmatpush1.bf16.msra.mxu0 0
  %848 = vmatprep.subr.bf16.mxu0 0
  %849 = vmatpush1.bf16.msra.mxu0 0
  %850 = vmatprep.subr.bf16.mxu0 0
  %851 = vmatpush1.bf16.msra.mxu0 0
  %852 = vmatprep.subr.bf16.mxu0 0
  %853 = vmatpush1.bf16.msra.mxu0 %v834
  %854 = vmatprep.subr.bf16.mxu0 0
  %855 = vmatpush1.bf16.msra.mxu0 %v833
  %856 = vmatprep.subr.bf16.mxu0 0
  %857 = vmatpush2.bf16.msra.mxu0 0
  %858 = vmatprep.subr.bf16.mxu0 0
  %859 = vmatpush2.bf16.msra.mxu0 0
  %860 = vmatprep.subr.bf16.mxu0 0
  %861 = vmatpush2.bf16.msra.mxu0 0
  %862 = vmatprep.subr.bf16.mxu0 0
  %863 = vmatpush2.bf16.msra.mxu0 0
  %864 = vmatprep.subr.bf16.mxu0 0
  %865 = vmatpush2.bf16.msra.mxu0 0
  %866 = vmatprep.subr.bf16.mxu0 0
  %867 = vmatpush2.bf16.msra.mxu0 0
  %868 = vmatprep.subr.bf16.mxu0 0
  %869 = vmatpush2.bf16.msra.mxu0 0
  %870 = vmatprep.subr.bf16.mxu0 0
  %871 = vmatpush2.bf16.msra.mxu0 0
  %872 = vmatprep.mubr.bf16.mxu0 0
  %873 = vmatmul.mubr.bf16.gmra.mxu0 %v838
  %v874 = vpop.f32.mrf.mxu0
  %v875 = vadd.f32 0.0, %v874
  %v876 = vpop.f32.mrf.mxu0
  %v877 = vpop.f32.mrf.mxu0
  %v878 = vpop.f32.mrf.mxu0
  %879 = vdwg.mxu0
  %v884 = vunpack.c.l.b16 %v120
  %v885 = vunpack.c.l.b16 %v121
  %v886 = vunpack.c.l.b16 %v122
  %v887 = vunpack.c.l.b16 %v123
  %v888 = vpack.c.b16 %v885, %v884
  %v889 = vpack.c.b16 %v887, %v886
  %v893 = vsel %vm176, %v57, 0
  %895 = vmatprep.subr.bf16.mxu0 0
  %896 = vmatpush1.bf16.msra.mxu0 0
  %897 = vmatprep.subr.bf16.mxu0 0
  %898 = vmatpush1.bf16.msra.mxu0 0
  %899 = vmatprep.subr.bf16.mxu0 0
  %900 = vmatpush1.bf16.msra.mxu0 0
  %901 = vmatprep.subr.bf16.mxu0 0
  %902 = vmatpush1.bf16.msra.mxu0 0
  %903 = vmatprep.subr.bf16.mxu0 0
  %904 = vmatpush1.bf16.msra.mxu0 0
  %905 = vmatprep.subr.bf16.mxu0 0
  %906 = vmatpush1.bf16.msra.mxu0 0
  %907 = vmatprep.subr.bf16.mxu0 0
  %908 = vmatpush1.bf16.msra.mxu0 %v889
  %909 = vmatprep.subr.bf16.mxu0 0
  %910 = vmatpush1.bf16.msra.mxu0 %v888
  %911 = vmatprep.subr.bf16.mxu0 0
  %912 = vmatpush2.bf16.msra.mxu0 0
  %913 = vmatprep.subr.bf16.mxu0 0
  %914 = vmatpush2.bf16.msra.mxu0 0
  %915 = vmatprep.subr.bf16.mxu0 0
  %916 = vmatpush2.bf16.msra.mxu0 0
  %917 = vmatprep.subr.bf16.mxu0 0
  %918 = vmatpush2.bf16.msra.mxu0 0
  %919 = vmatprep.subr.bf16.mxu0 0
  %920 = vmatpush2.bf16.msra.mxu0 0
  %921 = vmatprep.subr.bf16.mxu0 0
  %922 = vmatpush2.bf16.msra.mxu0 0
  %923 = vmatprep.subr.bf16.mxu0 0
  %924 = vmatpush2.bf16.msra.mxu0 0
  %925 = vmatprep.subr.bf16.mxu0 0
  %926 = vmatpush2.bf16.msra.mxu0 0
  %927 = vmatprep.mubr.bf16.mxu0 0
  %928 = vmatmul.mubr.bf16.gmra.mxu0 %v893
  %v929 = vpop.f32.mrf.mxu0
  %v930 = vadd.f32 0.0, %v929
  %v931 = vpop.f32.mrf.mxu0
  %v932 = vpop.f32.mrf.mxu0
  %v933 = vpop.f32.mrf.mxu0
  %934 = vdwg.mxu0
  %v939 = vunpack.c.l.b16 %v124
  %v940 = vunpack.c.l.b16 %v125
  %v941 = vunpack.c.l.b16 %v126
  %v942 = vunpack.c.l.b16 %v127
  %v943 = vpack.c.b16 %v940, %v939
  %v944 = vpack.c.b16 %v942, %v941
  %v948 = vsel %vm176, %v58, 0
  %950 = vmatprep.subr.bf16.mxu0 0
  %951 = vmatpush1.bf16.msra.mxu0 0
  %952 = vmatprep.subr.bf16.mxu0 0
  %953 = vmatpush1.bf16.msra.mxu0 0
  %954 = vmatprep.subr.bf16.mxu0 0
  %955 = vmatpush1.bf16.msra.mxu0 0
  %956 = vmatprep.subr.bf16.mxu0 0
  %957 = vmatpush1.bf16.msra.mxu0 0
  %958 = vmatprep.subr.bf16.mxu0 0
  %959 = vmatpush1.bf16.msra.mxu0 0
  %960 = vmatprep.subr.bf16.mxu0 0
  %961 = vmatpush1.bf16.msra.mxu0 0
  %962 = vmatprep.subr.bf16.mxu0 0
  %963 = vmatpush1.bf16.msra.mxu0 %v944
  %964 = vmatprep.subr.bf16.mxu0 0
  %965 = vmatpush1.bf16.msra.mxu0 %v943
  %966 = vmatprep.subr.bf16.mxu0 0
  %967 = vmatpush2.bf16.msra.mxu0 0
  %968 = vmatprep.subr.bf16.mxu0 0
  %969 = vmatpush2.bf16.msra.mxu0 0
  %970 = vmatprep.subr.bf16.mxu0 0
  %971 = vmatpush2.bf16.msra.mxu0 0
  %972 = vmatprep.subr.bf16.mxu0 0
  %973 = vmatpush2.bf16.msra.mxu0 0
  %974 = vmatprep.subr.bf16.mxu0 0
  %975 = vmatpush2.bf16.msra.mxu0 0
  %976 = vmatprep.subr.bf16.mxu0 0
  %977 = vmatpush2.bf16.msra.mxu0 0
  %978 = vmatprep.subr.bf16.mxu0 0
  %979 = vmatpush2.bf16.msra.mxu0 0
  %980 = vmatprep.subr.bf16.mxu0 0
  %981 = vmatpush2.bf16.msra.mxu0 0
  %982 = vmatprep.mubr.bf16.mxu0 0
  %983 = vmatmul.mubr.bf16.gmra.mxu0 %v948
  %v984 = vpop.f32.mrf.mxu0
  %v985 = vadd.f32 0.0, %v984
  %v986 = vpop.f32.mrf.mxu0
  %v987 = vpop.f32.mrf.mxu0
  %v988 = vpop.f32.mrf.mxu0
  %989 = vdwg.mxu0
  %v994 = vunpack.c.l.b16 %v128
  %v995 = vunpack.c.l.b16 %v129
  %v996 = vunpack.c.l.b16 %v130
  %v997 = vunpack.c.l.b16 %v131
  %v998 = vpack.c.b16 %v995, %v994
  %v999 = vpack.c.b16 %v997, %v996
  %v1003 = vsel %vm176, %v59, 0
  %1005 = vmatprep.subr.bf16.mxu0 0
  %1006 = vmatpush1.bf16.msra.mxu0 0
  %1007 = vmatprep.subr.bf16.mxu0 0
  %1008 = vmatpush1.bf16.msra.mxu0 0
  %1009 = vmatprep.subr.bf16.mxu0 0
  %1010 = vmatpush1.bf16.msra.mxu0 0
  %1011 = vmatprep.subr.bf16.mxu0 0
  %1012 = vmatpush1.bf16.msra.mxu0 0
  %1013 = vmatprep.subr.bf16.mxu0 0
  %1014 = vmatpush1.bf16.msra.mxu0 0
  %1015 = vmatprep.subr.bf16.mxu0 0
  %1016 = vmatpush1.bf16.msra.mxu0 0
  %1017 = vmatprep.subr.bf16.mxu0 0
  %1018 = vmatpush1.bf16.msra.mxu0 %v999
  %1019 = vmatprep.subr.bf16.mxu0 0
  %1020 = vmatpush1.bf16.msra.mxu0 %v998
  %1021 = vmatprep.subr.bf16.mxu0 0
  %1022 = vmatpush2.bf16.msra.mxu0 0
  %1023 = vmatprep.subr.bf16.mxu0 0
  %1024 = vmatpush2.bf16.msra.mxu0 0
  %1025 = vmatprep.subr.bf16.mxu0 0
  %1026 = vmatpush2.bf16.msra.mxu0 0
  %1027 = vmatprep.subr.bf16.mxu0 0
  %1028 = vmatpush2.bf16.msra.mxu0 0
  %1029 = vmatprep.subr.bf16.mxu0 0
  %1030 = vmatpush2.bf16.msra.mxu0 0
  %1031 = vmatprep.subr.bf16.mxu0 0
  %1032 = vmatpush2.bf16.msra.mxu0 0
  %1033 = vmatprep.subr.bf16.mxu0 0
  %1034 = vmatpush2.bf16.msra.mxu0 0
  %1035 = vmatprep.subr.bf16.mxu0 0
  %1036 = vmatpush2.bf16.msra.mxu0 0
  %1037 = vmatprep.mubr.bf16.mxu0 0
  %1038 = vmatmul.mubr.bf16.gmra.mxu0 %v1003
  %v1039 = vpop.f32.mrf.mxu0
  %v1040 = vadd.f32 0.0, %v1039
  %v1041 = vpop.f32.mrf.mxu0
  %v1042 = vpop.f32.mrf.mxu0
  %v1043 = vpop.f32.mrf.mxu0
  %1044 = vdwg.mxu0
  %v1049 = vunpack.c.l.b16 %v132
  %v1050 = vunpack.c.l.b16 %v133
  %v1051 = vunpack.c.l.b16 %v134
  %v1052 = vunpack.c.l.b16 %v135
  %v1053 = vpack.c.b16 %v1050, %v1049
  %v1054 = vpack.c.b16 %v1052, %v1051
  %v1058 = vsel %vm176, %v60, 0
  %1060 = vmatprep.subr.bf16.mxu0 0
  %1061 = vmatpush1.bf16.msra.mxu0 0
  %1062 = vmatprep.subr.bf16.mxu0 0
  %1063 = vmatpush1.bf16.msra.mxu0 0
  %1064 = vmatprep.subr.bf16.mxu0 0
  %1065 = vmatpush1.bf16.msra.mxu0 0
  %1066 = vmatprep.subr.bf16.mxu0 0
  %1067 = vmatpush1.bf16.msra.mxu0 0
  %1068 = vmatprep.subr.bf16.mxu0 0
  %1069 = vmatpush1.bf16.msra.mxu0 0
  %1070 = vmatprep.subr.bf16.mxu0 0
  %1071 = vmatpush1.bf16.msra.mxu0 0
  %1072 = vmatprep.subr.bf16.mxu0 0
  %1073 = vmatpush1.bf16.msra.mxu0 %v1054
  %1074 = vmatprep.subr.bf16.mxu0 0
  %1075 = vmatpush1.bf16.msra.mxu0 %v1053
  %1076 = vmatprep.subr.bf16.mxu0 0
  %1077 = vmatpush2.bf16.msra.mxu0 0
  %1078 = vmatprep.subr.bf16.mxu0 0
  %1079 = vmatpush2.bf16.msra.mxu0 0
  %1080 = vmatprep.subr.bf16.mxu0 0
  %1081 = vmatpush2.bf16.msra.mxu0 0
  %1082 = vmatprep.subr.bf16.mxu0 0
  %1083 = vmatpush2.bf16.msra.mxu0 0
  %1084 = vmatprep.subr.bf16.mxu0 0
  %1085 = vmatpush2.bf16.msra.mxu0 0
  %1086 = vmatprep.subr.bf16.mxu0 0
  %1087 = vmatpush2.bf16.msra.mxu0 0
  %1088 = vmatprep.subr.bf16.mxu0 0
  %1089 = vmatpush2.bf16.msra.mxu0 0
  %1090 = vmatprep.subr.bf16.mxu0 0
  %1091 = vmatpush2.bf16.msra.mxu0 0
  %1092 = vmatprep.mubr.bf16.mxu0 0
  %1093 = vmatmul.mubr.bf16.gmra.mxu0 %v1058
  %v1094 = vpop.f32.mrf.mxu0
  %v1095 = vadd.f32 0.0, %v1094
  %v1096 = vpop.f32.mrf.mxu0
  %v1097 = vpop.f32.mrf.mxu0
  %v1098 = vpop.f32.mrf.mxu0
  %1099 = vdwg.mxu0
  %v1104 = vunpack.c.l.b16 %v136
  %v1105 = vunpack.c.l.b16 %v137
  %v1106 = vunpack.c.l.b16 %v138
  %v1107 = vunpack.c.l.b16 %v139
  %v1108 = vpack.c.b16 %v1105, %v1104
  %v1109 = vpack.c.b16 %v1107, %v1106
  %v1113 = vsel %vm176, %v61, 0
  %1115 = vmatprep.subr.bf16.mxu0 0
  %1116 = vmatpush1.bf16.msra.mxu0 0
  %1117 = vmatprep.subr.bf16.mxu0 0
  %1118 = vmatpush1.bf16.msra.mxu0 0
  %1119 = vmatprep.subr.bf16.mxu0 0
  %1120 = vmatpush1.bf16.msra.mxu0 0
  %1121 = vmatprep.subr.bf16.mxu0 0
  %1122 = vmatpush1.bf16.msra.mxu0 0
  %1123 = vmatprep.subr.bf16.mxu0 0
  %1124 = vmatpush1.bf16.msra.mxu0 0
  %1125 = vmatprep.subr.bf16.mxu0 0
  %1126 = vmatpush1.bf16.msra.mxu0 0
  %1127 = vmatprep.subr.bf16.mxu0 0
  %1128 = vmatpush1.bf16.msra.mxu0 %v1109
  %1129 = vmatprep.subr.bf16.mxu0 0
  %1130 = vmatpush1.bf16.msra.mxu0 %v1108
  %1131 = vmatprep.subr.bf16.mxu0 0
  %1132 = vmatpush2.bf16.msra.mxu0 0
  %1133 = vmatprep.subr.bf16.mxu0 0
  %1134 = vmatpush2.bf16.msra.mxu0 0
  %1135 = vmatprep.subr.bf16.mxu0 0
  %1136 = vmatpush2.bf16.msra.mxu0 0
  %1137 = vmatprep.subr.bf16.mxu0 0
  %1138 = vmatpush2.bf16.msra.mxu0 0
  %1139 = vmatprep.subr.bf16.mxu0 0
  %1140 = vmatpush2.bf16.msra.mxu0 0
  %1141 = vmatprep.subr.bf16.mxu0 0
  %1142 = vmatpush2.bf16.msra.mxu0 0
  %1143 = vmatprep.subr.bf16.mxu0 0
  %1144 = vmatpush2.bf16.msra.mxu0 0
  %1145 = vmatprep.subr.bf16.mxu0 0
  %1146 = vmatpush2.bf16.msra.mxu0 0
  %1147 = vmatprep.mubr.bf16.mxu0 0
  %1148 = vmatmul.mubr.bf16.gmra.mxu0 %v1113
  %v1149 = vpop.f32.mrf.mxu0
  %v1150 = vadd.f32 0.0, %v1149
  %v1151 = vpop.f32.mrf.mxu0
  %v1152 = vpop.f32.mrf.mxu0
  %v1153 = vpop.f32.mrf.mxu0
  %1154 = vdwg.mxu0
  %v1159 = vunpack.c.l.b16 %v140
  %v1160 = vunpack.c.l.b16 %v141
  %v1161 = vunpack.c.l.b16 %v142
  %v1162 = vunpack.c.l.b16 %v143
  %v1163 = vpack.c.b16 %v1160, %v1159
  %v1164 = vpack.c.b16 %v1162, %v1161
  %v1168 = vsel %vm176, %v62, 0
  %1170 = vmatprep.subr.bf16.mxu0 0
  %1171 = vmatpush1.bf16.msra.mxu0 0
  %1172 = vmatprep.subr.bf16.mxu0 0
  %1173 = vmatpush1.bf16.msra.mxu0 0
  %1174 = vmatprep.subr.bf16.mxu0 0
  %1175 = vmatpush1.bf16.msra.mxu0 0
  %1176 = vmatprep.subr.bf16.mxu0 0
  %1177 = vmatpush1.bf16.msra.mxu0 0
  %1178 = vmatprep.subr.bf16.mxu0 0
  %1179 = vmatpush1.bf16.msra.mxu0 0
  %1180 = vmatprep.subr.bf16.mxu0 0
  %1181 = vmatpush1.bf16.msra.mxu0 0
  %1182 = vmatprep.subr.bf16.mxu0 0
  %1183 = vmatpush1.bf16.msra.mxu0 %v1164
  %1184 = vmatprep.subr.bf16.mxu0 0
  %1185 = vmatpush1.bf16.msra.mxu0 %v1163
  %1186 = vmatprep.subr.bf16.mxu0 0
  %1187 = vmatpush2.bf16.msra.mxu0 0
  %1188 = vmatprep.subr.bf16.mxu0 0
  %1189 = vmatpush2.bf16.msra.mxu0 0
  %1190 = vmatprep.subr.bf16.mxu0 0
  %1191 = vmatpush2.bf16.msra.mxu0 0
  %1192 = vmatprep.subr.bf16.mxu0 0
  %1193 = vmatpush2.bf16.msra.mxu0 0
  %1194 = vmatprep.subr.bf16.mxu0 0
  %1195 = vmatpush2.bf16.msra.mxu0 0
  %1196 = vmatprep.subr.bf16.mxu0 0
  %1197 = vmatpush2.bf16.msra.mxu0 0
  %1198 = vmatprep.subr.bf16.mxu0 0
  %1199 = vmatpush2.bf16.msra.mxu0 0
  %1200 = vmatprep.subr.bf16.mxu0 0
  %1201 = vmatpush2.bf16.msra.mxu0 0
  %1202 = vmatprep.mubr.bf16.mxu0 0
  %1203 = vmatmul.mubr.bf16.gmra.mxu0 %v1168
  %v1204 = vpop.f32.mrf.mxu0
  %v1205 = vadd.f32 0.0, %v1204
  %v1206 = vpop.f32.mrf.mxu0
  %v1207 = vpop.f32.mrf.mxu0
  %v1208 = vpop.f32.mrf.mxu0
  %1209 = vdwg.mxu0
  %v1214 = vunpack.c.l.b16 %v144
  %v1215 = vunpack.c.l.b16 %v145
  %v1216 = vunpack.c.l.b16 %v146
  %v1217 = vunpack.c.l.b16 %v147
  %v1218 = vpack.c.b16 %v1215, %v1214
  %v1219 = vpack.c.b16 %v1217, %v1216
  %v1223 = vsel %vm176, %v63, 0
  %1225 = vmatprep.subr.bf16.mxu0 0
  %1226 = vmatpush1.bf16.msra.mxu0 0
  %1227 = vmatprep.subr.bf16.mxu0 0
  %1228 = vmatpush1.bf16.msra.mxu0 0
  %1229 = vmatprep.subr.bf16.mxu0 0
  %1230 = vmatpush1.bf16.msra.mxu0 0
  %1231 = vmatprep.subr.bf16.mxu0 0
  %1232 = vmatpush1.bf16.msra.mxu0 0
  %1233 = vmatprep.subr.bf16.mxu0 0
  %1234 = vmatpush1.bf16.msra.mxu0 0
  %1235 = vmatprep.subr.bf16.mxu0 0
  %1236 = vmatpush1.bf16.msra.mxu0 0
  %1237 = vmatprep.subr.bf16.mxu0 0
  %1238 = vmatpush1.bf16.msra.mxu0 %v1219
  %1239 = vmatprep.subr.bf16.mxu0 0
  %1240 = vmatpush1.bf16.msra.mxu0 %v1218
  %1241 = vmatprep.subr.bf16.mxu0 0
  %1242 = vmatpush2.bf16.msra.mxu0 0
  %1243 = vmatprep.subr.bf16.mxu0 0
  %1244 = vmatpush2.bf16.msra.mxu0 0
  %1245 = vmatprep.subr.bf16.mxu0 0
  %1246 = vmatpush2.bf16.msra.mxu0 0
  %1247 = vmatprep.subr.bf16.mxu0 0
  %1248 = vmatpush2.bf16.msra.mxu0 0
  %1249 = vmatprep.subr.bf16.mxu0 0
  %1250 = vmatpush2.bf16.msra.mxu0 0
  %1251 = vmatprep.subr.bf16.mxu0 0
  %1252 = vmatpush2.bf16.msra.mxu0 0
  %1253 = vmatprep.subr.bf16.mxu0 0
  %1254 = vmatpush2.bf16.msra.mxu0 0
  %1255 = vmatprep.subr.bf16.mxu0 0
  %1256 = vmatpush2.bf16.msra.mxu0 0
  %1257 = vmatprep.mubr.bf16.mxu0 0
  %1258 = vmatmul.mubr.bf16.gmra.mxu0 %v1223
  %v1259 = vpop.f32.mrf.mxu0
  %v1260 = vadd.f32 0.0, %v1259
  %v1261 = vpop.f32.mrf.mxu0
  %v1262 = vpop.f32.mrf.mxu0
  %v1263 = vpop.f32.mrf.mxu0
  %1264 = vdwg.mxu0
  %v1269 = vunpack.c.l.b16 %v148
  %v1270 = vunpack.c.l.b16 %v149
  %v1271 = vunpack.c.l.b16 %v150
  %v1272 = vunpack.c.l.b16 %v151
  %v1273 = vpack.c.b16 %v1270, %v1269
  %v1274 = vpack.c.b16 %v1272, %v1271
  %v1278 = vsel %vm176, %v64, 0
  %1280 = vmatprep.subr.bf16.mxu0 0
  %1281 = vmatpush1.bf16.msra.mxu0 0
  %1282 = vmatprep.subr.bf16.mxu0 0
  %1283 = vmatpush1.bf16.msra.mxu0 0
  %1284 = vmatprep.subr.bf16.mxu0 0
  %1285 = vmatpush1.bf16.msra.mxu0 0
  %1286 = vmatprep.subr.bf16.mxu0 0
  %1287 = vmatpush1.bf16.msra.mxu0 0
  %1288 = vmatprep.subr.bf16.mxu0 0
  %1289 = vmatpush1.bf16.msra.mxu0 0
  %1290 = vmatprep.subr.bf16.mxu0 0
  %1291 = vmatpush1.bf16.msra.mxu0 0
  %1292 = vmatprep.subr.bf16.mxu0 0
  %1293 = vmatpush1.bf16.msra.mxu0 %v1274
  %1294 = vmatprep.subr.bf16.mxu0 0
  %1295 = vmatpush1.bf16.msra.mxu0 %v1273
  %1296 = vmatprep.subr.bf16.mxu0 0
  %1297 = vmatpush2.bf16.msra.mxu0 0
  %1298 = vmatprep.subr.bf16.mxu0 0
  %1299 = vmatpush2.bf16.msra.mxu0 0
  %1300 = vmatprep.subr.bf16.mxu0 0
  %1301 = vmatpush2.bf16.msra.mxu0 0
  %1302 = vmatprep.subr.bf16.mxu0 0
  %1303 = vmatpush2.bf16.msra.mxu0 0
  %1304 = vmatprep.subr.bf16.mxu0 0
  %1305 = vmatpush2.bf16.msra.mxu0 0
  %1306 = vmatprep.subr.bf16.mxu0 0
  %1307 = vmatpush2.bf16.msra.mxu0 0
  %1308 = vmatprep.subr.bf16.mxu0 0
  %1309 = vmatpush2.bf16.msra.mxu0 0
  %1310 = vmatprep.subr.bf16.mxu0 0
  %1311 = vmatpush2.bf16.msra.mxu0 0
  %1312 = vmatprep.mubr.bf16.mxu0 0
  %1313 = vmatmul.mubr.bf16.gmra.mxu0 %v1278
  %v1314 = vpop.f32.mrf.mxu0
  %v1315 = vadd.f32 0.0, %v1314
  %v1316 = vpop.f32.mrf.mxu0
  %v1317 = vpop.f32.mrf.mxu0
  %v1318 = vpop.f32.mrf.mxu0
  %1319 = vdwg.mxu0
  %v1324 = vunpack.c.l.b16 %v152
  %v1325 = vunpack.c.l.b16 %v153
  %v1326 = vunpack.c.l.b16 %v154
  %v1327 = vunpack.c.l.b16 %v155
  %v1328 = vpack.c.b16 %v1325, %v1324
  %v1329 = vpack.c.b16 %v1327, %v1326
  %v1333 = vsel %vm176, %v65, 0
  %1335 = vmatprep.subr.bf16.mxu0 0
  %1336 = vmatpush1.bf16.msra.mxu0 0
  %1337 = vmatprep.subr.bf16.mxu0 0
  %1338 = vmatpush1.bf16.msra.mxu0 0
  %1339 = vmatprep.subr.bf16.mxu0 0
  %1340 = vmatpush1.bf16.msra.mxu0 0
  %1341 = vmatprep.subr.bf16.mxu0 0
  %1342 = vmatpush1.bf16.msra.mxu0 0
  %1343 = vmatprep.subr.bf16.mxu0 0
  %1344 = vmatpush1.bf16.msra.mxu0 0
  %1345 = vmatprep.subr.bf16.mxu0 0
  %1346 = vmatpush1.bf16.msra.mxu0 0
  %1347 = vmatprep.subr.bf16.mxu0 0
  %1348 = vmatpush1.bf16.msra.mxu0 %v1329
  %1349 = vmatprep.subr.bf16.mxu0 0
  %1350 = vmatpush1.bf16.msra.mxu0 %v1328
  %1351 = vmatprep.subr.bf16.mxu0 0
  %1352 = vmatpush2.bf16.msra.mxu0 0
  %1353 = vmatprep.subr.bf16.mxu0 0
  %1354 = vmatpush2.bf16.msra.mxu0 0
  %1355 = vmatprep.subr.bf16.mxu0 0
  %1356 = vmatpush2.bf16.msra.mxu0 0
  %1357 = vmatprep.subr.bf16.mxu0 0
  %1358 = vmatpush2.bf16.msra.mxu0 0
  %1359 = vmatprep.subr.bf16.mxu0 0
  %1360 = vmatpush2.bf16.msra.mxu0 0
  %1361 = vmatprep.subr.bf16.mxu0 0
  %1362 = vmatpush2.bf16.msra.mxu0 0
  %1363 = vmatprep.subr.bf16.mxu0 0
  %1364 = vmatpush2.bf16.msra.mxu0 0
  %1365 = vmatprep.subr.bf16.mxu0 0
  %1366 = vmatpush2.bf16.msra.mxu0 0
  %1367 = vmatprep.mubr.bf16.mxu0 0
  %1368 = vmatmul.mubr.bf16.gmra.mxu0 %v1333
  %v1369 = vpop.f32.mrf.mxu0
  %v1370 = vadd.f32 0.0, %v1369
  %v1371 = vpop.f32.mrf.mxu0
  %v1372 = vpop.f32.mrf.mxu0
  %v1373 = vpop.f32.mrf.mxu0
  %1374 = vdwg.mxu0
  %v1379 = vunpack.c.l.b16 %v156
  %v1380 = vunpack.c.l.b16 %v157
  %v1381 = vunpack.c.l.b16 %v158
  %v1382 = vunpack.c.l.b16 %v159
  %v1383 = vpack.c.b16 %v1380, %v1379
  %v1384 = vpack.c.b16 %v1382, %v1381
  %v1388 = vsel %vm176, %v66, 0
  %1390 = vmatprep.subr.bf16.mxu0 0
  %1391 = vmatpush1.bf16.msra.mxu0 0
  %1392 = vmatprep.subr.bf16.mxu0 0
  %1393 = vmatpush1.bf16.msra.mxu0 0
  %1394 = vmatprep.subr.bf16.mxu0 0
  %1395 = vmatpush1.bf16.msra.mxu0 0
  %1396 = vmatprep.subr.bf16.mxu0 0
  %1397 = vmatpush1.bf16.msra.mxu0 0
  %1398 = vmatprep.subr.bf16.mxu0 0
  %1399 = vmatpush1.bf16.msra.mxu0 0
  %1400 = vmatprep.subr.bf16.mxu0 0
  %1401 = vmatpush1.bf16.msra.mxu0 0
  %1402 = vmatprep.subr.bf16.mxu0 0
  %1403 = vmatpush1.bf16.msra.mxu0 %v1384
  %1404 = vmatprep.subr.bf16.mxu0 0
  %1405 = vmatpush1.bf16.msra.mxu0 %v1383
  %1406 = vmatprep.subr.bf16.mxu0 0
  %1407 = vmatpush2.bf16.msra.mxu0 0
  %1408 = vmatprep.subr.bf16.mxu0 0
  %1409 = vmatpush2.bf16.msra.mxu0 0
  %1410 = vmatprep.subr.bf16.mxu0 0
  %1411 = vmatpush2.bf16.msra.mxu0 0
  %1412 = vmatprep.subr.bf16.mxu0 0
  %1413 = vmatpush2.bf16.msra.mxu0 0
  %1414 = vmatprep.subr.bf16.mxu0 0
  %1415 = vmatpush2.bf16.msra.mxu0 0
  %1416 = vmatprep.subr.bf16.mxu0 0
  %1417 = vmatpush2.bf16.msra.mxu0 0
  %1418 = vmatprep.subr.bf16.mxu0 0
  %1419 = vmatpush2.bf16.msra.mxu0 0
  %1420 = vmatprep.subr.bf16.mxu0 0
  %1421 = vmatpush2.bf16.msra.mxu0 0
  %1422 = vmatprep.mubr.bf16.mxu0 0
  %1423 = vmatmul.mubr.bf16.gmra.mxu0 %v1388
  %v1424 = vpop.f32.mrf.mxu0
  %v1425 = vadd.f32 0.0, %v1424
  %v1426 = vpop.f32.mrf.mxu0
  %v1427 = vpop.f32.mrf.mxu0
  %v1428 = vpop.f32.mrf.mxu0
  %1429 = vdwg.mxu0
  %v1434 = vunpack.c.l.b16 %v160
  %v1435 = vunpack.c.l.b16 %v161
  %v1436 = vunpack.c.l.b16 %v162
  %v1437 = vunpack.c.l.b16 %v163
  %v1438 = vpack.c.b16 %v1435, %v1434
  %v1439 = vpack.c.b16 %v1437, %v1436
  %v1443 = vsel %vm176, %v67, 0
  %1445 = vmatprep.subr.bf16.mxu0 0
  %1446 = vmatpush1.bf16.msra.mxu0 0
  %1447 = vmatprep.subr.bf16.mxu0 0
  %1448 = vmatpush1.bf16.msra.mxu0 0
  %1449 = vmatprep.subr.bf16.mxu0 0
  %1450 = vmatpush1.bf16.msra.mxu0 0
  %1451 = vmatprep.subr.bf16.mxu0 0
  %1452 = vmatpush1.bf16.msra.mxu0 0
  %1453 = vmatprep.subr.bf16.mxu0 0
  %1454 = vmatpush1.bf16.msra.mxu0 0
  %1455 = vmatprep.subr.bf16.mxu0 0
  %1456 = vmatpush1.bf16.msra.mxu0 0
  %1457 = vmatprep.subr.bf16.mxu0 0
  %1458 = vmatpush1.bf16.msra.mxu0 %v1439
  %1459 = vmatprep.subr.bf16.mxu0 0
  %1460 = vmatpush1.bf16.msra.mxu0 %v1438
  %1461 = vmatprep.subr.bf16.mxu0 0
  %1462 = vmatpush2.bf16.msra.mxu0 0
  %1463 = vmatprep.subr.bf16.mxu0 0
  %1464 = vmatpush2.bf16.msra.mxu0 0
  %1465 = vmatprep.subr.bf16.mxu0 0
  %1466 = vmatpush2.bf16.msra.mxu0 0
  %1467 = vmatprep.subr.bf16.mxu0 0
  %1468 = vmatpush2.bf16.msra.mxu0 0
  %1469 = vmatprep.subr.bf16.mxu0 0
  %1470 = vmatpush2.bf16.msra.mxu0 0
  %1471 = vmatprep.subr.bf16.mxu0 0
  %1472 = vmatpush2.bf16.msra.mxu0 0
  %1473 = vmatprep.subr.bf16.mxu0 0
  %1474 = vmatpush2.bf16.msra.mxu0 0
  %1475 = vmatprep.subr.bf16.mxu0 0
  %1476 = vmatpush2.bf16.msra.mxu0 0
  %1477 = vmatprep.mubr.bf16.mxu0 0
  %1478 = vmatmul.mubr.bf16.gmra.mxu0 %v1443
  %v1479 = vpop.f32.mrf.mxu0
  %v1480 = vadd.f32 0.0, %v1479
  %v1481 = vpop.f32.mrf.mxu0
  %v1482 = vpop.f32.mrf.mxu0
  %v1483 = vpop.f32.mrf.mxu0
  %1484 = vdwg.mxu0
  %1485 = vmatprep.subr.bf16.mxu0 0
  %1486 = vmatpush1.bf16.msra.mxu0 0
  %1487 = vmatprep.subr.bf16.mxu0 0
  %1488 = vmatpush1.bf16.msra.mxu0 0
  %1489 = vmatprep.subr.bf16.mxu0 0
  %1490 = vmatpush1.bf16.msra.mxu0 0
  %1491 = vmatprep.subr.bf16.mxu0 0
  %1492 = vmatpush1.bf16.msra.mxu0 0
  %1493 = vmatprep.subr.bf16.mxu0 0
  %1494 = vmatpush1.bf16.msra.mxu0 0
  %1495 = vmatprep.subr.bf16.mxu0 0
  %1496 = vmatpush1.bf16.msra.mxu0 0
  %1497 = vmatprep.subr.bf16.mxu0 0
  %1498 = vmatpush1.bf16.msra.mxu0 %v173
  %1499 = vmatprep.subr.bf16.mxu0 0
  %1500 = vmatpush1.bf16.msra.mxu0 %v172
  %1501 = vmatprep.subr.bf16.mxu0 0
  %1502 = vmatpush2.bf16.msra.mxu0 0
  %1503 = vmatprep.subr.bf16.mxu0 0
  %1504 = vmatpush2.bf16.msra.mxu0 0
  %1505 = vmatprep.subr.bf16.mxu0 0
  %1506 = vmatpush2.bf16.msra.mxu0 0
  %1507 = vmatprep.subr.bf16.mxu0 0
  %1508 = vmatpush2.bf16.msra.mxu0 0
  %1509 = vmatprep.subr.bf16.mxu0 0
  %1510 = vmatpush2.bf16.msra.mxu0 0
  %1511 = vmatprep.subr.bf16.mxu0 0
  %1512 = vmatpush2.bf16.msra.mxu0 0
  %1513 = vmatprep.subr.bf16.mxu0 0
  %1514 = vmatpush2.bf16.msra.mxu0 0
  %1515 = vmatprep.subr.bf16.mxu0 0
  %1516 = vmatpush2.bf16.msra.mxu0 0
  %1517 = vmatprep.mubr.bf16.mxu0 0
  %1518 = vmatmul.mubr.bf16.gmra.mxu0 %v838
  %v1519 = vpop.f32.mrf.mxu0
  %v1520 = vadd.f32 0.0, %v1519
  %v1521 = vpop.f32.mrf.mxu0
  %v1522 = vpop.f32.mrf.mxu0
  %v1523 = vpop.f32.mrf.mxu0
  %1524 = vdwg.mxu0
  %1525 = vmatprep.subr.bf16.mxu0 0
  %1526 = vmatpush1.bf16.msra.mxu0 0
  %1527 = vmatprep.subr.bf16.mxu0 0
  %1528 = vmatpush1.bf16.msra.mxu0 0
  %1529 = vmatprep.subr.bf16.mxu0 0
  %1530 = vmatpush1.bf16.msra.mxu0 0
  %1531 = vmatprep.subr.bf16.mxu0 0
  %1532 = vmatpush1.bf16.msra.mxu0 0
  %1533 = vmatprep.subr.bf16.mxu0 0
  %1534 = vmatpush1.bf16.msra.mxu0 0
  %1535 = vmatprep.subr.bf16.mxu0 0
  %1536 = vmatpush1.bf16.msra.mxu0 0
  %1537 = vmatprep.subr.bf16.mxu0 0
  %1538 = vmatpush1.bf16.msra.mxu0 %v229
  %1539 = vmatprep.subr.bf16.mxu0 0
  %1540 = vmatpush1.bf16.msra.mxu0 %v228
  %1541 = vmatprep.subr.bf16.mxu0 0
  %1542 = vmatpush2.bf16.msra.mxu0 0
  %1543 = vmatprep.subr.bf16.mxu0 0
  %1544 = vmatpush2.bf16.msra.mxu0 0
  %1545 = vmatprep.subr.bf16.mxu0 0
  %1546 = vmatpush2.bf16.msra.mxu0 0
  %1547 = vmatprep.subr.bf16.mxu0 0
  %1548 = vmatpush2.bf16.msra.mxu0 0
  %1549 = vmatprep.subr.bf16.mxu0 0
  %1550 = vmatpush2.bf16.msra.mxu0 0
  %1551 = vmatprep.subr.bf16.mxu0 0
  %1552 = vmatpush2.bf16.msra.mxu0 0
  %1553 = vmatprep.subr.bf16.mxu0 0
  %1554 = vmatpush2.bf16.msra.mxu0 0
  %1555 = vmatprep.subr.bf16.mxu0 0
  %1556 = vmatpush2.bf16.msra.mxu0 0
  %1557 = vmatprep.mubr.bf16.mxu0 0
  %1558 = vmatmul.mubr.bf16.gmra.mxu0 %v893
  %v1559 = vpop.f32.mrf.mxu0
  %v1560 = vadd.f32 0.0, %v1559
  %v1561 = vpop.f32.mrf.mxu0
  %v1562 = vpop.f32.mrf.mxu0
  %v1563 = vpop.f32.mrf.mxu0
  %1564 = vdwg.mxu0
  %1565 = vmatprep.subr.bf16.mxu0 0
  %1566 = vmatpush1.bf16.msra.mxu0 0
  %1567 = vmatprep.subr.bf16.mxu0 0
  %1568 = vmatpush1.bf16.msra.mxu0 0
  %1569 = vmatprep.subr.bf16.mxu0 0
  %1570 = vmatpush1.bf16.msra.mxu0 0
  %1571 = vmatprep.subr.bf16.mxu0 0
  %1572 = vmatpush1.bf16.msra.mxu0 0
  %1573 = vmatprep.subr.bf16.mxu0 0
  %1574 = vmatpush1.bf16.msra.mxu0 0
  %1575 = vmatprep.subr.bf16.mxu0 0
  %1576 = vmatpush1.bf16.msra.mxu0 0
  %1577 = vmatprep.subr.bf16.mxu0 0
  %1578 = vmatpush1.bf16.msra.mxu0 %v284
  %1579 = vmatprep.subr.bf16.mxu0 0
  %1580 = vmatpush1.bf16.msra.mxu0 %v283
  %1581 = vmatprep.subr.bf16.mxu0 0
  %1582 = vmatpush2.bf16.msra.mxu0 0
  %1583 = vmatprep.subr.bf16.mxu0 0
  %1584 = vmatpush2.bf16.msra.mxu0 0
  %1585 = vmatprep.subr.bf16.mxu0 0
  %1586 = vmatpush2.bf16.msra.mxu0 0
  %1587 = vmatprep.subr.bf16.mxu0 0
  %1588 = vmatpush2.bf16.msra.mxu0 0
  %1589 = vmatprep.subr.bf16.mxu0 0
  %1590 = vmatpush2.bf16.msra.mxu0 0
  %1591 = vmatprep.subr.bf16.mxu0 0
  %1592 = vmatpush2.bf16.msra.mxu0 0
  %1593 = vmatprep.subr.bf16.mxu0 0
  %1594 = vmatpush2.bf16.msra.mxu0 0
  %1595 = vmatprep.subr.bf16.mxu0 0
  %1596 = vmatpush2.bf16.msra.mxu0 0
  %1597 = vmatprep.mubr.bf16.mxu0 0
  %1598 = vmatmul.mubr.bf16.gmra.mxu0 %v948
  %v1599 = vpop.f32.mrf.mxu0
  %v1600 = vadd.f32 0.0, %v1599
  %v1601 = vpop.f32.mrf.mxu0
  %v1602 = vpop.f32.mrf.mxu0
  %v1603 = vpop.f32.mrf.mxu0
  %1604 = vdwg.mxu0
  %1605 = vmatprep.subr.bf16.mxu0 0
  %1606 = vmatpush1.bf16.msra.mxu0 0
  %1607 = vmatprep.subr.bf16.mxu0 0
  %1608 = vmatpush1.bf16.msra.mxu0 0
  %1609 = vmatprep.subr.bf16.mxu0 0
  %1610 = vmatpush1.bf16.msra.mxu0 0
  %1611 = vmatprep.subr.bf16.mxu0 0
  %1612 = vmatpush1.bf16.msra.mxu0 0
  %1613 = vmatprep.subr.bf16.mxu0 0
  %1614 = vmatpush1.bf16.msra.mxu0 0
  %1615 = vmatprep.subr.bf16.mxu0 0
  %1616 = vmatpush1.bf16.msra.mxu0 0
  %1617 = vmatprep.subr.bf16.mxu0 0
  %1618 = vmatpush1.bf16.msra.mxu0 %v339
  %1619 = vmatprep.subr.bf16.mxu0 0
  %1620 = vmatpush1.bf16.msra.mxu0 %v338
  %1621 = vmatprep.subr.bf16.mxu0 0
  %1622 = vmatpush2.bf16.msra.mxu0 0
  %1623 = vmatprep.subr.bf16.mxu0 0
  %1624 = vmatpush2.bf16.msra.mxu0 0
  %1625 = vmatprep.subr.bf16.mxu0 0
  %1626 = vmatpush2.bf16.msra.mxu0 0
  %1627 = vmatprep.subr.bf16.mxu0 0
  %1628 = vmatpush2.bf16.msra.mxu0 0
  %1629 = vmatprep.subr.bf16.mxu0 0
  %1630 = vmatpush2.bf16.msra.mxu0 0
  %1631 = vmatprep.subr.bf16.mxu0 0
  %1632 = vmatpush2.bf16.msra.mxu0 0
  %1633 = vmatprep.subr.bf16.mxu0 0
  %1634 = vmatpush2.bf16.msra.mxu0 0
  %1635 = vmatprep.subr.bf16.mxu0 0
  %1636 = vmatpush2.bf16.msra.mxu0 0
  %1637 = vmatprep.mubr.bf16.mxu0 0
  %1638 = vmatmul.mubr.bf16.gmra.mxu0 %v1003
  %v1639 = vpop.f32.mrf.mxu0
  %v1640 = vadd.f32 0.0, %v1639
  %v1641 = vpop.f32.mrf.mxu0
  %v1642 = vpop.f32.mrf.mxu0
  %v1643 = vpop.f32.mrf.mxu0
  %1644 = vdwg.mxu0
  %1645 = vmatprep.subr.bf16.mxu0 0
  %1646 = vmatpush1.bf16.msra.mxu0 0
  %1647 = vmatprep.subr.bf16.mxu0 0
  %1648 = vmatpush1.bf16.msra.mxu0 0
  %1649 = vmatprep.subr.bf16.mxu0 0
  %1650 = vmatpush1.bf16.msra.mxu0 0
  %1651 = vmatprep.subr.bf16.mxu0 0
  %1652 = vmatpush1.bf16.msra.mxu0 0
  %1653 = vmatprep.subr.bf16.mxu0 0
  %1654 = vmatpush1.bf16.msra.mxu0 0
  %1655 = vmatprep.subr.bf16.mxu0 0
  %1656 = vmatpush1.bf16.msra.mxu0 0
  %1657 = vmatprep.subr.bf16.mxu0 0
  %1658 = vmatpush1.bf16.msra.mxu0 %v394
  %1659 = vmatprep.subr.bf16.mxu0 0
  %1660 = vmatpush1.bf16.msra.mxu0 %v393
  %1661 = vmatprep.subr.bf16.mxu0 0
  %1662 = vmatpush2.bf16.msra.mxu0 0
  %1663 = vmatprep.subr.bf16.mxu0 0
  %1664 = vmatpush2.bf16.msra.mxu0 0
  %1665 = vmatprep.subr.bf16.mxu0 0
  %1666 = vmatpush2.bf16.msra.mxu0 0
  %1667 = vmatprep.subr.bf16.mxu0 0
  %1668 = vmatpush2.bf16.msra.mxu0 0
  %1669 = vmatprep.subr.bf16.mxu0 0
  %1670 = vmatpush2.bf16.msra.mxu0 0
  %1671 = vmatprep.subr.bf16.mxu0 0
  %1672 = vmatpush2.bf16.msra.mxu0 0
  %1673 = vmatprep.subr.bf16.mxu0 0
  %1674 = vmatpush2.bf16.msra.mxu0 0
  %1675 = vmatprep.subr.bf16.mxu0 0
  %1676 = vmatpush2.bf16.msra.mxu0 0
  %1677 = vmatprep.mubr.bf16.mxu0 0
  %1678 = vmatmul.mubr.bf16.gmra.mxu0 %v1058
  %v1679 = vpop.f32.mrf.mxu0
  %v1680 = vadd.f32 0.0, %v1679
  %v1681 = vpop.f32.mrf.mxu0
  %v1682 = vpop.f32.mrf.mxu0
  %v1683 = vpop.f32.mrf.mxu0
  %1684 = vdwg.mxu0
  %1685 = vmatprep.subr.bf16.mxu0 0
  %1686 = vmatpush1.bf16.msra.mxu0 0
  %1687 = vmatprep.subr.bf16.mxu0 0
  %1688 = vmatpush1.bf16.msra.mxu0 0
  %1689 = vmatprep.subr.bf16.mxu0 0
  %1690 = vmatpush1.bf16.msra.mxu0 0
  %1691 = vmatprep.subr.bf16.mxu0 0
  %1692 = vmatpush1.bf16.msra.mxu0 0
  %1693 = vmatprep.subr.bf16.mxu0 0
  %1694 = vmatpush1.bf16.msra.mxu0 0
  %1695 = vmatprep.subr.bf16.mxu0 0
  %1696 = vmatpush1.bf16.msra.mxu0 0
  %1697 = vmatprep.subr.bf16.mxu0 0
  %1698 = vmatpush1.bf16.msra.mxu0 %v449
  %1699 = vmatprep.subr.bf16.mxu0 0
  %1700 = vmatpush1.bf16.msra.mxu0 %v448
  %1701 = vmatprep.subr.bf16.mxu0 0
  %1702 = vmatpush2.bf16.msra.mxu0 0
  %1703 = vmatprep.subr.bf16.mxu0 0
  %1704 = vmatpush2.bf16.msra.mxu0 0
  %1705 = vmatprep.subr.bf16.mxu0 0
  %1706 = vmatpush2.bf16.msra.mxu0 0
  %1707 = vmatprep.subr.bf16.mxu0 0
  %1708 = vmatpush2.bf16.msra.mxu0 0
  %1709 = vmatprep.subr.bf16.mxu0 0
  %1710 = vmatpush2.bf16.msra.mxu0 0
  %1711 = vmatprep.subr.bf16.mxu0 0
  %1712 = vmatpush2.bf16.msra.mxu0 0
  %1713 = vmatprep.subr.bf16.mxu0 0
  %1714 = vmatpush2.bf16.msra.mxu0 0
  %1715 = vmatprep.subr.bf16.mxu0 0
  %1716 = vmatpush2.bf16.msra.mxu0 0
  %1717 = vmatprep.mubr.bf16.mxu0 0
  %1718 = vmatmul.mubr.bf16.gmra.mxu0 %v1113
  %v1719 = vpop.f32.mrf.mxu0
  %v1720 = vadd.f32 0.0, %v1719
  %v1721 = vpop.f32.mrf.mxu0
  %v1722 = vpop.f32.mrf.mxu0
  %v1723 = vpop.f32.mrf.mxu0
  %1724 = vdwg.mxu0
  %1725 = vmatprep.subr.bf16.mxu0 0
  %1726 = vmatpush1.bf16.msra.mxu0 0
  %1727 = vmatprep.subr.bf16.mxu0 0
  %1728 = vmatpush1.bf16.msra.mxu0 0
  %1729 = vmatprep.subr.bf16.mxu0 0
  %1730 = vmatpush1.bf16.msra.mxu0 0
  %1731 = vmatprep.subr.bf16.mxu0 0
  %1732 = vmatpush1.bf16.msra.mxu0 0
  %1733 = vmatprep.subr.bf16.mxu0 0
  %1734 = vmatpush1.bf16.msra.mxu0 0
  %1735 = vmatprep.subr.bf16.mxu0 0
  %1736 = vmatpush1.bf16.msra.mxu0 0
  %1737 = vmatprep.subr.bf16.mxu0 0
  %1738 = vmatpush1.bf16.msra.mxu0 %v504
  %1739 = vmatprep.subr.bf16.mxu0 0
  %1740 = vmatpush1.bf16.msra.mxu0 %v503
  %1741 = vmatprep.subr.bf16.mxu0 0
  %1742 = vmatpush2.bf16.msra.mxu0 0
  %1743 = vmatprep.subr.bf16.mxu0 0
  %1744 = vmatpush2.bf16.msra.mxu0 0
  %1745 = vmatprep.subr.bf16.mxu0 0
  %1746 = vmatpush2.bf16.msra.mxu0 0
  %1747 = vmatprep.subr.bf16.mxu0 0
  %1748 = vmatpush2.bf16.msra.mxu0 0
  %1749 = vmatprep.subr.bf16.mxu0 0
  %1750 = vmatpush2.bf16.msra.mxu0 0
  %1751 = vmatprep.subr.bf16.mxu0 0
  %1752 = vmatpush2.bf16.msra.mxu0 0
  %1753 = vmatprep.subr.bf16.mxu0 0
  %1754 = vmatpush2.bf16.msra.mxu0 0
  %1755 = vmatprep.subr.bf16.mxu0 0
  %1756 = vmatpush2.bf16.msra.mxu0 0
  %1757 = vmatprep.mubr.bf16.mxu0 0
  %1758 = vmatmul.mubr.bf16.gmra.mxu0 %v1168
  %v1759 = vpop.f32.mrf.mxu0
  %v1760 = vadd.f32 0.0, %v1759
  %v1761 = vpop.f32.mrf.mxu0
  %v1762 = vpop.f32.mrf.mxu0
  %v1763 = vpop.f32.mrf.mxu0
  %1764 = vdwg.mxu0
  %1765 = vmatprep.subr.bf16.mxu0 0
  %1766 = vmatpush1.bf16.msra.mxu0 0
  %1767 = vmatprep.subr.bf16.mxu0 0
  %1768 = vmatpush1.bf16.msra.mxu0 0
  %1769 = vmatprep.subr.bf16.mxu0 0
  %1770 = vmatpush1.bf16.msra.mxu0 0
  %1771 = vmatprep.subr.bf16.mxu0 0
  %1772 = vmatpush1.bf16.msra.mxu0 0
  %1773 = vmatprep.subr.bf16.mxu0 0
  %1774 = vmatpush1.bf16.msra.mxu0 0
  %1775 = vmatprep.subr.bf16.mxu0 0
  %1776 = vmatpush1.bf16.msra.mxu0 0
  %1777 = vmatprep.subr.bf16.mxu0 0
  %1778 = vmatpush1.bf16.msra.mxu0 %v559
  %1779 = vmatprep.subr.bf16.mxu0 0
  %1780 = vmatpush1.bf16.msra.mxu0 %v558
  %1781 = vmatprep.subr.bf16.mxu0 0
  %1782 = vmatpush2.bf16.msra.mxu0 0
  %1783 = vmatprep.subr.bf16.mxu0 0
  %1784 = vmatpush2.bf16.msra.mxu0 0
  %1785 = vmatprep.subr.bf16.mxu0 0
  %1786 = vmatpush2.bf16.msra.mxu0 0
  %1787 = vmatprep.subr.bf16.mxu0 0
  %1788 = vmatpush2.bf16.msra.mxu0 0
  %1789 = vmatprep.subr.bf16.mxu0 0
  %1790 = vmatpush2.bf16.msra.mxu0 0
  %1791 = vmatprep.subr.bf16.mxu0 0
  %1792 = vmatpush2.bf16.msra.mxu0 0
  %1793 = vmatprep.subr.bf16.mxu0 0
  %1794 = vmatpush2.bf16.msra.mxu0 0
  %1795 = vmatprep.subr.bf16.mxu0 0
  %1796 = vmatpush2.bf16.msra.mxu0 0
  %1797 = vmatprep.mubr.bf16.mxu0 0
  %1798 = vmatmul.mubr.bf16.gmra.mxu0 %v1223
  %v1799 = vpop.f32.mrf.mxu0
  %v1800 = vadd.f32 0.0, %v1799
  %v1801 = vpop.f32.mrf.mxu0
  %v1802 = vpop.f32.mrf.mxu0
  %v1803 = vpop.f32.mrf.mxu0
  %1804 = vdwg.mxu0
  %1805 = vmatprep.subr.bf16.mxu0 0
  %1806 = vmatpush1.bf16.msra.mxu0 0
  %1807 = vmatprep.subr.bf16.mxu0 0
  %1808 = vmatpush1.bf16.msra.mxu0 0
  %1809 = vmatprep.subr.bf16.mxu0 0
  %1810 = vmatpush1.bf16.msra.mxu0 0
  %1811 = vmatprep.subr.bf16.mxu0 0
  %1812 = vmatpush1.bf16.msra.mxu0 0
  %1813 = vmatprep.subr.bf16.mxu0 0
  %1814 = vmatpush1.bf16.msra.mxu0 0
  %1815 = vmatprep.subr.bf16.mxu0 0
  %1816 = vmatpush1.bf16.msra.mxu0 0
  %1817 = vmatprep.subr.bf16.mxu0 0
  %1818 = vmatpush1.bf16.msra.mxu0 %v614
  %1819 = vmatprep.subr.bf16.mxu0 0
  %1820 = vmatpush1.bf16.msra.mxu0 %v613
  %1821 = vmatprep.subr.bf16.mxu0 0
  %1822 = vmatpush2.bf16.msra.mxu0 0
  %1823 = vmatprep.subr.bf16.mxu0 0
  %1824 = vmatpush2.bf16.msra.mxu0 0
  %1825 = vmatprep.subr.bf16.mxu0 0
  %1826 = vmatpush2.bf16.msra.mxu0 0
  %1827 = vmatprep.subr.bf16.mxu0 0
  %1828 = vmatpush2.bf16.msra.mxu0 0
  %1829 = vmatprep.subr.bf16.mxu0 0
  %1830 = vmatpush2.bf16.msra.mxu0 0
  %1831 = vmatprep.subr.bf16.mxu0 0
  %1832 = vmatpush2.bf16.msra.mxu0 0
  %1833 = vmatprep.subr.bf16.mxu0 0
  %1834 = vmatpush2.bf16.msra.mxu0 0
  %1835 = vmatprep.subr.bf16.mxu0 0
  %1836 = vmatpush2.bf16.msra.mxu0 0
  %1837 = vmatprep.mubr.bf16.mxu0 0
  %1838 = vmatmul.mubr.bf16.gmra.mxu0 %v1278
  %v1839 = vpop.f32.mrf.mxu0
  %v1840 = vadd.f32 0.0, %v1839
  %v1841 = vpop.f32.mrf.mxu0
  %v1842 = vpop.f32.mrf.mxu0
  %v1843 = vpop.f32.mrf.mxu0
  %1844 = vdwg.mxu0
  %1845 = vmatprep.subr.bf16.mxu0 0
  %1846 = vmatpush1.bf16.msra.mxu0 0
  %1847 = vmatprep.subr.bf16.mxu0 0
  %1848 = vmatpush1.bf16.msra.mxu0 0
  %1849 = vmatprep.subr.bf16.mxu0 0
  %1850 = vmatpush1.bf16.msra.mxu0 0
  %1851 = vmatprep.subr.bf16.mxu0 0
  %1852 = vmatpush1.bf16.msra.mxu0 0
  %1853 = vmatprep.subr.bf16.mxu0 0
  %1854 = vmatpush1.bf16.msra.mxu0 0
  %1855 = vmatprep.subr.bf16.mxu0 0
  %1856 = vmatpush1.bf16.msra.mxu0 0
  %1857 = vmatprep.subr.bf16.mxu0 0
  %1858 = vmatpush1.bf16.msra.mxu0 %v669
  %1859 = vmatprep.subr.bf16.mxu0 0
  %1860 = vmatpush1.bf16.msra.mxu0 %v668
  %1861 = vmatprep.subr.bf16.mxu0 0
  %1862 = vmatpush2.bf16.msra.mxu0 0
  %1863 = vmatprep.subr.bf16.mxu0 0
  %1864 = vmatpush2.bf16.msra.mxu0 0
  %1865 = vmatprep.subr.bf16.mxu0 0
  %1866 = vmatpush2.bf16.msra.mxu0 0
  %1867 = vmatprep.subr.bf16.mxu0 0
  %1868 = vmatpush2.bf16.msra.mxu0 0
  %1869 = vmatprep.subr.bf16.mxu0 0
  %1870 = vmatpush2.bf16.msra.mxu0 0
  %1871 = vmatprep.subr.bf16.mxu0 0
  %1872 = vmatpush2.bf16.msra.mxu0 0
  %1873 = vmatprep.subr.bf16.mxu0 0
  %1874 = vmatpush2.bf16.msra.mxu0 0
  %1875 = vmatprep.subr.bf16.mxu0 0
  %1876 = vmatpush2.bf16.msra.mxu0 0
  %1877 = vmatprep.mubr.bf16.mxu0 0
  %1878 = vmatmul.mubr.bf16.gmra.mxu0 %v1333
  %v1879 = vpop.f32.mrf.mxu0
  %v1880 = vadd.f32 0.0, %v1879
  %v1881 = vpop.f32.mrf.mxu0
  %v1882 = vpop.f32.mrf.mxu0
  %v1883 = vpop.f32.mrf.mxu0
  %1884 = vdwg.mxu0
  %1885 = vmatprep.subr.bf16.mxu0 0
  %1886 = vmatpush1.bf16.msra.mxu0 0
  %1887 = vmatprep.subr.bf16.mxu0 0
  %1888 = vmatpush1.bf16.msra.mxu0 0
  %1889 = vmatprep.subr.bf16.mxu0 0
  %1890 = vmatpush1.bf16.msra.mxu0 0
  %1891 = vmatprep.subr.bf16.mxu0 0
  %1892 = vmatpush1.bf16.msra.mxu0 0
  %1893 = vmatprep.subr.bf16.mxu0 0
  %1894 = vmatpush1.bf16.msra.mxu0 0
  %1895 = vmatprep.subr.bf16.mxu0 0
  %1896 = vmatpush1.bf16.msra.mxu0 0
  %1897 = vmatprep.subr.bf16.mxu0 0
  %1898 = vmatpush1.bf16.msra.mxu0 %v724
  %1899 = vmatprep.subr.bf16.mxu0 0
  %1900 = vmatpush1.bf16.msra.mxu0 %v723
  %1901 = vmatprep.subr.bf16.mxu0 0
  %1902 = vmatpush2.bf16.msra.mxu0 0
  %1903 = vmatprep.subr.bf16.mxu0 0
  %1904 = vmatpush2.bf16.msra.mxu0 0
  %1905 = vmatprep.subr.bf16.mxu0 0
  %1906 = vmatpush2.bf16.msra.mxu0 0
  %1907 = vmatprep.subr.bf16.mxu0 0
  %1908 = vmatpush2.bf16.msra.mxu0 0
  %1909 = vmatprep.subr.bf16.mxu0 0
  %1910 = vmatpush2.bf16.msra.mxu0 0
  %1911 = vmatprep.subr.bf16.mxu0 0
  %1912 = vmatpush2.bf16.msra.mxu0 0
  %1913 = vmatprep.subr.bf16.mxu0 0
  %1914 = vmatpush2.bf16.msra.mxu0 0
  %1915 = vmatprep.subr.bf16.mxu0 0
  %1916 = vmatpush2.bf16.msra.mxu0 0
  %1917 = vmatprep.mubr.bf16.mxu0 0
  %1918 = vmatmul.mubr.bf16.gmra.mxu0 %v1388
  %v1919 = vpop.f32.mrf.mxu0
  %v1920 = vadd.f32 0.0, %v1919
  %v1921 = vpop.f32.mrf.mxu0
  %v1922 = vpop.f32.mrf.mxu0
  %v1923 = vpop.f32.mrf.mxu0
  %1924 = vdwg.mxu0
  %1925 = vmatprep.subr.bf16.mxu0 0
  %1926 = vmatpush1.bf16.msra.mxu0 0
  %1927 = vmatprep.subr.bf16.mxu0 0
  %1928 = vmatpush1.bf16.msra.mxu0 0
  %1929 = vmatprep.subr.bf16.mxu0 0
  %1930 = vmatpush1.bf16.msra.mxu0 0
  %1931 = vmatprep.subr.bf16.mxu0 0
  %1932 = vmatpush1.bf16.msra.mxu0 0
  %1933 = vmatprep.subr.bf16.mxu0 0
  %1934 = vmatpush1.bf16.msra.mxu0 0
  %1935 = vmatprep.subr.bf16.mxu0 0
  %1936 = vmatpush1.bf16.msra.mxu0 0
  %1937 = vmatprep.subr.bf16.mxu0 0
  %1938 = vmatpush1.bf16.msra.mxu0 %v779
  %1939 = vmatprep.subr.bf16.mxu0 0
  %1940 = vmatpush1.bf16.msra.mxu0 %v778
  %1941 = vmatprep.subr.bf16.mxu0 0
  %1942 = vmatpush2.bf16.msra.mxu0 0
  %1943 = vmatprep.subr.bf16.mxu0 0
  %1944 = vmatpush2.bf16.msra.mxu0 0
  %1945 = vmatprep.subr.bf16.mxu0 0
  %1946 = vmatpush2.bf16.msra.mxu0 0
  %1947 = vmatprep.subr.bf16.mxu0 0
  %1948 = vmatpush2.bf16.msra.mxu0 0
  %1949 = vmatprep.subr.bf16.mxu0 0
  %1950 = vmatpush2.bf16.msra.mxu0 0
  %1951 = vmatprep.subr.bf16.mxu0 0
  %1952 = vmatpush2.bf16.msra.mxu0 0
  %1953 = vmatprep.subr.bf16.mxu0 0
  %1954 = vmatpush2.bf16.msra.mxu0 0
  %1955 = vmatprep.subr.bf16.mxu0 0
  %1956 = vmatpush2.bf16.msra.mxu0 0
  %1957 = vmatprep.mubr.bf16.mxu0 0
  %1958 = vmatmul.mubr.bf16.gmra.mxu0 %v1443
  %v1959 = vpop.f32.mrf.mxu0
  %v1960 = vadd.f32 0.0, %v1959
  %v1961 = vpop.f32.mrf.mxu0
  %v1962 = vpop.f32.mrf.mxu0
  %v1963 = vpop.f32.mrf.mxu0
  %1964 = vdwg.mxu0
  %v1965 = vsub.f32 %v215, %v875
  %v1966 = vsub.f32 %v270, %v930
  %v1967 = vsub.f32 %v325, %v985
  %v1968 = vsub.f32 %v380, %v1040
  %v1969 = vsub.f32 %v435, %v1095
  %v1970 = vsub.f32 %v490, %v1150
  %v1971 = vsub.f32 %v545, %v1205
  %v1972 = vsub.f32 %v600, %v1260
  %v1973 = vsub.f32 %v655, %v1315
  %v1974 = vsub.f32 %v710, %v1370
  %v1975 = vsub.f32 %v765, %v1425
  %v1976 = vsub.f32 %v820, %v1480
  %vm1977 = vcmask 254976
  %1978 = vst.msk [vmem:[%s4] sm:$0x3] %vm1977, %v1965
  %1979 = vst.msk [vmem:[%s4 + $0x2] sm:$0x3] %vm1977, %v1966
  %1980 = vst.msk [vmem:[%s4 + $0x4] sm:$0x3] %vm1977, %v1967
  %1981 = vst.msk [vmem:[%s4 + $0x6] sm:$0x3] %vm1977, %v1968
  %1982 = vst.msk [vmem:[%s4 + $0x8] sm:$0x3] %vm1977, %v1969
  %1983 = vst.msk [vmem:[%s4 + $0xa] sm:$0x3] %vm1977, %v1970
  %1984 = vst.msk [vmem:[%s4 + $0xc] sm:$0x3] %vm1977, %v1971
  %1985 = vst.msk [vmem:[%s4 + $0xe] sm:$0x3] %vm1977, %v1972
  %1986 = vst.msk [vmem:[%s4 + $0x10] sm:$0x3] %vm1977, %v1973
  %1987 = vst.msk [vmem:[%s4 + $0x12] sm:$0x3] %vm1977, %v1974
  %1988 = vst.msk [vmem:[%s4 + $0x14] sm:$0x3] %vm1977, %v1975
  %1989 = vst.msk [vmem:[%s4 + $0x16] sm:$0x3] %vm1977, %v1976
  %1990 = vmatprep.subr.bf16.mxu0 0
  %1991 = vmatpush1.bf16.msra.mxu0 0
  %1992 = vmatprep.subr.bf16.mxu0 0
  %1993 = vmatpush1.bf16.msra.mxu0 0
  %1994 = vmatprep.subr.bf16.mxu0 0
  %1995 = vmatpush1.bf16.msra.mxu0 0
  %1996 = vmatprep.subr.bf16.mxu0 0
  %1997 = vmatpush1.bf16.msra.mxu0 0
  %1998 = vmatprep.subr.bf16.mxu0 0
  %1999 = vmatpush1.bf16.msra.mxu0 0
  %2000 = vmatprep.subr.bf16.mxu0 0
  %2001 = vmatpush1.bf16.msra.mxu0 0
  %2002 = vmatprep.subr.bf16.mxu0 0
  %2003 = vmatpush1.bf16.msra.mxu0 %v834
  %2004 = vmatprep.subr.bf16.mxu0 0
  %2005 = vmatpush1.bf16.msra.mxu0 %v833
  %2006 = vmatprep.subr.bf16.mxu0 0
  %2007 = vmatpush2.bf16.msra.mxu0 0
  %2008 = vmatprep.subr.bf16.mxu0 0
  %2009 = vmatpush2.bf16.msra.mxu0 0
  %2010 = vmatprep.subr.bf16.mxu0 0
  %2011 = vmatpush2.bf16.msra.mxu0 0
  %2012 = vmatprep.subr.bf16.mxu0 0
  %2013 = vmatpush2.bf16.msra.mxu0 0
  %2014 = vmatprep.subr.bf16.mxu0 0
  %2015 = vmatpush2.bf16.msra.mxu0 0
  %2016 = vmatprep.subr.bf16.mxu0 0
  %2017 = vmatpush2.bf16.msra.mxu0 0
  %2018 = vmatprep.subr.bf16.mxu0 0
  %2019 = vmatpush2.bf16.msra.mxu0 0
  %2020 = vmatprep.subr.bf16.mxu0 0
  %2021 = vmatpush2.bf16.msra.mxu0 0
  %2022 = vmatprep.mubr.bf16.mxu0 0
  %2023 = vmatmul.mubr.bf16.gmra.mxu0 %v178
  %v2024 = vpop.f32.mrf.mxu0
  %v2025 = vadd.f32 %v1520, %v2024
  %v2026 = vpop.f32.mrf.mxu0
  %v2027 = vpop.f32.mrf.mxu0
  %v2028 = vpop.f32.mrf.mxu0
  %2029 = vdwg.mxu0
  %2030 = vmatprep.subr.bf16.mxu0 0
  %2031 = vmatpush1.bf16.msra.mxu0 0
  %2032 = vmatprep.subr.bf16.mxu0 0
  %2033 = vmatpush1.bf16.msra.mxu0 0
  %2034 = vmatprep.subr.bf16.mxu0 0
  %2035 = vmatpush1.bf16.msra.mxu0 0
  %2036 = vmatprep.subr.bf16.mxu0 0
  %2037 = vmatpush1.bf16.msra.mxu0 0
  %2038 = vmatprep.subr.bf16.mxu0 0
  %2039 = vmatpush1.bf16.msra.mxu0 0
  %2040 = vmatprep.subr.bf16.mxu0 0
  %2041 = vmatpush1.bf16.msra.mxu0 0
  %2042 = vmatprep.subr.bf16.mxu0 0
  %2043 = vmatpush1.bf16.msra.mxu0 %v889
  %2044 = vmatprep.subr.bf16.mxu0 0
  %2045 = vmatpush1.bf16.msra.mxu0 %v888
  %2046 = vmatprep.subr.bf16.mxu0 0
  %2047 = vmatpush2.bf16.msra.mxu0 0
  %2048 = vmatprep.subr.bf16.mxu0 0
  %2049 = vmatpush2.bf16.msra.mxu0 0
  %2050 = vmatprep.subr.bf16.mxu0 0
  %2051 = vmatpush2.bf16.msra.mxu0 0
  %2052 = vmatprep.subr.bf16.mxu0 0
  %2053 = vmatpush2.bf16.msra.mxu0 0
  %2054 = vmatprep.subr.bf16.mxu0 0
  %2055 = vmatpush2.bf16.msra.mxu0 0
  %2056 = vmatprep.subr.bf16.mxu0 0
  %2057 = vmatpush2.bf16.msra.mxu0 0
  %2058 = vmatprep.subr.bf16.mxu0 0
  %2059 = vmatpush2.bf16.msra.mxu0 0
  %2060 = vmatprep.subr.bf16.mxu0 0
  %2061 = vmatpush2.bf16.msra.mxu0 0
  %2062 = vmatprep.mubr.bf16.mxu0 0
  %2063 = vmatmul.mubr.bf16.gmra.mxu0 %v233
  %v2064 = vpop.f32.mrf.mxu0
  %v2065 = vadd.f32 %v1560, %v2064
  %v2066 = vpop.f32.mrf.mxu0
  %v2067 = vpop.f32.mrf.mxu0
  %v2068 = vpop.f32.mrf.mxu0
  %2069 = vdwg.mxu0
  %2070 = vmatprep.subr.bf16.mxu0 0
  %2071 = vmatpush1.bf16.msra.mxu0 0
  %2072 = vmatprep.subr.bf16.mxu0 0
  %2073 = vmatpush1.bf16.msra.mxu0 0
  %2074 = vmatprep.subr.bf16.mxu0 0
  %2075 = vmatpush1.bf16.msra.mxu0 0
  %2076 = vmatprep.subr.bf16.mxu0 0
  %2077 = vmatpush1.bf16.msra.mxu0 0
  %2078 = vmatprep.subr.bf16.mxu0 0
  %2079 = vmatpush1.bf16.msra.mxu0 0
  %2080 = vmatprep.subr.bf16.mxu0 0
  %2081 = vmatpush1.bf16.msra.mxu0 0
  %2082 = vmatprep.subr.bf16.mxu0 0
  %2083 = vmatpush1.bf16.msra.mxu0 %v944
  %2084 = vmatprep.subr.bf16.mxu0 0
  %2085 = vmatpush1.bf16.msra.mxu0 %v943
  %2086 = vmatprep.subr.bf16.mxu0 0
  %2087 = vmatpush2.bf16.msra.mxu0 0
  %2088 = vmatprep.subr.bf16.mxu0 0
  %2089 = vmatpush2.bf16.msra.mxu0 0
  %2090 = vmatprep.subr.bf16.mxu0 0
  %2091 = vmatpush2.bf16.msra.mxu0 0
  %2092 = vmatprep.subr.bf16.mxu0 0
  %2093 = vmatpush2.bf16.msra.mxu0 0
  %2094 = vmatprep.subr.bf16.mxu0 0
  %2095 = vmatpush2.bf16.msra.mxu0 0
  %2096 = vmatprep.subr.bf16.mxu0 0
  %2097 = vmatpush2.bf16.msra.mxu0 0
  %2098 = vmatprep.subr.bf16.mxu0 0
  %2099 = vmatpush2.bf16.msra.mxu0 0
  %2100 = vmatprep.subr.bf16.mxu0 0
  %2101 = vmatpush2.bf16.msra.mxu0 0
  %2102 = vmatprep.mubr.bf16.mxu0 0
  %2103 = vmatmul.mubr.bf16.gmra.mxu0 %v288
  %v2104 = vpop.f32.mrf.mxu0
  %v2105 = vadd.f32 %v1600, %v2104
  %v2106 = vpop.f32.mrf.mxu0
  %v2107 = vpop.f32.mrf.mxu0
  %v2108 = vpop.f32.mrf.mxu0
  %2109 = vdwg.mxu0
  %2110 = vmatprep.subr.bf16.mxu0 0
  %2111 = vmatpush1.bf16.msra.mxu0 0
  %2112 = vmatprep.subr.bf16.mxu0 0
  %2113 = vmatpush1.bf16.msra.mxu0 0
  %2114 = vmatprep.subr.bf16.mxu0 0
  %2115 = vmatpush1.bf16.msra.mxu0 0
  %2116 = vmatprep.subr.bf16.mxu0 0
  %2117 = vmatpush1.bf16.msra.mxu0 0
  %2118 = vmatprep.subr.bf16.mxu0 0
  %2119 = vmatpush1.bf16.msra.mxu0 0
  %2120 = vmatprep.subr.bf16.mxu0 0
  %2121 = vmatpush1.bf16.msra.mxu0 0
  %2122 = vmatprep.subr.bf16.mxu0 0
  %2123 = vmatpush1.bf16.msra.mxu0 %v999
  %2124 = vmatprep.subr.bf16.mxu0 0
  %2125 = vmatpush1.bf16.msra.mxu0 %v998
  %2126 = vmatprep.subr.bf16.mxu0 0
  %2127 = vmatpush2.bf16.msra.mxu0 0
  %2128 = vmatprep.subr.bf16.mxu0 0
  %2129 = vmatpush2.bf16.msra.mxu0 0
  %2130 = vmatprep.subr.bf16.mxu0 0
  %2131 = vmatpush2.bf16.msra.mxu0 0
  %2132 = vmatprep.subr.bf16.mxu0 0
  %2133 = vmatpush2.bf16.msra.mxu0 0
  %2134 = vmatprep.subr.bf16.mxu0 0
  %2135 = vmatpush2.bf16.msra.mxu0 0
  %2136 = vmatprep.subr.bf16.mxu0 0
  %2137 = vmatpush2.bf16.msra.mxu0 0
  %2138 = vmatprep.subr.bf16.mxu0 0
  %2139 = vmatpush2.bf16.msra.mxu0 0
  %2140 = vmatprep.subr.bf16.mxu0 0
  %2141 = vmatpush2.bf16.msra.mxu0 0
  %2142 = vmatprep.mubr.bf16.mxu0 0
  %2143 = vmatmul.mubr.bf16.gmra.mxu0 %v343
  %v2144 = vpop.f32.mrf.mxu0
  %v2145 = vadd.f32 %v1640, %v2144
  %v2146 = vpop.f32.mrf.mxu0
  %v2147 = vpop.f32.mrf.mxu0
  %v2148 = vpop.f32.mrf.mxu0
  %2149 = vdwg.mxu0
  %2150 = vmatprep.subr.bf16.mxu0 0
  %2151 = vmatpush1.bf16.msra.mxu0 0
  %2152 = vmatprep.subr.bf16.mxu0 0
  %2153 = vmatpush1.bf16.msra.mxu0 0
  %2154 = vmatprep.subr.bf16.mxu0 0
  %2155 = vmatpush1.bf16.msra.mxu0 0
  %2156 = vmatprep.subr.bf16.mxu0 0
  %2157 = vmatpush1.bf16.msra.mxu0 0
  %2158 = vmatprep.subr.bf16.mxu0 0
  %2159 = vmatpush1.bf16.msra.mxu0 0
  %2160 = vmatprep.subr.bf16.mxu0 0
  %2161 = vmatpush1.bf16.msra.mxu0 0
  %2162 = vmatprep.subr.bf16.mxu0 0
  %2163 = vmatpush1.bf16.msra.mxu0 %v1054
  %2164 = vmatprep.subr.bf16.mxu0 0
  %2165 = vmatpush1.bf16.msra.mxu0 %v1053
  %2166 = vmatprep.subr.bf16.mxu0 0
  %2167 = vmatpush2.bf16.msra.mxu0 0
  %2168 = vmatprep.subr.bf16.mxu0 0
  %2169 = vmatpush2.bf16.msra.mxu0 0
  %2170 = vmatprep.subr.bf16.mxu0 0
  %2171 = vmatpush2.bf16.msra.mxu0 0
  %2172 = vmatprep.subr.bf16.mxu0 0
  %2173 = vmatpush2.bf16.msra.mxu0 0
  %2174 = vmatprep.subr.bf16.mxu0 0
  %2175 = vmatpush2.bf16.msra.mxu0 0
  %2176 = vmatprep.subr.bf16.mxu0 0
  %2177 = vmatpush2.bf16.msra.mxu0 0
  %2178 = vmatprep.subr.bf16.mxu0 0
  %2179 = vmatpush2.bf16.msra.mxu0 0
  %2180 = vmatprep.subr.bf16.mxu0 0
  %2181 = vmatpush2.bf16.msra.mxu0 0
  %2182 = vmatprep.mubr.bf16.mxu0 0
  %2183 = vmatmul.mubr.bf16.gmra.mxu0 %v398
  %v2184 = vpop.f32.mrf.mxu0
  %v2185 = vadd.f32 %v1680, %v2184
  %v2186 = vpop.f32.mrf.mxu0
  %v2187 = vpop.f32.mrf.mxu0
  %v2188 = vpop.f32.mrf.mxu0
  %2189 = vdwg.mxu0
  %2190 = vmatprep.subr.bf16.mxu0 0
  %2191 = vmatpush1.bf16.msra.mxu0 0
  %2192 = vmatprep.subr.bf16.mxu0 0
  %2193 = vmatpush1.bf16.msra.mxu0 0
  %2194 = vmatprep.subr.bf16.mxu0 0
  %2195 = vmatpush1.bf16.msra.mxu0 0
  %2196 = vmatprep.subr.bf16.mxu0 0
  %2197 = vmatpush1.bf16.msra.mxu0 0
  %2198 = vmatprep.subr.bf16.mxu0 0
  %2199 = vmatpush1.bf16.msra.mxu0 0
  %2200 = vmatprep.subr.bf16.mxu0 0
  %2201 = vmatpush1.bf16.msra.mxu0 0
  %2202 = vmatprep.subr.bf16.mxu0 0
  %2203 = vmatpush1.bf16.msra.mxu0 %v1109
  %2204 = vmatprep.subr.bf16.mxu0 0
  %2205 = vmatpush1.bf16.msra.mxu0 %v1108
  %2206 = vmatprep.subr.bf16.mxu0 0
  %2207 = vmatpush2.bf16.msra.mxu0 0
  %2208 = vmatprep.subr.bf16.mxu0 0
  %2209 = vmatpush2.bf16.msra.mxu0 0
  %2210 = vmatprep.subr.bf16.mxu0 0
  %2211 = vmatpush2.bf16.msra.mxu0 0
  %2212 = vmatprep.subr.bf16.mxu0 0
  %2213 = vmatpush2.bf16.msra.mxu0 0
  %2214 = vmatprep.subr.bf16.mxu0 0
  %2215 = vmatpush2.bf16.msra.mxu0 0
  %2216 = vmatprep.subr.bf16.mxu0 0
  %2217 = vmatpush2.bf16.msra.mxu0 0
  %2218 = vmatprep.subr.bf16.mxu0 0
  %2219 = vmatpush2.bf16.msra.mxu0 0
  %2220 = vmatprep.subr.bf16.mxu0 0
  %2221 = vmatpush2.bf16.msra.mxu0 0
  %2222 = vmatprep.mubr.bf16.mxu0 0
  %2223 = vmatmul.mubr.bf16.gmra.mxu0 %v453
  %v2224 = vpop.f32.mrf.mxu0
  %v2225 = vadd.f32 %v1720, %v2224
  %v2226 = vpop.f32.mrf.mxu0
  %v2227 = vpop.f32.mrf.mxu0
  %v2228 = vpop.f32.mrf.mxu0
  %2229 = vdwg.mxu0
  %2230 = vmatprep.subr.bf16.mxu0 0
  %2231 = vmatpush1.bf16.msra.mxu0 0
  %2232 = vmatprep.subr.bf16.mxu0 0
  %2233 = vmatpush1.bf16.msra.mxu0 0
  %2234 = vmatprep.subr.bf16.mxu0 0
  %2235 = vmatpush1.bf16.msra.mxu0 0
  %2236 = vmatprep.subr.bf16.mxu0 0
  %2237 = vmatpush1.bf16.msra.mxu0 0
  %2238 = vmatprep.subr.bf16.mxu0 0
  %2239 = vmatpush1.bf16.msra.mxu0 0
  %2240 = vmatprep.subr.bf16.mxu0 0
  %2241 = vmatpush1.bf16.msra.mxu0 0
  %2242 = vmatprep.subr.bf16.mxu0 0
  %2243 = vmatpush1.bf16.msra.mxu0 %v1164
  %2244 = vmatprep.subr.bf16.mxu0 0
  %2245 = vmatpush1.bf16.msra.mxu0 %v1163
  %2246 = vmatprep.subr.bf16.mxu0 0
  %2247 = vmatpush2.bf16.msra.mxu0 0
  %2248 = vmatprep.subr.bf16.mxu0 0
  %2249 = vmatpush2.bf16.msra.mxu0 0
  %2250 = vmatprep.subr.bf16.mxu0 0
  %2251 = vmatpush2.bf16.msra.mxu0 0
  %2252 = vmatprep.subr.bf16.mxu0 0
  %2253 = vmatpush2.bf16.msra.mxu0 0
  %2254 = vmatprep.subr.bf16.mxu0 0
  %2255 = vmatpush2.bf16.msra.mxu0 0
  %2256 = vmatprep.subr.bf16.mxu0 0
  %2257 = vmatpush2.bf16.msra.mxu0 0
  %2258 = vmatprep.subr.bf16.mxu0 0
  %2259 = vmatpush2.bf16.msra.mxu0 0
  %2260 = vmatprep.subr.bf16.mxu0 0
  %2261 = vmatpush2.bf16.msra.mxu0 0
  %2262 = vmatprep.mubr.bf16.mxu0 0
  %2263 = vmatmul.mubr.bf16.gmra.mxu0 %v508
  %v2264 = vpop.f32.mrf.mxu0
  %v2265 = vadd.f32 %v1760, %v2264
  %v2266 = vpop.f32.mrf.mxu0
  %v2267 = vpop.f32.mrf.mxu0
  %v2268 = vpop.f32.mrf.mxu0
  %2269 = vdwg.mxu0
  %2270 = vmatprep.subr.bf16.mxu0 0
  %2271 = vmatpush1.bf16.msra.mxu0 0
  %2272 = vmatprep.subr.bf16.mxu0 0
  %2273 = vmatpush1.bf16.msra.mxu0 0
  %2274 = vmatprep.subr.bf16.mxu0 0
  %2275 = vmatpush1.bf16.msra.mxu0 0
  %2276 = vmatprep.subr.bf16.mxu0 0
  %2277 = vmatpush1.bf16.msra.mxu0 0
  %2278 = vmatprep.subr.bf16.mxu0 0
  %2279 = vmatpush1.bf16.msra.mxu0 0
  %2280 = vmatprep.subr.bf16.mxu0 0
  %2281 = vmatpush1.bf16.msra.mxu0 0
  %2282 = vmatprep.subr.bf16.mxu0 0
  %2283 = vmatpush1.bf16.msra.mxu0 %v1219
  %2284 = vmatprep.subr.bf16.mxu0 0
  %2285 = vmatpush1.bf16.msra.mxu0 %v1218
  %2286 = vmatprep.subr.bf16.mxu0 0
  %2287 = vmatpush2.bf16.msra.mxu0 0
  %2288 = vmatprep.subr.bf16.mxu0 0
  %2289 = vmatpush2.bf16.msra.mxu0 0
  %2290 = vmatprep.subr.bf16.mxu0 0
  %2291 = vmatpush2.bf16.msra.mxu0 0
  %2292 = vmatprep.subr.bf16.mxu0 0
  %2293 = vmatpush2.bf16.msra.mxu0 0
  %2294 = vmatprep.subr.bf16.mxu0 0
  %2295 = vmatpush2.bf16.msra.mxu0 0
  %2296 = vmatprep.subr.bf16.mxu0 0
  %2297 = vmatpush2.bf16.msra.mxu0 0
  %2298 = vmatprep.subr.bf16.mxu0 0
  %2299 = vmatpush2.bf16.msra.mxu0 0
  %2300 = vmatprep.subr.bf16.mxu0 0
  %2301 = vmatpush2.bf16.msra.mxu0 0
  %2302 = vmatprep.mubr.bf16.mxu0 0
  %2303 = vmatmul.mubr.bf16.gmra.mxu0 %v563
  %v2304 = vpop.f32.mrf.mxu0
  %v2305 = vadd.f32 %v1800, %v2304
  %v2306 = vpop.f32.mrf.mxu0
  %v2307 = vpop.f32.mrf.mxu0
  %v2308 = vpop.f32.mrf.mxu0
  %2309 = vdwg.mxu0
  %2310 = vmatprep.subr.bf16.mxu0 0
  %2311 = vmatpush1.bf16.msra.mxu0 0
  %2312 = vmatprep.subr.bf16.mxu0 0
  %2313 = vmatpush1.bf16.msra.mxu0 0
  %2314 = vmatprep.subr.bf16.mxu0 0
  %2315 = vmatpush1.bf16.msra.mxu0 0
  %2316 = vmatprep.subr.bf16.mxu0 0
  %2317 = vmatpush1.bf16.msra.mxu0 0
  %2318 = vmatprep.subr.bf16.mxu0 0
  %2319 = vmatpush1.bf16.msra.mxu0 0
  %2320 = vmatprep.subr.bf16.mxu0 0
  %2321 = vmatpush1.bf16.msra.mxu0 0
  %2322 = vmatprep.subr.bf16.mxu0 0
  %2323 = vmatpush1.bf16.msra.mxu0 %v1274
  %2324 = vmatprep.subr.bf16.mxu0 0
  %2325 = vmatpush1.bf16.msra.mxu0 %v1273
  %2326 = vmatprep.subr.bf16.mxu0 0
  %2327 = vmatpush2.bf16.msra.mxu0 0
  %2328 = vmatprep.subr.bf16.mxu0 0
  %2329 = vmatpush2.bf16.msra.mxu0 0
  %2330 = vmatprep.subr.bf16.mxu0 0
  %2331 = vmatpush2.bf16.msra.mxu0 0
  %2332 = vmatprep.subr.bf16.mxu0 0
  %2333 = vmatpush2.bf16.msra.mxu0 0
  %2334 = vmatprep.subr.bf16.mxu0 0
  %2335 = vmatpush2.bf16.msra.mxu0 0
  %2336 = vmatprep.subr.bf16.mxu0 0
  %2337 = vmatpush2.bf16.msra.mxu0 0
  %2338 = vmatprep.subr.bf16.mxu0 0
  %2339 = vmatpush2.bf16.msra.mxu0 0
  %2340 = vmatprep.subr.bf16.mxu0 0
  %2341 = vmatpush2.bf16.msra.mxu0 0
  %2342 = vmatprep.mubr.bf16.mxu0 0
  %2343 = vmatmul.mubr.bf16.gmra.mxu0 %v618
  %v2344 = vpop.f32.mrf.mxu0
  %v2345 = vadd.f32 %v1840, %v2344
  %v2346 = vpop.f32.mrf.mxu0
  %v2347 = vpop.f32.mrf.mxu0
  %v2348 = vpop.f32.mrf.mxu0
  %2349 = vdwg.mxu0
  %2350 = vmatprep.subr.bf16.mxu0 0
  %2351 = vmatpush1.bf16.msra.mxu0 0
  %2352 = vmatprep.subr.bf16.mxu0 0
  %2353 = vmatpush1.bf16.msra.mxu0 0
  %2354 = vmatprep.subr.bf16.mxu0 0
  %2355 = vmatpush1.bf16.msra.mxu0 0
  %2356 = vmatprep.subr.bf16.mxu0 0
  %2357 = vmatpush1.bf16.msra.mxu0 0
  %2358 = vmatprep.subr.bf16.mxu0 0
  %2359 = vmatpush1.bf16.msra.mxu0 0
  %2360 = vmatprep.subr.bf16.mxu0 0
  %2361 = vmatpush1.bf16.msra.mxu0 0
  %2362 = vmatprep.subr.bf16.mxu0 0
  %2363 = vmatpush1.bf16.msra.mxu0 %v1329
  %2364 = vmatprep.subr.bf16.mxu0 0
  %2365 = vmatpush1.bf16.msra.mxu0 %v1328
  %2366 = vmatprep.subr.bf16.mxu0 0
  %2367 = vmatpush2.bf16.msra.mxu0 0
  %2368 = vmatprep.subr.bf16.mxu0 0
  %2369 = vmatpush2.bf16.msra.mxu0 0
  %2370 = vmatprep.subr.bf16.mxu0 0
  %2371 = vmatpush2.bf16.msra.mxu0 0
  %2372 = vmatprep.subr.bf16.mxu0 0
  %2373 = vmatpush2.bf16.msra.mxu0 0
  %2374 = vmatprep.subr.bf16.mxu0 0
  %2375 = vmatpush2.bf16.msra.mxu0 0
  %2376 = vmatprep.subr.bf16.mxu0 0
  %2377 = vmatpush2.bf16.msra.mxu0 0
  %2378 = vmatprep.subr.bf16.mxu0 0
  %2379 = vmatpush2.bf16.msra.mxu0 0
  %2380 = vmatprep.subr.bf16.mxu0 0
  %2381 = vmatpush2.bf16.msra.mxu0 0
  %2382 = vmatprep.mubr.bf16.mxu0 0
  %2383 = vmatmul.mubr.bf16.gmra.mxu0 %v673
  %v2384 = vpop.f32.mrf.mxu0
  %v2385 = vadd.f32 %v1880, %v2384
  %v2386 = vpop.f32.mrf.mxu0
  %v2387 = vpop.f32.mrf.mxu0
  %v2388 = vpop.f32.mrf.mxu0
  %2389 = vdwg.mxu0
  %2390 = vmatprep.subr.bf16.mxu0 0
  %2391 = vmatpush1.bf16.msra.mxu0 0
  %2392 = vmatprep.subr.bf16.mxu0 0
  %2393 = vmatpush1.bf16.msra.mxu0 0
  %2394 = vmatprep.subr.bf16.mxu0 0
  %2395 = vmatpush1.bf16.msra.mxu0 0
  %2396 = vmatprep.subr.bf16.mxu0 0
  %2397 = vmatpush1.bf16.msra.mxu0 0
  %2398 = vmatprep.subr.bf16.mxu0 0
  %2399 = vmatpush1.bf16.msra.mxu0 0
  %2400 = vmatprep.subr.bf16.mxu0 0
  %2401 = vmatpush1.bf16.msra.mxu0 0
  %2402 = vmatprep.subr.bf16.mxu0 0
  %2403 = vmatpush1.bf16.msra.mxu0 %v1384
  %2404 = vmatprep.subr.bf16.mxu0 0
  %2405 = vmatpush1.bf16.msra.mxu0 %v1383
  %2406 = vmatprep.subr.bf16.mxu0 0
  %2407 = vmatpush2.bf16.msra.mxu0 0
  %2408 = vmatprep.subr.bf16.mxu0 0
  %2409 = vmatpush2.bf16.msra.mxu0 0
  %2410 = vmatprep.subr.bf16.mxu0 0
  %2411 = vmatpush2.bf16.msra.mxu0 0
  %2412 = vmatprep.subr.bf16.mxu0 0
  %2413 = vmatpush2.bf16.msra.mxu0 0
  %2414 = vmatprep.subr.bf16.mxu0 0
  %2415 = vmatpush2.bf16.msra.mxu0 0
  %2416 = vmatprep.subr.bf16.mxu0 0
  %2417 = vmatpush2.bf16.msra.mxu0 0
  %2418 = vmatprep.subr.bf16.mxu0 0
  %2419 = vmatpush2.bf16.msra.mxu0 0
  %2420 = vmatprep.subr.bf16.mxu0 0
  %2421 = vmatpush2.bf16.msra.mxu0 0
  %2422 = vmatprep.mubr.bf16.mxu0 0
  %2423 = vmatmul.mubr.bf16.gmra.mxu0 %v728
  %v2424 = vpop.f32.mrf.mxu0
  %v2425 = vadd.f32 %v1920, %v2424
  %v2426 = vpop.f32.mrf.mxu0
  %v2427 = vpop.f32.mrf.mxu0
  %v2428 = vpop.f32.mrf.mxu0
  %2429 = vdwg.mxu0
  %2430 = vmatprep.subr.bf16.mxu0 0
  %2431 = vmatpush1.bf16.msra.mxu0 0
  %2432 = vmatprep.subr.bf16.mxu0 0
  %2433 = vmatpush1.bf16.msra.mxu0 0
  %2434 = vmatprep.subr.bf16.mxu0 0
  %2435 = vmatpush1.bf16.msra.mxu0 0
  %2436 = vmatprep.subr.bf16.mxu0 0
  %2437 = vmatpush1.bf16.msra.mxu0 0
  %2438 = vmatprep.subr.bf16.mxu0 0
  %2439 = vmatpush1.bf16.msra.mxu0 0
  %2440 = vmatprep.subr.bf16.mxu0 0
  %2441 = vmatpush1.bf16.msra.mxu0 0
  %2442 = vmatprep.subr.bf16.mxu0 0
  %2443 = vmatpush1.bf16.msra.mxu0 %v1439
  %2444 = vmatprep.subr.bf16.mxu0 0
  %2445 = vmatpush1.bf16.msra.mxu0 %v1438
  %2446 = vmatprep.subr.bf16.mxu0 0
  %2447 = vmatpush2.bf16.msra.mxu0 0
  %2448 = vmatprep.subr.bf16.mxu0 0
  %2449 = vmatpush2.bf16.msra.mxu0 0
  %2450 = vmatprep.subr.bf16.mxu0 0
  %2451 = vmatpush2.bf16.msra.mxu0 0
  %2452 = vmatprep.subr.bf16.mxu0 0
  %2453 = vmatpush2.bf16.msra.mxu0 0
  %2454 = vmatprep.subr.bf16.mxu0 0
  %2455 = vmatpush2.bf16.msra.mxu0 0
  %2456 = vmatprep.subr.bf16.mxu0 0
  %2457 = vmatpush2.bf16.msra.mxu0 0
  %2458 = vmatprep.subr.bf16.mxu0 0
  %2459 = vmatpush2.bf16.msra.mxu0 0
  %2460 = vmatprep.subr.bf16.mxu0 0
  %2461 = vmatpush2.bf16.msra.mxu0 0
  %2462 = vmatprep.mubr.bf16.mxu0 0
  %2463 = vmatmul.mubr.bf16.gmra.mxu0 %v783
  %v2464 = vpop.f32.mrf.mxu0
  %v2465 = vadd.f32 %v1960, %v2464
  %v2466 = vpop.f32.mrf.mxu0
  %v2467 = vpop.f32.mrf.mxu0
  %v2468 = vpop.f32.mrf.mxu0
  %2469 = vdwg.mxu0
  %2470 = vst.msk [vmem:[%s5] sm:$0x3] %vm1977, %v2025
  %2471 = vst.msk [vmem:[%s5 + $0x2] sm:$0x3] %vm1977, %v2065
  %2472 = vst.msk [vmem:[%s5 + $0x4] sm:$0x3] %vm1977, %v2105
  %2473 = vst.msk [vmem:[%s5 + $0x6] sm:$0x3] %vm1977, %v2145
  %2474 = vst.msk [vmem:[%s5 + $0x8] sm:$0x3] %vm1977, %v2185
  %2475 = vst.msk [vmem:[%s5 + $0xa] sm:$0x3] %vm1977, %v2225
  %2476 = vst.msk [vmem:[%s5 + $0xc] sm:$0x3] %vm1977, %v2265
  %2477 = vst.msk [vmem:[%s5 + $0xe] sm:$0x3] %vm1977, %v2305
  %2478 = vst.msk [vmem:[%s5 + $0x10] sm:$0x3] %vm1977, %v2345
  %2479 = vst.msk [vmem:[%s5 + $0x12] sm:$0x3] %vm1977, %v2385
  %2480 = vst.msk [vmem:[%s5 + $0x14] sm:$0x3] %vm1977, %v2425
  %2481 = vst.msk [vmem:[%s5 + $0x16] sm:$0x3] %vm1977, %v2465
  // Predicated region
  $region18: #{hifno_encoder_forward.7} parent=0 // pred_check
    _
  $region19: #{hifno_encoder_forward.7} parent=0 // pred_check_branch
    %2483 = sbr.rel (0) target = $region21
  $region20: #{hifno_encoder_forward.7} parent=0 // pred_region
    _
  $region21: #{hifno_encoder_forward.7} parent=0 // pred_fallthru
    _
  // Predicated region
  $region22: #{hifno_encoder_forward.7} parent=0 // pred_check
    _
  $region23: #{hifno_encoder_forward.7} parent=0 // pred_check_branch
    %2485 = sbr.rel (0) target = $region25
  $region24: #{hifno_encoder_forward.7} parent=0 // pred_region
    _
  $region25: #{hifno_encoder_forward.7} parent=0 // pred_fallthru
    _
  // Predicated region
  $region26: #{hifno_encoder_forward.7} parent=0 // pred_check
    _
  $region27: #{hifno_encoder_forward.7} parent=0 // pred_check_branch
    %2487 = sbr.rel (0) target = $region29
  $region28: #{hifno_encoder_forward.7} parent=0 // pred_region
    _
  $region29: #{hifno_encoder_forward.7} parent=0 // pred_fallthru
    _
  // Predicated region
  $region30: #{hifno_encoder_forward.7} parent=0 // pred_check
    _
  $region31: #{hifno_encoder_forward.7} parent=0 // pred_check_branch
    %2489 = sbr.rel (0) target = $region33
  $region32: #{hifno_encoder_forward.7} parent=0 // pred_region
    _
  $region33: #{hifno_encoder_forward.7} parent=0 // pred_fallthru
    _

// kernel: hifno_encoder_forward.8
$region0: #{hifno_encoder_forward.8}
  #allocation0 [shape = 'u32[]', space=smem, size = 0x4, offset = 0x4, fixed_abs, tag = 'smem constant byte address 0x4 - core index']
  #allocation1 [shape = 'u32[144,128]{1,0:T(1,128)}', space=vmem, size = 0x12000, scoped, tag = 'internal scratch']
  %s0 = inlined_call_operand.vmem [shape: f32[2,16,32], index: 0, kind: input, shape index: {}]
  %s1 = inlined_call_operand.vmem [shape: f32[2,16,32], index: 1, kind: input, shape index: {}]
  %s2 = inlined_call_operand.vmem [shape: bf16[32,32], index: 2, kind: input, shape index: {}]
  %s3 = inlined_call_operand.vmem [shape: f32[1,32], index: 3, kind: input, shape index: {}]
  %s4 = inlined_call_operand.vmem [shape: f32[1,32], index: 4, kind: input, shape index: {}]
  %s5 = inlined_call_operand.vmem [shape: f32[1,32], index: 5, kind: input, shape index: {}]
  %s6 = inlined_call_operand.vmem [shape: bf16[32,96], index: 6, kind: input, shape index: {}]
  %s7 = inlined_call_operand.vmem [shape: f32[1,96], index: 7, kind: input, shape index: {}]
  %s8 = inlined_call_operand.vmem [shape: bf16[32,32], index: 8, kind: input, shape index: {}]
  %s9 = inlined_call_operand.vmem [shape: f32[1,32], index: 9, kind: input, shape index: {}]
  %s10 = inlined_call_operand.vmem [shape: f32[1,32], index: 10, kind: input, shape index: {}]
  %s11 = inlined_call_operand.vmem [shape: f32[1,32], index: 11, kind: input, shape index: {}]
  %s12 = inlined_call_operand.vmem [shape: bf16[32,64], index: 12, kind: input, shape index: {}]
  %s13 = inlined_call_operand.vmem [shape: f32[1,64], index: 13, kind: input, shape index: {}]
  %s14 = inlined_call_operand.vmem [shape: bf16[64,32], index: 14, kind: input, shape index: {}]
  %s15 = inlined_call_operand.vmem [shape: f32[1,32], index: 15, kind: input, shape index: {}]
  %s16 = inlined_call_operand.vmem [shape: f32[2,16,32], index: 16, kind: output, shape index: {}]
  %s17 = sld [smem:[#allocation0]]
  $region97: #{hifno_encoder_forward.8} parent=0
    _
  %s19 = ssub.s32 1, %s17
  %s20 = scalar_select 0, %s19, %s17
  loop: start=0, step=1, limit=4
  $region2: #{hifno_encoder_forward.8} parent=0 // loop_pre_header
    _
  $region3: #{hifno_encoder_forward.8} parent=0 // loop_header
    %s22 = sphi 0, %s26
    %p23 = scmp.ge.s32.totalorder %s22, 4
    %s32 = sphi 0, %s34
    %s35 = sphi 0, %s32
    %s36 = sphi 0, %s35
    %s52 = sphi 0, %s36
    %s58 = sphi 0, %s60
    %s61 = sphi 0, %s58
    %s62 = sphi 0, %s61
    %s78 = sphi 0, %s62
    %s82 = sphi 0, %s82
    %s84 = sphi 0, %s82
    %s85 = sphi 0, %s84
    %s99 = sphi 0, %s85
    %s103 = sphi 0, %s103
    %s105 = sphi 0, %s103
    %s106 = sphi 0, %s105
    %s120 = sphi 0, %s106
    %s124 = sphi 0, %s124
    %s126 = sphi 0, %s124
    %s127 = sphi 0, %s126
    %s141 = sphi 0, %s127
    %s145 = sphi 0, %s145
    %s147 = sphi 0, %s145
    %s148 = sphi 0, %s147
    %s162 = sphi 0, %s148
    %s166 = sphi 0, %s166
    %s168 = sphi 0, %s166
    %s169 = sphi 0, %s168
    %s183 = sphi 0, %s169
    %s187 = sphi 0, %s187
    %s189 = sphi 0, %s187
    %s190 = sphi 0, %s189
    %s204 = sphi 0, %s190
    %s208 = sphi 0, %s208
    %s210 = sphi 0, %s208
    %s211 = sphi 0, %s210
    %s225 = sphi 0, %s211
    %s229 = sphi 0, %s229
    %s231 = sphi 0, %s229
    %s232 = sphi 0, %s231
    %s246 = sphi 0, %s232
    %s250 = sphi 0, %s250
    %s252 = sphi 0, %s250
    %s253 = sphi 0, %s252
    %s267 = sphi 0, %s253
    %s271 = sphi 0, %s271
    %s273 = sphi 0, %s271
    %s274 = sphi 0, %s273
    %s288 = sphi 0, %s274
    %s292 = sphi 0, %s292
    %s294 = sphi 0, %s292
    %s295 = sphi 0, %s294
    %s309 = sphi 0, %s295
    %s313 = sphi 0, %s313
    %s315 = sphi 0, %s313
    %s316 = sphi 0, %s315
    %s330 = sphi 0, %s316
    %s334 = sphi 0, %s334
    %s336 = sphi 0, %s334
    %s337 = sphi 0, %s336
    %s351 = sphi 0, %s337
    %s355 = sphi 0, %s355
    %s357 = sphi 0, %s355
    %s358 = sphi 0, %s357
    %s372 = sphi 0, %s358
    %s378 = sphi 0, %s380
    %s381 = sphi 0, %s378
    %s382 = sphi 0, %s381
    %s398 = sphi 0, %s382
  $region4: #{hifno_encoder_forward.8} parent=0 // loop_header_branch
    %25 = sbr.rel (%p23) target = $region8
  $region5: #{hifno_encoder_forward.8} parent=0 // loop_body
    %s27 = ssub.s32 %s22, 1
    %s28 = ssub.s32 %s22, 2
    %s29 = sadd.s32 %s22, 1
    %s30 = ssub.s32 %s22, %s29
    %p31 = scmp.eq.s32.totalorder %s30, 0
    %s33 = sadd.s32 %s32, 1
    %s34 = scalar_select %p31, %s32, %s33
    %p37 = pneg %p31
    %p38 = scmp.eq.s32.totalorder %s22, 1
    %p39 = por %p37, %p38
    %p40 = scmp.ne.s32.totalorder %s32, %s35
    %p41 = scmp.eq.s32.totalorder %s22, 0
    %p42 = por %p40, %p41
    %p43 = scmp.ne.s32.totalorder %s32, %s35
    %p44 = scmp.eq.s32.totalorder %s27, 1
    %p45 = por %p43, %p44
    %p46 = scmp.ne.s32.totalorder %s35, %s36
    %p47 = scmp.eq.s32.totalorder %s27, 0
    %p48 = por %p46, %p47
    %p49 = scmp.ne.s32.totalorder %s35, %s36
    %p50 = scmp.eq.s32.totalorder %s28, 1
    %p51 = por %p49, %p50
    %p53 = scmp.ne.s32.totalorder %s36, %s52
    %p54 = scmp.eq.s32.totalorder %s28, 0
    %p55 = por %p53, %p54
    %s56 = ssub.s32 %s22, %s29
    %p57 = scmp.eq.s32.totalorder %s56, 0
    %s59 = sadd.s32 %s58, 1
    %s60 = scalar_select %p57, %s58, %s59
    %p63 = pneg %p57
    %p64 = scmp.eq.s32.totalorder %s22, 1
    %p65 = por %p63, %p64
    %p66 = scmp.ne.s32.totalorder %s58, %s61
    %p67 = scmp.eq.s32.totalorder %s22, 0
    %p68 = por %p66, %p67
    %p69 = scmp.ne.s32.totalorder %s58, %s61
    %p70 = scmp.eq.s32.totalorder %s27, 1
    %p71 = por %p69, %p70
    %p72 = scmp.ne.s32.totalorder %s61, %s62
    %p73 = scmp.eq.s32.totalorder %s27, 0
    %p74 = por %p72, %p73
    %p75 = scmp.ne.s32.totalorder %s61, %s62
    %p76 = scmp.eq.s32.totalorder %s28, 1
    %p77 = por %p75, %p76
    %p79 = scmp.ne.s32.totalorder %s62, %s78
    %p80 = scmp.eq.s32.totalorder %s28, 0
    %p81 = por %p79, %p80
    %s83 = sadd.s32 %s82, 1
    %p86 = scmp.eq.s32.totalorder %s22, 1
    %p87 = scmp.ne.s32.totalorder %s82, %s84
    %p88 = scmp.eq.s32.totalorder %s22, 0
    %p89 = por %p87, %p88
    %p90 = scmp.ne.s32.totalorder %s82, %s84
    %p91 = scmp.eq.s32.totalorder %s27, 1
    %p92 = por %p90, %p91
    %p93 = scmp.ne.s32.totalorder %s84, %s85
    %p94 = scmp.eq.s32.totalorder %s27, 0
    %p95 = por %p93, %p94
    %p96 = scmp.ne.s32.totalorder %s84, %s85
    %p97 = scmp.eq.s32.totalorder %s28, 1
    %p98 = por %p96, %p97
    %p100 = scmp.ne.s32.totalorder %s85, %s99
    %p101 = scmp.eq.s32.totalorder %s28, 0
    %p102 = por %p100, %p101
    %s104 = sadd.s32 %s103, 1
    %p107 = scmp.eq.s32.totalorder %s22, 1
    %p108 = scmp.ne.s32.totalorder %s103, %s105
    %p109 = scmp.eq.s32.totalorder %s22, 0
    %p110 = por %p108, %p109
    %p111 = scmp.ne.s32.totalorder %s103, %s105
    %p112 = scmp.eq.s32.totalorder %s27, 1
    %p113 = por %p111, %p112
    %p114 = scmp.ne.s32.totalorder %s105, %s106
    %p115 = scmp.eq.s32.totalorder %s27, 0
    %p116 = por %p114, %p115
    %p117 = scmp.ne.s32.totalorder %s105, %s106
    %p118 = scmp.eq.s32.totalorder %s28, 1
    %p119 = por %p117, %p118
    %p121 = scmp.ne.s32.totalorder %s106, %s120
    %p122 = scmp.eq.s32.totalorder %s28, 0
    %p123 = por %p121, %p122
    %s125 = sadd.s32 %s124, 1
    %p128 = scmp.eq.s32.totalorder %s22, 1
    %p129 = scmp.ne.s32.totalorder %s124, %s126
    %p130 = scmp.eq.s32.totalorder %s22, 0
    %p131 = por %p129, %p130
    %p132 = scmp.ne.s32.totalorder %s124, %s126
    %p133 = scmp.eq.s32.totalorder %s27, 1
    %p134 = por %p132, %p133
    %p135 = scmp.ne.s32.totalorder %s126, %s127
    %p136 = scmp.eq.s32.totalorder %s27, 0
    %p137 = por %p135, %p136
    %p138 = scmp.ne.s32.totalorder %s126, %s127
    %p139 = scmp.eq.s32.totalorder %s28, 1
    %p140 = por %p138, %p139
    %p142 = scmp.ne.s32.totalorder %s127, %s141
    %p143 = scmp.eq.s32.totalorder %s28, 0
    %p144 = por %p142, %p143
    %s146 = sadd.s32 %s145, 1
    %p149 = scmp.eq.s32.totalorder %s22, 1
    %p150 = scmp.ne.s32.totalorder %s145, %s147
    %p151 = scmp.eq.s32.totalorder %s22, 0
    %p152 = por %p150, %p151
    %p153 = scmp.ne.s32.totalorder %s145, %s147
    %p154 = scmp.eq.s32.totalorder %s27, 1
    %p155 = por %p153, %p154
    %p156 = scmp.ne.s32.totalorder %s147, %s148
    %p157 = scmp.eq.s32.totalorder %s27, 0
    %p158 = por %p156, %p157
    %p159 = scmp.ne.s32.totalorder %s147, %s148
    %p160 = scmp.eq.s32.totalorder %s28, 1
    %p161 = por %p159, %p160
    %p163 = scmp.ne.s32.totalorder %s148, %s162
    %p164 = scmp.eq.s32.totalorder %s28, 0
    %p165 = por %p163, %p164
    %s167 = sadd.s32 %s166, 1
    %p170 = scmp.eq.s32.totalorder %s22, 1
    %p171 = scmp.ne.s32.totalorder %s166, %s168
    %p172 = scmp.eq.s32.totalorder %s22, 0
    %p173 = por %p171, %p172
    %p174 = scmp.ne.s32.totalorder %s166, %s168
    %p175 = scmp.eq.s32.totalorder %s27, 1
    %p176 = por %p174, %p175
    %p177 = scmp.ne.s32.totalorder %s168, %s169
    %p178 = scmp.eq.s32.totalorder %s27, 0
    %p179 = por %p177, %p178
    %p180 = scmp.ne.s32.totalorder %s168, %s169
    %p181 = scmp.eq.s32.totalorder %s28, 1
    %p182 = por %p180, %p181
    %p184 = scmp.ne.s32.totalorder %s169, %s183
    %p185 = scmp.eq.s32.totalorder %s28, 0
    %p186 = por %p184, %p185
    %s188 = sadd.s32 %s187, 1
    %p191 = scmp.eq.s32.totalorder %s22, 1
    %p192 = scmp.ne.s32.totalorder %s187, %s189
    %p193 = scmp.eq.s32.totalorder %s22, 0
    %p194 = por %p192, %p193
    %p195 = scmp.ne.s32.totalorder %s187, %s189
    %p196 = scmp.eq.s32.totalorder %s27, 1
    %p197 = por %p195, %p196
    %p198 = scmp.ne.s32.totalorder %s189, %s190
    %p199 = scmp.eq.s32.totalorder %s27, 0
    %p200 = por %p198, %p199
    %p201 = scmp.ne.s32.totalorder %s189, %s190
    %p202 = scmp.eq.s32.totalorder %s28, 1
    %p203 = por %p201, %p202
    %p205 = scmp.ne.s32.totalorder %s190, %s204
    %p206 = scmp.eq.s32.totalorder %s28, 0
    %p207 = por %p205, %p206
    %s209 = sadd.s32 %s208, 1
    %p212 = scmp.eq.s32.totalorder %s22, 1
    %p213 = scmp.ne.s32.totalorder %s208, %s210
    %p214 = scmp.eq.s32.totalorder %s22, 0
    %p215 = por %p213, %p214
    %p216 = scmp.ne.s32.totalorder %s208, %s210
    %p217 = scmp.eq.s32.totalorder %s27, 1
    %p218 = por %p216, %p217
    %p219 = scmp.ne.s32.totalorder %s210, %s211
    %p220 = scmp.eq.s32.totalorder %s27, 0
    %p221 = por %p219, %p220
    %p222 = scmp.ne.s32.totalorder %s210, %s211
    %p223 = scmp.eq.s32.totalorder %s28, 1
    %p224 = por %p222, %p223
    %p226 = scmp.ne.s32.totalorder %s211, %s225
    %p227 = scmp.eq.s32.totalorder %s28, 0
    %p228 = por %p226, %p227
    %s230 = sadd.s32 %s229, 1
    %p233 = scmp.eq.s32.totalorder %s22, 1
    %p234 = scmp.ne.s32.totalorder %s229, %s231
    %p235 = scmp.eq.s32.totalorder %s22, 0
    %p236 = por %p234, %p235
    %p237 = scmp.ne.s32.totalorder %s229, %s231
    %p238 = scmp.eq.s32.totalorder %s27, 1
    %p239 = por %p237, %p238
    %p240 = scmp.ne.s32.totalorder %s231, %s232
    %p241 = scmp.eq.s32.totalorder %s27, 0
    %p242 = por %p240, %p241
    %p243 = scmp.ne.s32.totalorder %s231, %s232
    %p244 = scmp.eq.s32.totalorder %s28, 1
    %p245 = por %p243, %p244
    %p247 = scmp.ne.s32.totalorder %s232, %s246
    %p248 = scmp.eq.s32.totalorder %s28, 0
    %p249 = por %p247, %p248
    %s251 = sadd.s32 %s250, 1
    %p254 = scmp.eq.s32.totalorder %s22, 1
    %p255 = scmp.ne.s32.totalorder %s250, %s252
    %p256 = scmp.eq.s32.totalorder %s22, 0
    %p257 = por %p255, %p256
    %p258 = scmp.ne.s32.totalorder %s250, %s252
    %p259 = scmp.eq.s32.totalorder %s27, 1
    %p260 = por %p258, %p259
    %p261 = scmp.ne.s32.totalorder %s252, %s253
    %p262 = scmp.eq.s32.totalorder %s27, 0
    %p263 = por %p261, %p262
    %p264 = scmp.ne.s32.totalorder %s252, %s253
    %p265 = scmp.eq.s32.totalorder %s28, 1
    %p266 = por %p264, %p265
    %p268 = scmp.ne.s32.totalorder %s253, %s267
    %p269 = scmp.eq.s32.totalorder %s28, 0
    %p270 = por %p268, %p269
    %s272 = sadd.s32 %s271, 1
    %p275 = scmp.eq.s32.totalorder %s22, 1
    %p276 = scmp.ne.s32.totalorder %s271, %s273
    %p277 = scmp.eq.s32.totalorder %s22, 0
    %p278 = por %p276, %p277
    %p279 = scmp.ne.s32.totalorder %s271, %s273
    %p280 = scmp.eq.s32.totalorder %s27, 1
    %p281 = por %p279, %p280
    %p282 = scmp.ne.s32.totalorder %s273, %s274
    %p283 = scmp.eq.s32.totalorder %s27, 0
    %p284 = por %p282, %p283
    %p285 = scmp.ne.s32.totalorder %s273, %s274
    %p286 = scmp.eq.s32.totalorder %s28, 1
    %p287 = por %p285, %p286
    %p289 = scmp.ne.s32.totalorder %s274, %s288
    %p290 = scmp.eq.s32.totalorder %s28, 0
    %p291 = por %p289, %p290
    %s293 = sadd.s32 %s292, 1
    %p296 = scmp.eq.s32.totalorder %s22, 1
    %p297 = scmp.ne.s32.totalorder %s292, %s294
    %p298 = scmp.eq.s32.totalorder %s22, 0
    %p299 = por %p297, %p298
    %p300 = scmp.ne.s32.totalorder %s292, %s294
    %p301 = scmp.eq.s32.totalorder %s27, 1
    %p302 = por %p300, %p301
    %p303 = scmp.ne.s32.totalorder %s294, %s295
    %p304 = scmp.eq.s32.totalorder %s27, 0
    %p305 = por %p303, %p304
    %p306 = scmp.ne.s32.totalorder %s294, %s295
    %p307 = scmp.eq.s32.totalorder %s28, 1
    %p308 = por %p306, %p307
    %p310 = scmp.ne.s32.totalorder %s295, %s309
    %p311 = scmp.eq.s32.totalorder %s28, 0
    %p312 = por %p310, %p311
    %s314 = sadd.s32 %s313, 1
    %p317 = scmp.eq.s32.totalorder %s22, 1
    %p318 = scmp.ne.s32.totalorder %s313, %s315
    %p319 = scmp.eq.s32.totalorder %s22, 0
    %p320 = por %p318, %p319
    %p321 = scmp.ne.s32.totalorder %s313, %s315
    %p322 = scmp.eq.s32.totalorder %s27, 1
    %p323 = por %p321, %p322
    %p324 = scmp.ne.s32.totalorder %s315, %s316
    %p325 = scmp.eq.s32.totalorder %s27, 0
    %p326 = por %p324, %p325
    %p327 = scmp.ne.s32.totalorder %s315, %s316
    %p328 = scmp.eq.s32.totalorder %s28, 1
    %p329 = por %p327, %p328
    %p331 = scmp.ne.s32.totalorder %s316, %s330
    %p332 = scmp.eq.s32.totalorder %s28, 0
    %p333 = por %p331, %p332
    %s335 = sadd.s32 %s334, 1
    %p338 = scmp.eq.s32.totalorder %s22, 1
    %p339 = scmp.ne.s32.totalorder %s334, %s336
    %p340 = scmp.eq.s32.totalorder %s22, 0
    %p341 = por %p339, %p340
    %p342 = scmp.ne.s32.totalorder %s334, %s336
    %p343 = scmp.eq.s32.totalorder %s27, 1
    %p344 = por %p342, %p343
    %p345 = scmp.ne.s32.totalorder %s336, %s337
    %p346 = scmp.eq.s32.totalorder %s27, 0
    %p347 = por %p345, %p346
    %p348 = scmp.ne.s32.totalorder %s336, %s337
    %p349 = scmp.eq.s32.totalorder %s28, 1
    %p350 = por %p348, %p349
    %p352 = scmp.ne.s32.totalorder %s337, %s351
    %p353 = scmp.eq.s32.totalorder %s28, 0
    %p354 = por %p352, %p353
    %s356 = sadd.s32 %s355, 1
    %p359 = scmp.eq.s32.totalorder %s22, 1
    %p360 = scmp.ne.s32.totalorder %s355, %s357
    %p361 = scmp.eq.s32.totalorder %s22, 0
    %p362 = por %p360, %p361
    %p363 = scmp.ne.s32.totalorder %s355, %s357
    %p364 = scmp.eq.s32.totalorder %s27, 1
    %p365 = por %p363, %p364
    %p366 = scmp.ne.s32.totalorder %s357, %s358
    %p367 = scmp.eq.s32.totalorder %s27, 0
    %p368 = por %p366, %p367
    %p369 = scmp.ne.s32.totalorder %s357, %s358
    %p370 = scmp.eq.s32.totalorder %s28, 1
    %p371 = por %p369, %p370
    %p373 = scmp.ne.s32.totalorder %s358, %s372
    %p374 = scmp.eq.s32.totalorder %s28, 0
    %p375 = por %p373, %p374
    %s376 = ssub.s32 %s22, %s29
    %p377 = scmp.eq.s32.totalorder %s376, 0
    %s379 = sadd.s32 %s378, 1
    %s380 = scalar_select %p377, %s378, %s379
    %p383 = pneg %p377
    %p384 = scmp.eq.s32.totalorder %s22, 1
    %p385 = por %p383, %p384
    %p386 = scmp.ne.s32.totalorder %s378, %s381
    %p387 = scmp.eq.s32.totalorder %s22, 0
    %p388 = por %p386, %p387
    %p389 = scmp.ne.s32.totalorder %s378, %s381
    %p390 = scmp.eq.s32.totalorder %s27, 1
    %p391 = por %p389, %p390
    %p392 = scmp.ne.s32.totalorder %s381, %s382
    %p393 = scmp.eq.s32.totalorder %s27, 0
    %p394 = por %p392, %p393
    %p395 = scmp.ne.s32.totalorder %s381, %s382
    %p396 = scmp.eq.s32.totalorder %s28, 1
    %p397 = por %p395, %p396
    %p399 = scmp.ne.s32.totalorder %s382, %s398
    %p400 = scmp.eq.s32.totalorder %s28, 0
    %p401 = por %p399, %p400
    %p402 = scmp.le.s32.totalorder 1, %s22
    %p403 = scmp.lt.s32.totalorder %s22, 3
    %p404 = pnand %p402, %p403
    %p405 = pneg %p404
    // Predicated region
    $region9: #{hifno_encoder_forward.8} parent=5 // pred_check
      _
    $region10: #{hifno_encoder_forward.8} parent=5 // pred_check_branch
      %407 = sbr.rel (%p404) target = $region12
    $region11: #{hifno_encoder_forward.8} parent=5 // pred_region
      %s408 = ssub.s32 %s22, 1
      // Predicated region
      $region13: #{hifno_encoder_forward.8} parent=11 // pred_check
        %p409 = pneg %p95
      $region14: #{hifno_encoder_forward.8} parent=11 // pred_check_branch
        %411 = sbr.rel (%p409) target = $region16
      $region15: #{hifno_encoder_forward.8} parent=11 // pred_region
        _
      $region16: #{hifno_encoder_forward.8} parent=11 // pred_fallthru
        _
      // Predicated region
      $region17: #{hifno_encoder_forward.8} parent=11 // pred_check
        %p412 = pneg %p116
      $region18: #{hifno_encoder_forward.8} parent=11 // pred_check_branch
        %414 = sbr.rel (%p412) target = $region20
      $region19: #{hifno_encoder_forward.8} parent=11 // pred_region
        _
      $region20: #{hifno_encoder_forward.8} parent=11 // pred_fallthru
        _
      // Predicated region
      $region21: #{hifno_encoder_forward.8} parent=11 // pred_check
        %p415 = pneg %p137
      $region22: #{hifno_encoder_forward.8} parent=11 // pred_check_branch
        %417 = sbr.rel (%p415) target = $region24
      $region23: #{hifno_encoder_forward.8} parent=11 // pred_region
        _
      $region24: #{hifno_encoder_forward.8} parent=11 // pred_fallthru
        _
      // Predicated region
      $region25: #{hifno_encoder_forward.8} parent=11 // pred_check
        %p418 = pneg %p158
      $region26: #{hifno_encoder_forward.8} parent=11 // pred_check_branch
        %420 = sbr.rel (%p418) target = $region28
      $region27: #{hifno_encoder_forward.8} parent=11 // pred_region
        _
      $region28: #{hifno_encoder_forward.8} parent=11 // pred_fallthru
        _
      // Predicated region
      $region29: #{hifno_encoder_forward.8} parent=11 // pred_check
        %p421 = pneg %p179
      $region30: #{hifno_encoder_forward.8} parent=11 // pred_check_branch
        %423 = sbr.rel (%p421) target = $region32
      $region31: #{hifno_encoder_forward.8} parent=11 // pred_region
        _
      $region32: #{hifno_encoder_forward.8} parent=11 // pred_fallthru
        _
      // Predicated region
      $region33: #{hifno_encoder_forward.8} parent=11 // pred_check
        %p424 = pneg %p200
      $region34: #{hifno_encoder_forward.8} parent=11 // pred_check_branch
        %426 = sbr.rel (%p424) target = $region36
      $region35: #{hifno_encoder_forward.8} parent=11 // pred_region
        _
      $region36: #{hifno_encoder_forward.8} parent=11 // pred_fallthru
        _
      // Predicated region
      $region37: #{hifno_encoder_forward.8} parent=11 // pred_check
        %p427 = pneg %p221
      $region38: #{hifno_encoder_forward.8} parent=11 // pred_check_branch
        %429 = sbr.rel (%p427) target = $region40
      $region39: #{hifno_encoder_forward.8} parent=11 // pred_region
        _
      $region40: #{hifno_encoder_forward.8} parent=11 // pred_fallthru
        _
      // Predicated region
      $region41: #{hifno_encoder_forward.8} parent=11 // pred_check
        %p430 = pneg %p242
      $region42: #{hifno_encoder_forward.8} parent=11 // pred_check_branch
        %432 = sbr.rel (%p430) target = $region44
      $region43: #{hifno_encoder_forward.8} parent=11 // pred_region
        _
      $region44: #{hifno_encoder_forward.8} parent=11 // pred_fallthru
        _
      // Predicated region
      $region45: #{hifno_encoder_forward.8} parent=11 // pred_check
        %p433 = pneg %p263
      $region46: #{hifno_encoder_forward.8} parent=11 // pred_check_branch
        %435 = sbr.rel (%p433) target = $region48
      $region47: #{hifno_encoder_forward.8} parent=11 // pred_region
        _
      $region48: #{hifno_encoder_forward.8} parent=11 // pred_fallthru
        _
      // Predicated region
      $region49: #{hifno_encoder_forward.8} parent=11 // pred_check
        %p436 = pneg %p284
      $region50: #{hifno_encoder_forward.8} parent=11 // pred_check_branch
        %438 = sbr.rel (%p436) target = $region52
      $region51: #{hifno_encoder_forward.8} parent=11 // pred_region
        _
      $region52: #{hifno_encoder_forward.8} parent=11 // pred_fallthru
        _
      // Predicated region
      $region53: #{hifno_encoder_forward.8} parent=11 // pred_check
        %p439 = pneg %p305
      $region54: #{hifno_encoder_forward.8} parent=11 // pred_check_branch
        %441 = sbr.rel (%p439) target = $region56
      $region55: #{hifno_encoder_forward.8} parent=11 // pred_region
        _
      $region56: #{hifno_encoder_forward.8} parent=11 // pred_fallthru
        _
      // Predicated region
      $region57: #{hifno_encoder_forward.8} parent=11 // pred_check
        %p442 = pneg %p326
      $region58: #{hifno_encoder_forward.8} parent=11 // pred_check_branch
        %444 = sbr.rel (%p442) target = $region60
      $region59: #{hifno_encoder_forward.8} parent=11 // pred_region
        _
      $region60: #{hifno_encoder_forward.8} parent=11 // pred_fallthru
        _
      // Predicated region
      $region61: #{hifno_encoder_forward.8} parent=11 // pred_check
        %p445 = pneg %p347
      $region62: #{hifno_encoder_forward.8} parent=11 // pred_check_branch
        %447 = sbr.rel (%p445) target = $region64
      $region63: #{hifno_encoder_forward.8} parent=11 // pred_region
        _
      $region64: #{hifno_encoder_forward.8} parent=11 // pred_fallthru
        _
      // Predicated region
      $region65: #{hifno_encoder_forward.8} parent=11 // pred_check
        %p448 = pneg %p368
      $region66: #{hifno_encoder_forward.8} parent=11 // pred_check_branch
        %450 = sbr.rel (%p448) target = $region68
      $region67: #{hifno_encoder_forward.8} parent=11 // pred_region
        _
      $region68: #{hifno_encoder_forward.8} parent=11 // pred_fallthru
        _
    $region12: #{hifno_encoder_forward.8} parent=5 // pred_fallthru
      _
    %p451 = scmp.lt.s32.totalorder %s22, 2
    // Predicated region
    $region69: #{hifno_encoder_forward.8} parent=5 // pred_check
      %p452 = pneg %p451
    $region70: #{hifno_encoder_forward.8} parent=5 // pred_check_branch
      %454 = sbr.rel (%p452) target = $region72
    $region71: #{hifno_encoder_forward.8} parent=5 // pred_region
      // Predicated region
      $region73: #{hifno_encoder_forward.8} parent=71 // pred_check
        %p455 = pneg %p42
      $region74: #{hifno_encoder_forward.8} parent=71 // pred_check_branch
        %457 = sbr.rel (%p455) target = $region76
      $region75: #{hifno_encoder_forward.8} parent=71 // pred_region
        %p458 = scmp.lt.s32.totalorder %s22, 1
        %s459 = scalar_select %p458, %s22, 1
        %s460 = smul.addr %s459, 2
        %s461 = smul.addr %s460, 8
        %s462 = scalar_lea.vmem %s0, %s461
      $region76: #{hifno_encoder_forward.8} parent=71 // pred_fallthru
        _
      // Predicated region
      $region77: #{hifno_encoder_forward.8} parent=71 // pred_check
        %p463 = pneg %p68
      $region78: #{hifno_encoder_forward.8} parent=71 // pred_check_branch
        %465 = sbr.rel (%p463) target = $region80
      $region79: #{hifno_encoder_forward.8} parent=71 // pred_region
        %p466 = scmp.lt.s32.totalorder %s22, 1
        %s467 = scalar_select %p466, %s22, 1
        %s468 = smul.addr %s467, 2
        %s469 = smul.addr %s468, 8
        %s470 = scalar_lea.vmem %s1, %s469
      $region80: #{hifno_encoder_forward.8} parent=71 // pred_fallthru
        _
    $region72: #{hifno_encoder_forward.8} parent=5 // pred_fallthru
      _
    %p471 = scmp.le.s32.totalorder 1, %s22
    %p472 = scmp.lt.s32.totalorder %s22, 3
    %p473 = pnand %p471, %p472
    %p474 = pneg %p473
    // Predicated region
    $region81: #{hifno_encoder_forward.8} parent=5 // pred_check
      _
    $region82: #{hifno_encoder_forward.8} parent=5 // pred_check_branch
      %476 = sbr.rel (%p473) target = $region84
    $region83: #{hifno_encoder_forward.8} parent=5 // pred_region
      %s477 = ssub.s32 %s22, 1
      %p478 = scmp.lt.s32.totalorder %s27, 1
      %s479 = scalar_select %p478, %s27, 1
      %s480 = smul.addr %s479, 2
      %s481 = smul.addr %s480, 8
      %s482 = scalar_lea.vmem %s0, %s481
      %p483 = pneg %p48
      %p484 = pneg %p45
      %p485 = scmp.lt.s32.totalorder %s27, 1
      %s486 = scalar_select %p485, %s27, 1
      %s487 = smul.addr %s486, 2
      %s488 = smul.addr %s487, 8
      %s489 = scalar_lea.vmem %s1, %s488
      %p490 = pneg %p74
      %p491 = pneg %p71
      %p492 = pneg %p95
      %p493 = pneg %p92
      %p494 = pneg %p116
      %p495 = pneg %p113
      %p496 = pneg %p137
      %p497 = pneg %p134
      %p498 = pneg %p158
      %p499 = pneg %p155
      %p500 = pneg %p179
      %p501 = pneg %p176
      %p502 = pneg %p200
      %p503 = pneg %p197
      %p504 = pneg %p221
      %p505 = pneg %p218
      %p506 = pneg %p242
      %p507 = pneg %p239
      %p508 = pneg %p263
      %p509 = pneg %p260
      %p510 = pneg %p284
      %p511 = pneg %p281
      %p512 = pneg %p305
      %p513 = pneg %p302
      %p514 = pneg %p326
      %p515 = pneg %p323
      %p516 = pneg %p347
      %p517 = pneg %p344
      %p518 = pneg %p368
      %p519 = pneg %p365
      %p520 = pneg %p394
      %p521 = pneg %p391
      %p522 = scmp.lt.s32.totalorder %s27, 1
      %s523 = scalar_select %p522, %s27, 1
      %s524 = smul.addr %s523, 2
      %s525 = smul.addr %s524, 8
      %s526 = scalar_lea.vmem %s16, %s525
      %p527 = scmp.lt.s32.totalorder %s27, 1
      %s528 = scalar_select %p527, %s27, 1
      %s529 = smul.addr %s528, 2
      %s530 = smul.addr %s529, 8
      %s531 = scalar_lea.vmem %s0, %s530
      %p532 = scmp.lt.s32.totalorder %s27, 1
      %s533 = scalar_select %p532, %s27, 1
      %s534 = smul.addr %s533, 2
      %s535 = smul.addr %s534, 8
      %s536 = scalar_lea.vmem %s1, %s535
      %p537 = scmp.lt.s32.totalorder %s27, 1
      %s538 = scalar_select %p537, %s27, 1
      %s539 = smul.addr %s538, 2
      %s540 = smul.addr %s539, 8
      %s541 = scalar_lea.vmem %s16, %s540
      %v543 = vld [vmem:[%s531] sm:$0xff]
      %v544 = vld [vmem:[%s531 + $0x8] sm:$0xff]
      %v545 = vld [vmem:[%s536] sm:$0xff]
      %v546 = vld [vmem:[%s536 + $0x8] sm:$0xff]
      %v547 = vld [vmem:[%s2] sm:$0xf]
      %v548 = vld [vmem:[%s2 + $0x4] sm:$0xf]
      %v549 = vld [vmem:[%s2 + $0x8] sm:$0xf]
      %v550 = vld [vmem:[%s2 + $0xc] sm:$0xf]
      %v551 = vpack.c.bf16 %v544, %v543
      %v556 = vunpack.c.l.b16 %v547
      %v557 = vunpack.c.l.b16 %v548
      %v558 = vunpack.c.l.b16 %v549
      %v559 = vunpack.c.l.b16 %v550
      %v560 = vpack.c.b16 %v557, %v556
      %v561 = vpack.c.b16 %v559, %v558
      %vm564 = vcmask 261120
      %v566 = vsel %vm564, %v551, 0
      %568 = vmatprep.subr.bf16.mxu0 0
      %569 = vmatpush1.bf16.msra.mxu0 0
      %570 = vmatprep.subr.bf16.mxu0 0
      %571 = vmatpush1.bf16.msra.mxu0 0
      %572 = vmatprep.subr.bf16.mxu0 0
      %573 = vmatpush1.bf16.msra.mxu0 0
      %574 = vmatprep.subr.bf16.mxu0 0
      %575 = vmatpush1.bf16.msra.mxu0 0
      %576 = vmatprep.subr.bf16.mxu0 0
      %577 = vmatpush1.bf16.msra.mxu0 0
      %578 = vmatprep.subr.bf16.mxu0 0
      %579 = vmatpush1.bf16.msra.mxu0 0
      %580 = vmatprep.subr.bf16.mxu0 0
      %581 = vmatpush1.bf16.msra.mxu0 %v561
      %582 = vmatprep.subr.bf16.mxu0 0
      %583 = vmatpush1.bf16.msra.mxu0 %v560
      %584 = vmatprep.subr.bf16.mxu0 0
      %585 = vmatpush2.bf16.msra.mxu0 0
      %586 = vmatprep.subr.bf16.mxu0 0
      %587 = vmatpush2.bf16.msra.mxu0 0
      %588 = vmatprep.subr.bf16.mxu0 0
      %589 = vmatpush2.bf16.msra.mxu0 0
      %590 = vmatprep.subr.bf16.mxu0 0
      %591 = vmatpush2.bf16.msra.mxu0 0
      %592 = vmatprep.subr.bf16.mxu0 0
      %593 = vmatpush2.bf16.msra.mxu0 0
      %594 = vmatprep.subr.bf16.mxu0 0
      %595 = vmatpush2.bf16.msra.mxu0 0
      %596 = vmatprep.subr.bf16.mxu0 0
      %597 = vmatpush2.bf16.msra.mxu0 0
      %598 = vmatprep.subr.bf16.mxu0 0
      %599 = vmatpush2.bf16.msra.mxu0 0
      %600 = vmatprep.mubr.bf16.mxu0 0
      %601 = vmatmul.mubr.bf16.gmra.mxu0 %v566
      %v602 = vpop.f32.mrf.mxu0
      %v603 = vadd.f32 0.0, %v602
      %v604 = vpop.f32.mrf.mxu0
      %v605 = vpop.f32.mrf.mxu0
      %v606 = vadd.f32 0.0, %v605
      %v607 = vpop.f32.mrf.mxu0
      %608 = vdwg.mxu0
      %v609 = vadd.f32 %v545, %v603
      %v610 = vadd.f32 %v546, %v606
      %v611 = vld [vmem:[%s3] sm:$0x1]
      %v613 = vlaneseq
      %v614 = vshrl.u32 %v613, 7
      %v615 = vsub.s32 0, %v614
      %v616 = vrot.slane %v611, %v615
      %v618 = vadd.f32 %v609, %v616
      %v619 = vadd.f32 %v610, %v616
      %v620 = vmul.f32 %v618, 0.5
      %v621 = vmul.f32 %v619, 0.5
      %v622 = vmul.f32 %v618, 0.044715
      %v623 = vmul.f32 %v619, 0.044715
      %v624 = vmul.f32 %v622, %v618
      %v625 = vmul.f32 %v623, %v619
      %v626 = vmul.f32 %v624, %v618
      %v627 = vmul.f32 %v625, %v619
      %v628 = vadd.f32 %v618, %v626
      %v629 = vadd.f32 %v619, %v627
      %v630 = vmul.f32 %v628, 0.7978846
      %v631 = vmul.f32 %v629, 0.7978846
      %v632 = vtanh.pop %v630
      %v633 = vtanh.pop %v631
      %v634 = vadd.f32 %v632, 1.0
      %v635 = vadd.f32 %v633, 1.0
      %v636 = vmul.f32 %v620, %v634
      %v637 = vmul.f32 %v621, %v635
      %v638 = vadd.f32 %v543, %v636
      %v639 = vadd.f32 %v544, %v637
      %v640 = vld [vmem:[%s4] sm:$0x1]
      %v641 = vld [vmem:[%s5] sm:$0x1]
      %v642 = vsel %vm564, %v638, 0.0
      %643 = vadd.xlane.f32.xlu0 %v642
      %v644 = vpop.xlane.xlu0 %643
      %v645 = vsel %vm564, %v639, 0.0
      %646 = vadd.xlane.f32.xlu0 %v645
      %v647 = vpop.xlane.xlu0 %646
      %v648 = vrcp.pop 32.0
      %v649 = vmul.f32 %v644, %v648
      %v650 = vmul.f32 %v647, %v648
      %v651 = vsub.f32 %v638, %v649
      %v652 = vsub.f32 %v639, %v650
      %v653 = vmul.f32 %v651, %v651
      %v654 = vmul.f32 %v652, %v652
      %v655 = vsel %vm564, %v653, 0.0
      %656 = vadd.xlane.f32.xlu0 %v655
      %v657 = vpop.xlane.xlu0 %656
      %v658 = vsel %vm564, %v654, 0.0
      %659 = vadd.xlane.f32.xlu0 %v658
      %v660 = vpop.xlane.xlu0 %659
      %v661 = vmul.f32 %v657, %v648
      %v662 = vmul.f32 %v660, %v648
      %v663 = vadd.f32 %v661, 1e-05
      %v664 = vadd.f32 %v662, 1e-05
      %v665 = vrsqrt.pop %v663
      %v666 = vrsqrt.pop %v664
      %v667 = vmul.f32 %v651, %v665
      %v668 = vmul.f32 %v652, %v666
      %v670 = vlaneseq
      %v671 = vshrl.u32 %v670, 7
      %v672 = vsub.s32 0, %v671
      %v673 = vrot.slane %v640, %v672
      %v675 = vmul.f32 %v667, %v673
      %v676 = vmul.f32 %v668, %v673
      %v678 = vlaneseq
      %v679 = vshrl.u32 %v678, 7
      %v680 = vsub.s32 0, %v679
      %v681 = vrot.slane %v641, %v680
      %v683 = vadd.f32 %v675, %v681
      %v684 = vadd.f32 %v676, %v681
      %v685 = vld [vmem:[%s6] sm:$0xf]
      %v686 = vld [vmem:[%s6 + $0x4] sm:$0xf]
      %v687 = vld [vmem:[%s6 + $0x8] sm:$0xf]
      %v688 = vld [vmem:[%s6 + $0xc] sm:$0xf]
      %v689 = vpack.c.bf16 %v684, %v683
      %v690 = vld [vmem:[%s7] sm:$0x1]
      %v692 = vlaneseq
      %v693 = vshrl.u32 %v692, 7
      %v694 = vsub.s32 0, %v693
      %v695 = vrot.slane %v690, %v694
      %v701 = vunpack.c.l.b16 %v685
      %v702 = vunpack.c.l.b16 %v686
      %v703 = vunpack.c.l.b16 %v687
      %v704 = vunpack.c.l.b16 %v688
      %v705 = vpack.c.b16 %v702, %v701
      %v706 = vpack.c.b16 %v704, %v703
      %v710 = vsel %vm564, %v689, 0
      %712 = vmatprep.subr.bf16.mxu0 0
      %713 = vmatpush1.bf16.msra.mxu0 0
      %714 = vmatprep.subr.bf16.mxu0 0
      %715 = vmatpush1.bf16.msra.mxu0 0
      %716 = vmatprep.subr.bf16.mxu0 0
      %717 = vmatpush1.bf16.msra.mxu0 0
      %718 = vmatprep.subr.bf16.mxu0 0
      %719 = vmatpush1.bf16.msra.mxu0 0
      %720 = vmatprep.subr.bf16.mxu0 0
      %721 = vmatpush1.bf16.msra.mxu0 0
      %722 = vmatprep.subr.bf16.mxu0 0
      %723 = vmatpush1.bf16.msra.mxu0 0
      %724 = vmatprep.subr.bf16.mxu0 0
      %725 = vmatpush1.bf16.msra.mxu0 %v706
      %726 = vmatprep.subr.bf16.mxu0 0
      %727 = vmatpush1.bf16.msra.mxu0 %v705
      %728 = vmatprep.subr.bf16.mxu0 0
      %729 = vmatpush2.bf16.msra.mxu0 0
      %730 = vmatprep.subr.bf16.mxu0 0
      %731 = vmatpush2.bf16.msra.mxu0 0
      %732 = vmatprep.subr.bf16.mxu0 0
      %733 = vmatpush2.bf16.msra.mxu0 0
      %734 = vmatprep.subr.bf16.mxu0 0
      %735 = vmatpush2.bf16.msra.mxu0 0
      %736 = vmatprep.subr.bf16.mxu0 0
      %737 = vmatpush2.bf16.msra.mxu0 0
      %738 = vmatprep.subr.bf16.mxu0 0
      %739 = vmatpush2.bf16.msra.mxu0 0
      %740 = vmatprep.subr.bf16.mxu0 0
      %741 = vmatpush2.bf16.msra.mxu0 0
      %742 = vmatprep.subr.bf16.mxu0 0
      %743 = vmatpush2.bf16.msra.mxu0 0
      %744 = vmatprep.mubr.bf16.mxu0 0
      %745 = vmatmul.mubr.bf16.gmra.mxu0 %v710
      %v746 = vpop.f32.mrf.mxu0
      %v747 = vadd.f32 %v695, %v746
      %v748 = vpop.f32.mrf.mxu0
      %v749 = vpop.f32.mrf.mxu0
      %v750 = vadd.f32 %v695, %v749
      %v751 = vpop.f32.mrf.mxu0
      %752 = vdwg.mxu0
      %755 = vrot.lane.b32.xlu0 %v747, 120
      %v756 = vpop.permute.xlu0 %755
      %757 = vrot.lane.b32.xlu0 %v750, 120
      %v758 = vpop.permute.xlu0 %757
      %761 = vrot.lane.b32.xlu0 %v747, 112
      %v762 = vpop.permute.xlu0 %761
      %763 = vrot.lane.b32.xlu0 %v750, 112
      %v764 = vpop.permute.xlu0 %763
      %767 = vrot.lane.b32.xlu0 %v747, 104
      %v768 = vpop.permute.xlu0 %767
      %769 = vrot.lane.b32.xlu0 %v750, 104
      %v770 = vpop.permute.xlu0 %769
      %v773 = vpack.c.bf16 %v750, %v747
      %v774 = vpack.c.bf16 %v758, %v756
      %v775 = vpack.c.bf16 %v764, %v762
      %v776 = vpack.c.bf16 %v770, %v768
      %778 = vrot.lane.b32.xlu0 %v773, 96
      %v779 = vpop.permute.xlu0 %778
      %vm780 = vcmask 64512
      %v782 = vsel %vm780, %v773, 0
      %v785 = vsel %vm780, %v779, 0
      %787 = vmatprep.subr.bf16.mxu0 0
      %788 = vmatpush1.bf16.xpose.msra.mxu0 0
      %789 = vmatprep.subr.bf16.mxu0 0
      %790 = vmatpush1.bf16.xpose.msra.mxu0 0
      %791 = vmatprep.subr.bf16.mxu0 0
      %792 = vmatpush1.bf16.xpose.msra.mxu0 0
      %793 = vmatprep.subr.bf16.mxu0 0
      %794 = vmatpush1.bf16.xpose.msra.mxu0 0
      %795 = vmatprep.subr.bf16.mxu0 0
      %796 = vmatpush1.bf16.xpose.msra.mxu0 0
      %797 = vmatprep.subr.bf16.mxu0 0
      %798 = vmatpush1.bf16.xpose.msra.mxu0 0
      %799 = vmatprep.subr.bf16.mxu0 0
      %800 = vmatpush1.bf16.xpose.msra.mxu0 0
      %801 = vmatprep.subr.bf16.mxu0 0
      %802 = vmatpush1.bf16.xpose.msra.mxu0 %v785
      %803 = vmatprep.subr.bf16.mxu0 0
      %804 = vmatpush2.bf16.xpose.msra.mxu0 0
      %805 = vmatprep.subr.bf16.mxu0 0
      %806 = vmatpush2.bf16.xpose.msra.mxu0 0
      %807 = vmatprep.subr.bf16.mxu0 0
      %808 = vmatpush2.bf16.xpose.msra.mxu0 0
      %809 = vmatprep.subr.bf16.mxu0 0
      %810 = vmatpush2.bf16.xpose.msra.mxu0 0
      %811 = vmatprep.subr.bf16.mxu0 0
      %812 = vmatpush2.bf16.xpose.msra.mxu0 0
      %813 = vmatprep.subr.bf16.mxu0 0
      %814 = vmatpush2.bf16.xpose.msra.mxu0 0
      %815 = vmatprep.subr.bf16.mxu0 0
      %816 = vmatpush2.bf16.xpose.msra.mxu0 0
      %817 = vmatprep.subr.bf16.mxu0 0
      %818 = vmatpush2.bf16.xpose.msra.mxu0 0
      %819 = vmatprep.mubr.bf16.mxu0 0
      %820 = vmatmul.mubr.bf16.gmra.mxu0 %v782
      %v821 = vpop.f32.mrf.mxu0
      %v822 = vadd.f32 0.0, %v821
      %v823 = vpop.f32.mrf.mxu0
      %v824 = vpop.f32.mrf.mxu0
      %v825 = vadd.f32 0.0, %v824
      %v826 = vpop.f32.mrf.mxu0
      %827 = vdwg.mxu0
      %829 = vrot.lane.b32.xlu0 %v774, 96
      %v830 = vpop.permute.xlu0 %829
      %v832 = vsel %vm780, %v774, 0
      %v835 = vsel %vm780, %v830, 0
      %837 = vmatprep.subr.bf16.mxu0 0
      %838 = vmatpush1.bf16.xpose.msra.mxu0 0
      %839 = vmatprep.subr.bf16.mxu0 0
      %840 = vmatpush1.bf16.xpose.msra.mxu0 0
      %841 = vmatprep.subr.bf16.mxu0 0
      %842 = vmatpush1.bf16.xpose.msra.mxu0 0
      %843 = vmatprep.subr.bf16.mxu0 0
      %844 = vmatpush1.bf16.xpose.msra.mxu0 0
      %845 = vmatprep.subr.bf16.mxu0 0
      %846 = vmatpush1.bf16.xpose.msra.mxu0 0
      %847 = vmatprep.subr.bf16.mxu0 0
      %848 = vmatpush1.bf16.xpose.msra.mxu0 0
      %849 = vmatprep.subr.bf16.mxu0 0
      %850 = vmatpush1.bf16.xpose.msra.mxu0 0
      %851 = vmatprep.subr.bf16.mxu0 0
      %852 = vmatpush1.bf16.xpose.msra.mxu0 %v835
      %853 = vmatprep.subr.bf16.mxu0 0
      %854 = vmatpush2.bf16.xpose.msra.mxu0 0
      %855 = vmatprep.subr.bf16.mxu0 0
      %856 = vmatpush2.bf16.xpose.msra.mxu0 0
      %857 = vmatprep.subr.bf16.mxu0 0
      %858 = vmatpush2.bf16.xpose.msra.mxu0 0
      %859 = vmatprep.subr.bf16.mxu0 0
      %860 = vmatpush2.bf16.xpose.msra.mxu0 0
      %861 = vmatprep.subr.bf16.mxu0 0
      %862 = vmatpush2.bf16.xpose.msra.mxu0 0
      %863 = vmatprep.subr.bf16.mxu0 0
      %864 = vmatpush2.bf16.xpose.msra.mxu0 0
      %865 = vmatprep.subr.bf16.mxu0 0
      %866 = vmatpush2.bf16.xpose.msra.mxu0 0
      %867 = vmatprep.subr.bf16.mxu0 0
      %868 = vmatpush2.bf16.xpose.msra.mxu0 0
      %869 = vmatprep.mubr.bf16.mxu0 0
      %870 = vmatmul.mubr.bf16.gmra.mxu0 %v832
      %v871 = vpop.f32.mrf.mxu0
      %v872 = vadd.f32 0.0, %v871
      %v873 = vpop.f32.mrf.mxu0
      %v874 = vpop.f32.mrf.mxu0
      %v875 = vadd.f32 0.0, %v874
      %v876 = vpop.f32.mrf.mxu0
      %877 = vdwg.mxu0
      %879 = vrot.lane.b32.xlu0 %v775, 96
      %v880 = vpop.permute.xlu0 %879
      %v882 = vsel %vm780, %v775, 0
      %v885 = vsel %vm780, %v880, 0
      %887 = vmatprep.subr.bf16.mxu0 0
      %888 = vmatpush1.bf16.xpose.msra.mxu0 0
      %889 = vmatprep.subr.bf16.mxu0 0
      %890 = vmatpush1.bf16.xpose.msra.mxu0 0
      %891 = vmatprep.subr.bf16.mxu0 0
      %892 = vmatpush1.bf16.xpose.msra.mxu0 0
      %893 = vmatprep.subr.bf16.mxu0 0
      %894 = vmatpush1.bf16.xpose.msra.mxu0 0
      %895 = vmatprep.subr.bf16.mxu0 0
      %896 = vmatpush1.bf16.xpose.msra.mxu0 0
      %897 = vmatprep.subr.bf16.mxu0 0
      %898 = vmatpush1.bf16.xpose.msra.mxu0 0
      %899 = vmatprep.subr.bf16.mxu0 0
      %900 = vmatpush1.bf16.xpose.msra.mxu0 0
      %901 = vmatprep.subr.bf16.mxu0 0
      %902 = vmatpush1.bf16.xpose.msra.mxu0 %v885
      %903 = vmatprep.subr.bf16.mxu0 0
      %904 = vmatpush2.bf16.xpose.msra.mxu0 0
      %905 = vmatprep.subr.bf16.mxu0 0
      %906 = vmatpush2.bf16.xpose.msra.mxu0 0
      %907 = vmatprep.subr.bf16.mxu0 0
      %908 = vmatpush2.bf16.xpose.msra.mxu0 0
      %909 = vmatprep.subr.bf16.mxu0 0
      %910 = vmatpush2.bf16.xpose.msra.mxu0 0
      %911 = vmatprep.subr.bf16.mxu0 0
      %912 = vmatpush2.bf16.xpose.msra.mxu0 0
      %913 = vmatprep.subr.bf16.mxu0 0
      %914 = vmatpush2.bf16.xpose.msra.mxu0 0
      %915 = vmatprep.subr.bf16.mxu0 0
      %916 = vmatpush2.bf16.xpose.msra.mxu0 0
      %917 = vmatprep.subr.bf16.mxu0 0
      %918 = vmatpush2.bf16.xpose.msra.mxu0 0
      %919 = vmatprep.mubr.bf16.mxu0 0
      %920 = vmatmul.mubr.bf16.gmra.mxu0 %v882
      %v921 = vpop.f32.mrf.mxu0
      %v922 = vadd.f32 0.0, %v921
      %v923 = vpop.f32.mrf.mxu0
      %v924 = vpop.f32.mrf.mxu0
      %v925 = vadd.f32 0.0, %v924
      %v926 = vpop.f32.mrf.mxu0
      %927 = vdwg.mxu0
      %929 = vrot.lane.b32.xlu0 %v776, 96
      %v930 = vpop.permute.xlu0 %929
      %v932 = vsel %vm780, %v776, 0
      %v935 = vsel %vm780, %v930, 0
      %937 = vmatprep.subr.bf16.mxu0 0
      %938 = vmatpush1.bf16.xpose.msra.mxu0 0
      %939 = vmatprep.subr.bf16.mxu0 0
      %940 = vmatpush1.bf16.xpose.msra.mxu0 0
      %941 = vmatprep.subr.bf16.mxu0 0
      %942 = vmatpush1.bf16.xpose.msra.mxu0 0
      %943 = vmatprep.subr.bf16.mxu0 0
      %944 = vmatpush1.bf16.xpose.msra.mxu0 0
      %945 = vmatprep.subr.bf16.mxu0 0
      %946 = vmatpush1.bf16.xpose.msra.mxu0 0
      %947 = vmatprep.subr.bf16.mxu0 0
      %948 = vmatpush1.bf16.xpose.msra.mxu0 0
      %949 = vmatprep.subr.bf16.mxu0 0
      %950 = vmatpush1.bf16.xpose.msra.mxu0 0
      %951 = vmatprep.subr.bf16.mxu0 0
      %952 = vmatpush1.bf16.xpose.msra.mxu0 %v935
      %953 = vmatprep.subr.bf16.mxu0 0
      %954 = vmatpush2.bf16.xpose.msra.mxu0 0
      %955 = vmatprep.subr.bf16.mxu0 0
      %956 = vmatpush2.bf16.xpose.msra.mxu0 0
      %957 = vmatprep.subr.bf16.mxu0 0
      %958 = vmatpush2.bf16.xpose.msra.mxu0 0
      %959 = vmatprep.subr.bf16.mxu0 0
      %960 = vmatpush2.bf16.xpose.msra.mxu0 0
      %961 = vmatprep.subr.bf16.mxu0 0
      %962 = vmatpush2.bf16.xpose.msra.mxu0 0
      %963 = vmatprep.subr.bf16.mxu0 0
      %964 = vmatpush2.bf16.xpose.msra.mxu0 0
      %965 = vmatprep.subr.bf16.mxu0 0
      %966 = vmatpush2.bf16.xpose.msra.mxu0 0
      %967 = vmatprep.subr.bf16.mxu0 0
      %968 = vmatpush2.bf16.xpose.msra.mxu0 0
      %969 = vmatprep.mubr.bf16.mxu0 0
      %970 = vmatmul.mubr.bf16.gmra.mxu0 %v932
      %v971 = vpop.f32.mrf.mxu0
      %v972 = vadd.f32 0.0, %v971
      %v973 = vpop.f32.mrf.mxu0
      %v974 = vpop.f32.mrf.mxu0
      %v975 = vadd.f32 0.0, %v974
      %v976 = vpop.f32.mrf.mxu0
      %977 = vdwg.mxu0
      %v978 = vmul.f32 %v822, 0.35355338
      %v979 = vmul.f32 %v825, 0.35355338
      %v980 = vmul.f32 %v872, 0.35355338
      %v981 = vmul.f32 %v875, 0.35355338
      %v982 = vmul.f32 %v922, 0.35355338
      %v983 = vmul.f32 %v925, 0.35355338
      %v984 = vmul.f32 %v972, 0.35355338
      %v985 = vmul.f32 %v975, 0.35355338
      %vm986 = vcmask 130048
      %v987 = vsel %vm986, %v978, -inf
      %988 = vmax.xlane.f32.xlu0 %v987
      %v989 = vpop.xlane.xlu0 %988
      %v990 = vsel %vm986, %v979, -inf
      %991 = vmax.xlane.f32.xlu0 %v990
      %v992 = vpop.xlane.xlu0 %991
      %v993 = vsel %vm986, %v980, -inf
      %994 = vmax.xlane.f32.xlu0 %v993
      %v995 = vpop.xlane.xlu0 %994
      %v996 = vsel %vm986, %v981, -inf
      %997 = vmax.xlane.f32.xlu0 %v996
      %v998 = vpop.xlane.xlu0 %997
      %v999 = vsel %vm986, %v982, -inf
      %1000 = vmax.xlane.f32.xlu0 %v999
      %v1001 = vpop.xlane.xlu0 %1000
      %v1002 = vsel %vm986, %v983, -inf
      %1003 = vmax.xlane.f32.xlu0 %v1002
      %v1004 = vpop.xlane.xlu0 %1003
      %v1005 = vsel %vm986, %v984, -inf
      %1006 = vmax.xlane.f32.xlu0 %v1005
      %v1007 = vpop.xlane.xlu0 %1006
      %v1008 = vsel %vm986, %v985, -inf
      %1009 = vmax.xlane.f32.xlu0 %v1008
      %v1010 = vpop.xlane.xlu0 %1009
      %v1011 = vsub.f32 %v978, %v989
      %v1012 = vsub.f32 %v979, %v992
      %v1013 = vsub.f32 %v980, %v995
      %v1014 = vsub.f32 %v981, %v998
      %v1015 = vsub.f32 %v982, %v1001
      %v1016 = vsub.f32 %v983, %v1004
      %v1017 = vsub.f32 %v984, %v1007
      %v1018 = vsub.f32 %v985, %v1010
      %v1019 = vmul.f32 %v1011, 1.442695
      %v1020 = vpow.pop %v1019
      %v1021 = vmul.f32 %v1012, 1.442695
      %v1022 = vpow.pop %v1021
      %v1023 = vmul.f32 %v1013, 1.442695
      %v1024 = vpow.pop %v1023
      %v1025 = vmul.f32 %v1014, 1.442695
      %v1026 = vpow.pop %v1025
      %v1027 = vmul.f32 %v1015, 1.442695
      %v1028 = vpow.pop %v1027
      %v1029 = vmul.f32 %v1016, 1.442695
      %v1030 = vpow.pop %v1029
      %v1031 = vmul.f32 %v1017, 1.442695
      %v1032 = vpow.pop %v1031
      %v1033 = vmul.f32 %v1018, 1.442695
      %v1034 = vpow.pop %v1033
      %v1035 = vsel %vm986, %v1020, 0.0
      %1036 = vadd.xlane.f32.xlu0 %v1035
      %v1037 = vpop.xlane.xlu0 %1036
      %v1038 = vsel %vm986, %v1022, 0.0
      %1039 = vadd.xlane.f32.xlu0 %v1038
      %v1040 = vpop.xlane.xlu0 %1039
      %v1041 = vsel %vm986, %v1024, 0.0
      %1042 = vadd.xlane.f32.xlu0 %v1041
      %v1043 = vpop.xlane.xlu0 %1042
      %v1044 = vsel %vm986, %v1026, 0.0
      %1045 = vadd.xlane.f32.xlu0 %v1044
      %v1046 = vpop.xlane.xlu0 %1045
      %v1047 = vsel %vm986, %v1028, 0.0
      %1048 = vadd.xlane.f32.xlu0 %v1047
      %v1049 = vpop.xlane.xlu0 %1048
      %v1050 = vsel %vm986, %v1030, 0.0
      %1051 = vadd.xlane.f32.xlu0 %v1050
      %v1052 = vpop.xlane.xlu0 %1051
      %v1053 = vsel %vm986, %v1032, 0.0
      %1054 = vadd.xlane.f32.xlu0 %v1053
      %v1055 = vpop.xlane.xlu0 %1054
      %v1056 = vsel %vm986, %v1034, 0.0
      %1057 = vadd.xlane.f32.xlu0 %v1056
      %v1058 = vpop.xlane.xlu0 %1057
      %v1059 = vrcp.pop %v1037
      %v1060 = vrcp.pop %v1040
      %v1061 = vrcp.pop %v1043
      %v1062 = vrcp.pop %v1046
      %v1063 = vrcp.pop %v1049
      %v1064 = vrcp.pop %v1052
      %v1065 = vrcp.pop %v1055
      %v1066 = vrcp.pop %v1058
      %v1067 = vmul.f32 %v1020, %v1059
      %v1068 = vmul.f32 %v1022, %v1060
      %v1069 = vmul.f32 %v1024, %v1061
      %v1070 = vmul.f32 %v1026, %v1062
      %v1071 = vmul.f32 %v1028, %v1063
      %v1072 = vmul.f32 %v1030, %v1064
      %v1073 = vmul.f32 %v1032, %v1065
      %v1074 = vmul.f32 %v1034, %v1066
      %v1075 = vpack.c.bf16 %v1068, %v1067
      %v1076 = vpack.c.bf16 %v1070, %v1069
      %v1077 = vpack.c.bf16 %v1072, %v1071
      %v1078 = vpack.c.bf16 %v1074, %v1073
      %1079 = vrot.lane.b32.xlu0 %v773, 64
      %v1080 = vpop.permute.xlu0 %1079
      %v1083 = vsel %vm986, %v1075, 0
      %1085 = vmatprep.subr.bf16.mxu0 0
      %1086 = vmatpush1.bf16.msra.mxu0 0
      %1087 = vmatprep.subr.bf16.mxu0 0
      %1088 = vmatpush1.bf16.msra.mxu0 0
      %1089 = vmatprep.subr.bf16.mxu0 0
      %1090 = vmatpush1.bf16.msra.mxu0 0
      %1091 = vmatprep.subr.bf16.mxu0 0
      %1092 = vmatpush1.bf16.msra.mxu0 0
      %1093 = vmatprep.subr.bf16.mxu0 0
      %1094 = vmatpush1.bf16.msra.mxu0 0
      %1095 = vmatprep.subr.bf16.mxu0 0
      %1096 = vmatpush1.bf16.msra.mxu0 0
      %1097 = vmatprep.subr.bf16.mxu0 0
      %1098 = vmatpush1.bf16.msra.mxu0 0
      %1099 = vmatprep.subr.bf16.mxu0 0
      %1100 = vmatpush1.bf16.msra.mxu0 %v1080
      %1101 = vmatprep.subr.bf16.mxu0 0
      %1102 = vmatpush2.bf16.msra.mxu0 0
      %1103 = vmatprep.subr.bf16.mxu0 0
      %1104 = vmatpush2.bf16.msra.mxu0 0
      %1105 = vmatprep.subr.bf16.mxu0 0
      %1106 = vmatpush2.bf16.msra.mxu0 0
      %1107 = vmatprep.subr.bf16.mxu0 0
      %1108 = vmatpush2.bf16.msra.mxu0 0
      %1109 = vmatprep.subr.bf16.mxu0 0
      %1110 = vmatpush2.bf16.msra.mxu0 0
      %1111 = vmatprep.subr.bf16.mxu0 0
      %1112 = vmatpush2.bf16.msra.mxu0 0
      %1113 = vmatprep.subr.bf16.mxu0 0
      %1114 = vmatpush2.bf16.msra.mxu0 0
      %1115 = vmatprep.subr.bf16.mxu0 0
      %1116 = vmatpush2.bf16.msra.mxu0 0
      %1117 = vmatprep.mubr.bf16.mxu0 0
      %1118 = vmatmul.mubr.bf16.gmra.mxu0 %v1083
      %v1119 = vpop.f32.mrf.mxu0
      %v1120 = vadd.f32 0.0, %v1119
      %v1121 = vpop.f32.mrf.mxu0
      %v1122 = vpop.f32.mrf.mxu0
      %v1123 = vadd.f32 0.0, %v1122
      %v1124 = vpop.f32.mrf.mxu0
      %1125 = vdwg.mxu0
      %1126 = vrot.lane.b32.xlu0 %v774, 64
      %v1127 = vpop.permute.xlu0 %1126
      %v1130 = vsel %vm986, %v1076, 0
      %1132 = vmatprep.subr.bf16.mxu0 0
      %1133 = vmatpush1.bf16.msra.mxu0 0
      %1134 = vmatprep.subr.bf16.mxu0 0
      %1135 = vmatpush1.bf16.msra.mxu0 0
      %1136 = vmatprep.subr.bf16.mxu0 0
      %1137 = vmatpush1.bf16.msra.mxu0 0
      %1138 = vmatprep.subr.bf16.mxu0 0
      %1139 = vmatpush1.bf16.msra.mxu0 0
      %1140 = vmatprep.subr.bf16.mxu0 0
      %1141 = vmatpush1.bf16.msra.mxu0 0
      %1142 = vmatprep.subr.bf16.mxu0 0
      %1143 = vmatpush1.bf16.msra.mxu0 0
      %1144 = vmatprep.subr.bf16.mxu0 0
      %1145 = vmatpush1.bf16.msra.mxu0 0
      %1146 = vmatprep.subr.bf16.mxu0 0
      %1147 = vmatpush1.bf16.msra.mxu0 %v1127
      %1148 = vmatprep.subr.bf16.mxu0 0
      %1149 = vmatpush2.bf16.msra.mxu0 0
      %1150 = vmatprep.subr.bf16.mxu0 0
      %1151 = vmatpush2.bf16.msra.mxu0 0
      %1152 = vmatprep.subr.bf16.mxu0 0
      %1153 = vmatpush2.bf16.msra.mxu0 0
      %1154 = vmatprep.subr.bf16.mxu0 0
      %1155 = vmatpush2.bf16.msra.mxu0 0
      %1156 = vmatprep.subr.bf16.mxu0 0
      %1157 = vmatpush2.bf16.msra.mxu0 0
      %1158 = vmatprep.subr.bf16.mxu0 0
      %1159 = vmatpush2.bf16.msra.mxu0 0
      %1160 = vmatprep.subr.bf16.mxu0 0
      %1161 = vmatpush2.bf16.msra.mxu0 0
      %1162 = vmatprep.subr.bf16.mxu0 0
      %1163 = vmatpush2.bf16.msra.mxu0 0
      %1164 = vmatprep.mubr.bf16.mxu0 0
      %1165 = vmatmul.mubr.bf16.gmra.mxu0 %v1130
      %v1166 = vpop.f32.mrf.mxu0
      %v1167 = vadd.f32 0.0, %v1166
      %v1168 = vpop.f32.mrf.mxu0
      %v1169 = vpop.f32.mrf.mxu0
      %v1170 = vadd.f32 0.0, %v1169
      %v1171 = vpop.f32.mrf.mxu0
      %1172 = vdwg.mxu0
      %1173 = vrot.lane.b32.xlu0 %v775, 64
      %v1174 = vpop.permute.xlu0 %1173
      %v1177 = vsel %vm986, %v1077, 0
      %1179 = vmatprep.subr.bf16.mxu0 0
      %1180 = vmatpush1.bf16.msra.mxu0 0
      %1181 = vmatprep.subr.bf16.mxu0 0
      %1182 = vmatpush1.bf16.msra.mxu0 0
      %1183 = vmatprep.subr.bf16.mxu0 0
      %1184 = vmatpush1.bf16.msra.mxu0 0
      %1185 = vmatprep.subr.bf16.mxu0 0
      %1186 = vmatpush1.bf16.msra.mxu0 0
      %1187 = vmatprep.subr.bf16.mxu0 0
      %1188 = vmatpush1.bf16.msra.mxu0 0
      %1189 = vmatprep.subr.bf16.mxu0 0
      %1190 = vmatpush1.bf16.msra.mxu0 0
      %1191 = vmatprep.subr.bf16.mxu0 0
      %1192 = vmatpush1.bf16.msra.mxu0 0
      %1193 = vmatprep.subr.bf16.mxu0 0
      %1194 = vmatpush1.bf16.msra.mxu0 %v1174
      %1195 = vmatprep.subr.bf16.mxu0 0
      %1196 = vmatpush2.bf16.msra.mxu0 0
      %1197 = vmatprep.subr.bf16.mxu0 0
      %1198 = vmatpush2.bf16.msra.mxu0 0
      %1199 = vmatprep.subr.bf16.mxu0 0
      %1200 = vmatpush2.bf16.msra.mxu0 0
      %1201 = vmatprep.subr.bf16.mxu0 0
      %1202 = vmatpush2.bf16.msra.mxu0 0
      %1203 = vmatprep.subr.bf16.mxu0 0
      %1204 = vmatpush2.bf16.msra.mxu0 0
      %1205 = vmatprep.subr.bf16.mxu0 0
      %1206 = vmatpush2.bf16.msra.mxu0 0
      %1207 = vmatprep.subr.bf16.mxu0 0
      %1208 = vmatpush2.bf16.msra.mxu0 0
      %1209 = vmatprep.subr.bf16.mxu0 0
      %1210 = vmatpush2.bf16.msra.mxu0 0
      %1211 = vmatprep.mubr.bf16.mxu0 0
      %1212 = vmatmul.mubr.bf16.gmra.mxu0 %v1177
      %v1213 = vpop.f32.mrf.mxu0
      %v1214 = vadd.f32 0.0, %v1213
      %v1215 = vpop.f32.mrf.mxu0
      %v1216 = vpop.f32.mrf.mxu0
      %v1217 = vadd.f32 0.0, %v1216
      %v1218 = vpop.f32.mrf.mxu0
      %1219 = vdwg.mxu0
      %1220 = vrot.lane.b32.xlu0 %v776, 64
      %v1221 = vpop.permute.xlu0 %1220
      %v1224 = vsel %vm986, %v1078, 0
      %1226 = vmatprep.subr.bf16.mxu0 0
      %1227 = vmatpush1.bf16.msra.mxu0 0
      %1228 = vmatprep.subr.bf16.mxu0 0
      %1229 = vmatpush1.bf16.msra.mxu0 0
      %1230 = vmatprep.subr.bf16.mxu0 0
      %1231 = vmatpush1.bf16.msra.mxu0 0
      %1232 = vmatprep.subr.bf16.mxu0 0
      %1233 = vmatpush1.bf16.msra.mxu0 0
      %1234 = vmatprep.subr.bf16.mxu0 0
      %1235 = vmatpush1.bf16.msra.mxu0 0
      %1236 = vmatprep.subr.bf16.mxu0 0
      %1237 = vmatpush1.bf16.msra.mxu0 0
      %1238 = vmatprep.subr.bf16.mxu0 0
      %1239 = vmatpush1.bf16.msra.mxu0 0
      %1240 = vmatprep.subr.bf16.mxu0 0
      %1241 = vmatpush1.bf16.msra.mxu0 %v1221
      %1242 = vmatprep.subr.bf16.mxu0 0
      %1243 = vmatpush2.bf16.msra.mxu0 0
      %1244 = vmatprep.subr.bf16.mxu0 0
      %1245 = vmatpush2.bf16.msra.mxu0 0
      %1246 = vmatprep.subr.bf16.mxu0 0
      %1247 = vmatpush2.bf16.msra.mxu0 0
      %1248 = vmatprep.subr.bf16.mxu0 0
      %1249 = vmatpush2.bf16.msra.mxu0 0
      %1250 = vmatprep.subr.bf16.mxu0 0
      %1251 = vmatpush2.bf16.msra.mxu0 0
      %1252 = vmatprep.subr.bf16.mxu0 0
      %1253 = vmatpush2.bf16.msra.mxu0 0
      %1254 = vmatprep.subr.bf16.mxu0 0
      %1255 = vmatpush2.bf16.msra.mxu0 0
      %1256 = vmatprep.subr.bf16.mxu0 0
      %1257 = vmatpush2.bf16.msra.mxu0 0
      %1258 = vmatprep.mubr.bf16.mxu0 0
      %1259 = vmatmul.mubr.bf16.gmra.mxu0 %v1224
      %v1260 = vpop.f32.mrf.mxu0
      %v1261 = vadd.f32 0.0, %v1260
      %v1262 = vpop.f32.mrf.mxu0
      %v1263 = vpop.f32.mrf.mxu0
      %v1264 = vadd.f32 0.0, %v1263
      %v1265 = vpop.f32.mrf.mxu0
      %1266 = vdwg.mxu0
      %1269 = vrot.lane.b32.xlu0 %v1167, 8
      %v1270 = vpop.permute.xlu0 %1269
      %1271 = vrot.lane.b32.xlu0 %v1170, 8
      %v1272 = vpop.permute.xlu0 %1271
      %1277 = vrot.lane.b32.xlu0 %v1214, 16
      %v1278 = vpop.permute.xlu0 %1277
      %1279 = vrot.lane.b32.xlu0 %v1217, 16
      %v1280 = vpop.permute.xlu0 %1279
      %1285 = vrot.lane.b32.xlu0 %v1261, 24
      %v1286 = vpop.permute.xlu0 %1285
      %1287 = vrot.lane.b32.xlu0 %v1264, 24
      %v1288 = vpop.permute.xlu0 %1287
      %v1291 = vsel %vm780, %v1120, %v1270
      %v1292 = vsel %vm780, %v1123, %v1272
      %v1293 = vsel %vm986, %v1291, %v1278
      %v1294 = vsel %vm986, %v1292, %v1280
      %vm1295 = vcmask 195584
      %v1296 = vsel %vm1295, %v1293, %v1286
      %v1297 = vsel %vm1295, %v1294, %v1288
      %v1298 = vld [vmem:[%s8] sm:$0xf]
      %v1299 = vld [vmem:[%s8 + $0x4] sm:$0xf]
      %v1300 = vld [vmem:[%s8 + $0x8] sm:$0xf]
      %v1301 = vld [vmem:[%s8 + $0xc] sm:$0xf]
      %v1302 = vpack.c.bf16 %v1297, %v1296
      %v1307 = vunpack.c.l.b16 %v1298
      %v1308 = vunpack.c.l.b16 %v1299
      %v1309 = vunpack.c.l.b16 %v1300
      %v1310 = vunpack.c.l.b16 %v1301
      %v1311 = vpack.c.b16 %v1308, %v1307
      %v1312 = vpack.c.b16 %v1310, %v1309
      %v1316 = vsel %vm564, %v1302, 0
      %1318 = vmatprep.subr.bf16.mxu0 0
      %1319 = vmatpush1.bf16.msra.mxu0 0
      %1320 = vmatprep.subr.bf16.mxu0 0
      %1321 = vmatpush1.bf16.msra.mxu0 0
      %1322 = vmatprep.subr.bf16.mxu0 0
      %1323 = vmatpush1.bf16.msra.mxu0 0
      %1324 = vmatprep.subr.bf16.mxu0 0
      %1325 = vmatpush1.bf16.msra.mxu0 0
      %1326 = vmatprep.subr.bf16.mxu0 0
      %1327 = vmatpush1.bf16.msra.mxu0 0
      %1328 = vmatprep.subr.bf16.mxu0 0
      %1329 = vmatpush1.bf16.msra.mxu0 0
      %1330 = vmatprep.subr.bf16.mxu0 0
      %1331 = vmatpush1.bf16.msra.mxu0 %v1312
      %1332 = vmatprep.subr.bf16.mxu0 0
      %1333 = vmatpush1.bf16.msra.mxu0 %v1311
      %1334 = vmatprep.subr.bf16.mxu0 0
      %1335 = vmatpush2.bf16.msra.mxu0 0
      %1336 = vmatprep.subr.bf16.mxu0 0
      %1337 = vmatpush2.bf16.msra.mxu0 0
      %1338 = vmatprep.subr.bf16.mxu0 0
      %1339 = vmatpush2.bf16.msra.mxu0 0
      %1340 = vmatprep.subr.bf16.mxu0 0
      %1341 = vmatpush2.bf16.msra.mxu0 0
      %1342 = vmatprep.subr.bf16.mxu0 0
      %1343 = vmatpush2.bf16.msra.mxu0 0
      %1344 = vmatprep.subr.bf16.mxu0 0
      %1345 = vmatpush2.bf16.msra.mxu0 0
      %1346 = vmatprep.subr.bf16.mxu0 0
      %1347 = vmatpush2.bf16.msra.mxu0 0
      %1348 = vmatprep.subr.bf16.mxu0 0
      %1349 = vmatpush2.bf16.msra.mxu0 0
      %1350 = vmatprep.mubr.bf16.mxu0 0
      %1351 = vmatmul.mubr.bf16.gmra.mxu0 %v1316
      %v1352 = vpop.f32.mrf.mxu0
      %v1353 = vadd.f32 0.0, %v1352
      %v1354 = vpop.f32.mrf.mxu0
      %v1355 = vpop.f32.mrf.mxu0
      %v1356 = vadd.f32 0.0, %v1355
      %v1357 = vpop.f32.mrf.mxu0
      %1358 = vdwg.mxu0
      %v1359 = vadd.f32 %v638, %v1353
      %v1360 = vadd.f32 %v639, %v1356
      %v1361 = vld [vmem:[%s9] sm:$0x1]
      %v1363 = vlaneseq
      %v1364 = vshrl.u32 %v1363, 7
      %v1365 = vsub.s32 0, %v1364
      %v1366 = vrot.slane %v1361, %v1365
      %v1368 = vadd.f32 %v1359, %v1366
      %v1369 = vadd.f32 %v1360, %v1366
      %v1370 = vld [vmem:[%s10] sm:$0x1]
      %v1371 = vld [vmem:[%s11] sm:$0x1]
      %v1372 = vsel %vm564, %v1368, 0.0
      %1373 = vadd.xlane.f32.xlu0 %v1372
      %v1374 = vpop.xlane.xlu0 %1373
      %v1375 = vsel %vm564, %v1369, 0.0
      %1376 = vadd.xlane.f32.xlu0 %v1375
      %v1377 = vpop.xlane.xlu0 %1376
      %v1378 = vmul.f32 %v1374, %v648
      %v1379 = vmul.f32 %v1377, %v648
      %v1380 = vsub.f32 %v1368, %v1378
      %v1381 = vsub.f32 %v1369, %v1379
      %v1382 = vmul.f32 %v1380, %v1380
      %v1383 = vmul.f32 %v1381, %v1381
      %v1384 = vsel %vm564, %v1382, 0.0
      %1385 = vadd.xlane.f32.xlu0 %v1384
      %v1386 = vpop.xlane.xlu0 %1385
      %v1387 = vsel %vm564, %v1383, 0.0
      %1388 = vadd.xlane.f32.xlu0 %v1387
      %v1389 = vpop.xlane.xlu0 %1388
      %v1390 = vmul.f32 %v1386, %v648
      %v1391 = vmul.f32 %v1389, %v648
      %v1392 = vadd.f32 %v1390, 1e-05
      %v1393 = vadd.f32 %v1391, 1e-05
      %v1394 = vrsqrt.pop %v1392
      %v1395 = vrsqrt.pop %v1393
      %v1396 = vmul.f32 %v1380, %v1394
      %v1397 = vmul.f32 %v1381, %v1395
      %v1399 = vlaneseq
      %v1400 = vshrl.u32 %v1399, 7
      %v1401 = vsub.s32 0, %v1400
      %v1402 = vrot.slane %v1370, %v1401
      %v1404 = vmul.f32 %v1396, %v1402
      %v1405 = vmul.f32 %v1397, %v1402
      %v1407 = vlaneseq
      %v1408 = vshrl.u32 %v1407, 7
      %v1409 = vsub.s32 0, %v1408
      %v1410 = vrot.slane %v1371, %v1409
      %v1412 = vadd.f32 %v1404, %v1410
      %v1413 = vadd.f32 %v1405, %v1410
      %v1414 = vld [vmem:[%s12] sm:$0xf]
      %v1415 = vld [vmem:[%s12 + $0x4] sm:$0xf]
      %v1416 = vld [vmem:[%s12 + $0x8] sm:$0xf]
      %v1417 = vld [vmem:[%s12 + $0xc] sm:$0xf]
      %v1418 = vpack.c.bf16 %v1413, %v1412
      %v1419 = vld [vmem:[%s13] sm:$0x1]
      %v1421 = vlaneseq
      %v1422 = vshrl.u32 %v1421, 7
      %v1423 = vsub.s32 0, %v1422
      %v1424 = vrot.slane %v1419, %v1423
      %v1430 = vunpack.c.l.b16 %v1414
      %v1431 = vunpack.c.l.b16 %v1415
      %v1432 = vunpack.c.l.b16 %v1416
      %v1433 = vunpack.c.l.b16 %v1417
      %v1434 = vpack.c.b16 %v1431, %v1430
      %v1435 = vpack.c.b16 %v1433, %v1432
      %v1439 = vsel %vm564, %v1418, 0
      %1441 = vmatprep.subr.bf16.mxu0 0
      %1442 = vmatpush1.bf16.msra.mxu0 0
      %1443 = vmatprep.subr.bf16.mxu0 0
      %1444 = vmatpush1.bf16.msra.mxu0 0
      %1445 = vmatprep.subr.bf16.mxu0 0
      %1446 = vmatpush1.bf16.msra.mxu0 0
      %1447 = vmatprep.subr.bf16.mxu0 0
      %1448 = vmatpush1.bf16.msra.mxu0 0
      %1449 = vmatprep.subr.bf16.mxu0 0
      %1450 = vmatpush1.bf16.msra.mxu0 0
      %1451 = vmatprep.subr.bf16.mxu0 0
      %1452 = vmatpush1.bf16.msra.mxu0 0
      %1453 = vmatprep.subr.bf16.mxu0 0
      %1454 = vmatpush1.bf16.msra.mxu0 %v1435
      %1455 = vmatprep.subr.bf16.mxu0 0
      %1456 = vmatpush1.bf16.msra.mxu0 %v1434
      %1457 = vmatprep.subr.bf16.mxu0 0
      %1458 = vmatpush2.bf16.msra.mxu0 0
      %1459 = vmatprep.subr.bf16.mxu0 0
      %1460 = vmatpush2.bf16.msra.mxu0 0
      %1461 = vmatprep.subr.bf16.mxu0 0
      %1462 = vmatpush2.bf16.msra.mxu0 0
      %1463 = vmatprep.subr.bf16.mxu0 0
      %1464 = vmatpush2.bf16.msra.mxu0 0
      %1465 = vmatprep.subr.bf16.mxu0 0
      %1466 = vmatpush2.bf16.msra.mxu0 0
      %1467 = vmatprep.subr.bf16.mxu0 0
      %1468 = vmatpush2.bf16.msra.mxu0 0
      %1469 = vmatprep.subr.bf16.mxu0 0
      %1470 = vmatpush2.bf16.msra.mxu0 0
      %1471 = vmatprep.subr.bf16.mxu0 0
      %1472 = vmatpush2.bf16.msra.mxu0 0
      %1473 = vmatprep.mubr.bf16.mxu0 0
      %1474 = vmatmul.mubr.bf16.gmra.mxu0 %v1439
      %v1475 = vpop.f32.mrf.mxu0
      %v1476 = vadd.f32 %v1424, %v1475
      %v1477 = vpop.f32.mrf.mxu0
      %v1478 = vpop.f32.mrf.mxu0
      %v1479 = vadd.f32 %v1424, %v1478
      %v1480 = vpop.f32.mrf.mxu0
      %1481 = vdwg.mxu0
      %v1482 = vmul.f32 %v1476, 0.5
      %v1483 = vmul.f32 %v1479, 0.5
      %v1484 = vmul.f32 %v1476, 0.044715
      %v1485 = vmul.f32 %v1479, 0.044715
      %v1486 = vmul.f32 %v1484, %v1476
      %v1487 = vmul.f32 %v1485, %v1479
      %v1488 = vmul.f32 %v1486, %v1476
      %v1489 = vmul.f32 %v1487, %v1479
      %v1490 = vadd.f32 %v1476, %v1488
      %v1491 = vadd.f32 %v1479, %v1489
      %v1492 = vmul.f32 %v1490, 0.7978846
      %v1493 = vmul.f32 %v1491, 0.7978846
      %v1494 = vtanh.pop %v1492
      %v1495 = vtanh.pop %v1493
      %v1496 = vadd.f32 %v1494, 1.0
      %v1497 = vadd.f32 %v1495, 1.0
      %v1498 = vmul.f32 %v1482, %v1496
      %v1499 = vmul.f32 %v1483, %v1497
      %v1500 = vld [vmem:[%s14] sm:$0xf]
      %v1501 = vld [vmem:[%s14 + $0x4] sm:$0xf]
      %v1502 = vld [vmem:[%s14 + $0x8] sm:$0xf]
      %v1503 = vld [vmem:[%s14 + $0xc] sm:$0xf]
      %v1504 = vld [vmem:[%s14 + $0x10] sm:$0xf]
      %v1505 = vld [vmem:[%s14 + $0x14] sm:$0xf]
      %v1506 = vld [vmem:[%s14 + $0x18] sm:$0xf]
      %v1507 = vld [vmem:[%s14 + $0x1c] sm:$0xf]
      %v1508 = vpack.c.bf16 %v1499, %v1498
      %v1517 = vunpack.c.l.b16 %v1500
      %v1518 = vunpack.c.l.b16 %v1501
      %v1519 = vunpack.c.l.b16 %v1502
      %v1520 = vunpack.c.l.b16 %v1503
      %v1521 = vunpack.c.l.b16 %v1504
      %v1522 = vunpack.c.l.b16 %v1505
      %v1523 = vunpack.c.l.b16 %v1506
      %v1524 = vunpack.c.l.b16 %v1507
      %v1525 = vpack.c.b16 %v1518, %v1517
      %v1526 = vpack.c.b16 %v1520, %v1519
      %v1527 = vpack.c.b16 %v1522, %v1521
      %v1528 = vpack.c.b16 %v1524, %v1523
      %vm1533 = vcmask 523264
      %v1535 = vsel %vm1533, %v1508, 0
      %1537 = vmatprep.subr.bf16.mxu0 0
      %1538 = vmatpush1.bf16.msra.mxu0 0
      %1539 = vmatprep.subr.bf16.mxu0 0
      %1540 = vmatpush1.bf16.msra.mxu0 0
      %1541 = vmatprep.subr.bf16.mxu0 0
      %1542 = vmatpush1.bf16.msra.mxu0 0
      %1543 = vmatprep.subr.bf16.mxu0 0
      %1544 = vmatpush1.bf16.msra.mxu0 0
      %1545 = vmatprep.subr.bf16.mxu0 0
      %1546 = vmatpush1.bf16.msra.mxu0 %v1528
      %1547 = vmatprep.subr.bf16.mxu0 0
      %1548 = vmatpush1.bf16.msra.mxu0 %v1527
      %1549 = vmatprep.subr.bf16.mxu0 0
      %1550 = vmatpush1.bf16.msra.mxu0 %v1526
      %1551 = vmatprep.subr.bf16.mxu0 0
      %1552 = vmatpush1.bf16.msra.mxu0 %v1525
      %1553 = vmatprep.subr.bf16.mxu0 0
      %1554 = vmatpush2.bf16.msra.mxu0 0
      %1555 = vmatprep.subr.bf16.mxu0 0
      %1556 = vmatpush2.bf16.msra.mxu0 0
      %1557 = vmatprep.subr.bf16.mxu0 0
      %1558 = vmatpush2.bf16.msra.mxu0 0
      %1559 = vmatprep.subr.bf16.mxu0 0
      %1560 = vmatpush2.bf16.msra.mxu0 0
      %1561 = vmatprep.subr.bf16.mxu0 0
      %1562 = vmatpush2.bf16.msra.mxu0 0
      %1563 = vmatprep.subr.bf16.mxu0 0
      %1564 = vmatpush2.bf16.msra.mxu0 0
      %1565 = vmatprep.subr.bf16.mxu0 0
      %1566 = vmatpush2.bf16.msra.mxu0 0
      %1567 = vmatprep.subr.bf16.mxu0 0
      %1568 = vmatpush2.bf16.msra.mxu0 0
      %1569 = vmatprep.mubr.bf16.mxu0 0
      %1570 = vmatmul.mubr.bf16.gmra.mxu0 %v1535
      %v1571 = vpop.f32.mrf.mxu0
      %v1572 = vadd.f32 0.0, %v1571
      %v1573 = vpop.f32.mrf.mxu0
      %v1574 = vpop.f32.mrf.mxu0
      %v1575 = vadd.f32 0.0, %v1574
      %v1576 = vpop.f32.mrf.mxu0
      %1577 = vdwg.mxu0
      %v1578 = vadd.f32 %v1368, %v1572
      %v1579 = vadd.f32 %v1369, %v1575
      %v1580 = vld [vmem:[%s15] sm:$0x1]
      %v1582 = vlaneseq
      %v1583 = vshrl.u32 %v1582, 7
      %v1584 = vsub.s32 0, %v1583
      %v1585 = vrot.slane %v1580, %v1584
      %v1587 = vadd.f32 %v1578, %v1585
      %v1588 = vadd.f32 %v1579, %v1585
      %1589 = vst.msk [vmem:[%s541] sm:$0xff] %vm564, %v1587
      %1590 = vst.msk [vmem:[%s541 + $0x8] sm:$0xff] %vm564, %v1588
      %p1591 = scmp.lt.s32.totalorder %s27, 1
      %s1592 = scalar_select %p1591, %s27, 1
      %s1593 = smul.addr %s1592, 2
      %s1594 = smul.addr %s1593, 8
      %s1595 = scalar_lea.vmem %s16, %s1594
      // Predicated region
      $region85: #{hifno_encoder_forward.8} parent=83 // pred_check
        %p1596 = pneg %p391
      $region86: #{hifno_encoder_forward.8} parent=83 // pred_check_branch
        %1598 = sbr.rel (%p1596) target = $region88
      $region87: #{hifno_encoder_forward.8} parent=83 // pred_region
        _
      $region88: #{hifno_encoder_forward.8} parent=83 // pred_fallthru
        _
    $region84: #{hifno_encoder_forward.8} parent=5 // pred_fallthru
      _
    %p1599 = scmp.le.s32.totalorder 2, %s22
    // Predicated region
    $region89: #{hifno_encoder_forward.8} parent=5 // pred_check
      %p1600 = pneg %p1599
    $region90: #{hifno_encoder_forward.8} parent=5 // pred_check_branch
      %1602 = sbr.rel (%p1600) target = $region92
    $region91: #{hifno_encoder_forward.8} parent=5 // pred_region
      %s1603 = ssub.s32 %s22, 2
      // Predicated region
      $region93: #{hifno_encoder_forward.8} parent=91 // pred_check
        %p1604 = pneg %p397
      $region94: #{hifno_encoder_forward.8} parent=91 // pred_check_branch
        %1606 = sbr.rel (%p1604) target = $region96
      $region95: #{hifno_encoder_forward.8} parent=91 // pred_region
        %p1607 = scmp.lt.s32.totalorder %s28, 1
        %s1608 = scalar_select %p1607, %s28, 1
        %s1609 = smul.addr %s1608, 2
        %s1610 = smul.addr %s1609, 8
        %s1611 = scalar_lea.vmem %s16, %s1610
      $region96: #{hifno_encoder_forward.8} parent=91 // pred_fallthru
        _
    $region92: #{hifno_encoder_forward.8} parent=5 // pred_fallthru
      _
  $region6: #{hifno_encoder_forward.8} parent=0 // loop_footer
    %s26 = sadd.s32 1, %s22
  $region7: #{hifno_encoder_forward.8} parent=0 // loop_footer_branch
    %21 = sbr.rel target = $region3
  $region8: #{hifno_encoder_forward.8} parent=0 // loop_exit
    _

// kernel: hifno_encoder_forward.11
$region0: #{hifno_encoder_forward.11}
  #allocation0 [shape = 'u32[]', space=smem, size = 0x4, offset = 0x4, fixed_abs, tag = 'smem constant byte address 0x4 - core index']
  #allocation1 [shape = 'u32[144,128]{1,0:T(1,128)}', space=vmem, size = 0x12000, scoped, tag = 'internal scratch']
  %s0 = inlined_call_operand.vmem [shape: f32[32,32], index: 0, kind: input, shape index: {}]
  %s1 = inlined_call_operand.vmem [shape: f32[3,32], index: 1, kind: input, shape index: {}]
  %s2 = inlined_call_operand.vmem [shape: f32[2,96], index: 2, kind: input, shape index: {}]
  %s3 = inlined_call_operand.vmem [shape: bf16[32,32], index: 3, kind: input, shape index: {}]
  %s4 = inlined_call_operand.vmem [shape: f32[1,32], index: 4, kind: input, shape index: {}]
  %s5 = inlined_call_operand.vmem [shape: f32[2,1,32], index: 5, kind: input, shape index: {}]
  %s6 = inlined_call_operand.vmem [shape: f32[2,1,32], index: 6, kind: input, shape index: {}]
  %s7 = inlined_call_operand.vmem [shape: bf16[2,32,32], index: 7, kind: input, shape index: {}]
  %s8 = inlined_call_operand.vmem [shape: f32[2,1,32], index: 8, kind: input, shape index: {}]
  %s9 = inlined_call_operand.vmem [shape: bf16[2,32,32], index: 9, kind: input, shape index: {}]
  %s10 = inlined_call_operand.vmem [shape: f32[2,1,32], index: 10, kind: input, shape index: {}]
  %s11 = inlined_call_operand.vmem [shape: f32[2,1,32], index: 11, kind: input, shape index: {}]
  %s12 = inlined_call_operand.vmem [shape: f32[2,1,32], index: 12, kind: input, shape index: {}]
  %s13 = inlined_call_operand.vmem [shape: bf16[2,32,64], index: 13, kind: input, shape index: {}]
  %s14 = inlined_call_operand.vmem [shape: f32[2,1,64], index: 14, kind: input, shape index: {}]
  %s15 = inlined_call_operand.vmem [shape: bf16[2,64,32], index: 15, kind: input, shape index: {}]
  %s16 = inlined_call_operand.vmem [shape: f32[2,1,32], index: 16, kind: input, shape index: {}]
  %s17 = inlined_call_operand.vmem [shape: bf16[32,32], index: 17, kind: input, shape index: {}]
  %s18 = inlined_call_operand.vmem [shape: f32[1,32], index: 18, kind: input, shape index: {}]
  %s19 = inlined_call_operand.vmem [shape: f32[1,32], index: 19, kind: input, shape index: {}]
  %s20 = inlined_call_operand.vmem [shape: f32[1,32], index: 20, kind: input, shape index: {}]
  %s21 = inlined_call_operand.hbm [shape: f32[2,32], index: 21, kind: output, shape index: {}]
  %s22 = sld [smem:[#allocation0]]
  $region94: #{hifno_encoder_forward.11} parent=0
    _
  %s24 = ssub.s32 1, %s22
  %s25 = scalar_select 0, %s24, %s22
  $region1: #{hifno_encoder_forward.11} parent=0
    #allocation2 [shape = 'u8[1024]{0}', space=vmem, size = 0x400, scoped, tag = 'output window, operand 0, single buffered']
    #allocation3 [shape = 's32[1]{0}', space=sflag, size = 0x4, scoped, tag = 'scoped memory for hifno_encoder_forward.11']
    %26 = vsyncpa [#allocation3], 0
    // Predicated region
    $region2: #{hifno_encoder_forward.11} parent=1 // pred_check
      _
    $region3: #{hifno_encoder_forward.11} parent=1 // pred_check_branch
      %28 = sbr.rel (0) target = $region5
    $region4: #{hifno_encoder_forward.11} parent=1 // pred_region
      _
    $region5: #{hifno_encoder_forward.11} parent=1 // pred_fallthru
      _
    // Predicated region
    $region6: #{hifno_encoder_forward.11} parent=1 // pred_check
      _
    $region7: #{hifno_encoder_forward.11} parent=1 // pred_check_branch
      %30 = sbr.rel (0) target = $region9
    $region8: #{hifno_encoder_forward.11} parent=1 // pred_region
      _
    $region9: #{hifno_encoder_forward.11} parent=1 // pred_fallthru
      _
    // Predicated region
    $region10: #{hifno_encoder_forward.11} parent=1 // pred_check
      _
    $region11: #{hifno_encoder_forward.11} parent=1 // pred_check_branch
      %32 = sbr.rel (0) target = $region13
    $region12: #{hifno_encoder_forward.11} parent=1 // pred_region
      _
    $region13: #{hifno_encoder_forward.11} parent=1 // pred_fallthru
      _
    // Predicated region
    $region14: #{hifno_encoder_forward.11} parent=1 // pred_check
      _
    $region15: #{hifno_encoder_forward.11} parent=1 // pred_check_branch
      %34 = sbr.rel (0) target = $region17
    $region16: #{hifno_encoder_forward.11} parent=1 // pred_region
      _
    $region17: #{hifno_encoder_forward.11} parent=1 // pred_fallthru
      _
    // Predicated region
    $region18: #{hifno_encoder_forward.11} parent=1 // pred_check
      _
    $region19: #{hifno_encoder_forward.11} parent=1 // pred_check_branch
      %36 = sbr.rel (0) target = $region21
    $region20: #{hifno_encoder_forward.11} parent=1 // pred_region
      _
    $region21: #{hifno_encoder_forward.11} parent=1 // pred_fallthru
      _
    // Predicated region
    $region22: #{hifno_encoder_forward.11} parent=1 // pred_check
      _
    $region23: #{hifno_encoder_forward.11} parent=1 // pred_check_branch
      %38 = sbr.rel (0) target = $region25
    $region24: #{hifno_encoder_forward.11} parent=1 // pred_region
      _
    $region25: #{hifno_encoder_forward.11} parent=1 // pred_fallthru
      _
    // Predicated region
    $region26: #{hifno_encoder_forward.11} parent=1 // pred_check
      _
    $region27: #{hifno_encoder_forward.11} parent=1 // pred_check_branch
      %40 = sbr.rel (0) target = $region29
    $region28: #{hifno_encoder_forward.11} parent=1 // pred_region
      _
    $region29: #{hifno_encoder_forward.11} parent=1 // pred_fallthru
      _
    // Predicated region
    $region30: #{hifno_encoder_forward.11} parent=1 // pred_check
      _
    $region31: #{hifno_encoder_forward.11} parent=1 // pred_check_branch
      %42 = sbr.rel (0) target = $region33
    $region32: #{hifno_encoder_forward.11} parent=1 // pred_region
      _
    $region33: #{hifno_encoder_forward.11} parent=1 // pred_fallthru
      _
    // Predicated region
    $region34: #{hifno_encoder_forward.11} parent=1 // pred_check
      _
    $region35: #{hifno_encoder_forward.11} parent=1 // pred_check_branch
      %44 = sbr.rel (0) target = $region37
    $region36: #{hifno_encoder_forward.11} parent=1 // pred_region
      _
    $region37: #{hifno_encoder_forward.11} parent=1 // pred_fallthru
      _
    // Predicated region
    $region38: #{hifno_encoder_forward.11} parent=1 // pred_check
      _
    $region39: #{hifno_encoder_forward.11} parent=1 // pred_check_branch
      %46 = sbr.rel (0) target = $region41
    $region40: #{hifno_encoder_forward.11} parent=1 // pred_region
      _
    $region41: #{hifno_encoder_forward.11} parent=1 // pred_fallthru
      _
    // Predicated region
    $region42: #{hifno_encoder_forward.11} parent=1 // pred_check
      _
    $region43: #{hifno_encoder_forward.11} parent=1 // pred_check_branch
      %48 = sbr.rel (0) target = $region45
    $region44: #{hifno_encoder_forward.11} parent=1 // pred_region
      _
    $region45: #{hifno_encoder_forward.11} parent=1 // pred_fallthru
      _
    // Predicated region
    $region46: #{hifno_encoder_forward.11} parent=1 // pred_check
      _
    $region47: #{hifno_encoder_forward.11} parent=1 // pred_check_branch
      %50 = sbr.rel (0) target = $region49
    $region48: #{hifno_encoder_forward.11} parent=1 // pred_region
      _
    $region49: #{hifno_encoder_forward.11} parent=1 // pred_fallthru
      _
    // Predicated region
    $region50: #{hifno_encoder_forward.11} parent=1 // pred_check
      _
    $region51: #{hifno_encoder_forward.11} parent=1 // pred_check_branch
      %52 = sbr.rel (0) target = $region53
    $region52: #{hifno_encoder_forward.11} parent=1 // pred_region
      _
    $region53: #{hifno_encoder_forward.11} parent=1 // pred_fallthru
      _
    // Predicated region
    $region54: #{hifno_encoder_forward.11} parent=1 // pred_check
      _
    $region55: #{hifno_encoder_forward.11} parent=1 // pred_check_branch
      %54 = sbr.rel (0) target = $region57
    $region56: #{hifno_encoder_forward.11} parent=1 // pred_region
      _
    $region57: #{hifno_encoder_forward.11} parent=1 // pred_fallthru
      _
    // Predicated region
    $region58: #{hifno_encoder_forward.11} parent=1 // pred_check
      _
    $region59: #{hifno_encoder_forward.11} parent=1 // pred_check_branch
      %56 = sbr.rel (0) target = $region61
    $region60: #{hifno_encoder_forward.11} parent=1 // pred_region
      _
    $region61: #{hifno_encoder_forward.11} parent=1 // pred_fallthru
      _
    // Predicated region
    $region62: #{hifno_encoder_forward.11} parent=1 // pred_check
      _
    $region63: #{hifno_encoder_forward.11} parent=1 // pred_check_branch
      %58 = sbr.rel (0) target = $region65
    $region64: #{hifno_encoder_forward.11} parent=1 // pred_region
      _
    $region65: #{hifno_encoder_forward.11} parent=1 // pred_fallthru
      _
    // Predicated region
    $region66: #{hifno_encoder_forward.11} parent=1 // pred_check
      _
    $region67: #{hifno_encoder_forward.11} parent=1 // pred_check_branch
      %60 = sbr.rel (0) target = $region69
    $region68: #{hifno_encoder_forward.11} parent=1 // pred_region
      _
    $region69: #{hifno_encoder_forward.11} parent=1 // pred_fallthru
      _
    // Predicated region
    $region70: #{hifno_encoder_forward.11} parent=1 // pred_check
      _
    $region71: #{hifno_encoder_forward.11} parent=1 // pred_check_branch
      %62 = sbr.rel (0) target = $region73
    $region72: #{hifno_encoder_forward.11} parent=1 // pred_region
      _
    $region73: #{hifno_encoder_forward.11} parent=1 // pred_fallthru
      _
    // Predicated region
    $region74: #{hifno_encoder_forward.11} parent=1 // pred_check
      _
    $region75: #{hifno_encoder_forward.11} parent=1 // pred_check_branch
      %64 = sbr.rel (0) target = $region77
    $region76: #{hifno_encoder_forward.11} parent=1 // pred_region
      _
    $region77: #{hifno_encoder_forward.11} parent=1 // pred_fallthru
      _
    // Predicated region
    $region78: #{hifno_encoder_forward.11} parent=1 // pred_check
      _
    $region79: #{hifno_encoder_forward.11} parent=1 // pred_check_branch
      %66 = sbr.rel (0) target = $region81
    $region80: #{hifno_encoder_forward.11} parent=1 // pred_region
      _
    $region81: #{hifno_encoder_forward.11} parent=1 // pred_fallthru
      _
    // Predicated region
    $region82: #{hifno_encoder_forward.11} parent=1 // pred_check
      _
    $region83: #{hifno_encoder_forward.11} parent=1 // pred_check_branch
      %68 = sbr.rel (0) target = $region85
    $region84: #{hifno_encoder_forward.11} parent=1 // pred_region
      _
    $region85: #{hifno_encoder_forward.11} parent=1 // pred_fallthru
      _
    %v70 = vld [vmem:[%s0] sm:$0xff]
    %v71 = vld [vmem:[%s0 + $0x8] sm:$0xff]
    %v72 = vld [vmem:[%s0 + $0x10] sm:$0xff]
    %v73 = vld [vmem:[%s0 + $0x18] sm:$0xff]
    %v74 = vld [vmem:[%s3] sm:$0xf]
    %v75 = vld [vmem:[%s3 + $0x4] sm:$0xf]
    %v76 = vld [vmem:[%s3 + $0x8] sm:$0xf]
    %v77 = vld [vmem:[%s3 + $0xc] sm:$0xf]
    %v78 = vpack.c.bf16 %v71, %v70
    %v79 = vpack.c.bf16 %v73, %v72
    %v80 = vld [vmem:[%s4] sm:$0x1]
    %v82 = vlaneseq
    %v83 = vshrl.u32 %v82, 7
    %v84 = vsub.s32 0, %v83
    %v85 = vrot.slane %v80, %v84
    %v91 = vunpack.c.l.b16 %v74
    %v92 = vunpack.c.l.b16 %v75
    %v93 = vunpack.c.l.b16 %v76
    %v94 = vunpack.c.l.b16 %v77
    %v95 = vpack.c.b16 %v92, %v91
    %v96 = vpack.c.b16 %v94, %v93
    %vm99 = vcmask 261120
    %v101 = vsel %vm99, %v78, 0
    %v104 = vsel %vm99, %v79, 0
    %106 = vmatprep.subr.bf16.mxu0 0
    %107 = vmatpush1.bf16.msra.mxu0 0
    %108 = vmatprep.subr.bf16.mxu0 0
    %109 = vmatpush1.bf16.msra.mxu0 0
    %110 = vmatprep.subr.bf16.mxu0 0
    %111 = vmatpush1.bf16.msra.mxu0 0
    %112 = vmatprep.subr.bf16.mxu0 0
    %113 = vmatpush1.bf16.msra.mxu0 0
    %114 = vmatprep.subr.bf16.mxu0 0
    %115 = vmatpush1.bf16.msra.mxu0 0
    %116 = vmatprep.subr.bf16.mxu0 0
    %117 = vmatpush1.bf16.msra.mxu0 0
    %118 = vmatprep.subr.bf16.mxu0 0
    %119 = vmatpush1.bf16.msra.mxu0 %v96
    %120 = vmatprep.subr.bf16.mxu0 0
    %121 = vmatpush1.bf16.msra.mxu0 %v95
    %122 = vmatprep.subr.bf16.mxu0 0
    %123 = vmatpush2.bf16.msra.mxu0 0
    %124 = vmatprep.subr.bf16.mxu0 0
    %125 = vmatpush2.bf16.msra.mxu0 0
    %126 = vmatprep.subr.bf16.mxu0 0
    %127 = vmatpush2.bf16.msra.mxu0 0
    %128 = vmatprep.subr.bf16.mxu0 0
    %129 = vmatpush2.bf16.msra.mxu0 0
    %130 = vmatprep.subr.bf16.mxu0 0
    %131 = vmatpush2.bf16.msra.mxu0 0
    %132 = vmatprep.subr.bf16.mxu0 0
    %133 = vmatpush2.bf16.msra.mxu0 0
    %134 = vmatprep.subr.bf16.mxu0 0
    %135 = vmatpush2.bf16.msra.mxu0 0
    %136 = vmatprep.subr.bf16.mxu0 0
    %137 = vmatpush2.bf16.msra.mxu0 0
    %138 = vmatprep.mubr.bf16.mxu0 0
    %139 = vmatmul.mubr.bf16.gmra.mxu0 %v101
    %v140 = vpop.f32.mrf.mxu0
    %v141 = vadd.f32 %v85, %v140
    %v142 = vpop.f32.mrf.mxu0
    %v143 = vpop.f32.mrf.mxu0
    %v144 = vadd.f32 %v85, %v143
    %v145 = vpop.f32.mrf.mxu0
    %146 = vmatprep.mubr.bf16.mxu0 0
    %147 = vmatmul.mubr.bf16.gmra.mxu0 %v104
    %v148 = vpop.f32.mrf.mxu0
    %v149 = vadd.f32 %v85, %v148
    %v150 = vpop.f32.mrf.mxu0
    %v151 = vpop.f32.mrf.mxu0
    %v152 = vadd.f32 %v85, %v151
    %v153 = vpop.f32.mrf.mxu0
    %154 = vdwg.mxu0
    %v155 = vld [vmem:[%s1] sm:$0x7]
    %v156 = vlaneseq
    %v157 = vshrl.u32 %v156, 7
    %v158 = vsub.s32 0, %v157
    %v159 = vrot.slane %v155, %v158
    %v160 = vlaneseq
    %v161 = vshrl.u32 %v160, 7
    %v162 = vsub.s32 1, %v161
    %v163 = vrot.slane %v155, %v162
    %v164 = vlaneseq
    %v165 = vshrl.u32 %v164, 7
    %v166 = vsub.s32 2, %v165
    %v167 = vrot.slane %v155, %v166
    %v168 = vld [vmem:[%s5] sm:$0x1]
    %v169 = vld [vmem:[%s6] sm:$0x1]
    %v170 = vsel %vm99, %v141, 0.0
    %171 = vadd.xlane.f32.xlu0 %v170
    %v172 = vpop.xlane.xlu0 %171
    %v173 = vsel %vm99, %v144, 0.0
    %174 = vadd.xlane.f32.xlu0 %v173
    %v175 = vpop.xlane.xlu0 %174
    %v176 = vsel %vm99, %v149, 0.0
    %177 = vadd.xlane.f32.xlu0 %v176
    %v178 = vpop.xlane.xlu0 %177
    %v179 = vsel %vm99, %v152, 0.0
    %180 = vadd.xlane.f32.xlu0 %v179
    %v181 = vpop.xlane.xlu0 %180
    %v182 = vrcp.pop 32.0
    %v183 = vmul.f32 %v172, %v182
    %v184 = vmul.f32 %v175, %v182
    %v185 = vmul.f32 %v178, %v182
    %v186 = vmul.f32 %v181, %v182
    %v187 = vsub.f32 %v141, %v183
    %v188 = vsub.f32 %v144, %v184
    %v189 = vsub.f32 %v149, %v185
    %v190 = vsub.f32 %v152, %v186
    %v191 = vmul.f32 %v187, %v187
    %v192 = vmul.f32 %v188, %v188
    %v193 = vmul.f32 %v189, %v189
    %v194 = vmul.f32 %v190, %v190
    %v195 = vsel %vm99, %v191, 0.0
    %196 = vadd.xlane.f32.xlu0 %v195
    %v197 = vpop.xlane.xlu0 %196
    %v198 = vsel %vm99, %v192, 0.0
    %199 = vadd.xlane.f32.xlu0 %v198
    %v200 = vpop.xlane.xlu0 %199
    %v201 = vsel %vm99, %v193, 0.0
    %202 = vadd.xlane.f32.xlu0 %v201
    %v203 = vpop.xlane.xlu0 %202
    %v204 = vsel %vm99, %v194, 0.0
    %205 = vadd.xlane.f32.xlu0 %v204
    %v206 = vpop.xlane.xlu0 %205
    %v207 = vmul.f32 %v197, %v182
    %v208 = vmul.f32 %v200, %v182
    %v209 = vmul.f32 %v203, %v182
    %v210 = vmul.f32 %v206, %v182
    %v211 = vadd.f32 %v207, 1e-05
    %v212 = vadd.f32 %v208, 1e-05
    %v213 = vadd.f32 %v209, 1e-05
    %v214 = vadd.f32 %v210, 1e-05
    %v215 = vrsqrt.pop %v211
    %v216 = vrsqrt.pop %v212
    %v217 = vrsqrt.pop %v213
    %v218 = vrsqrt.pop %v214
    %v219 = vmul.f32 %v187, %v215
    %v220 = vmul.f32 %v188, %v216
    %v221 = vmul.f32 %v189, %v217
    %v222 = vmul.f32 %v190, %v218
    %v224 = vlaneseq
    %v225 = vshrl.u32 %v224, 7
    %v226 = vsub.s32 0, %v225
    %v227 = vrot.slane %v168, %v226
    %v229 = vmul.f32 %v219, %v227
    %v230 = vmul.f32 %v220, %v227
    %v231 = vmul.f32 %v221, %v227
    %v232 = vmul.f32 %v222, %v227
    %v234 = vlaneseq
    %v235 = vshrl.u32 %v234, 7
    %v236 = vsub.s32 0, %v235
    %v237 = vrot.slane %v169, %v236
    %v239 = vadd.f32 %v229, %v237
    %v240 = vadd.f32 %v230, %v237
    %v241 = vadd.f32 %v231, %v237
    %v242 = vadd.f32 %v232, %v237
    %v243 = vld [vmem:[%s7] sm:$0xf]
    %v244 = vld [vmem:[%s7 + $0x4] sm:$0xf]
    %v245 = vld [vmem:[%s7 + $0x8] sm:$0xf]
    %v246 = vld [vmem:[%s7 + $0xc] sm:$0xf]
    %v247 = vpack.c.bf16 %v240, %v239
    %v248 = vpack.c.bf16 %v242, %v241
    %v249 = vld [vmem:[%s8] sm:$0x1]
    %v251 = vlaneseq
    %v252 = vshrl.u32 %v251, 7
    %v253 = vsub.s32 0, %v252
    %v254 = vrot.slane %v249, %v253
    %v260 = vunpack.c.l.b16 %v243
    %v261 = vunpack.c.l.b16 %v244
    %v262 = vunpack.c.l.b16 %v245
    %v263 = vunpack.c.l.b16 %v246
    %v264 = vpack.c.b16 %v261, %v260
    %v265 = vpack.c.b16 %v263, %v262
    %v269 = vsel %vm99, %v247, 0
    %v272 = vsel %vm99, %v248, 0
    %274 = vmatprep.subr.bf16.mxu0 0
    %275 = vmatpush1.bf16.msra.mxu0 0
    %276 = vmatprep.subr.bf16.mxu0 0
    %277 = vmatpush1.bf16.msra.mxu0 0
    %278 = vmatprep.subr.bf16.mxu0 0
    %279 = vmatpush1.bf16.msra.mxu0 0
    %280 = vmatprep.subr.bf16.mxu0 0
    %281 = vmatpush1.bf16.msra.mxu0 0
    %282 = vmatprep.subr.bf16.mxu0 0
    %283 = vmatpush1.bf16.msra.mxu0 0
    %284 = vmatprep.subr.bf16.mxu0 0
    %285 = vmatpush1.bf16.msra.mxu0 0
    %286 = vmatprep.subr.bf16.mxu0 0
    %287 = vmatpush1.bf16.msra.mxu0 %v265
    %288 = vmatprep.subr.bf16.mxu0 0
    %289 = vmatpush1.bf16.msra.mxu0 %v264
    %290 = vmatprep.subr.bf16.mxu0 0
    %291 = vmatpush2.bf16.msra.mxu0 0
    %292 = vmatprep.subr.bf16.mxu0 0
    %293 = vmatpush2.bf16.msra.mxu0 0
    %294 = vmatprep.subr.bf16.mxu0 0
    %295 = vmatpush2.bf16.msra.mxu0 0
    %296 = vmatprep.subr.bf16.mxu0 0
    %297 = vmatpush2.bf16.msra.mxu0 0
    %298 = vmatprep.subr.bf16.mxu0 0
    %299 = vmatpush2.bf16.msra.mxu0 0
    %300 = vmatprep.subr.bf16.mxu0 0
    %301 = vmatpush2.bf16.msra.mxu0 0
    %302 = vmatprep.subr.bf16.mxu0 0
    %303 = vmatpush2.bf16.msra.mxu0 0
    %304 = vmatprep.subr.bf16.mxu0 0
    %305 = vmatpush2.bf16.msra.mxu0 0
    %306 = vmatprep.mubr.bf16.mxu0 0
    %307 = vmatmul.mubr.bf16.gmra.mxu0 %v269
    %v308 = vpop.f32.mrf.mxu0
    %v309 = vadd.f32 %v254, %v308
    %v310 = vpop.f32.mrf.mxu0
    %v311 = vpop.f32.mrf.mxu0
    %v312 = vadd.f32 %v254, %v311
    %v313 = vpop.f32.mrf.mxu0
    %314 = vmatprep.mubr.bf16.mxu0 0
    %315 = vmatmul.mubr.bf16.gmra.mxu0 %v272
    %v316 = vpop.f32.mrf.mxu0
    %v317 = vadd.f32 %v254, %v316
    %v318 = vpop.f32.mrf.mxu0
    %v319 = vpop.f32.mrf.mxu0
    %v320 = vadd.f32 %v254, %v319
    %v321 = vpop.f32.mrf.mxu0
    %322 = vdwg.mxu0
    %v323 = vld [vmem:[%s9] sm:$0xf]
    %v324 = vld [vmem:[%s9 + $0x4] sm:$0xf]
    %v325 = vld [vmem:[%s9 + $0x8] sm:$0xf]
    %v326 = vld [vmem:[%s9 + $0xc] sm:$0xf]
    %v327 = vpack.c.bf16 %v312, %v309
    %v328 = vpack.c.bf16 %v320, %v317
    %v329 = vld [vmem:[%s10] sm:$0x1]
    %v331 = vlaneseq
    %v332 = vshrl.u32 %v331, 7
    %v333 = vsub.s32 0, %v332
    %v334 = vrot.slane %v329, %v333
    %v340 = vunpack.c.l.b16 %v323
    %v341 = vunpack.c.l.b16 %v324
    %v342 = vunpack.c.l.b16 %v325
    %v343 = vunpack.c.l.b16 %v326
    %v344 = vpack.c.b16 %v341, %v340
    %v345 = vpack.c.b16 %v343, %v342
    %v349 = vsel %vm99, %v327, 0
    %v352 = vsel %vm99, %v328, 0
    %354 = vmatprep.subr.bf16.mxu0 0
    %355 = vmatpush1.bf16.msra.mxu0 0
    %356 = vmatprep.subr.bf16.mxu0 0
    %357 = vmatpush1.bf16.msra.mxu0 0
    %358 = vmatprep.subr.bf16.mxu0 0
    %359 = vmatpush1.bf16.msra.mxu0 0
    %360 = vmatprep.subr.bf16.mxu0 0
    %361 = vmatpush1.bf16.msra.mxu0 0
    %362 = vmatprep.subr.bf16.mxu0 0
    %363 = vmatpush1.bf16.msra.mxu0 0
    %364 = vmatprep.subr.bf16.mxu0 0
    %365 = vmatpush1.bf16.msra.mxu0 0
    %366 = vmatprep.subr.bf16.mxu0 0
    %367 = vmatpush1.bf16.msra.mxu0 %v345
    %368 = vmatprep.subr.bf16.mxu0 0
    %369 = vmatpush1.bf16.msra.mxu0 %v344
    %370 = vmatprep.subr.bf16.mxu0 0
    %371 = vmatpush2.bf16.msra.mxu0 0
    %372 = vmatprep.subr.bf16.mxu0 0
    %373 = vmatpush2.bf16.msra.mxu0 0
    %374 = vmatprep.subr.bf16.mxu0 0
    %375 = vmatpush2.bf16.msra.mxu0 0
    %376 = vmatprep.subr.bf16.mxu0 0
    %377 = vmatpush2.bf16.msra.mxu0 0
    %378 = vmatprep.subr.bf16.mxu0 0
    %379 = vmatpush2.bf16.msra.mxu0 0
    %380 = vmatprep.subr.bf16.mxu0 0
    %381 = vmatpush2.bf16.msra.mxu0 0
    %382 = vmatprep.subr.bf16.mxu0 0
    %383 = vmatpush2.bf16.msra.mxu0 0
    %384 = vmatprep.subr.bf16.mxu0 0
    %385 = vmatpush2.bf16.msra.mxu0 0
    %386 = vmatprep.mubr.bf16.mxu0 0
    %387 = vmatmul.mubr.bf16.gmra.mxu0 %v349
    %v388 = vpop.f32.mrf.mxu0
    %v389 = vadd.f32 %v334, %v388
    %v390 = vpop.f32.mrf.mxu0
    %v391 = vpop.f32.mrf.mxu0
    %v392 = vadd.f32 %v334, %v391
    %v393 = vpop.f32.mrf.mxu0
    %394 = vmatprep.mubr.bf16.mxu0 0
    %395 = vmatmul.mubr.bf16.gmra.mxu0 %v352
    %v396 = vpop.f32.mrf.mxu0
    %v397 = vadd.f32 %v334, %v396
    %v398 = vpop.f32.mrf.mxu0
    %v399 = vpop.f32.mrf.mxu0
    %v400 = vadd.f32 %v334, %v399
    %v401 = vpop.f32.mrf.mxu0
    %402 = vdwg.mxu0
    %v403 = vadd.f32 %v159, %v389
    %v404 = vadd.f32 %v159, %v392
    %v405 = vadd.f32 %v159, %v397
    %v406 = vadd.f32 %v159, %v400
    %v407 = vadd.f32 %v163, %v389
    %v408 = vadd.f32 %v163, %v392
    %v409 = vadd.f32 %v163, %v397
    %v410 = vadd.f32 %v163, %v400
    %v411 = vadd.f32 %v167, %v389
    %v412 = vadd.f32 %v167, %v392
    %v413 = vadd.f32 %v167, %v397
    %v414 = vadd.f32 %v167, %v400
    %v415 = vld [vmem:[%s11] sm:$0x1]
    %v416 = vld [vmem:[%s12] sm:$0x1]
    %v417 = vsel %vm99, %v403, 0.0
    %418 = vadd.xlane.f32.xlu0 %v417
    %v419 = vpop.xlane.xlu0 %418
    %v420 = vsel %vm99, %v404, 0.0
    %421 = vadd.xlane.f32.xlu0 %v420
    %v422 = vpop.xlane.xlu0 %421
    %v423 = vsel %vm99, %v405, 0.0
    %424 = vadd.xlane.f32.xlu0 %v423
    %v425 = vpop.xlane.xlu0 %424
    %v426 = vsel %vm99, %v406, 0.0
    %427 = vadd.xlane.f32.xlu0 %v426
    %v428 = vpop.xlane.xlu0 %427
    %v429 = vsel %vm99, %v407, 0.0
    %430 = vadd.xlane.f32.xlu0 %v429
    %v431 = vpop.xlane.xlu0 %430
    %v432 = vsel %vm99, %v408, 0.0
    %433 = vadd.xlane.f32.xlu0 %v432
    %v434 = vpop.xlane.xlu0 %433
    %v435 = vsel %vm99, %v409, 0.0
    %436 = vadd.xlane.f32.xlu0 %v435
    %v437 = vpop.xlane.xlu0 %436
    %v438 = vsel %vm99, %v410, 0.0
    %439 = vadd.xlane.f32.xlu0 %v438
    %v440 = vpop.xlane.xlu0 %439
    %v441 = vsel %vm99, %v411, 0.0
    %442 = vadd.xlane.f32.xlu0 %v441
    %v443 = vpop.xlane.xlu0 %442
    %v444 = vsel %vm99, %v412, 0.0
    %445 = vadd.xlane.f32.xlu0 %v444
    %v446 = vpop.xlane.xlu0 %445
    %v447 = vsel %vm99, %v413, 0.0
    %448 = vadd.xlane.f32.xlu0 %v447
    %v449 = vpop.xlane.xlu0 %448
    %v450 = vsel %vm99, %v414, 0.0
    %451 = vadd.xlane.f32.xlu0 %v450
    %v452 = vpop.xlane.xlu0 %451
    %v453 = vmul.f32 %v419, %v182
    %v454 = vmul.f32 %v422, %v182
    %v455 = vmul.f32 %v425, %v182
    %v456 = vmul.f32 %v428, %v182
    %v457 = vmul.f32 %v431, %v182
    %v458 = vmul.f32 %v434, %v182
    %v459 = vmul.f32 %v437, %v182
    %v460 = vmul.f32 %v440, %v182
    %v461 = vmul.f32 %v443, %v182
    %v462 = vmul.f32 %v446, %v182
    %v463 = vmul.f32 %v449, %v182
    %v464 = vmul.f32 %v452, %v182
    %v465 = vsub.f32 %v403, %v453
    %v466 = vsub.f32 %v404, %v454
    %v467 = vsub.f32 %v405, %v455
    %v468 = vsub.f32 %v406, %v456
    %v469 = vsub.f32 %v407, %v457
    %v470 = vsub.f32 %v408, %v458
    %v471 = vsub.f32 %v409, %v459
    %v472 = vsub.f32 %v410, %v460
    %v473 = vsub.f32 %v411, %v461
    %v474 = vsub.f32 %v412, %v462
    %v475 = vsub.f32 %v413, %v463
    %v476 = vsub.f32 %v414, %v464
    %v477 = vmul.f32 %v465, %v465
    %v478 = vmul.f32 %v466, %v466
    %v479 = vmul.f32 %v467, %v467
    %v480 = vmul.f32 %v468, %v468
    %v481 = vmul.f32 %v469, %v469
    %v482 = vmul.f32 %v470, %v470
    %v483 = vmul.f32 %v471, %v471
    %v484 = vmul.f32 %v472, %v472
    %v485 = vmul.f32 %v473, %v473
    %v486 = vmul.f32 %v474, %v474
    %v487 = vmul.f32 %v475, %v475
    %v488 = vmul.f32 %v476, %v476
    %v489 = vsel %vm99, %v477, 0.0
    %490 = vadd.xlane.f32.xlu0 %v489
    %v491 = vpop.xlane.xlu0 %490
    %v492 = vsel %vm99, %v478, 0.0
    %493 = vadd.xlane.f32.xlu0 %v492
    %v494 = vpop.xlane.xlu0 %493
    %v495 = vsel %vm99, %v479, 0.0
    %496 = vadd.xlane.f32.xlu0 %v495
    %v497 = vpop.xlane.xlu0 %496
    %v498 = vsel %vm99, %v480, 0.0
    %499 = vadd.xlane.f32.xlu0 %v498
    %v500 = vpop.xlane.xlu0 %499
    %v501 = vsel %vm99, %v481, 0.0
    %502 = vadd.xlane.f32.xlu0 %v501
    %v503 = vpop.xlane.xlu0 %502
    %v504 = vsel %vm99, %v482, 0.0
    %505 = vadd.xlane.f32.xlu0 %v504
    %v506 = vpop.xlane.xlu0 %505
    %v507 = vsel %vm99, %v483, 0.0
    %508 = vadd.xlane.f32.xlu0 %v507
    %v509 = vpop.xlane.xlu0 %508
    %v510 = vsel %vm99, %v484, 0.0
    %511 = vadd.xlane.f32.xlu0 %v510
    %v512 = vpop.xlane.xlu0 %511
    %v513 = vsel %vm99, %v485, 0.0
    %514 = vadd.xlane.f32.xlu0 %v513
    %v515 = vpop.xlane.xlu0 %514
    %v516 = vsel %vm99, %v486, 0.0
    %517 = vadd.xlane.f32.xlu0 %v516
    %v518 = vpop.xlane.xlu0 %517
    %v519 = vsel %vm99, %v487, 0.0
    %520 = vadd.xlane.f32.xlu0 %v519
    %v521 = vpop.xlane.xlu0 %520
    %v522 = vsel %vm99, %v488, 0.0
    %523 = vadd.xlane.f32.xlu0 %v522
    %v524 = vpop.xlane.xlu0 %523
    %v525 = vmul.f32 %v491, %v182
    %v526 = vmul.f32 %v494, %v182
    %v527 = vmul.f32 %v497, %v182
    %v528 = vmul.f32 %v500, %v182
    %v529 = vmul.f32 %v503, %v182
    %v530 = vmul.f32 %v506, %v182
    %v531 = vmul.f32 %v509, %v182
    %v532 = vmul.f32 %v512, %v182
    %v533 = vmul.f32 %v515, %v182
    %v534 = vmul.f32 %v518, %v182
    %v535 = vmul.f32 %v521, %v182
    %v536 = vmul.f32 %v524, %v182
    %v537 = vadd.f32 %v525, 1e-05
    %v538 = vadd.f32 %v526, 1e-05
    %v539 = vadd.f32 %v527, 1e-05
    %v540 = vadd.f32 %v528, 1e-05
    %v541 = vadd.f32 %v529, 1e-05
    %v542 = vadd.f32 %v530, 1e-05
    %v543 = vadd.f32 %v531, 1e-05
    %v544 = vadd.f32 %v532, 1e-05
    %v545 = vadd.f32 %v533, 1e-05
    %v546 = vadd.f32 %v534, 1e-05
    %v547 = vadd.f32 %v535, 1e-05
    %v548 = vadd.f32 %v536, 1e-05
    %v549 = vrsqrt.pop %v537
    %v550 = vrsqrt.pop %v538
    %v551 = vrsqrt.pop %v539
    %v552 = vrsqrt.pop %v540
    %v553 = vrsqrt.pop %v541
    %v554 = vrsqrt.pop %v542
    %v555 = vrsqrt.pop %v543
    %v556 = vrsqrt.pop %v544
    %v557 = vrsqrt.pop %v545
    %v558 = vrsqrt.pop %v546
    %v559 = vrsqrt.pop %v547
    %v560 = vrsqrt.pop %v548
    %v561 = vmul.f32 %v465, %v549
    %v562 = vmul.f32 %v466, %v550
    %v563 = vmul.f32 %v467, %v551
    %v564 = vmul.f32 %v468, %v552
    %v565 = vmul.f32 %v469, %v553
    %v566 = vmul.f32 %v470, %v554
    %v567 = vmul.f32 %v471, %v555
    %v568 = vmul.f32 %v472, %v556
    %v569 = vmul.f32 %v473, %v557
    %v570 = vmul.f32 %v474, %v558
    %v571 = vmul.f32 %v475, %v559
    %v572 = vmul.f32 %v476, %v560
    %v574 = vlaneseq
    %v575 = vshrl.u32 %v574, 7
    %v576 = vsub.s32 0, %v575
    %v577 = vrot.slane %v415, %v576
    %v579 = vmul.f32 %v561, %v577
    %v580 = vmul.f32 %v562, %v577
    %v581 = vmul.f32 %v563, %v577
    %v582 = vmul.f32 %v564, %v577
    %v583 = vmul.f32 %v565, %v577
    %v584 = vmul.f32 %v566, %v577
    %v585 = vmul.f32 %v567, %v577
    %v586 = vmul.f32 %v568, %v577
    %v587 = vmul.f32 %v569, %v577
    %v588 = vmul.f32 %v570, %v577
    %v589 = vmul.f32 %v571, %v577
    %v590 = vmul.f32 %v572, %v577
    %v592 = vlaneseq
    %v593 = vshrl.u32 %v592, 7
    %v594 = vsub.s32 0, %v593
    %v595 = vrot.slane %v416, %v594
    %v597 = vadd.f32 %v579, %v595
    %v598 = vadd.f32 %v580, %v595
    %v599 = vadd.f32 %v581, %v595
    %v600 = vadd.f32 %v582, %v595
    %v601 = vadd.f32 %v583, %v595
    %v602 = vadd.f32 %v584, %v595
    %v603 = vadd.f32 %v585, %v595
    %v604 = vadd.f32 %v586, %v595
    %v605 = vadd.f32 %v587, %v595
    %v606 = vadd.f32 %v588, %v595
    %v607 = vadd.f32 %v589, %v595
    %v608 = vadd.f32 %v590, %v595
    %v609 = vld [vmem:[%s13] sm:$0xf]
    %v610 = vld [vmem:[%s13 + $0x4] sm:$0xf]
    %v611 = vld [vmem:[%s13 + $0x8] sm:$0xf]
    %v612 = vld [vmem:[%s13 + $0xc] sm:$0xf]
    %v613 = vpack.c.bf16 %v598, %v597
    %v614 = vpack.c.bf16 %v600, %v599
    %v615 = vpack.c.bf16 %v602, %v601
    %v616 = vpack.c.bf16 %v604, %v603
    %v617 = vpack.c.bf16 %v606, %v605
    %v618 = vpack.c.bf16 %v608, %v607
    %v619 = vld [vmem:[%s14] sm:$0x1]
    %v621 = vlaneseq
    %v622 = vshrl.u32 %v621, 7
    %v623 = vsub.s32 0, %v622
    %v624 = vrot.slane %v619, %v623
    %v630 = vunpack.c.l.b16 %v609
    %v631 = vunpack.c.l.b16 %v610
    %v632 = vunpack.c.l.b16 %v611
    %v633 = vunpack.c.l.b16 %v612
    %v634 = vpack.c.b16 %v631, %v630
    %v635 = vpack.c.b16 %v633, %v632
    %v639 = vsel %vm99, %v613, 0
    %v642 = vsel %vm99, %v614, 0
    %v645 = vsel %vm99, %v615, 0
    %v648 = vsel %vm99, %v616, 0
    %v651 = vsel %vm99, %v617, 0
    %v654 = vsel %vm99, %v618, 0
    %656 = vmatprep.subr.bf16.mxu0 0
    %657 = vmatpush1.bf16.msra.mxu0 0
    %658 = vmatprep.subr.bf16.mxu0 0
    %659 = vmatpush1.bf16.msra.mxu0 0
    %660 = vmatprep.subr.bf16.mxu0 0
    %661 = vmatpush1.bf16.msra.mxu0 0
    %662 = vmatprep.subr.bf16.mxu0 0
    %663 = vmatpush1.bf16.msra.mxu0 0
    %664 = vmatprep.subr.bf16.mxu0 0
    %665 = vmatpush1.bf16.msra.mxu0 0
    %666 = vmatprep.subr.bf16.mxu0 0
    %667 = vmatpush1.bf16.msra.mxu0 0
    %668 = vmatprep.subr.bf16.mxu0 0
    %669 = vmatpush1.bf16.msra.mxu0 %v635
    %670 = vmatprep.subr.bf16.mxu0 0
    %671 = vmatpush1.bf16.msra.mxu0 %v634
    %672 = vmatprep.subr.bf16.mxu0 0
    %673 = vmatpush2.bf16.msra.mxu0 0
    %674 = vmatprep.subr.bf16.mxu0 0
    %675 = vmatpush2.bf16.msra.mxu0 0
    %676 = vmatprep.subr.bf16.mxu0 0
    %677 = vmatpush2.bf16.msra.mxu0 0
    %678 = vmatprep.subr.bf16.mxu0 0
    %679 = vmatpush2.bf16.msra.mxu0 0
    %680 = vmatprep.subr.bf16.mxu0 0
    %681 = vmatpush2.bf16.msra.mxu0 0
    %682 = vmatprep.subr.bf16.mxu0 0
    %683 = vmatpush2.bf16.msra.mxu0 0
    %684 = vmatprep.subr.bf16.mxu0 0
    %685 = vmatpush2.bf16.msra.mxu0 0
    %686 = vmatprep.subr.bf16.mxu0 0
    %687 = vmatpush2.bf16.msra.mxu0 0
    %688 = vmatprep.mubr.bf16.mxu0 0
    %689 = vmatmul.mubr.bf16.gmra.mxu0 %v639
    %v690 = vpop.f32.mrf.mxu0
    %v691 = vadd.f32 %v624, %v690
    %v692 = vpop.f32.mrf.mxu0
    %v693 = vpop.f32.mrf.mxu0
    %v694 = vadd.f32 %v624, %v693
    %v695 = vpop.f32.mrf.mxu0
    %696 = vmatprep.mubr.bf16.mxu0 0
    %697 = vmatmul.mubr.bf16.gmra.mxu0 %v642
    %v698 = vpop.f32.mrf.mxu0
    %v699 = vadd.f32 %v624, %v698
    %v700 = vpop.f32.mrf.mxu0
    %v701 = vpop.f32.mrf.mxu0
    %v702 = vadd.f32 %v624, %v701
    %v703 = vpop.f32.mrf.mxu0
    %704 = vmatprep.mubr.bf16.mxu0 0
    %705 = vmatmul.mubr.bf16.gmra.mxu0 %v645
    %v706 = vpop.f32.mrf.mxu0
    %v707 = vadd.f32 %v624, %v706
    %v708 = vpop.f32.mrf.mxu0
    %v709 = vpop.f32.mrf.mxu0
    %v710 = vadd.f32 %v624, %v709
    %v711 = vpop.f32.mrf.mxu0
    %712 = vmatprep.mubr.bf16.mxu0 0
    %713 = vmatmul.mubr.bf16.gmra.mxu0 %v648
    %v714 = vpop.f32.mrf.mxu0
    %v715 = vadd.f32 %v624, %v714
    %v716 = vpop.f32.mrf.mxu0
    %v717 = vpop.f32.mrf.mxu0
    %v718 = vadd.f32 %v624, %v717
    %v719 = vpop.f32.mrf.mxu0
    %720 = vmatprep.mubr.bf16.mxu0 0
    %721 = vmatmul.mubr.bf16.gmra.mxu0 %v651
    %v722 = vpop.f32.mrf.mxu0
    %v723 = vadd.f32 %v624, %v722
    %v724 = vpop.f32.mrf.mxu0
    %v725 = vpop.f32.mrf.mxu0
    %v726 = vadd.f32 %v624, %v725
    %v727 = vpop.f32.mrf.mxu0
    %728 = vmatprep.mubr.bf16.mxu0 0
    %729 = vmatmul.mubr.bf16.gmra.mxu0 %v654
    %v730 = vpop.f32.mrf.mxu0
    %v731 = vadd.f32 %v624, %v730
    %v732 = vpop.f32.mrf.mxu0
    %v733 = vpop.f32.mrf.mxu0
    %v734 = vadd.f32 %v624, %v733
    %v735 = vpop.f32.mrf.mxu0
    %736 = vdwg.mxu0
    %v737 = vmul.f32 %v691, 0.5
    %v738 = vmul.f32 %v694, 0.5
    %v739 = vmul.f32 %v699, 0.5
    %v740 = vmul.f32 %v702, 0.5
    %v741 = vmul.f32 %v707, 0.5
    %v742 = vmul.f32 %v710, 0.5
    %v743 = vmul.f32 %v715, 0.5
    %v744 = vmul.f32 %v718, 0.5
    %v745 = vmul.f32 %v723, 0.5
    %v746 = vmul.f32 %v726, 0.5
    %v747 = vmul.f32 %v731, 0.5
    %v748 = vmul.f32 %v734, 0.5
    %v749 = vmul.f32 %v691, 0.044715
    %v750 = vmul.f32 %v694, 0.044715
    %v751 = vmul.f32 %v699, 0.044715
    %v752 = vmul.f32 %v702, 0.044715
    %v753 = vmul.f32 %v707, 0.044715
    %v754 = vmul.f32 %v710, 0.044715
    %v755 = vmul.f32 %v715, 0.044715
    %v756 = vmul.f32 %v718, 0.044715
    %v757 = vmul.f32 %v723, 0.044715
    %v758 = vmul.f32 %v726, 0.044715
    %v759 = vmul.f32 %v731, 0.044715
    %v760 = vmul.f32 %v734, 0.044715
    %v761 = vmul.f32 %v749, %v691
    %v762 = vmul.f32 %v750, %v694
    %v763 = vmul.f32 %v751, %v699
    %v764 = vmul.f32 %v752, %v702
    %v765 = vmul.f32 %v753, %v707
    %v766 = vmul.f32 %v754, %v710
    %v767 = vmul.f32 %v755, %v715
    %v768 = vmul.f32 %v756, %v718
    %v769 = vmul.f32 %v757, %v723
    %v770 = vmul.f32 %v758, %v726
    %v771 = vmul.f32 %v759, %v731
    %v772 = vmul.f32 %v760, %v734
    %v773 = vmul.f32 %v761, %v691
    %v774 = vmul.f32 %v762, %v694
    %v775 = vmul.f32 %v763, %v699
    %v776 = vmul.f32 %v764, %v702
    %v777 = vmul.f32 %v765, %v707
    %v778 = vmul.f32 %v766, %v710
    %v779 = vmul.f32 %v767, %v715
    %v780 = vmul.f32 %v768, %v718
    %v781 = vmul.f32 %v769, %v723
    %v782 = vmul.f32 %v770, %v726
    %v783 = vmul.f32 %v771, %v731
    %v784 = vmul.f32 %v772, %v734
    %v785 = vadd.f32 %v691, %v773
    %v786 = vadd.f32 %v694, %v774
    %v787 = vadd.f32 %v699, %v775
    %v788 = vadd.f32 %v702, %v776
    %v789 = vadd.f32 %v707, %v777
    %v790 = vadd.f32 %v710, %v778
    %v791 = vadd.f32 %v715, %v779
    %v792 = vadd.f32 %v718, %v780
    %v793 = vadd.f32 %v723, %v781
    %v794 = vadd.f32 %v726, %v782
    %v795 = vadd.f32 %v731, %v783
    %v796 = vadd.f32 %v734, %v784
    %v797 = vmul.f32 %v785, 0.7978846
    %v798 = vmul.f32 %v786, 0.7978846
    %v799 = vmul.f32 %v787, 0.7978846
    %v800 = vmul.f32 %v788, 0.7978846
    %v801 = vmul.f32 %v789, 0.7978846
    %v802 = vmul.f32 %v790, 0.7978846
    %v803 = vmul.f32 %v791, 0.7978846
    %v804 = vmul.f32 %v792, 0.7978846
    %v805 = vmul.f32 %v793, 0.7978846
    %v806 = vmul.f32 %v794, 0.7978846
    %v807 = vmul.f32 %v795, 0.7978846
    %v808 = vmul.f32 %v796, 0.7978846
    %v809 = vtanh.pop %v797
    %v810 = vtanh.pop %v798
    %v811 = vtanh.pop %v799
    %v812 = vtanh.pop %v800
    %v813 = vtanh.pop %v801
    %v814 = vtanh.pop %v802
    %v815 = vtanh.pop %v803
    %v816 = vtanh.pop %v804
    %v817 = vtanh.pop %v805
    %v818 = vtanh.pop %v806
    %v819 = vtanh.pop %v807
    %v820 = vtanh.pop %v808
    %v821 = vadd.f32 %v809, 1.0
    %v822 = vadd.f32 %v810, 1.0
    %v823 = vadd.f32 %v811, 1.0
    %v824 = vadd.f32 %v812, 1.0
    %v825 = vadd.f32 %v813, 1.0
    %v826 = vadd.f32 %v814, 1.0
    %v827 = vadd.f32 %v815, 1.0
    %v828 = vadd.f32 %v816, 1.0
    %v829 = vadd.f32 %v817, 1.0
    %v830 = vadd.f32 %v818, 1.0
    %v831 = vadd.f32 %v819, 1.0
    %v832 = vadd.f32 %v820, 1.0
    %v833 = vmul.f32 %v737, %v821
    %v834 = vmul.f32 %v738, %v822
    %v835 = vmul.f32 %v739, %v823
    %v836 = vmul.f32 %v740, %v824
    %v837 = vmul.f32 %v741, %v825
    %v838 = vmul.f32 %v742, %v826
    %v839 = vmul.f32 %v743, %v827
    %v840 = vmul.f32 %v744, %v828
    %v841 = vmul.f32 %v745, %v829
    %v842 = vmul.f32 %v746, %v830
    %v843 = vmul.f32 %v747, %v831
    %v844 = vmul.f32 %v748, %v832
    %v845 = vld [vmem:[%s15] sm:$0xf]
    %v846 = vld [vmem:[%s15 + $0x4] sm:$0xf]
    %v847 = vld [vmem:[%s15 + $0x8] sm:$0xf]
    %v848 = vld [vmem:[%s15 + $0xc] sm:$0xf]
    %v849 = vld [vmem:[%s15 + $0x10] sm:$0xf]
    %v850 = vld [vmem:[%s15 + $0x14] sm:$0xf]
    %v851 = vld [vmem:[%s15 + $0x18] sm:$0xf]
    %v852 = vld [vmem:[%s15 + $0x1c] sm:$0xf]
    %v853 = vpack.c.bf16 %v834, %v833
    %v854 = vpack.c.bf16 %v836, %v835
    %v855 = vpack.c.bf16 %v838, %v837
    %v856 = vpack.c.bf16 %v840, %v839
    %v857 = vpack.c.bf16 %v842, %v841
    %v858 = vpack.c.bf16 %v844, %v843
    %v867 = vunpack.c.l.b16 %v845
    %v868 = vunpack.c.l.b16 %v846
    %v869 = vunpack.c.l.b16 %v847
    %v870 = vunpack.c.l.b16 %v848
    %v871 = vunpack.c.l.b16 %v849
    %v872 = vunpack.c.l.b16 %v850
    %v873 = vunpack.c.l.b16 %v851
    %v874 = vunpack.c.l.b16 %v852
    %v875 = vpack.c.b16 %v868, %v867
    %v876 = vpack.c.b16 %v870, %v869
    %v877 = vpack.c.b16 %v872, %v871
    %v878 = vpack.c.b16 %v874, %v873
    %vm883 = vcmask 523264
    %v885 = vsel %vm883, %v853, 0
    %v888 = vsel %vm883, %v854, 0
    %v891 = vsel %vm883, %v855, 0
    %v894 = vsel %vm883, %v856, 0
    %v897 = vsel %vm883, %v857, 0
    %v900 = vsel %vm883, %v858, 0
    %902 = vmatprep.subr.bf16.mxu0 0
    %903 = vmatpush1.bf16.msra.mxu0 0
    %904 = vmatprep.subr.bf16.mxu0 0
    %905 = vmatpush1.bf16.msra.mxu0 0
    %906 = vmatprep.subr.bf16.mxu0 0
    %907 = vmatpush1.bf16.msra.mxu0 0
    %908 = vmatprep.subr.bf16.mxu0 0
    %909 = vmatpush1.bf16.msra.mxu0 0
    %910 = vmatprep.subr.bf16.mxu0 0
    %911 = vmatpush1.bf16.msra.mxu0 %v878
    %912 = vmatprep.subr.bf16.mxu0 0
    %913 = vmatpush1.bf16.msra.mxu0 %v877
    %914 = vmatprep.subr.bf16.mxu0 0
    %915 = vmatpush1.bf16.msra.mxu0 %v876
    %916 = vmatprep.subr.bf16.mxu0 0
    %917 = vmatpush1.bf16.msra.mxu0 %v875
    %918 = vmatprep.subr.bf16.mxu0 0
    %919 = vmatpush2.bf16.msra.mxu0 0
    %920 = vmatprep.subr.bf16.mxu0 0
    %921 = vmatpush2.bf16.msra.mxu0 0
    %922 = vmatprep.subr.bf16.mxu0 0
    %923 = vmatpush2.bf16.msra.mxu0 0
    %924 = vmatprep.subr.bf16.mxu0 0
    %925 = vmatpush2.bf16.msra.mxu0 0
    %926 = vmatprep.subr.bf16.mxu0 0
    %927 = vmatpush2.bf16.msra.mxu0 0
    %928 = vmatprep.subr.bf16.mxu0 0
    %929 = vmatpush2.bf16.msra.mxu0 0
    %930 = vmatprep.subr.bf16.mxu0 0
    %931 = vmatpush2.bf16.msra.mxu0 0
    %932 = vmatprep.subr.bf16.mxu0 0
    %933 = vmatpush2.bf16.msra.mxu0 0
    %934 = vmatprep.mubr.bf16.mxu0 0
    %935 = vmatmul.mubr.bf16.gmra.mxu0 %v885
    %v936 = vpop.f32.mrf.mxu0
    %v937 = vadd.f32 0.0, %v936
    %v938 = vpop.f32.mrf.mxu0
    %v939 = vpop.f32.mrf.mxu0
    %v940 = vadd.f32 0.0, %v939
    %v941 = vpop.f32.mrf.mxu0
    %942 = vmatprep.mubr.bf16.mxu0 0
    %943 = vmatmul.mubr.bf16.gmra.mxu0 %v888
    %v944 = vpop.f32.mrf.mxu0
    %v945 = vadd.f32 0.0, %v944
    %v946 = vpop.f32.mrf.mxu0
    %v947 = vpop.f32.mrf.mxu0
    %v948 = vadd.f32 0.0, %v947
    %v949 = vpop.f32.mrf.mxu0
    %950 = vmatprep.mubr.bf16.mxu0 0
    %951 = vmatmul.mubr.bf16.gmra.mxu0 %v891
    %v952 = vpop.f32.mrf.mxu0
    %v953 = vadd.f32 0.0, %v952
    %v954 = vpop.f32.mrf.mxu0
    %v955 = vpop.f32.mrf.mxu0
    %v956 = vadd.f32 0.0, %v955
    %v957 = vpop.f32.mrf.mxu0
    %958 = vmatprep.mubr.bf16.mxu0 0
    %959 = vmatmul.mubr.bf16.gmra.mxu0 %v894
    %v960 = vpop.f32.mrf.mxu0
    %v961 = vadd.f32 0.0, %v960
    %v962 = vpop.f32.mrf.mxu0
    %v963 = vpop.f32.mrf.mxu0
    %v964 = vadd.f32 0.0, %v963
    %v965 = vpop.f32.mrf.mxu0
    %966 = vmatprep.mubr.bf16.mxu0 0
    %967 = vmatmul.mubr.bf16.gmra.mxu0 %v897
    %v968 = vpop.f32.mrf.mxu0
    %v969 = vadd.f32 0.0, %v968
    %v970 = vpop.f32.mrf.mxu0
    %v971 = vpop.f32.mrf.mxu0
    %v972 = vadd.f32 0.0, %v971
    %v973 = vpop.f32.mrf.mxu0
    %974 = vmatprep.mubr.bf16.mxu0 0
    %975 = vmatmul.mubr.bf16.gmra.mxu0 %v900
    %v976 = vpop.f32.mrf.mxu0
    %v977 = vadd.f32 0.0, %v976
    %v978 = vpop.f32.mrf.mxu0
    %v979 = vpop.f32.mrf.mxu0
    %v980 = vadd.f32 0.0, %v979
    %v981 = vpop.f32.mrf.mxu0
    %982 = vdwg.mxu0
    %v983 = vadd.f32 %v403, %v937
    %v984 = vadd.f32 %v404, %v940
    %v985 = vadd.f32 %v405, %v945
    %v986 = vadd.f32 %v406, %v948
    %v987 = vadd.f32 %v407, %v953
    %v988 = vadd.f32 %v408, %v956
    %v989 = vadd.f32 %v409, %v961
    %v990 = vadd.f32 %v410, %v964
    %v991 = vadd.f32 %v411, %v969
    %v992 = vadd.f32 %v412, %v972
    %v993 = vadd.f32 %v413, %v977
    %v994 = vadd.f32 %v414, %v980
    %v995 = vld [vmem:[%s16] sm:$0x1]
    %v997 = vlaneseq
    %v998 = vshrl.u32 %v997, 7
    %v999 = vsub.s32 0, %v998
    %v1000 = vrot.slane %v995, %v999
    %v1002 = vadd.f32 %v983, %v1000
    %v1003 = vadd.f32 %v984, %v1000
    %v1004 = vadd.f32 %v985, %v1000
    %v1005 = vadd.f32 %v986, %v1000
    %v1006 = vadd.f32 %v987, %v1000
    %v1007 = vadd.f32 %v988, %v1000
    %v1008 = vadd.f32 %v989, %v1000
    %v1009 = vadd.f32 %v990, %v1000
    %v1010 = vadd.f32 %v991, %v1000
    %v1011 = vadd.f32 %v992, %v1000
    %v1012 = vadd.f32 %v993, %v1000
    %v1013 = vadd.f32 %v994, %v1000
    %s1014 = scalar_lea.vmem %s5, 1
    %v1015 = vld [vmem:[%s1014] sm:$0x1]
    %s1016 = scalar_lea.vmem %s6, 1
    %v1017 = vld [vmem:[%s1016] sm:$0x1]
    %v1019 = vlaneseq
    %v1020 = vshrl.u32 %v1019, 7
    %v1021 = vsub.s32 0, %v1020
    %v1022 = vrot.slane %v1015, %v1021
    %v1024 = vmul.f32 %v219, %v1022
    %v1025 = vmul.f32 %v220, %v1022
    %v1026 = vmul.f32 %v221, %v1022
    %v1027 = vmul.f32 %v222, %v1022
    %v1029 = vlaneseq
    %v1030 = vshrl.u32 %v1029, 7
    %v1031 = vsub.s32 0, %v1030
    %v1032 = vrot.slane %v1017, %v1031
    %v1034 = vadd.f32 %v1024, %v1032
    %v1035 = vadd.f32 %v1025, %v1032
    %v1036 = vadd.f32 %v1026, %v1032
    %v1037 = vadd.f32 %v1027, %v1032
    %s1038 = scalar_lea.vmem %s7, 16
    %v1039 = vld [vmem:[%s1038] sm:$0xf]
    %v1040 = vld [vmem:[%s1038 + $0x4] sm:$0xf]
    %v1041 = vld [vmem:[%s1038 + $0x8] sm:$0xf]
    %v1042 = vld [vmem:[%s1038 + $0xc] sm:$0xf]
    %v1043 = vpack.c.bf16 %v1035, %v1034
    %v1044 = vpack.c.bf16 %v1037, %v1036
    %s1045 = scalar_lea.vmem %s8, 1
    %v1046 = vld [vmem:[%s1045] sm:$0x1]
    %v1048 = vlaneseq
    %v1049 = vshrl.u32 %v1048, 7
    %v1050 = vsub.s32 0, %v1049
    %v1051 = vrot.slane %v1046, %v1050
    %v1057 = vunpack.c.l.b16 %v1039
    %v1058 = vunpack.c.l.b16 %v1040
    %v1059 = vunpack.c.l.b16 %v1041
    %v1060 = vunpack.c.l.b16 %v1042
    %v1061 = vpack.c.b16 %v1058, %v1057
    %v1062 = vpack.c.b16 %v1060, %v1059
    %v1066 = vsel %vm99, %v1043, 0
    %v1069 = vsel %vm99, %v1044, 0
    %1071 = vmatprep.subr.bf16.mxu0 0
    %1072 = vmatpush1.bf16.msra.mxu0 0
    %1073 = vmatprep.subr.bf16.mxu0 0
    %1074 = vmatpush1.bf16.msra.mxu0 0
    %1075 = vmatprep.subr.bf16.mxu0 0
    %1076 = vmatpush1.bf16.msra.mxu0 0
    %1077 = vmatprep.subr.bf16.mxu0 0
    %1078 = vmatpush1.bf16.msra.mxu0 0
    %1079 = vmatprep.subr.bf16.mxu0 0
    %1080 = vmatpush1.bf16.msra.mxu0 0
    %1081 = vmatprep.subr.bf16.mxu0 0
    %1082 = vmatpush1.bf16.msra.mxu0 0
    %1083 = vmatprep.subr.bf16.mxu0 0
    %1084 = vmatpush1.bf16.msra.mxu0 %v1062
    %1085 = vmatprep.subr.bf16.mxu0 0
    %1086 = vmatpush1.bf16.msra.mxu0 %v1061
    %1087 = vmatprep.subr.bf16.mxu0 0
    %1088 = vmatpush2.bf16.msra.mxu0 0
    %1089 = vmatprep.subr.bf16.mxu0 0
    %1090 = vmatpush2.bf16.msra.mxu0 0
    %1091 = vmatprep.subr.bf16.mxu0 0
    %1092 = vmatpush2.bf16.msra.mxu0 0
    %1093 = vmatprep.subr.bf16.mxu0 0
    %1094 = vmatpush2.bf16.msra.mxu0 0
    %1095 = vmatprep.subr.bf16.mxu0 0
    %1096 = vmatpush2.bf16.msra.mxu0 0
    %1097 = vmatprep.subr.bf16.mxu0 0
    %1098 = vmatpush2.bf16.msra.mxu0 0
    %1099 = vmatprep.subr.bf16.mxu0 0
    %1100 = vmatpush2.bf16.msra.mxu0 0
    %1101 = vmatprep.subr.bf16.mxu0 0
    %1102 = vmatpush2.bf16.msra.mxu0 0
    %1103 = vmatprep.mubr.bf16.mxu0 0
    %1104 = vmatmul.mubr.bf16.gmra.mxu0 %v1066
    %v1105 = vpop.f32.mrf.mxu0
    %v1106 = vadd.f32 %v1051, %v1105
    %v1107 = vpop.f32.mrf.mxu0
    %v1108 = vpop.f32.mrf.mxu0
    %v1109 = vadd.f32 %v1051, %v1108
    %v1110 = vpop.f32.mrf.mxu0
    %1111 = vmatprep.mubr.bf16.mxu0 0
    %1112 = vmatmul.mubr.bf16.gmra.mxu0 %v1069
    %v1113 = vpop.f32.mrf.mxu0
    %v1114 = vadd.f32 %v1051, %v1113
    %v1115 = vpop.f32.mrf.mxu0
    %v1116 = vpop.f32.mrf.mxu0
    %v1117 = vadd.f32 %v1051, %v1116
    %v1118 = vpop.f32.mrf.mxu0
    %1119 = vdwg.mxu0
    %s1120 = scalar_lea.vmem %s9, 16
    %v1121 = vld [vmem:[%s1120] sm:$0xf]
    %v1122 = vld [vmem:[%s1120 + $0x4] sm:$0xf]
    %v1123 = vld [vmem:[%s1120 + $0x8] sm:$0xf]
    %v1124 = vld [vmem:[%s1120 + $0xc] sm:$0xf]
    %v1125 = vpack.c.bf16 %v1109, %v1106
    %v1126 = vpack.c.bf16 %v1117, %v1114
    %s1127 = scalar_lea.vmem %s10, 1
    %v1128 = vld [vmem:[%s1127] sm:$0x1]
    %v1130 = vlaneseq
    %v1131 = vshrl.u32 %v1130, 7
    %v1132 = vsub.s32 0, %v1131
    %v1133 = vrot.slane %v1128, %v1132
    %v1139 = vunpack.c.l.b16 %v1121
    %v1140 = vunpack.c.l.b16 %v1122
    %v1141 = vunpack.c.l.b16 %v1123
    %v1142 = vunpack.c.l.b16 %v1124
    %v1143 = vpack.c.b16 %v1140, %v1139
    %v1144 = vpack.c.b16 %v1142, %v1141
    %v1148 = vsel %vm99, %v1125, 0
    %v1151 = vsel %vm99, %v1126, 0
    %1153 = vmatprep.subr.bf16.mxu0 0
    %1154 = vmatpush1.bf16.msra.mxu0 0
    %1155 = vmatprep.subr.bf16.mxu0 0
    %1156 = vmatpush1.bf16.msra.mxu0 0
    %1157 = vmatprep.subr.bf16.mxu0 0
    %1158 = vmatpush1.bf16.msra.mxu0 0
    %1159 = vmatprep.subr.bf16.mxu0 0
    %1160 = vmatpush1.bf16.msra.mxu0 0
    %1161 = vmatprep.subr.bf16.mxu0 0
    %1162 = vmatpush1.bf16.msra.mxu0 0
    %1163 = vmatprep.subr.bf16.mxu0 0
    %1164 = vmatpush1.bf16.msra.mxu0 0
    %1165 = vmatprep.subr.bf16.mxu0 0
    %1166 = vmatpush1.bf16.msra.mxu0 %v1144
    %1167 = vmatprep.subr.bf16.mxu0 0
    %1168 = vmatpush1.bf16.msra.mxu0 %v1143
    %1169 = vmatprep.subr.bf16.mxu0 0
    %1170 = vmatpush2.bf16.msra.mxu0 0
    %1171 = vmatprep.subr.bf16.mxu0 0
    %1172 = vmatpush2.bf16.msra.mxu0 0
    %1173 = vmatprep.subr.bf16.mxu0 0
    %1174 = vmatpush2.bf16.msra.mxu0 0
    %1175 = vmatprep.subr.bf16.mxu0 0
    %1176 = vmatpush2.bf16.msra.mxu0 0
    %1177 = vmatprep.subr.bf16.mxu0 0
    %1178 = vmatpush2.bf16.msra.mxu0 0
    %1179 = vmatprep.subr.bf16.mxu0 0
    %1180 = vmatpush2.bf16.msra.mxu0 0
    %1181 = vmatprep.subr.bf16.mxu0 0
    %1182 = vmatpush2.bf16.msra.mxu0 0
    %1183 = vmatprep.subr.bf16.mxu0 0
    %1184 = vmatpush2.bf16.msra.mxu0 0
    %1185 = vmatprep.mubr.bf16.mxu0 0
    %1186 = vmatmul.mubr.bf16.gmra.mxu0 %v1148
    %v1187 = vpop.f32.mrf.mxu0
    %v1188 = vadd.f32 %v1133, %v1187
    %v1189 = vpop.f32.mrf.mxu0
    %v1190 = vpop.f32.mrf.mxu0
    %v1191 = vadd.f32 %v1133, %v1190
    %v1192 = vpop.f32.mrf.mxu0
    %1193 = vmatprep.mubr.bf16.mxu0 0
    %1194 = vmatmul.mubr.bf16.gmra.mxu0 %v1151
    %v1195 = vpop.f32.mrf.mxu0
    %v1196 = vadd.f32 %v1133, %v1195
    %v1197 = vpop.f32.mrf.mxu0
    %v1198 = vpop.f32.mrf.mxu0
    %v1199 = vadd.f32 %v1133, %v1198
    %v1200 = vpop.f32.mrf.mxu0
    %1201 = vdwg.mxu0
    %v1202 = vadd.f32 %v1002, %v1188
    %v1203 = vadd.f32 %v1003, %v1191
    %v1204 = vadd.f32 %v1004, %v1196
    %v1205 = vadd.f32 %v1005, %v1199
    %v1206 = vadd.f32 %v1006, %v1188
    %v1207 = vadd.f32 %v1007, %v1191
    %v1208 = vadd.f32 %v1008, %v1196
    %v1209 = vadd.f32 %v1009, %v1199
    %v1210 = vadd.f32 %v1010, %v1188
    %v1211 = vadd.f32 %v1011, %v1191
    %v1212 = vadd.f32 %v1012, %v1196
    %v1213 = vadd.f32 %v1013, %v1199
    %s1214 = scalar_lea.vmem %s11, 1
    %v1215 = vld [vmem:[%s1214] sm:$0x1]
    %s1216 = scalar_lea.vmem %s12, 1
    %v1217 = vld [vmem:[%s1216] sm:$0x1]
    %v1218 = vsel %vm99, %v1202, 0.0
    %1219 = vadd.xlane.f32.xlu0 %v1218
    %v1220 = vpop.xlane.xlu0 %1219
    %v1221 = vsel %vm99, %v1203, 0.0
    %1222 = vadd.xlane.f32.xlu0 %v1221
    %v1223 = vpop.xlane.xlu0 %1222
    %v1224 = vsel %vm99, %v1204, 0.0
    %1225 = vadd.xlane.f32.xlu0 %v1224
    %v1226 = vpop.xlane.xlu0 %1225
    %v1227 = vsel %vm99, %v1205, 0.0
    %1228 = vadd.xlane.f32.xlu0 %v1227
    %v1229 = vpop.xlane.xlu0 %1228
    %v1230 = vsel %vm99, %v1206, 0.0
    %1231 = vadd.xlane.f32.xlu0 %v1230
    %v1232 = vpop.xlane.xlu0 %1231
    %v1233 = vsel %vm99, %v1207, 0.0
    %1234 = vadd.xlane.f32.xlu0 %v1233
    %v1235 = vpop.xlane.xlu0 %1234
    %v1236 = vsel %vm99, %v1208, 0.0
    %1237 = vadd.xlane.f32.xlu0 %v1236
    %v1238 = vpop.xlane.xlu0 %1237
    %v1239 = vsel %vm99, %v1209, 0.0
    %1240 = vadd.xlane.f32.xlu0 %v1239
    %v1241 = vpop.xlane.xlu0 %1240
    %v1242 = vsel %vm99, %v1210, 0.0
    %1243 = vadd.xlane.f32.xlu0 %v1242
    %v1244 = vpop.xlane.xlu0 %1243
    %v1245 = vsel %vm99, %v1211, 0.0
    %1246 = vadd.xlane.f32.xlu0 %v1245
    %v1247 = vpop.xlane.xlu0 %1246
    %v1248 = vsel %vm99, %v1212, 0.0
    %1249 = vadd.xlane.f32.xlu0 %v1248
    %v1250 = vpop.xlane.xlu0 %1249
    %v1251 = vsel %vm99, %v1213, 0.0
    %1252 = vadd.xlane.f32.xlu0 %v1251
    %v1253 = vpop.xlane.xlu0 %1252
    %v1254 = vmul.f32 %v1220, %v182
    %v1255 = vmul.f32 %v1223, %v182
    %v1256 = vmul.f32 %v1226, %v182
    %v1257 = vmul.f32 %v1229, %v182
    %v1258 = vmul.f32 %v1232, %v182
    %v1259 = vmul.f32 %v1235, %v182
    %v1260 = vmul.f32 %v1238, %v182
    %v1261 = vmul.f32 %v1241, %v182
    %v1262 = vmul.f32 %v1244, %v182
    %v1263 = vmul.f32 %v1247, %v182
    %v1264 = vmul.f32 %v1250, %v182
    %v1265 = vmul.f32 %v1253, %v182
    %v1266 = vsub.f32 %v1202, %v1254
    %v1267 = vsub.f32 %v1203, %v1255
    %v1268 = vsub.f32 %v1204, %v1256
    %v1269 = vsub.f32 %v1205, %v1257
    %v1270 = vsub.f32 %v1206, %v1258
    %v1271 = vsub.f32 %v1207, %v1259
    %v1272 = vsub.f32 %v1208, %v1260
    %v1273 = vsub.f32 %v1209, %v1261
    %v1274 = vsub.f32 %v1210, %v1262
    %v1275 = vsub.f32 %v1211, %v1263
    %v1276 = vsub.f32 %v1212, %v1264
    %v1277 = vsub.f32 %v1213, %v1265
    %v1278 = vmul.f32 %v1266, %v1266
    %v1279 = vmul.f32 %v1267, %v1267
    %v1280 = vmul.f32 %v1268, %v1268
    %v1281 = vmul.f32 %v1269, %v1269
    %v1282 = vmul.f32 %v1270, %v1270
    %v1283 = vmul.f32 %v1271, %v1271
    %v1284 = vmul.f32 %v1272, %v1272
    %v1285 = vmul.f32 %v1273, %v1273
    %v1286 = vmul.f32 %v1274, %v1274
    %v1287 = vmul.f32 %v1275, %v1275
    %v1288 = vmul.f32 %v1276, %v1276
    %v1289 = vmul.f32 %v1277, %v1277
    %v1290 = vsel %vm99, %v1278, 0.0
    %1291 = vadd.xlane.f32.xlu0 %v1290
    %v1292 = vpop.xlane.xlu0 %1291
    %v1293 = vsel %vm99, %v1279, 0.0
    %1294 = vadd.xlane.f32.xlu0 %v1293
    %v1295 = vpop.xlane.xlu0 %1294
    %v1296 = vsel %vm99, %v1280, 0.0
    %1297 = vadd.xlane.f32.xlu0 %v1296
    %v1298 = vpop.xlane.xlu0 %1297
    %v1299 = vsel %vm99, %v1281, 0.0
    %1300 = vadd.xlane.f32.xlu0 %v1299
    %v1301 = vpop.xlane.xlu0 %1300
    %v1302 = vsel %vm99, %v1282, 0.0
    %1303 = vadd.xlane.f32.xlu0 %v1302
    %v1304 = vpop.xlane.xlu0 %1303
    %v1305 = vsel %vm99, %v1283, 0.0
    %1306 = vadd.xlane.f32.xlu0 %v1305
    %v1307 = vpop.xlane.xlu0 %1306
    %v1308 = vsel %vm99, %v1284, 0.0
    %1309 = vadd.xlane.f32.xlu0 %v1308
    %v1310 = vpop.xlane.xlu0 %1309
    %v1311 = vsel %vm99, %v1285, 0.0
    %1312 = vadd.xlane.f32.xlu0 %v1311
    %v1313 = vpop.xlane.xlu0 %1312
    %v1314 = vsel %vm99, %v1286, 0.0
    %1315 = vadd.xlane.f32.xlu0 %v1314
    %v1316 = vpop.xlane.xlu0 %1315
    %v1317 = vsel %vm99, %v1287, 0.0
    %1318 = vadd.xlane.f32.xlu0 %v1317
    %v1319 = vpop.xlane.xlu0 %1318
    %v1320 = vsel %vm99, %v1288, 0.0
    %1321 = vadd.xlane.f32.xlu0 %v1320
    %v1322 = vpop.xlane.xlu0 %1321
    %v1323 = vsel %vm99, %v1289, 0.0
    %1324 = vadd.xlane.f32.xlu0 %v1323
    %v1325 = vpop.xlane.xlu0 %1324
    %v1326 = vmul.f32 %v1292, %v182
    %v1327 = vmul.f32 %v1295, %v182
    %v1328 = vmul.f32 %v1298, %v182
    %v1329 = vmul.f32 %v1301, %v182
    %v1330 = vmul.f32 %v1304, %v182
    %v1331 = vmul.f32 %v1307, %v182
    %v1332 = vmul.f32 %v1310, %v182
    %v1333 = vmul.f32 %v1313, %v182
    %v1334 = vmul.f32 %v1316, %v182
    %v1335 = vmul.f32 %v1319, %v182
    %v1336 = vmul.f32 %v1322, %v182
    %v1337 = vmul.f32 %v1325, %v182
    %v1338 = vadd.f32 %v1326, 1e-05
    %v1339 = vadd.f32 %v1327, 1e-05
    %v1340 = vadd.f32 %v1328, 1e-05
    %v1341 = vadd.f32 %v1329, 1e-05
    %v1342 = vadd.f32 %v1330, 1e-05
    %v1343 = vadd.f32 %v1331, 1e-05
    %v1344 = vadd.f32 %v1332, 1e-05
    %v1345 = vadd.f32 %v1333, 1e-05
    %v1346 = vadd.f32 %v1334, 1e-05
    %v1347 = vadd.f32 %v1335, 1e-05
    %v1348 = vadd.f32 %v1336, 1e-05
    %v1349 = vadd.f32 %v1337, 1e-05
    %v1350 = vrsqrt.pop %v1338
    %v1351 = vrsqrt.pop %v1339
    %v1352 = vrsqrt.pop %v1340
    %v1353 = vrsqrt.pop %v1341
    %v1354 = vrsqrt.pop %v1342
    %v1355 = vrsqrt.pop %v1343
    %v1356 = vrsqrt.pop %v1344
    %v1357 = vrsqrt.pop %v1345
    %v1358 = vrsqrt.pop %v1346
    %v1359 = vrsqrt.pop %v1347
    %v1360 = vrsqrt.pop %v1348
    %v1361 = vrsqrt.pop %v1349
    %v1362 = vmul.f32 %v1266, %v1350
    %v1363 = vmul.f32 %v1267, %v1351
    %v1364 = vmul.f32 %v1268, %v1352
    %v1365 = vmul.f32 %v1269, %v1353
    %v1366 = vmul.f32 %v1270, %v1354
    %v1367 = vmul.f32 %v1271, %v1355
    %v1368 = vmul.f32 %v1272, %v1356
    %v1369 = vmul.f32 %v1273, %v1357
    %v1370 = vmul.f32 %v1274, %v1358
    %v1371 = vmul.f32 %v1275, %v1359
    %v1372 = vmul.f32 %v1276, %v1360
    %v1373 = vmul.f32 %v1277, %v1361
    %v1375 = vlaneseq
    %v1376 = vshrl.u32 %v1375, 7
    %v1377 = vsub.s32 0, %v1376
    %v1378 = vrot.slane %v1215, %v1377
    %v1380 = vmul.f32 %v1362, %v1378
    %v1381 = vmul.f32 %v1363, %v1378
    %v1382 = vmul.f32 %v1364, %v1378
    %v1383 = vmul.f32 %v1365, %v1378
    %v1384 = vmul.f32 %v1366, %v1378
    %v1385 = vmul.f32 %v1367, %v1378
    %v1386 = vmul.f32 %v1368, %v1378
    %v1387 = vmul.f32 %v1369, %v1378
    %v1388 = vmul.f32 %v1370, %v1378
    %v1389 = vmul.f32 %v1371, %v1378
    %v1390 = vmul.f32 %v1372, %v1378
    %v1391 = vmul.f32 %v1373, %v1378
    %v1393 = vlaneseq
    %v1394 = vshrl.u32 %v1393, 7
    %v1395 = vsub.s32 0, %v1394
    %v1396 = vrot.slane %v1217, %v1395
    %v1398 = vadd.f32 %v1380, %v1396
    %v1399 = vadd.f32 %v1381, %v1396
    %v1400 = vadd.f32 %v1382, %v1396
    %v1401 = vadd.f32 %v1383, %v1396
    %v1402 = vadd.f32 %v1384, %v1396
    %v1403 = vadd.f32 %v1385, %v1396
    %v1404 = vadd.f32 %v1386, %v1396
    %v1405 = vadd.f32 %v1387, %v1396
    %v1406 = vadd.f32 %v1388, %v1396
    %v1407 = vadd.f32 %v1389, %v1396
    %v1408 = vadd.f32 %v1390, %v1396
    %v1409 = vadd.f32 %v1391, %v1396
    %s1410 = scalar_lea.vmem %s13, 16
    %v1411 = vld [vmem:[%s1410] sm:$0xf]
    %v1412 = vld [vmem:[%s1410 + $0x4] sm:$0xf]
    %v1413 = vld [vmem:[%s1410 + $0x8] sm:$0xf]
    %v1414 = vld [vmem:[%s1410 + $0xc] sm:$0xf]
    %v1415 = vpack.c.bf16 %v1399, %v1398
    %v1416 = vpack.c.bf16 %v1401, %v1400
    %v1417 = vpack.c.bf16 %v1403, %v1402
    %v1418 = vpack.c.bf16 %v1405, %v1404
    %v1419 = vpack.c.bf16 %v1407, %v1406
    %v1420 = vpack.c.bf16 %v1409, %v1408
    %s1421 = scalar_lea.vmem %s14, 1
    %v1422 = vld [vmem:[%s1421] sm:$0x1]
    %v1424 = vlaneseq
    %v1425 = vshrl.u32 %v1424, 7
    %v1426 = vsub.s32 0, %v1425
    %v1427 = vrot.slane %v1422, %v1426
    %v1433 = vunpack.c.l.b16 %v1411
    %v1434 = vunpack.c.l.b16 %v1412
    %v1435 = vunpack.c.l.b16 %v1413
    %v1436 = vunpack.c.l.b16 %v1414
    %v1437 = vpack.c.b16 %v1434, %v1433
    %v1438 = vpack.c.b16 %v1436, %v1435
    %v1442 = vsel %vm99, %v1415, 0
    %v1445 = vsel %vm99, %v1416, 0
    %v1448 = vsel %vm99, %v1417, 0
    %v1451 = vsel %vm99, %v1418, 0
    %v1454 = vsel %vm99, %v1419, 0
    %v1457 = vsel %vm99, %v1420, 0
    %1459 = vmatprep.subr.bf16.mxu0 0
    %1460 = vmatpush1.bf16.msra.mxu0 0
    %1461 = vmatprep.subr.bf16.mxu0 0
    %1462 = vmatpush1.bf16.msra.mxu0 0
    %1463 = vmatprep.subr.bf16.mxu0 0
    %1464 = vmatpush1.bf16.msra.mxu0 0
    %1465 = vmatprep.subr.bf16.mxu0 0
    %1466 = vmatpush1.bf16.msra.mxu0 0
    %1467 = vmatprep.subr.bf16.mxu0 0
    %1468 = vmatpush1.bf16.msra.mxu0 0
    %1469 = vmatprep.subr.bf16.mxu0 0
    %1470 = vmatpush1.bf16.msra.mxu0 0
    %1471 = vmatprep.subr.bf16.mxu0 0
    %1472 = vmatpush1.bf16.msra.mxu0 %v1438
    %1473 = vmatprep.subr.bf16.mxu0 0
    %1474 = vmatpush1.bf16.msra.mxu0 %v1437
    %1475 = vmatprep.subr.bf16.mxu0 0
    %1476 = vmatpush2.bf16.msra.mxu0 0
    %1477 = vmatprep.subr.bf16.mxu0 0
    %1478 = vmatpush2.bf16.msra.mxu0 0
    %1479 = vmatprep.subr.bf16.mxu0 0
    %1480 = vmatpush2.bf16.msra.mxu0 0
    %1481 = vmatprep.subr.bf16.mxu0 0
    %1482 = vmatpush2.bf16.msra.mxu0 0
    %1483 = vmatprep.subr.bf16.mxu0 0
    %1484 = vmatpush2.bf16.msra.mxu0 0
    %1485 = vmatprep.subr.bf16.mxu0 0
    %1486 = vmatpush2.bf16.msra.mxu0 0
    %1487 = vmatprep.subr.bf16.mxu0 0
    %1488 = vmatpush2.bf16.msra.mxu0 0
    %1489 = vmatprep.subr.bf16.mxu0 0
    %1490 = vmatpush2.bf16.msra.mxu0 0
    %1491 = vmatprep.mubr.bf16.mxu0 0
    %1492 = vmatmul.mubr.bf16.gmra.mxu0 %v1442
    %v1493 = vpop.f32.mrf.mxu0
    %v1494 = vadd.f32 %v1427, %v1493
    %v1495 = vpop.f32.mrf.mxu0
    %v1496 = vpop.f32.mrf.mxu0
    %v1497 = vadd.f32 %v1427, %v1496
    %v1498 = vpop.f32.mrf.mxu0
    %1499 = vmatprep.mubr.bf16.mxu0 0
    %1500 = vmatmul.mubr.bf16.gmra.mxu0 %v1445
    %v1501 = vpop.f32.mrf.mxu0
    %v1502 = vadd.f32 %v1427, %v1501
    %v1503 = vpop.f32.mrf.mxu0
    %v1504 = vpop.f32.mrf.mxu0
    %v1505 = vadd.f32 %v1427, %v1504
    %v1506 = vpop.f32.mrf.mxu0
    %1507 = vmatprep.mubr.bf16.mxu0 0
    %1508 = vmatmul.mubr.bf16.gmra.mxu0 %v1448
    %v1509 = vpop.f32.mrf.mxu0
    %v1510 = vadd.f32 %v1427, %v1509
    %v1511 = vpop.f32.mrf.mxu0
    %v1512 = vpop.f32.mrf.mxu0
    %v1513 = vadd.f32 %v1427, %v1512
    %v1514 = vpop.f32.mrf.mxu0
    %1515 = vmatprep.mubr.bf16.mxu0 0
    %1516 = vmatmul.mubr.bf16.gmra.mxu0 %v1451
    %v1517 = vpop.f32.mrf.mxu0
    %v1518 = vadd.f32 %v1427, %v1517
    %v1519 = vpop.f32.mrf.mxu0
    %v1520 = vpop.f32.mrf.mxu0
    %v1521 = vadd.f32 %v1427, %v1520
    %v1522 = vpop.f32.mrf.mxu0
    %1523 = vmatprep.mubr.bf16.mxu0 0
    %1524 = vmatmul.mubr.bf16.gmra.mxu0 %v1454
    %v1525 = vpop.f32.mrf.mxu0
    %v1526 = vadd.f32 %v1427, %v1525
    %v1527 = vpop.f32.mrf.mxu0
    %v1528 = vpop.f32.mrf.mxu0
    %v1529 = vadd.f32 %v1427, %v1528
    %v1530 = vpop.f32.mrf.mxu0
    %1531 = vmatprep.mubr.bf16.mxu0 0
    %1532 = vmatmul.mubr.bf16.gmra.mxu0 %v1457
    %v1533 = vpop.f32.mrf.mxu0
    %v1534 = vadd.f32 %v1427, %v1533
    %v1535 = vpop.f32.mrf.mxu0
    %v1536 = vpop.f32.mrf.mxu0
    %v1537 = vadd.f32 %v1427, %v1536
    %v1538 = vpop.f32.mrf.mxu0
    %1539 = vdwg.mxu0
    %v1540 = vmul.f32 %v1494, 0.5
    %v1541 = vmul.f32 %v1497, 0.5
    %v1542 = vmul.f32 %v1502, 0.5
    %v1543 = vmul.f32 %v1505, 0.5
    %v1544 = vmul.f32 %v1510, 0.5
    %v1545 = vmul.f32 %v1513, 0.5
    %v1546 = vmul.f32 %v1518, 0.5
    %v1547 = vmul.f32 %v1521, 0.5
    %v1548 = vmul.f32 %v1526, 0.5
    %v1549 = vmul.f32 %v1529, 0.5
    %v1550 = vmul.f32 %v1534, 0.5
    %v1551 = vmul.f32 %v1537, 0.5
    %v1552 = vmul.f32 %v1494, 0.044715
    %v1553 = vmul.f32 %v1497, 0.044715
    %v1554 = vmul.f32 %v1502, 0.044715
    %v1555 = vmul.f32 %v1505, 0.044715
    %v1556 = vmul.f32 %v1510, 0.044715
    %v1557 = vmul.f32 %v1513, 0.044715
    %v1558 = vmul.f32 %v1518, 0.044715
    %v1559 = vmul.f32 %v1521, 0.044715
    %v1560 = vmul.f32 %v1526, 0.044715
    %v1561 = vmul.f32 %v1529, 0.044715
    %v1562 = vmul.f32 %v1534, 0.044715
    %v1563 = vmul.f32 %v1537, 0.044715
    %v1564 = vmul.f32 %v1552, %v1494
    %v1565 = vmul.f32 %v1553, %v1497
    %v1566 = vmul.f32 %v1554, %v1502
    %v1567 = vmul.f32 %v1555, %v1505
    %v1568 = vmul.f32 %v1556, %v1510
    %v1569 = vmul.f32 %v1557, %v1513
    %v1570 = vmul.f32 %v1558, %v1518
    %v1571 = vmul.f32 %v1559, %v1521
    %v1572 = vmul.f32 %v1560, %v1526
    %v1573 = vmul.f32 %v1561, %v1529
    %v1574 = vmul.f32 %v1562, %v1534
    %v1575 = vmul.f32 %v1563, %v1537
    %v1576 = vmul.f32 %v1564, %v1494
    %v1577 = vmul.f32 %v1565, %v1497
    %v1578 = vmul.f32 %v1566, %v1502
    %v1579 = vmul.f32 %v1567, %v1505
    %v1580 = vmul.f32 %v1568, %v1510
    %v1581 = vmul.f32 %v1569, %v1513
    %v1582 = vmul.f32 %v1570, %v1518
    %v1583 = vmul.f32 %v1571, %v1521
    %v1584 = vmul.f32 %v1572, %v1526
    %v1585 = vmul.f32 %v1573, %v1529
    %v1586 = vmul.f32 %v1574, %v1534
    %v1587 = vmul.f32 %v1575, %v1537
    %v1588 = vadd.f32 %v1494, %v1576
    %v1589 = vadd.f32 %v1497, %v1577
    %v1590 = vadd.f32 %v1502, %v1578
    %v1591 = vadd.f32 %v1505, %v1579
    %v1592 = vadd.f32 %v1510, %v1580
    %v1593 = vadd.f32 %v1513, %v1581
    %v1594 = vadd.f32 %v1518, %v1582
    %v1595 = vadd.f32 %v1521, %v1583
    %v1596 = vadd.f32 %v1526, %v1584
    %v1597 = vadd.f32 %v1529, %v1585
    %v1598 = vadd.f32 %v1534, %v1586
    %v1599 = vadd.f32 %v1537, %v1587
    %v1600 = vmul.f32 %v1588, 0.7978846
    %v1601 = vmul.f32 %v1589, 0.7978846
    %v1602 = vmul.f32 %v1590, 0.7978846
    %v1603 = vmul.f32 %v1591, 0.7978846
    %v1604 = vmul.f32 %v1592, 0.7978846
    %v1605 = vmul.f32 %v1593, 0.7978846
    %v1606 = vmul.f32 %v1594, 0.7978846
    %v1607 = vmul.f32 %v1595, 0.7978846
    %v1608 = vmul.f32 %v1596, 0.7978846
    %v1609 = vmul.f32 %v1597, 0.7978846
    %v1610 = vmul.f32 %v1598, 0.7978846
    %v1611 = vmul.f32 %v1599, 0.7978846
    %v1612 = vtanh.pop %v1600
    %v1613 = vtanh.pop %v1601
    %v1614 = vtanh.pop %v1602
    %v1615 = vtanh.pop %v1603
    %v1616 = vtanh.pop %v1604
    %v1617 = vtanh.pop %v1605
    %v1618 = vtanh.pop %v1606
    %v1619 = vtanh.pop %v1607
    %v1620 = vtanh.pop %v1608
    %v1621 = vtanh.pop %v1609
    %v1622 = vtanh.pop %v1610
    %v1623 = vtanh.pop %v1611
    %v1624 = vadd.f32 %v1612, 1.0
    %v1625 = vadd.f32 %v1613, 1.0
    %v1626 = vadd.f32 %v1614, 1.0
    %v1627 = vadd.f32 %v1615, 1.0
    %v1628 = vadd.f32 %v1616, 1.0
    %v1629 = vadd.f32 %v1617, 1.0
    %v1630 = vadd.f32 %v1618, 1.0
    %v1631 = vadd.f32 %v1619, 1.0
    %v1632 = vadd.f32 %v1620, 1.0
    %v1633 = vadd.f32 %v1621, 1.0
    %v1634 = vadd.f32 %v1622, 1.0
    %v1635 = vadd.f32 %v1623, 1.0
    %v1636 = vmul.f32 %v1540, %v1624
    %v1637 = vmul.f32 %v1541, %v1625
    %v1638 = vmul.f32 %v1542, %v1626
    %v1639 = vmul.f32 %v1543, %v1627
    %v1640 = vmul.f32 %v1544, %v1628
    %v1641 = vmul.f32 %v1545, %v1629
    %v1642 = vmul.f32 %v1546, %v1630
    %v1643 = vmul.f32 %v1547, %v1631
    %v1644 = vmul.f32 %v1548, %v1632
    %v1645 = vmul.f32 %v1549, %v1633
    %v1646 = vmul.f32 %v1550, %v1634
    %v1647 = vmul.f32 %v1551, %v1635
    %s1648 = scalar_lea.vmem %s15, 32
    %v1649 = vld [vmem:[%s1648] sm:$0xf]
    %v1650 = vld [vmem:[%s1648 + $0x4] sm:$0xf]
    %v1651 = vld [vmem:[%s1648 + $0x8] sm:$0xf]
    %v1652 = vld [vmem:[%s1648 + $0xc] sm:$0xf]
    %v1653 = vld [vmem:[%s1648 + $0x10] sm:$0xf]
    %v1654 = vld [vmem:[%s1648 + $0x14] sm:$0xf]
    %v1655 = vld [vmem:[%s1648 + $0x18] sm:$0xf]
    %v1656 = vld [vmem:[%s1648 + $0x1c] sm:$0xf]
    %v1657 = vpack.c.bf16 %v1637, %v1636
    %v1658 = vpack.c.bf16 %v1639, %v1638
    %v1659 = vpack.c.bf16 %v1641, %v1640
    %v1660 = vpack.c.bf16 %v1643, %v1642
    %v1661 = vpack.c.bf16 %v1645, %v1644
    %v1662 = vpack.c.bf16 %v1647, %v1646
    %v1671 = vunpack.c.l.b16 %v1649
    %v1672 = vunpack.c.l.b16 %v1650
    %v1673 = vunpack.c.l.b16 %v1651
    %v1674 = vunpack.c.l.b16 %v1652
    %v1675 = vunpack.c.l.b16 %v1653
    %v1676 = vunpack.c.l.b16 %v1654
    %v1677 = vunpack.c.l.b16 %v1655
    %v1678 = vunpack.c.l.b16 %v1656
    %v1679 = vpack.c.b16 %v1672, %v1671
    %v1680 = vpack.c.b16 %v1674, %v1673
    %v1681 = vpack.c.b16 %v1676, %v1675
    %v1682 = vpack.c.b16 %v1678, %v1677
    %v1688 = vsel %vm883, %v1657, 0
    %v1691 = vsel %vm883, %v1658, 0
    %v1694 = vsel %vm883, %v1659, 0
    %v1697 = vsel %vm883, %v1660, 0
    %v1700 = vsel %vm883, %v1661, 0
    %v1703 = vsel %vm883, %v1662, 0
    %1705 = vmatprep.subr.bf16.mxu0 0
    %1706 = vmatpush1.bf16.msra.mxu0 0
    %1707 = vmatprep.subr.bf16.mxu0 0
    %1708 = vmatpush1.bf16.msra.mxu0 0
    %1709 = vmatprep.subr.bf16.mxu0 0
    %1710 = vmatpush1.bf16.msra.mxu0 0
    %1711 = vmatprep.subr.bf16.mxu0 0
    %1712 = vmatpush1.bf16.msra.mxu0 0
    %1713 = vmatprep.subr.bf16.mxu0 0
    %1714 = vmatpush1.bf16.msra.mxu0 %v1682
    %1715 = vmatprep.subr.bf16.mxu0 0
    %1716 = vmatpush1.bf16.msra.mxu0 %v1681
    %1717 = vmatprep.subr.bf16.mxu0 0
    %1718 = vmatpush1.bf16.msra.mxu0 %v1680
    %1719 = vmatprep.subr.bf16.mxu0 0
    %1720 = vmatpush1.bf16.msra.mxu0 %v1679
    %1721 = vmatprep.subr.bf16.mxu0 0
    %1722 = vmatpush2.bf16.msra.mxu0 0
    %1723 = vmatprep.subr.bf16.mxu0 0
    %1724 = vmatpush2.bf16.msra.mxu0 0
    %1725 = vmatprep.subr.bf16.mxu0 0
    %1726 = vmatpush2.bf16.msra.mxu0 0
    %1727 = vmatprep.subr.bf16.mxu0 0
    %1728 = vmatpush2.bf16.msra.mxu0 0
    %1729 = vmatprep.subr.bf16.mxu0 0
    %1730 = vmatpush2.bf16.msra.mxu0 0
    %1731 = vmatprep.subr.bf16.mxu0 0
    %1732 = vmatpush2.bf16.msra.mxu0 0
    %1733 = vmatprep.subr.bf16.mxu0 0
    %1734 = vmatpush2.bf16.msra.mxu0 0
    %1735 = vmatprep.subr.bf16.mxu0 0
    %1736 = vmatpush2.bf16.msra.mxu0 0
    %1737 = vmatprep.mubr.bf16.mxu0 0
    %1738 = vmatmul.mubr.bf16.gmra.mxu0 %v1688
    %v1739 = vpop.f32.mrf.mxu0
    %v1740 = vadd.f32 0.0, %v1739
    %v1741 = vpop.f32.mrf.mxu0
    %v1742 = vpop.f32.mrf.mxu0
    %v1743 = vadd.f32 0.0, %v1742
    %v1744 = vpop.f32.mrf.mxu0
    %1745 = vmatprep.mubr.bf16.mxu0 0
    %1746 = vmatmul.mubr.bf16.gmra.mxu0 %v1691
    %v1747 = vpop.f32.mrf.mxu0
    %v1748 = vadd.f32 0.0, %v1747
    %v1749 = vpop.f32.mrf.mxu0
    %v1750 = vpop.f32.mrf.mxu0
    %v1751 = vadd.f32 0.0, %v1750
    %v1752 = vpop.f32.mrf.mxu0
    %1753 = vmatprep.mubr.bf16.mxu0 0
    %1754 = vmatmul.mubr.bf16.gmra.mxu0 %v1694
    %v1755 = vpop.f32.mrf.mxu0
    %v1756 = vadd.f32 0.0, %v1755
    %v1757 = vpop.f32.mrf.mxu0
    %v1758 = vpop.f32.mrf.mxu0
    %v1759 = vadd.f32 0.0, %v1758
    %v1760 = vpop.f32.mrf.mxu0
    %1761 = vmatprep.mubr.bf16.mxu0 0
    %1762 = vmatmul.mubr.bf16.gmra.mxu0 %v1697
    %v1763 = vpop.f32.mrf.mxu0
    %v1764 = vadd.f32 0.0, %v1763
    %v1765 = vpop.f32.mrf.mxu0
    %v1766 = vpop.f32.mrf.mxu0
    %v1767 = vadd.f32 0.0, %v1766
    %v1768 = vpop.f32.mrf.mxu0
    %1769 = vmatprep.mubr.bf16.mxu0 0
    %1770 = vmatmul.mubr.bf16.gmra.mxu0 %v1700
    %v1771 = vpop.f32.mrf.mxu0
    %v1772 = vadd.f32 0.0, %v1771
    %v1773 = vpop.f32.mrf.mxu0
    %v1774 = vpop.f32.mrf.mxu0
    %v1775 = vadd.f32 0.0, %v1774
    %v1776 = vpop.f32.mrf.mxu0
    %1777 = vmatprep.mubr.bf16.mxu0 0
    %1778 = vmatmul.mubr.bf16.gmra.mxu0 %v1703
    %v1779 = vpop.f32.mrf.mxu0
    %v1780 = vadd.f32 0.0, %v1779
    %v1781 = vpop.f32.mrf.mxu0
    %v1782 = vpop.f32.mrf.mxu0
    %v1783 = vadd.f32 0.0, %v1782
    %v1784 = vpop.f32.mrf.mxu0
    %1785 = vdwg.mxu0
    %v1786 = vadd.f32 %v1202, %v1740
    %v1787 = vadd.f32 %v1203, %v1743
    %v1788 = vadd.f32 %v1204, %v1748
    %v1789 = vadd.f32 %v1205, %v1751
    %v1790 = vadd.f32 %v1206, %v1756
    %v1791 = vadd.f32 %v1207, %v1759
    %v1792 = vadd.f32 %v1208, %v1764
    %v1793 = vadd.f32 %v1209, %v1767
    %v1794 = vadd.f32 %v1210, %v1772
    %v1795 = vadd.f32 %v1211, %v1775
    %v1796 = vadd.f32 %v1212, %v1780
    %v1797 = vadd.f32 %v1213, %v1783
    %s1798 = scalar_lea.vmem %s16, 1
    %v1799 = vld [vmem:[%s1798] sm:$0x1]
    %v1801 = vlaneseq
    %v1802 = vshrl.u32 %v1801, 7
    %v1803 = vsub.s32 0, %v1802
    %v1804 = vrot.slane %v1799, %v1803
    %v1806 = vadd.f32 %v1786, %v1804
    %v1807 = vadd.f32 %v1787, %v1804
    %v1808 = vadd.f32 %v1788, %v1804
    %v1809 = vadd.f32 %v1789, %v1804
    %v1810 = vadd.f32 %v1790, %v1804
    %v1811 = vadd.f32 %v1791, %v1804
    %v1812 = vadd.f32 %v1792, %v1804
    %v1813 = vadd.f32 %v1793, %v1804
    %v1814 = vadd.f32 %v1794, %v1804
    %v1815 = vadd.f32 %v1795, %v1804
    %v1816 = vadd.f32 %v1796, %v1804
    %v1817 = vadd.f32 %v1797, %v1804
    %v1818 = vld [vmem:[%s2] sm:$0x3]
    %vm1819 = vcmask 785408
    %v1821 = vsel %vm1819, %v1818, 0
    %1823 = vmatprep.subr.mxu0 0.0
    %1824 = vmatpush1.msra.mxu0 0.0
    %1825 = vmatprep.subr.mxu0 0.0
    %1826 = vmatpush1.msra.mxu0 0.0
    %1827 = vmatprep.subr.mxu0 0.0
    %1828 = vmatpush1.msra.mxu0 0.0
    %1829 = vmatprep.subr.mxu0 0.0
    %1830 = vmatpush1.msra.mxu0 0.0
    %1831 = vmatprep.subr.mxu0 0.0
    %1832 = vmatpush1.msra.mxu0 %v1817
    %1833 = vmatprep.subr.mxu0 0.0
    %1834 = vmatpush1.msra.mxu0 %v1816
    %1835 = vmatprep.subr.mxu0 0.0
    %1836 = vmatpush1.msra.mxu0 %v1815
    %1837 = vmatprep.subr.mxu0 0.0
    %1838 = vmatpush1.msra.mxu0 %v1814
    %1839 = vmatprep.subr.mxu0 0.0
    %1840 = vmatpush1.msra.mxu0 %v1813
    %1841 = vmatprep.subr.mxu0 0.0
    %1842 = vmatpush1.msra.mxu0 %v1812
    %1843 = vmatprep.subr.mxu0 0.0
    %1844 = vmatpush1.msra.mxu0 %v1811
    %1845 = vmatprep.subr.mxu0 0.0
    %1846 = vmatpush1.msra.mxu0 %v1810
    %1847 = vmatprep.subr.mxu0 0.0
    %1848 = vmatpush1.msra.mxu0 %v1809
    %1849 = vmatprep.subr.mxu0 0.0
    %1850 = vmatpush1.msra.mxu0 %v1808
    %1851 = vmatprep.subr.mxu0 0.0
    %1852 = vmatpush1.msra.mxu0 %v1807
    %1853 = vmatprep.subr.mxu0 0.0
    %1854 = vmatpush1.msra.mxu0 %v1806
    %1855 = vmatprep.subr.mxu0 0.0
    %1856 = vmatpush2.msra.mxu0 0.0
    %1857 = vmatprep.subr.mxu0 0.0
    %1858 = vmatpush2.msra.mxu0 0.0
    %1859 = vmatprep.subr.mxu0 0.0
    %1860 = vmatpush2.msra.mxu0 0.0
    %1861 = vmatprep.subr.mxu0 0.0
    %1862 = vmatpush2.msra.mxu0 0.0
    %1863 = vmatprep.subr.mxu0 0.0
    %1864 = vmatpush2.msra.mxu0 0.0
    %1865 = vmatprep.subr.mxu0 0.0
    %1866 = vmatpush2.msra.mxu0 0.0
    %1867 = vmatprep.subr.mxu0 0.0
    %1868 = vmatpush2.msra.mxu0 0.0
    %1869 = vmatprep.subr.mxu0 0.0
    %1870 = vmatpush2.msra.mxu0 0.0
    %1871 = vmatprep.subr.mxu0 0.0
    %1872 = vmatpush2.msra.mxu0 0.0
    %1873 = vmatprep.subr.mxu0 0.0
    %1874 = vmatpush2.msra.mxu0 0.0
    %1875 = vmatprep.subr.mxu0 0.0
    %1876 = vmatpush2.msra.mxu0 0.0
    %1877 = vmatprep.subr.mxu0 0.0
    %1878 = vmatpush2.msra.mxu0 0.0
    %1879 = vmatprep.subr.mxu0 0.0
    %1880 = vmatpush2.msra.mxu0 0.0
    %1881 = vmatprep.subr.mxu0 0.0
    %1882 = vmatpush2.msra.mxu0 0.0
    %1883 = vmatprep.subr.mxu0 0.0
    %1884 = vmatpush2.msra.mxu0 0.0
    %1885 = vmatprep.subr.mxu0 0.0
    %1886 = vmatpush2.msra.mxu0 0.0
    %1887 = vmatprep.mubr.f32.mxu0 0.0
    %1888 = vmatmul.mubr.f32.gmra.mxu0 %v1821
    %v1889 = vpop.f32.mrf.mxu0
    %v1890 = vadd.f32 0.0, %v1889
    %v1891 = vpop.f32.mrf.mxu0
    %1892 = vdwg.mxu0
    %v1893 = vmul.f32 %v1890, 0.020833334
    %v1894 = vld [vmem:[%s17] sm:$0xf]
    %v1895 = vld [vmem:[%s17 + $0x4] sm:$0xf]
    %v1896 = vld [vmem:[%s17 + $0x8] sm:$0xf]
    %v1897 = vld [vmem:[%s17 + $0xc] sm:$0xf]
    %v1898 = vpack.c.bf16 %v1893, %v1893
    %v1899 = vld [vmem:[%s18] sm:$0x1]
    %v1901 = vlaneseq
    %v1902 = vshrl.u32 %v1901, 7
    %v1903 = vsub.s32 0, %v1902
    %v1904 = vrot.slane %v1899, %v1903
    %v1910 = vunpack.c.l.b16 %v1894
    %v1911 = vunpack.c.l.b16 %v1895
    %v1912 = vunpack.c.l.b16 %v1896
    %v1913 = vunpack.c.l.b16 %v1897
    %v1914 = vpack.c.b16 %v1911, %v1910
    %v1915 = vpack.c.b16 %v1913, %v1912
    %v1919 = vsel %vm99, %v1898, 0
    %1921 = vmatprep.subr.bf16.mxu0 0
    %1922 = vmatpush1.bf16.msra.mxu0 0
    %1923 = vmatprep.subr.bf16.mxu0 0
    %1924 = vmatpush1.bf16.msra.mxu0 0
    %1925 = vmatprep.subr.bf16.mxu0 0
    %1926 = vmatpush1.bf16.msra.mxu0 0
    %1927 = vmatprep.subr.bf16.mxu0 0
    %1928 = vmatpush1.bf16.msra.mxu0 0
    %1929 = vmatprep.subr.bf16.mxu0 0
    %1930 = vmatpush1.bf16.msra.mxu0 0
    %1931 = vmatprep.subr.bf16.mxu0 0
    %1932 = vmatpush1.bf16.msra.mxu0 0
    %1933 = vmatprep.subr.bf16.mxu0 0
    %1934 = vmatpush1.bf16.msra.mxu0 %v1915
    %1935 = vmatprep.subr.bf16.mxu0 0
    %1936 = vmatpush1.bf16.msra.mxu0 %v1914
    %1937 = vmatprep.subr.bf16.mxu0 0
    %1938 = vmatpush2.bf16.msra.mxu0 0
    %1939 = vmatprep.subr.bf16.mxu0 0
    %1940 = vmatpush2.bf16.msra.mxu0 0
    %1941 = vmatprep.subr.bf16.mxu0 0
    %1942 = vmatpush2.bf16.msra.mxu0 0
    %1943 = vmatprep.subr.bf16.mxu0 0
    %1944 = vmatpush2.bf16.msra.mxu0 0
    %1945 = vmatprep.subr.bf16.mxu0 0
    %1946 = vmatpush2.bf16.msra.mxu0 0
    %1947 = vmatprep.subr.bf16.mxu0 0
    %1948 = vmatpush2.bf16.msra.mxu0 0
    %1949 = vmatprep.subr.bf16.mxu0 0
    %1950 = vmatpush2.bf16.msra.mxu0 0
    %1951 = vmatprep.subr.bf16.mxu0 0
    %1952 = vmatpush2.bf16.msra.mxu0 0
    %1953 = vmatprep.mubr.bf16.mxu0 0
    %1954 = vmatmul.mubr.bf16.gmra.mxu0 %v1919
    %v1955 = vpop.f32.mrf.mxu0
    %v1956 = vadd.f32 %v1904, %v1955
    %v1957 = vpop.f32.mrf.mxu0
    %v1958 = vpop.f32.mrf.mxu0
    %v1959 = vpop.f32.mrf.mxu0
    %1960 = vdwg.mxu0
    %v1961 = vld [vmem:[%s19] sm:$0x1]
    %v1962 = vld [vmem:[%s20] sm:$0x1]
    %vm1963 = vcmask 254976
    %v1964 = vsel %vm1963, %v1956, 0.0
    %1965 = vadd.xlane.f32.xlu0 %v1964
    %v1966 = vpop.xlane.xlu0 %1965
    %v1967 = vmul.f32 %v1966, %v182
    %v1968 = vsub.f32 %v1956, %v1967
    %v1969 = vmul.f32 %v1968, %v1968
    %v1970 = vsel %vm1963, %v1969, 0.0
    %1971 = vadd.xlane.f32.xlu0 %v1970
    %v1972 = vpop.xlane.xlu0 %1971
    %v1973 = vmul.f32 %v1972, %v182
    %v1974 = vadd.f32 %v1973, 1e-05
    %v1975 = vrsqrt.pop %v1974
    %v1976 = vmul.f32 %v1968, %v1975
    %v1978 = vlaneseq
    %v1979 = vshrl.u32 %v1978, 7
    %v1980 = vsub.s32 0, %v1979
    %v1981 = vrot.slane %v1961, %v1980
    %v1983 = vmul.f32 %v1976, %v1981
    %v1985 = vlaneseq
    %v1986 = vshrl.u32 %v1985, 7
    %v1987 = vsub.s32 0, %v1986
    %v1988 = vrot.slane %v1962, %v1987
    %v1990 = vadd.f32 %v1983, %v1988
    %v1991 = vmax.f32 %v1990, 0.0
    %1992 = vst.msk [vmem:[#allocation2] sm:$0x3] %vm1963, %v1991
    // Predicated region
    $region86: #{hifno_encoder_forward.11} parent=1 // pred_check
      _
    $region87: #{hifno_encoder_forward.11} parent=1 // pred_check_branch
      %1994 = sbr.rel (0) target = $region89
    $region88: #{hifno_encoder_forward.11} parent=1 // pred_region
      %s1996 = ssub.s32 32, 32
      %1997 = vsyncadd [#allocation3], %s1996
      %s1999 = sshll.u32 [#allocation2], 4
      %s2000 = int_to_ptr.vmem [resolvable:$true] %s1999
      %2002 = dma.vmem_to_hbm [thread:$0]  %s2000, 32, %s21, [#allocation3]
    $region89: #{hifno_encoder_forward.11} parent=1 // pred_fallthru
      _
    // Predicated region
    $region90: #{hifno_encoder_forward.11} parent=1 // pred_check
      _
    $region91: #{hifno_encoder_forward.11} parent=1 // pred_check_branch
      %2004 = sbr.rel (0) target = $region93
    $region92: #{hifno_encoder_forward.11} parent=1 // pred_region
      %2005 = dma.done [#allocation3], 32
    $region93: #{hifno_encoder_forward.11} parent=1 // pred_fallthru
      _
    %2006 = vsyncpa [#allocation3], 1

</llo_original>
